<compile_context>
chip_gen: v7x
topology: tpu7x:2x2x1
jax: 0.10.0
libtpu: 0.0.40
codegen_flags: <defaults>
</compile_context>

<pallas_src>
import functools

import numpy as np

import jax
import jax.numpy as jnp
from jax.experimental import pallas as pl
from jax.experimental.pallas import tpu as pltpu

LATENT = 8     # latent_dim_size
HIDDEN = 32    # hidden_dim_size


def _round_up(x, m):
    return ((x + m - 1) // m) * m


# ------------------------------ fused kernel ------------------------------- #

def _vae_kernel(x_ref, eps_ref,
                conv1_t, conv2_t,
                fc1_w, fc1_b, fc2_w_mu, fc2_b_mu, fc2_w_ls, fc2_b_ls,
                fc3_w, fc3_b, fc4_w, fc4_b,
                deconv1_t, deconv2_t,
                out_ref, mu_ref, ls_ref, *, bt):
    """Whole VAE forward for one batch tile of `bt` images.

    Activation layout between layers: rows = (image_row, batch) on sublanes,
    lanes = (col, channel) col-major.  All slicing is on leading dims only.
    """
    f32 = jnp.float32

    def mm(a, w_bf16):
        # bf16-stored weight, f32 accumulate (compute is not the bottleneck
        # at these sizes; this keeps numerics tight for the reference check).
        return jnp.dot(a, w_bf16.astype(f32), preferred_element_type=f32)

    def conv(x3, t_ref, oh):
        """4x4 / stride 2 / pad 1 conv + ReLU.

        x3: (H, bt, W*IC) f32 (unpadded rows); t_ref: (4, W*IC, (W//2)*OC)
        band matrices (one per kernel row, columns+channels folded in).
        Returns (oh*bt, (W//2)*OC), rows ordered (oh, b), lanes (ow, oc).
        """
        h_in, _, k = x3.shape
        n = t_ref.shape[-1]
        zrow = jnp.zeros((1, bt, k), f32)
        xpad = jnp.concatenate([zrow, x3, zrow], axis=0)      # (h_in+2, bt, k)
        xq = xpad.reshape((h_in + 2) // 2, 2, bt, k)          # row-parity split
        acc = jnp.zeros((oh * bt, n), f32)
        for kh in range(4):                                   # 4 kernel rows
            xt = xq[kh // 2: kh // 2 + oh, kh % 2].reshape(oh * bt, k)
            acc = acc + mm(xt, t_ref[kh])
        return jnp.maximum(acc, 0.0)

    def deconv(x2, d_ref, h_in, relu):
        """4x4 / stride 2 / pad 1 transposed conv (sub-pixel form).

        x2: (h_in*bt, W*IC); d_ref: (4, W*IC, 2W*OC) band matrices for kernel
        rows (3, 1, 2, 0).  Returns (2*h_in*bt, 2W*OC), rows (oh, b).
        """
        k = x2.shape[-1]
        n = d_ref.shape[-1]
        x3 = x2.reshape(h_in, bt, k)
        zrow = jnp.zeros((1, bt, k), f32)
        xpad = jnp.concatenate([zrow, x3, zrow], axis=0)      # (h_in+2, bt, k)
        ra = xpad[0:h_in].reshape(h_in * bt, k)               # input rows ho-1
        rb = xpad[1:h_in + 1].reshape(h_in * bt, k)           # input rows ho
        rc = xpad[2:h_in + 2].reshape(h_in * bt, k)           # input rows ho+1
        even = mm(ra, d_ref[0]) + mm(rb, d_ref[1])            # out rows 2*ho
        odd = mm(rb, d_ref[2]) + mm(rc, d_ref[3])             # out rows 2*ho+1
        out = jnp.concatenate(
            [even.reshape(h_in, 1, bt, n), odd.reshape(h_in, 1, bt, n)], axis=1)
        out = out.reshape(2 * h_in * bt, n)                   # rows (oh, b)
        if relu:
            out = jnp.maximum(out, 0.0)
        return out

    # ------------------------------ encoder ------------------------------ #
    h1 = conv(x_ref[...], conv1_t, 14)                    # (14*bt, 14*16)
    h2 = conv(h1.reshape(14, bt, 14 * 16), conv2_t, 7)    # (7*bt, 7*32)

    # enc fc1 (Linear 1568->32), accumulated over the 7 image rows so no
    # in-kernel transpose is needed for the flatten.
    h2r = h2.reshape(7, bt, 7 * 32)
    acc = jnp.zeros((bt, HIDDEN), f32)
    for h in range(7):
        acc = acc + mm(h2r[h], fc1_w[h])
    henc = jnp.maximum(acc + fc1_b[...], 0.0)              # (bt, HIDDEN)

    mu = mm(henc, fc2_w_mu[...]) + fc2_b_mu[...]           # (bt, LATENT)
    ls = mm(henc, fc2_w_ls[...]) + fc2_b_ls[...]           # (bt, LATENT)
    z = mu + jnp.exp(ls) * eps_ref[...]                    # reparameterization

    # ------------------------------ decoder ------------------------------ #
    hdec = jnp.maximum(mm(z, fc3_w[...]) + fc3_b[...], 0.0)   # (bt, HIDDEN)
    rows = []
    for h in range(7):                                      # dec fc2, row-blocked
        r = jnp.maximum(mm(hdec, fc4_w[h]) + fc4_b[h], 0.0)   # (bt, 7*32)
        rows.append(r.reshape(1, bt, 7 * 32))
    dec = jnp.concatenate(rows, axis=0).reshape(7 * bt, 7 * 32)

    g1 = deconv(dec, deconv1_t, 7, relu=True)              # (14*bt, 14*16)
    g2 = deconv(g1, deconv2_t, 14, relu=False)             # (28*bt, 28)

    out_ref[...] = g2.reshape(28, bt, 28)
    mu_ref[...] = mu
    ls_ref[...] = ls


# ------------------------------- parameters -------------------------------- #

def init_params(key):
    """Raw parameters in the PyTorch layouts used by the reference module."""
    ks = jax.random.split(key, 12)
    p = {}

    def conv_w(k, oc, ic, kh, kw):
        sf = 1.0 / (ic * kh * kw) ** 0.5
        return jax.random.uniform(k, (oc, ic, kh, kw), jnp.float32, -sf, sf)

    def deconv_w(k, ic, oc, kh, kw):
        sf = 1.0 / (oc * kh * kw) ** 0.5
        return jax.random.uniform(k, (ic, oc, kh, kw), jnp.float32, -sf, sf)

    def linear(kw_, kb_, in_f, out_f):
        sf = 1.0 / in_f ** 0.5
        w = jax.random.uniform(kw_, (out_f, in_f), jnp.float32, -sf, sf)
        b = jax.random.uniform(kb_, (out_f,), jnp.float32, -sf, sf)
        return w, b

    p["enc_conv1_w"] = conv_w(ks[0], 16, 1, 4, 4)
    p["enc_conv2_w"] = conv_w(ks[1], 32, 16, 4, 4)
    p["enc_fc1_w"], p["enc_fc1_b"] = linear(ks[2], ks[3], 7 * 7 * 32, HIDDEN)
    p["enc_fc2_w"], p["enc_fc2_b"] = linear(ks[4], ks[5], HIDDEN, 2 * LATENT)
    p["dec_fc1_w"], p["dec_fc1_b"] = linear(ks[6], ks[7], LATENT, HIDDEN)
    p["dec_fc2_w"], p["dec_fc2_b"] = linear(ks[8], ks[9], HIDDEN, 7 * 7 * 32)
    p["dec_deconv1_w"] = deconv_w(ks[10], 32, 16, 4, 4)
    p["dec_deconv2_w"] = deconv_w(ks[11], 16, 1, 4, 4)
    return p


def preprocess_params(p):
    """One-time (outside jit) weight re-layout: band (Toeplitz) matrices for
    the (de)convs, row-blocked/permuted FC weights, all matrices in bf16."""
    q = {}

    def conv_band(w, w_in):
        # w: torch Conv2d weight (OC, IC, 4, 4), stride 2, padding 1.
        w = np.asarray(w, np.float32)
        oc, ic = w.shape[0], w.shape[1]
        w_out = w_in // 2
        t = np.zeros((4, w_in * ic, w_out * oc), np.float32)
        for kh in range(4):
            for ow in range(w_out):
                for kw in range(4):
                    iw = 2 * ow + kw - 1          # padding=1 column relation
                    if 0 <= iw < w_in:
                        t[kh, iw * ic:(iw + 1) * ic,
                          ow * oc:(ow + 1) * oc] = w[:, :, kh, kw].T
        return jnp.asarray(t, jnp.bfloat16)

    def deconv_band(w, w_in):
        # w: torch ConvTranspose2d weight (IC, OC, 4, 4), stride 2, padding 1.
        # Slot order = kernel rows (3, 1, 2, 0): even-phase taps then odd-phase.
        w = np.asarray(w, np.float32)
        ic, oc = w.shape[0], w.shape[1]
        w_out = 2 * w_in
        d = np.zeros((4, w_in * ic, w_out * oc), np.float32)
        for slot, kh in enumerate((3, 1, 2, 0)):
            for iw in range(w_in):
                for kw in range(4):
                    ow = 2 * iw + kw - 1          # oh/ow = 2*i + k - 1
                    if 0 <= ow < w_out:
                        d[slot, iw * ic:(iw + 1) * ic,
                          ow * oc:(ow + 1) * oc] = w[:, :, kh, kw]
        return jnp.asarray(d, jnp.bfloat16)

    q["conv1_t"] = conv_band(p["enc_conv1_w"], 28)        # (4, 28, 224)
    q["conv2_t"] = conv_band(p["enc_conv2_w"], 14)        # (4, 224, 224)
    q["deconv1_t"] = deconv_band(p["dec_deconv1_w"], 7)   # (4, 224, 224)
    q["deconv2_t"] = deconv_band(p["dec_deconv2_w"], 14)  # (4, 224, 28)

    # enc_fc1: torch flatten order is (c, h, w); re-block per image row h with
    # lane order (w, c) to match the conv output layout.
    w1 = np.asarray(p["enc_fc1_w"], np.float32).reshape(HIDDEN, 32, 7, 7)
    w1 = w1.transpose(2, 3, 1, 0).reshape(7, 7 * 32, HIDDEN)    # (h, (w,c), j)
    q["fc1_w"] = jnp.asarray(w1, jnp.bfloat16)
    q["fc1_b"] = jnp.asarray(p["enc_fc1_b"], jnp.float32).reshape(1, HIDDEN)

    w2 = np.asarray(p["enc_fc2_w"], np.float32)                 # (2*LAT, HID)
    q["fc2_w_mu"] = jnp.asarray(w2[:LATENT].T, jnp.bfloat16)    # (HID, LAT)
    q["fc2_w_ls"] = jnp.asarray(w2[LATENT:].T, jnp.bfloat16)
    b2 = np.asarray(p["enc_fc2_b"], np.float32)
    q["fc2_b_mu"] = jnp.asarray(b2[:LATENT].reshape(1, LATENT), jnp.float32)
    q["fc2_b_ls"] = jnp.asarray(b2[LATENT:].reshape(1, LATENT), jnp.float32)

    q["fc3_w"] = jnp.asarray(np.asarray(p["dec_fc1_w"], np.float32).T,
                             jnp.bfloat16)                      # (LAT, HID)
    q["fc3_b"] = jnp.asarray(p["dec_fc1_b"], jnp.float32).reshape(1, HIDDEN)

    # dec_fc2: row-blocked (h) with output lane order (w, c).
    w4 = np.asarray(p["dec_fc2_w"], np.float32).reshape(32, 7, 7, HIDDEN)
    w4 = w4.transpose(1, 2, 0, 3).reshape(7, 7 * 32, HIDDEN)    # (h, (w,c), i)
    q["fc4_w"] = jnp.asarray(w4.transpose(0, 2, 1), jnp.bfloat16)  # (h, i, (w,c))
    b4 = np.asarray(p["dec_fc2_b"], np.float32).reshape(32, 7, 7)
    q["fc4_b"] = jnp.asarray(b4.transpose(1, 2, 0).reshape(7, 1, 7 * 32),
                             jnp.float32)
    return q


# -------------------------------- forward ---------------------------------- #

def vae_forward(q, x, eps, bt=8):
    """x: (B, 1, 28, 28) NCHW, eps: (B, LATENT) ~ N(0,1).

    Returns (x_prime (B,1,28,28), mu (B,LATENT), logsigma (B,LATENT)).
    `bt` is the per-grid-step batch tile (multiple of 8).
    """
    assert bt % 8 == 0
    B = x.shape[0]
    b_pad = _round_up(B, bt)

    # API-boundary layout change only: (B,1,28,28) -> (h, b, w) + batch pad.
    xw = x.reshape(B, 28, 28).transpose(1, 0, 2)          # (28, B, 28)
    if b_pad != B:
        xw = jnp.pad(xw, ((0, 0), (0, b_pad - B), (0, 0)))
        eps = jnp.pad(eps, ((0, b_pad - B), (0, 0)))

    def resident(a):                                      # VMEM-resident weight
        nd = a.ndim
        return pl.BlockSpec(a.shape, lambda b, nd=nd: (0,) * nd)

    weight_names = ["conv1_t", "conv2_t", "fc1_w", "fc1_b",
                    "fc2_w_mu", "fc2_b_mu", "fc2_w_ls", "fc2_b_ls",
                    "fc3_w", "fc3_b", "fc4_w", "fc4_b",
                    "deconv1_t", "deconv2_t"]
    weights = [q[n] for n in weight_names]

    out, mu, ls = pl.pallas_call(
        functools.partial(_vae_kernel, bt=bt),
        out_shape=(
            jax.ShapeDtypeStruct((28, b_pad, 28), jnp.float32),
            jax.ShapeDtypeStruct((b_pad, LATENT), jnp.float32),
            jax.ShapeDtypeStruct((b_pad, LATENT), jnp.float32),
        ),
        grid=(b_pad // bt,),
        in_specs=[
            pl.BlockSpec((28, bt, 28), lambda b: (0, b, 0)),   # x tile
            pl.BlockSpec((bt, LATENT), lambda b: (b, 0)),      # eps tile
        ] + [resident(w) for w in weights],
        out_specs=(
            pl.BlockSpec((28, bt, 28), lambda b: (0, b, 0)),
            pl.BlockSpec((bt, LATENT), lambda b: (b, 0)),
            pl.BlockSpec((bt, LATENT), lambda b: (b, 0)),
        ),
        compiler_params=pltpu.CompilerParams(
            dimension_semantics=("parallel",)),
    )(xw, eps, *weights)

    x_prime = out.transpose(1, 0, 2)[:B].reshape(B, 1, 28, 28)
    return x_prime, mu[:B], ls[:B]


# -------------------------- pure-JAX f32 reference -------------------------- #

def vae_reference(p, x, eps):
    """Straightforward f32 reference matching the PyTorch module semantics."""
    def conv(a, w):      # torch Conv2d, stride 2, padding 1, bias=False
        return jax.lax.conv_general_dilated(
            a, w, (2, 2), [(1, 1), (1, 1)],
            dimension_numbers=("NCHW", "OIHW", "NCHW"))

    def deconv(a, w):    # torch conv_transpose2d, stride 2, padding 1, bias=False
        wt = jnp.transpose(jnp.flip(w, (2, 3)), (1, 0, 2, 3))
        return jax.lax.conv_general_dilated(
            a, wt, (1, 1), [(2, 2), (2, 2)], lhs_dilation=(2, 2),
            dimension_numbers=("NCHW", "OIHW", "NCHW"))

    B = x.shape[0]
    h = jax.nn.relu(conv(x, p["enc_conv1_w"]))
    h = jax.nn.relu(conv(h, p["enc_conv2_w"]))
    h = h.reshape(B, -1)                                        # (c, h, w) flatten
    h = jax.nn.relu(h @ p["enc_fc1_w"].T + p["enc_fc1_b"])
    stats = h @ p["enc_fc2_w"].T + p["enc_fc2_b"]
    mu, ls = stats[:, :LATENT], stats[:, LATENT:]
    z = mu + jnp.exp(ls) * eps
    d = jax.nn.relu(z @ p["dec_fc1_w"].T + p["dec_fc1_b"])
    d = jax.nn.relu(d @ p["dec_fc2_w"].T + p["dec_fc2_b"])
    d = d.reshape(B, 32, 7, 7)
    d = jax.nn.relu(deconv(d, p["dec_deconv1_w"]))
    x_prime = deconv(d, p["dec_deconv2_w"])
    return x_prime, mu, ls


# ---------------------------------- main ------------------------------------ #

if __name__ == "__main__":
    key = jax.random.PRNGKey(0)
    k_param, k_x, k_eps = jax.random.split(key, 3)

    params = init_params(k_param)
    q = preprocess_params(params)       # one-time weight re-layout, outside jit

    B = 2
    x = jax.random.normal(k_x, (B, 1, 28, 28), jnp.float32)
    # TODO(synk): torch.randn_like drawn in-module is replaced by a deterministic
    # host-side eps fed into the fused reparameterization step.
    eps = jax.random.normal(k_eps, (B, LATENT), jnp.float32)

    fwd = jax.jit(vae_forward)
    x_prime, mu, logsigma = fwd(q, x, eps)
    jax.block_until_ready((x_prime, mu, logsigma))

    assert x_prime.shape == (B, 1, 28, 28)
    assert mu.shape == (B, LATENT)
    assert logsigma.shape == (B, LATENT)

    # Correctness check vs. a pure-JAX f32 reference using the same
    # bf16-rounded weight values the kernel consumes.
    p_ref = {k: (v.astype(jnp.bfloat16).astype(jnp.float32)
                 if k.endswith("_w") else v) for k, v in params.items()}
    xr, mur, lsr = jax.jit(vae_reference)(p_ref, x, eps)
    jax.block_until_ready((xr, mur, lsr))
    np.testing.assert_allclose(np.asarray(mu), np.asarray(mur),
                               rtol=5e-2, atol=5e-3)
    np.testing.assert_allclose(np.asarray(logsigma), np.asarray(lsr),
                               rtol=5e-2, atol=5e-3)
    np.testing.assert_allclose(np.asarray(x_prime), np.asarray(xr),
                               rtol=5e-2, atol=5e-3)

    print("KERNEL_OK")
</pallas_src>

<mosaic_0001>
module attributes {stable_mosaic.version = 11 : i64} {
  func.func @_vae_kernel(%arg0: i32, %arg1: memref<28x8x28xf32, #tpu.memory_space<vmem>>, %arg2: memref<8x8xf32, #tpu.memory_space<vmem>>, %arg3: memref<4x28x224xbf16, #tpu.memory_space<vmem>>, %arg4: memref<4x224x224xbf16, #tpu.memory_space<vmem>>, %arg5: memref<7x224x32xbf16, #tpu.memory_space<vmem>>, %arg6: memref<1x32xf32, #tpu.memory_space<vmem>>, %arg7: memref<32x8xbf16, #tpu.memory_space<vmem>>, %arg8: memref<1x8xf32, #tpu.memory_space<vmem>>, %arg9: memref<32x8xbf16, #tpu.memory_space<vmem>>, %arg10: memref<1x8xf32, #tpu.memory_space<vmem>>, %arg11: memref<8x32xbf16, #tpu.memory_space<vmem>>, %arg12: memref<1x32xf32, #tpu.memory_space<vmem>>, %arg13: memref<7x32x224xbf16, #tpu.memory_space<vmem>>, %arg14: memref<7x1x224xf32, #tpu.memory_space<vmem>>, %arg15: memref<4x224x224xbf16, #tpu.memory_space<vmem>>, %arg16: memref<4x224x28xbf16, #tpu.memory_space<vmem>>, %arg17: memref<28x8x28xf32, #tpu.memory_space<vmem>>, %arg18: memref<8x8xf32, #tpu.memory_space<vmem>>, %arg19: memref<8x8xf32, #tpu.memory_space<vmem>>) attributes {dimension_semantics = [#tpu.dimension_semantics<parallel>], iteration_bounds = array<i64: 1>, scalar_prefetch = 0 : i64, scratch_operands = 0 : i64, tpu.core_type = #tpu.core_type<tc>, window_params = [{transform_indices = @transform_0, window_bounds = array<i64: 28, 8, 28>}, {transform_indices = @transform_1, window_bounds = array<i64: 8, 8>}, {pipeline_mode = #tpu.pipeline_mode<synchronous>, transform_indices = @transform_2, window_bounds = array<i64: 4, 28, 224>}, {pipeline_mode = #tpu.pipeline_mode<synchronous>, transform_indices = @transform_3, window_bounds = array<i64: 4, 224, 224>}, {pipeline_mode = #tpu.pipeline_mode<synchronous>, transform_indices = @transform_4, window_bounds = array<i64: 7, 224, 32>}, {pipeline_mode = #tpu.pipeline_mode<synchronous>, transform_indices = @transform_5, window_bounds = array<i64: 1, 32>}, {pipeline_mode = #tpu.pipeline_mode<synchronous>, transform_indices = @transform_6, window_bounds = array<i64: 32, 8>}, {pipeline_mode = #tpu.pipeline_mode<synchronous>, transform_indices = @transform_7, window_bounds = array<i64: 1, 8>}, {pipeline_mode = #tpu.pipeline_mode<synchronous>, transform_indices = @transform_8, window_bounds = array<i64: 32, 8>}, {pipeline_mode = #tpu.pipeline_mode<synchronous>, transform_indices = @transform_9, window_bounds = array<i64: 1, 8>}, {pipeline_mode = #tpu.pipeline_mode<synchronous>, transform_indices = @transform_10, window_bounds = array<i64: 8, 32>}, {pipeline_mode = #tpu.pipeline_mode<synchronous>, transform_indices = @transform_11, window_bounds = array<i64: 1, 32>}, {pipeline_mode = #tpu.pipeline_mode<synchronous>, transform_indices = @transform_12, window_bounds = array<i64: 7, 32, 224>}, {pipeline_mode = #tpu.pipeline_mode<synchronous>, transform_indices = @transform_13, window_bounds = array<i64: 7, 1, 224>}, {pipeline_mode = #tpu.pipeline_mode<synchronous>, transform_indices = @transform_14, window_bounds = array<i64: 4, 224, 224>}, {pipeline_mode = #tpu.pipeline_mode<synchronous>, transform_indices = @transform_15, window_bounds = array<i64: 4, 224, 28>}, {transform_indices = @transform_16, window_bounds = array<i64: 28, 8, 28>}, {transform_indices = @transform_17, window_bounds = array<i64: 8, 8>}, {transform_indices = @transform_18, window_bounds = array<i64: 8, 8>}]} {
    %c0 = arith.constant 0 : index
    %c0_0 = arith.constant 0 : index
    %c0_1 = arith.constant 0 : index
    %0 = vector.load %arg1[%c0, %c0_0, %c0_1] : memref<28x8x28xf32, #tpu.memory_space<vmem>>, vector<28x8x28xf32>
    %cst = arith.constant 0.000000e+00 : f32
    %1 = vector.broadcast %cst : f32 to vector<1x8x28xf32>
    %2 = tpu.concatenate %1, %0, %1 in 0 : vector<1x8x28xf32>, vector<28x8x28xf32>, vector<1x8x28xf32> -> vector<30x8x28xf32>
    %3 = vector.shape_cast %2 : vector<30x8x28xf32> to vector<15x2x8x28xf32>
    %cst_2 = arith.constant 0.000000e+00 : f32
    %4 = vector.broadcast %cst_2 : f32 to vector<112x224xf32>
    %5 = vector.extract_strided_slice %3 {offsets = [0, 0, 0, 0], sizes = [14, 1, 8, 28], strides = [1, 1, 1, 1]} : vector<15x2x8x28xf32> to vector<14x1x8x28xf32>
    %6 = vector.shape_cast %5 : vector<14x1x8x28xf32> to vector<14x8x28xf32>
    %7 = vector.shape_cast %6 : vector<14x8x28xf32> to vector<112x28xf32>
    %c0_3 = arith.constant 0 : index
    %c0_4 = arith.constant 0 : index
    %c0_5 = arith.constant 0 : index
    %8 = vector.load %arg3[%c0_3, %c0_4, %c0_5] : memref<4x28x224xbf16, #tpu.memory_space<vmem>>, vector<1x28x224xbf16>
    %9 = vector.shape_cast %8 : vector<1x28x224xbf16> to vector<28x224xbf16>
    %10 = arith.extf %9 : vector<28x224xbf16> to vector<28x224xf32>
    %cst_6 = arith.constant dense<0.000000e+00> : vector<112x224xf32>
    %11 = tpu.matmul %7, %10, %cst_6 {dimension_numbers = #tpu.dot_dimension_numbers<[1], [0], [0], [1], [0, 0, 1, 1], [], []>} : vector<112x28xf32>, vector<28x224xf32>, vector<112x224xf32> -> vector<112x224xf32>
    %12 = arith.addf %4, %11 : vector<112x224xf32>
    %13 = vector.extract_strided_slice %3 {offsets = [0, 1, 0, 0], sizes = [14, 1, 8, 28], strides = [1, 1, 1, 1]} : vector<15x2x8x28xf32> to vector<14x1x8x28xf32>
    %14 = vector.shape_cast %13 : vector<14x1x8x28xf32> to vector<14x8x28xf32>
    %15 = vector.shape_cast %14 : vector<14x8x28xf32> to vector<112x28xf32>
    %c1 = arith.constant 1 : index
    %c0_7 = arith.constant 0 : index
    %c0_8 = arith.constant 0 : index
    %16 = vector.load %arg3[%c1, %c0_7, %c0_8] : memref<4x28x224xbf16, #tpu.memory_space<vmem>>, vector<1x28x224xbf16>
    %17 = vector.shape_cast %16 : vector<1x28x224xbf16> to vector<28x224xbf16>
    %18 = arith.extf %17 : vector<28x224xbf16> to vector<28x224xf32>
    %cst_9 = arith.constant dense<0.000000e+00> : vector<112x224xf32>
    %19 = tpu.matmul %15, %18, %cst_9 {dimension_numbers = #tpu.dot_dimension_numbers<[1], [0], [0], [1], [0, 0, 1, 1], [], []>} : vector<112x28xf32>, vector<28x224xf32>, vector<112x224xf32> -> vector<112x224xf32>
    %20 = arith.addf %12, %19 : vector<112x224xf32>
    %21 = vector.extract_strided_slice %3 {offsets = [1, 0, 0, 0], sizes = [14, 1, 8, 28], strides = [1, 1, 1, 1]} : vector<15x2x8x28xf32> to vector<14x1x8x28xf32>
    %22 = vector.shape_cast %21 : vector<14x1x8x28xf32> to vector<14x8x28xf32>
    %23 = vector.shape_cast %22 : vector<14x8x28xf32> to vector<112x28xf32>
    %c2 = arith.constant 2 : index
    %c0_10 = arith.constant 0 : index
    %c0_11 = arith.constant 0 : index
    %24 = vector.load %arg3[%c2, %c0_10, %c0_11] : memref<4x28x224xbf16, #tpu.memory_space<vmem>>, vector<1x28x224xbf16>
    %25 = vector.shape_cast %24 : vector<1x28x224xbf16> to vector<28x224xbf16>
    %26 = arith.extf %25 : vector<28x224xbf16> to vector<28x224xf32>
    %cst_12 = arith.constant dense<0.000000e+00> : vector<112x224xf32>
    %27 = tpu.matmul %23, %26, %cst_12 {dimension_numbers = #tpu.dot_dimension_numbers<[1], [0], [0], [1], [0, 0, 1, 1], [], []>} : vector<112x28xf32>, vector<28x224xf32>, vector<112x224xf32> -> vector<112x224xf32>
    %28 = arith.addf %20, %27 : vector<112x224xf32>
    %29 = vector.extract_strided_slice %3 {offsets = [1, 1, 0, 0], sizes = [14, 1, 8, 28], strides = [1, 1, 1, 1]} : vector<15x2x8x28xf32> to vector<14x1x8x28xf32>
    %30 = vector.shape_cast %29 : vector<14x1x8x28xf32> to vector<14x8x28xf32>
    %31 = vector.shape_cast %30 : vector<14x8x28xf32> to vector<112x28xf32>
    %c3 = arith.constant 3 : index
    %c0_13 = arith.constant 0 : index
    %c0_14 = arith.constant 0 : index
    %32 = vector.load %arg3[%c3, %c0_13, %c0_14] : memref<4x28x224xbf16, #tpu.memory_space<vmem>>, vector<1x28x224xbf16>
    %33 = vector.shape_cast %32 : vector<1x28x224xbf16> to vector<28x224xbf16>
    %34 = arith.extf %33 : vector<28x224xbf16> to vector<28x224xf32>
    %cst_15 = arith.constant dense<0.000000e+00> : vector<112x224xf32>
    %35 = tpu.matmul %31, %34, %cst_15 {dimension_numbers = #tpu.dot_dimension_numbers<[1], [0], [0], [1], [0, 0, 1, 1], [], []>} : vector<112x28xf32>, vector<28x224xf32>, vector<112x224xf32> -> vector<112x224xf32>
    %36 = arith.addf %28, %35 : vector<112x224xf32>
    %cst_16 = arith.constant 0.000000e+00 : f32
    %37 = vector.broadcast %cst_16 : f32 to vector<112x224xf32>
    %38 = arith.maximumf %36, %37 : vector<112x224xf32>
    %39 = vector.shape_cast %38 : vector<112x224xf32> to vector<14x8x224xf32>
    %cst_17 = arith.constant 0.000000e+00 : f32
    %40 = vector.broadcast %cst_17 : f32 to vector<1x8x224xf32>
    %41 = tpu.concatenate %40, %39, %40 in 0 : vector<1x8x224xf32>, vector<14x8x224xf32>, vector<1x8x224xf32> -> vector<16x8x224xf32>
    %42 = vector.shape_cast %41 : vector<16x8x224xf32> to vector<8x2x8x224xf32>
    %cst_18 = arith.constant 0.000000e+00 : f32
    %43 = vector.broadcast %cst_18 : f32 to vector<56x224xf32>
    %44 = vector.extract_strided_slice %42 {offsets = [0, 0, 0, 0], sizes = [7, 1, 8, 224], strides = [1, 1, 1, 1]} : vector<8x2x8x224xf32> to vector<7x1x8x224xf32>
    %45 = vector.shape_cast %44 : vector<7x1x8x224xf32> to vector<7x8x224xf32>
    %46 = vector.shape_cast %45 : vector<7x8x224xf32> to vector<56x224xf32>
    %c0_19 = arith.constant 0 : index
    %c0_20 = arith.constant 0 : index
    %c0_21 = arith.constant 0 : index
    %47 = vector.load %arg4[%c0_19, %c0_20, %c0_21] : memref<4x224x224xbf16, #tpu.memory_space<vmem>>, vector<1x224x224xbf16>
    %48 = vector.shape_cast %47 : vector<1x224x224xbf16> to vector<224x224xbf16>
    %49 = arith.extf %48 : vector<224x224xbf16> to vector<224x224xf32>
    %cst_22 = arith.constant dense<0.000000e+00> : vector<56x224xf32>
    %50 = tpu.matmul %46, %49, %cst_22 {dimension_numbers = #tpu.dot_dimension_numbers<[1], [0], [0], [1], [0, 0, 1, 1], [], []>} : vector<56x224xf32>, vector<224x224xf32>, vector<56x224xf32> -> vector<56x224xf32>
    %51 = arith.addf %43, %50 : vector<56x224xf32>
    %52 = vector.extract_strided_slice %42 {offsets = [0, 1, 0, 0], sizes = [7, 1, 8, 224], strides = [1, 1, 1, 1]} : vector<8x2x8x224xf32> to vector<7x1x8x224xf32>
    %53 = vector.shape_cast %52 : vector<7x1x8x224xf32> to vector<7x8x224xf32>
    %54 = vector.shape_cast %53 : vector<7x8x224xf32> to vector<56x224xf32>
    %c1_23 = arith.constant 1 : index
    %c0_24 = arith.constant 0 : index
    %c0_25 = arith.constant 0 : index
    %55 = vector.load %arg4[%c1_23, %c0_24, %c0_25] : memref<4x224x224xbf16, #tpu.memory_space<vmem>>, vector<1x224x224xbf16>
    %56 = vector.shape_cast %55 : vector<1x224x224xbf16> to vector<224x224xbf16>
    %57 = arith.extf %56 : vector<224x224xbf16> to vector<224x224xf32>
    %cst_26 = arith.constant dense<0.000000e+00> : vector<56x224xf32>
    %58 = tpu.matmul %54, %57, %cst_26 {dimension_numbers = #tpu.dot_dimension_numbers<[1], [0], [0], [1], [0, 0, 1, 1], [], []>} : vector<56x224xf32>, vector<224x224xf32>, vector<56x224xf32> -> vector<56x224xf32>
    %59 = arith.addf %51, %58 : vector<56x224xf32>
    %60 = vector.extract_strided_slice %42 {offsets = [1, 0, 0, 0], sizes = [7, 1, 8, 224], strides = [1, 1, 1, 1]} : vector<8x2x8x224xf32> to vector<7x1x8x224xf32>
    %61 = vector.shape_cast %60 : vector<7x1x8x224xf32> to vector<7x8x224xf32>
    %62 = vector.shape_cast %61 : vector<7x8x224xf32> to vector<56x224xf32>
    %c2_27 = arith.constant 2 : index
    %c0_28 = arith.constant 0 : index
    %c0_29 = arith.constant 0 : index
    %63 = vector.load %arg4[%c2_27, %c0_28, %c0_29] : memref<4x224x224xbf16, #tpu.memory_space<vmem>>, vector<1x224x224xbf16>
    %64 = vector.shape_cast %63 : vector<1x224x224xbf16> to vector<224x224xbf16>
    %65 = arith.extf %64 : vector<224x224xbf16> to vector<224x224xf32>
    %cst_30 = arith.constant dense<0.000000e+00> : vector<56x224xf32>
    %66 = tpu.matmul %62, %65, %cst_30 {dimension_numbers = #tpu.dot_dimension_numbers<[1], [0], [0], [1], [0, 0, 1, 1], [], []>} : vector<56x224xf32>, vector<224x224xf32>, vector<56x224xf32> -> vector<56x224xf32>
    %67 = arith.addf %59, %66 : vector<56x224xf32>
    %68 = vector.extract_strided_slice %42 {offsets = [1, 1, 0, 0], sizes = [7, 1, 8, 224], strides = [1, 1, 1, 1]} : vector<8x2x8x224xf32> to vector<7x1x8x224xf32>
    %69 = vector.shape_cast %68 : vector<7x1x8x224xf32> to vector<7x8x224xf32>
    %70 = vector.shape_cast %69 : vector<7x8x224xf32> to vector<56x224xf32>
    %c3_31 = arith.constant 3 : index
    %c0_32 = arith.constant 0 : index
    %c0_33 = arith.constant 0 : index
    %71 = vector.load %arg4[%c3_31, %c0_32, %c0_33] : memref<4x224x224xbf16, #tpu.memory_space<vmem>>, vector<1x224x224xbf16>
    %72 = vector.shape_cast %71 : vector<1x224x224xbf16> to vector<224x224xbf16>
    %73 = arith.extf %72 : vector<224x224xbf16> to vector<224x224xf32>
    %cst_34 = arith.constant dense<0.000000e+00> : vector<56x224xf32>
    %74 = tpu.matmul %70, %73, %cst_34 {dimension_numbers = #tpu.dot_dimension_numbers<[1], [0], [0], [1], [0, 0, 1, 1], [], []>} : vector<56x224xf32>, vector<224x224xf32>, vector<56x224xf32> -> vector<56x224xf32>
    %75 = arith.addf %67, %74 : vector<56x224xf32>
    %cst_35 = arith.constant 0.000000e+00 : f32
    %76 = vector.broadcast %cst_35 : f32 to vector<56x224xf32>
    %77 = arith.maximumf %75, %76 : vector<56x224xf32>
    %78 = vector.shape_cast %77 : vector<56x224xf32> to vector<7x8x224xf32>
    %cst_36 = arith.constant 0.000000e+00 : f32
    %79 = vector.broadcast %cst_36 : f32 to vector<8x32xf32>
    %80 = vector.extract_strided_slice %78 {offsets = [0, 0, 0], sizes = [1, 8, 224], strides = [1, 1, 1]} : vector<7x8x224xf32> to vector<1x8x224xf32>
    %81 = vector.shape_cast %80 : vector<1x8x224xf32> to vector<8x224xf32>
    %c0_37 = arith.constant 0 : index
    %c0_38 = arith.constant 0 : index
    %c0_39 = arith.constant 0 : index
    %82 = vector.load %arg5[%c0_37, %c0_38, %c0_39] : memref<7x224x32xbf16, #tpu.memory_space<vmem>>, vector<1x224x32xbf16>
    %83 = vector.shape_cast %82 : vector<1x224x32xbf16> to vector<224x32xbf16>
    %84 = arith.extf %83 : vector<224x32xbf16> to vector<224x32xf32>
    %cst_40 = arith.constant dense<0.000000e+00> : vector<8x32xf32>
    %85 = tpu.matmul %81, %84, %cst_40 {dimension_numbers = #tpu.dot_dimension_numbers<[1], [0], [0], [1], [0, 0, 1, 1], [], []>} : vector<8x224xf32>, vector<224x32xf32>, vector<8x32xf32> -> vector<8x32xf32>
    %86 = arith.addf %79, %85 : vector<8x32xf32>
    %87 = vector.extract_strided_slice %78 {offsets = [1, 0, 0], sizes = [1, 8, 224], strides = [1, 1, 1]} : vector<7x8x224xf32> to vector<1x8x224xf32>
    %88 = vector.shape_cast %87 : vector<1x8x224xf32> to vector<8x224xf32>
    %c1_41 = arith.constant 1 : index
    %c0_42 = arith.constant 0 : index
    %c0_43 = arith.constant 0 : index
    %89 = vector.load %arg5[%c1_41, %c0_42, %c0_43] : memref<7x224x32xbf16, #tpu.memory_space<vmem>>, vector<1x224x32xbf16>
    %90 = vector.shape_cast %89 : vector<1x224x32xbf16> to vector<224x32xbf16>
    %91 = arith.extf %90 : vector<224x32xbf16> to vector<224x32xf32>
    %cst_44 = arith.constant dense<0.000000e+00> : vector<8x32xf32>
    %92 = tpu.matmul %88, %91, %cst_44 {dimension_numbers = #tpu.dot_dimension_numbers<[1], [0], [0], [1], [0, 0, 1, 1], [], []>} : vector<8x224xf32>, vector<224x32xf32>, vector<8x32xf32> -> vector<8x32xf32>
    %93 = arith.addf %86, %92 : vector<8x32xf32>
    %94 = vector.extract_strided_slice %78 {offsets = [2, 0, 0], sizes = [1, 8, 224], strides = [1, 1, 1]} : vector<7x8x224xf32> to vector<1x8x224xf32>
    %95 = vector.shape_cast %94 : vector<1x8x224xf32> to vector<8x224xf32>
    %c2_45 = arith.constant 2 : index
    %c0_46 = arith.constant 0 : index
    %c0_47 = arith.constant 0 : index
    %96 = vector.load %arg5[%c2_45, %c0_46, %c0_47] : memref<7x224x32xbf16, #tpu.memory_space<vmem>>, vector<1x224x32xbf16>
    %97 = vector.shape_cast %96 : vector<1x224x32xbf16> to vector<224x32xbf16>
    %98 = arith.extf %97 : vector<224x32xbf16> to vector<224x32xf32>
    %cst_48 = arith.constant dense<0.000000e+00> : vector<8x32xf32>
    %99 = tpu.matmul %95, %98, %cst_48 {dimension_numbers = #tpu.dot_dimension_numbers<[1], [0], [0], [1], [0, 0, 1, 1], [], []>} : vector<8x224xf32>, vector<224x32xf32>, vector<8x32xf32> -> vector<8x32xf32>
    %100 = arith.addf %93, %99 : vector<8x32xf32>
    %101 = vector.extract_strided_slice %78 {offsets = [3, 0, 0], sizes = [1, 8, 224], strides = [1, 1, 1]} : vector<7x8x224xf32> to vector<1x8x224xf32>
    %102 = vector.shape_cast %101 : vector<1x8x224xf32> to vector<8x224xf32>
    %c3_49 = arith.constant 3 : index
    %c0_50 = arith.constant 0 : index
    %c0_51 = arith.constant 0 : index
    %103 = vector.load %arg5[%c3_49, %c0_50, %c0_51] : memref<7x224x32xbf16, #tpu.memory_space<vmem>>, vector<1x224x32xbf16>
    %104 = vector.shape_cast %103 : vector<1x224x32xbf16> to vector<224x32xbf16>
    %105 = arith.extf %104 : vector<224x32xbf16> to vector<224x32xf32>
    %cst_52 = arith.constant dense<0.000000e+00> : vector<8x32xf32>
    %106 = tpu.matmul %102, %105, %cst_52 {dimension_numbers = #tpu.dot_dimension_numbers<[1], [0], [0], [1], [0, 0, 1, 1], [], []>} : vector<8x224xf32>, vector<224x32xf32>, vector<8x32xf32> -> vector<8x32xf32>
    %107 = arith.addf %100, %106 : vector<8x32xf32>
    %108 = vector.extract_strided_slice %78 {offsets = [4, 0, 0], sizes = [1, 8, 224], strides = [1, 1, 1]} : vector<7x8x224xf32> to vector<1x8x224xf32>
    %109 = vector.shape_cast %108 : vector<1x8x224xf32> to vector<8x224xf32>
    %c4 = arith.constant 4 : index
    %c0_53 = arith.constant 0 : index
    %c0_54 = arith.constant 0 : index
    %110 = vector.load %arg5[%c4, %c0_53, %c0_54] : memref<7x224x32xbf16, #tpu.memory_space<vmem>>, vector<1x224x32xbf16>
    %111 = vector.shape_cast %110 : vector<1x224x32xbf16> to vector<224x32xbf16>
    %112 = arith.extf %111 : vector<224x32xbf16> to vector<224x32xf32>
    %cst_55 = arith.constant dense<0.000000e+00> : vector<8x32xf32>
    %113 = tpu.matmul %109, %112, %cst_55 {dimension_numbers = #tpu.dot_dimension_numbers<[1], [0], [0], [1], [0, 0, 1, 1], [], []>} : vector<8x224xf32>, vector<224x32xf32>, vector<8x32xf32> -> vector<8x32xf32>
    %114 = arith.addf %107, %113 : vector<8x32xf32>
    %115 = vector.extract_strided_slice %78 {offsets = [5, 0, 0], sizes = [1, 8, 224], strides = [1, 1, 1]} : vector<7x8x224xf32> to vector<1x8x224xf32>
    %116 = vector.shape_cast %115 : vector<1x8x224xf32> to vector<8x224xf32>
    %c5 = arith.constant 5 : index
    %c0_56 = arith.constant 0 : index
    %c0_57 = arith.constant 0 : index
    %117 = vector.load %arg5[%c5, %c0_56, %c0_57] : memref<7x224x32xbf16, #tpu.memory_space<vmem>>, vector<1x224x32xbf16>
    %118 = vector.shape_cast %117 : vector<1x224x32xbf16> to vector<224x32xbf16>
    %119 = arith.extf %118 : vector<224x32xbf16> to vector<224x32xf32>
    %cst_58 = arith.constant dense<0.000000e+00> : vector<8x32xf32>
    %120 = tpu.matmul %116, %119, %cst_58 {dimension_numbers = #tpu.dot_dimension_numbers<[1], [0], [0], [1], [0, 0, 1, 1], [], []>} : vector<8x224xf32>, vector<224x32xf32>, vector<8x32xf32> -> vector<8x32xf32>
    %121 = arith.addf %114, %120 : vector<8x32xf32>
    %122 = vector.extract_strided_slice %78 {offsets = [6, 0, 0], sizes = [1, 8, 224], strides = [1, 1, 1]} : vector<7x8x224xf32> to vector<1x8x224xf32>
    %123 = vector.shape_cast %122 : vector<1x8x224xf32> to vector<8x224xf32>
    %c6 = arith.constant 6 : index
    %c0_59 = arith.constant 0 : index
    %c0_60 = arith.constant 0 : index
    %124 = vector.load %arg5[%c6, %c0_59, %c0_60] : memref<7x224x32xbf16, #tpu.memory_space<vmem>>, vector<1x224x32xbf16>
    %125 = vector.shape_cast %124 : vector<1x224x32xbf16> to vector<224x32xbf16>
    %126 = arith.extf %125 : vector<224x32xbf16> to vector<224x32xf32>
    %cst_61 = arith.constant dense<0.000000e+00> : vector<8x32xf32>
    %127 = tpu.matmul %123, %126, %cst_61 {dimension_numbers = #tpu.dot_dimension_numbers<[1], [0], [0], [1], [0, 0, 1, 1], [], []>} : vector<8x224xf32>, vector<224x32xf32>, vector<8x32xf32> -> vector<8x32xf32>
    %128 = arith.addf %121, %127 : vector<8x32xf32>
    %c0_62 = arith.constant 0 : index
    %c0_63 = arith.constant 0 : index
    %129 = vector.load %arg6[%c0_62, %c0_63] : memref<1x32xf32, #tpu.memory_space<vmem>>, vector<1x32xf32>
    %130 = vector.broadcast %129 : vector<1x32xf32> to vector<8x32xf32>
    %131 = arith.addf %128, %130 : vector<8x32xf32>
    %cst_64 = arith.constant 0.000000e+00 : f32
    %132 = vector.broadcast %cst_64 : f32 to vector<8x32xf32>
    %133 = arith.maximumf %131, %132 : vector<8x32xf32>
    %c0_65 = arith.constant 0 : index
    %c0_66 = arith.constant 0 : index
    %134 = vector.load %arg7[%c0_65, %c0_66] : memref<32x8xbf16, #tpu.memory_space<vmem>>, vector<32x8xbf16>
    %135 = arith.extf %134 : vector<32x8xbf16> to vector<32x8xf32>
    %cst_67 = arith.constant dense<0.000000e+00> : vector<8x8xf32>
    %136 = tpu.matmul %133, %135, %cst_67 {dimension_numbers = #tpu.dot_dimension_numbers<[1], [0], [0], [1], [0, 0, 1, 1], [], []>} : vector<8x32xf32>, vector<32x8xf32>, vector<8x8xf32> -> vector<8x8xf32>
    %c0_68 = arith.constant 0 : index
    %c0_69 = arith.constant 0 : index
    %137 = vector.load %arg8[%c0_68, %c0_69] : memref<1x8xf32, #tpu.memory_space<vmem>>, vector<1x8xf32>
    %138 = vector.broadcast %137 : vector<1x8xf32> to vector<8x8xf32>
    %139 = arith.addf %136, %138 : vector<8x8xf32>
    %c0_70 = arith.constant 0 : index
    %c0_71 = arith.constant 0 : index
    %140 = vector.load %arg9[%c0_70, %c0_71] : memref<32x8xbf16, #tpu.memory_space<vmem>>, vector<32x8xbf16>
    %141 = arith.extf %140 : vector<32x8xbf16> to vector<32x8xf32>
    %cst_72 = arith.constant dense<0.000000e+00> : vector<8x8xf32>
    %142 = tpu.matmul %133, %141, %cst_72 {dimension_numbers = #tpu.dot_dimension_numbers<[1], [0], [0], [1], [0, 0, 1, 1], [], []>} : vector<8x32xf32>, vector<32x8xf32>, vector<8x8xf32> -> vector<8x8xf32>
    %c0_73 = arith.constant 0 : index
    %c0_74 = arith.constant 0 : index
    %143 = vector.load %arg10[%c0_73, %c0_74] : memref<1x8xf32, #tpu.memory_space<vmem>>, vector<1x8xf32>
    %144 = vector.broadcast %143 : vector<1x8xf32> to vector<8x8xf32>
    %145 = arith.addf %142, %144 : vector<8x8xf32>
    %146 = math.exp %145 : vector<8x8xf32>
    %c0_75 = arith.constant 0 : index
    %c0_76 = arith.constant 0 : index
    %147 = vector.load %arg2[%c0_75, %c0_76] : memref<8x8xf32, #tpu.memory_space<vmem>>, vector<8x8xf32>
    %148 = arith.mulf %146, %147 : vector<8x8xf32>
    %149 = arith.addf %139, %148 : vector<8x8xf32>
    %c0_77 = arith.constant 0 : index
    %c0_78 = arith.constant 0 : index
    %150 = vector.load %arg11[%c0_77, %c0_78] : memref<8x32xbf16, #tpu.memory_space<vmem>>, vector<8x32xbf16>
    %151 = arith.extf %150 : vector<8x32xbf16> to vector<8x32xf32>
    %cst_79 = arith.constant dense<0.000000e+00> : vector<8x32xf32>
    %152 = tpu.matmul %149, %151, %cst_79 {dimension_numbers = #tpu.dot_dimension_numbers<[1], [0], [0], [1], [0, 0, 1, 1], [], []>} : vector<8x8xf32>, vector<8x32xf32>, vector<8x32xf32> -> vector<8x32xf32>
    %c0_80 = arith.constant 0 : index
    %c0_81 = arith.constant 0 : index
    %153 = vector.load %arg12[%c0_80, %c0_81] : memref<1x32xf32, #tpu.memory_space<vmem>>, vector<1x32xf32>
    %154 = vector.broadcast %153 : vector<1x32xf32> to vector<8x32xf32>
    %155 = arith.addf %152, %154 : vector<8x32xf32>
    %cst_82 = arith.constant 0.000000e+00 : f32
    %156 = vector.broadcast %cst_82 : f32 to vector<8x32xf32>
    %157 = arith.maximumf %155, %156 : vector<8x32xf32>
    %c0_83 = arith.constant 0 : index
    %c0_84 = arith.constant 0 : index
    %c0_85 = arith.constant 0 : index
    %158 = vector.load %arg13[%c0_83, %c0_84, %c0_85] : memref<7x32x224xbf16, #tpu.memory_space<vmem>>, vector<1x32x224xbf16>
    %159 = vector.shape_cast %158 : vector<1x32x224xbf16> to vector<32x224xbf16>
    %160 = arith.extf %159 : vector<32x224xbf16> to vector<32x224xf32>
    %cst_86 = arith.constant dense<0.000000e+00> : vector<8x224xf32>
    %161 = tpu.matmul %157, %160, %cst_86 {dimension_numbers = #tpu.dot_dimension_numbers<[1], [0], [0], [1], [0, 0, 1, 1], [], []>} : vector<8x32xf32>, vector<32x224xf32>, vector<8x224xf32> -> vector<8x224xf32>
    %c0_87 = arith.constant 0 : index
    %c0_88 = arith.constant 0 : index
    %c0_89 = arith.constant 0 : index
    %162 = vector.load %arg14[%c0_87, %c0_88, %c0_89] : memref<7x1x224xf32, #tpu.memory_space<vmem>>, vector<1x1x224xf32>
    %163 = vector.shape_cast %162 : vector<1x1x224xf32> to vector<1x224xf32>
    %164 = vector.broadcast %163 : vector<1x224xf32> to vector<8x224xf32>
    %165 = arith.addf %161, %164 : vector<8x224xf32>
    %cst_90 = arith.constant 0.000000e+00 : f32
    %166 = vector.broadcast %cst_90 : f32 to vector<8x224xf32>
    %167 = arith.maximumf %165, %166 : vector<8x224xf32>
    %168 = vector.shape_cast %167 : vector<8x224xf32> to vector<1x8x224xf32>
    %c1_91 = arith.constant 1 : index
    %c0_92 = arith.constant 0 : index
    %c0_93 = arith.constant 0 : index
    %169 = vector.load %arg13[%c1_91, %c0_92, %c0_93] : memref<7x32x224xbf16, #tpu.memory_space<vmem>>, vector<1x32x224xbf16>
    %170 = vector.shape_cast %169 : vector<1x32x224xbf16> to vector<32x224xbf16>
    %171 = arith.extf %170 : vector<32x224xbf16> to vector<32x224xf32>
    %cst_94 = arith.constant dense<0.000000e+00> : vector<8x224xf32>
    %172 = tpu.matmul %157, %171, %cst_94 {dimension_numbers = #tpu.dot_dimension_numbers<[1], [0], [0], [1], [0, 0, 1, 1], [], []>} : vector<8x32xf32>, vector<32x224xf32>, vector<8x224xf32> -> vector<8x224xf32>
    %c1_95 = arith.constant 1 : index
    %c0_96 = arith.constant 0 : index
    %c0_97 = arith.constant 0 : index
    %173 = vector.load %arg14[%c1_95, %c0_96, %c0_97] : memref<7x1x224xf32, #tpu.memory_space<vmem>>, vector<1x1x224xf32>
    %174 = vector.shape_cast %173 : vector<1x1x224xf32> to vector<1x224xf32>
    %175 = vector.broadcast %174 : vector<1x224xf32> to vector<8x224xf32>
    %176 = arith.addf %172, %175 : vector<8x224xf32>
    %cst_98 = arith.constant 0.000000e+00 : f32
    %177 = vector.broadcast %cst_98 : f32 to vector<8x224xf32>
    %178 = arith.maximumf %176, %177 : vector<8x224xf32>
    %179 = vector.shape_cast %178 : vector<8x224xf32> to vector<1x8x224xf32>
    %c2_99 = arith.constant 2 : index
    %c0_100 = arith.constant 0 : index
    %c0_101 = arith.constant 0 : index
    %180 = vector.load %arg13[%c2_99, %c0_100, %c0_101] : memref<7x32x224xbf16, #tpu.memory_space<vmem>>, vector<1x32x224xbf16>
    %181 = vector.shape_cast %180 : vector<1x32x224xbf16> to vector<32x224xbf16>
    %182 = arith.extf %181 : vector<32x224xbf16> to vector<32x224xf32>
    %cst_102 = arith.constant dense<0.000000e+00> : vector<8x224xf32>
    %183 = tpu.matmul %157, %182, %cst_102 {dimension_numbers = #tpu.dot_dimension_numbers<[1], [0], [0], [1], [0, 0, 1, 1], [], []>} : vector<8x32xf32>, vector<32x224xf32>, vector<8x224xf32> -> vector<8x224xf32>
    %c2_103 = arith.constant 2 : index
    %c0_104 = arith.constant 0 : index
    %c0_105 = arith.constant 0 : index
    %184 = vector.load %arg14[%c2_103, %c0_104, %c0_105] : memref<7x1x224xf32, #tpu.memory_space<vmem>>, vector<1x1x224xf32>
    %185 = vector.shape_cast %184 : vector<1x1x224xf32> to vector<1x224xf32>
    %186 = vector.broadcast %185 : vector<1x224xf32> to vector<8x224xf32>
    %187 = arith.addf %183, %186 : vector<8x224xf32>
    %cst_106 = arith.constant 0.000000e+00 : f32
    %188 = vector.broadcast %cst_106 : f32 to vector<8x224xf32>
    %189 = arith.maximumf %187, %188 : vector<8x224xf32>
    %190 = vector.shape_cast %189 : vector<8x224xf32> to vector<1x8x224xf32>
    %c3_107 = arith.constant 3 : index
    %c0_108 = arith.constant 0 : index
    %c0_109 = arith.constant 0 : index
    %191 = vector.load %arg13[%c3_107, %c0_108, %c0_109] : memref<7x32x224xbf16, #tpu.memory_space<vmem>>, vector<1x32x224xbf16>
    %192 = vector.shape_cast %191 : vector<1x32x224xbf16> to vector<32x224xbf16>
    %193 = arith.extf %192 : vector<32x224xbf16> to vector<32x224xf32>
    %cst_110 = arith.constant dense<0.000000e+00> : vector<8x224xf32>
    %194 = tpu.matmul %157, %193, %cst_110 {dimension_numbers = #tpu.dot_dimension_numbers<[1], [0], [0], [1], [0, 0, 1, 1], [], []>} : vector<8x32xf32>, vector<32x224xf32>, vector<8x224xf32> -> vector<8x224xf32>
    %c3_111 = arith.constant 3 : index
    %c0_112 = arith.constant 0 : index
    %c0_113 = arith.constant 0 : index
    %195 = vector.load %arg14[%c3_111, %c0_112, %c0_113] : memref<7x1x224xf32, #tpu.memory_space<vmem>>, vector<1x1x224xf32>
    %196 = vector.shape_cast %195 : vector<1x1x224xf32> to vector<1x224xf32>
    %197 = vector.broadcast %196 : vector<1x224xf32> to vector<8x224xf32>
    %198 = arith.addf %194, %197 : vector<8x224xf32>
    %cst_114 = arith.constant 0.000000e+00 : f32
    %199 = vector.broadcast %cst_114 : f32 to vector<8x224xf32>
    %200 = arith.maximumf %198, %199 : vector<8x224xf32>
    %201 = vector.shape_cast %200 : vector<8x224xf32> to vector<1x8x224xf32>
    %c4_115 = arith.constant 4 : index
    %c0_116 = arith.constant 0 : index
    %c0_117 = arith.constant 0 : index
    %202 = vector.load %arg13[%c4_115, %c0_116, %c0_117] : memref<7x32x224xbf16, #tpu.memory_space<vmem>>, vector<1x32x224xbf16>
    %203 = vector.shape_cast %202 : vector<1x32x224xbf16> to vector<32x224xbf16>
    %204 = arith.extf %203 : vector<32x224xbf16> to vector<32x224xf32>
    %cst_118 = arith.constant dense<0.000000e+00> : vector<8x224xf32>
    %205 = tpu.matmul %157, %204, %cst_118 {dimension_numbers = #tpu.dot_dimension_numbers<[1], [0], [0], [1], [0, 0, 1, 1], [], []>} : vector<8x32xf32>, vector<32x224xf32>, vector<8x224xf32> -> vector<8x224xf32>
    %c4_119 = arith.constant 4 : index
    %c0_120 = arith.constant 0 : index
    %c0_121 = arith.constant 0 : index
    %206 = vector.load %arg14[%c4_119, %c0_120, %c0_121] : memref<7x1x224xf32, #tpu.memory_space<vmem>>, vector<1x1x224xf32>
    %207 = vector.shape_cast %206 : vector<1x1x224xf32> to vector<1x224xf32>
    %208 = vector.broadcast %207 : vector<1x224xf32> to vector<8x224xf32>
    %209 = arith.addf %205, %208 : vector<8x224xf32>
    %cst_122 = arith.constant 0.000000e+00 : f32
    %210 = vector.broadcast %cst_122 : f32 to vector<8x224xf32>
    %211 = arith.maximumf %209, %210 : vector<8x224xf32>
    %212 = vector.shape_cast %211 : vector<8x224xf32> to vector<1x8x224xf32>
    %c5_123 = arith.constant 5 : index
    %c0_124 = arith.constant 0 : index
    %c0_125 = arith.constant 0 : index
    %213 = vector.load %arg13[%c5_123, %c0_124, %c0_125] : memref<7x32x224xbf16, #tpu.memory_space<vmem>>, vector<1x32x224xbf16>
    %214 = vector.shape_cast %213 : vector<1x32x224xbf16> to vector<32x224xbf16>
    %215 = arith.extf %214 : vector<32x224xbf16> to vector<32x224xf32>
    %cst_126 = arith.constant dense<0.000000e+00> : vector<8x224xf32>
    %216 = tpu.matmul %157, %215, %cst_126 {dimension_numbers = #tpu.dot_dimension_numbers<[1], [0], [0], [1], [0, 0, 1, 1], [], []>} : vector<8x32xf32>, vector<32x224xf32>, vector<8x224xf32> -> vector<8x224xf32>
    %c5_127 = arith.constant 5 : index
    %c0_128 = arith.constant 0 : index
    %c0_129 = arith.constant 0 : index
    %217 = vector.load %arg14[%c5_127, %c0_128, %c0_129] : memref<7x1x224xf32, #tpu.memory_space<vmem>>, vector<1x1x224xf32>
    %218 = vector.shape_cast %217 : vector<1x1x224xf32> to vector<1x224xf32>
    %219 = vector.broadcast %218 : vector<1x224xf32> to vector<8x224xf32>
    %220 = arith.addf %216, %219 : vector<8x224xf32>
    %cst_130 = arith.constant 0.000000e+00 : f32
    %221 = vector.broadcast %cst_130 : f32 to vector<8x224xf32>
    %222 = arith.maximumf %220, %221 : vector<8x224xf32>
    %223 = vector.shape_cast %222 : vector<8x224xf32> to vector<1x8x224xf32>
    %c6_131 = arith.constant 6 : index
    %c0_132 = arith.constant 0 : index
    %c0_133 = arith.constant 0 : index
    %224 = vector.load %arg13[%c6_131, %c0_132, %c0_133] : memref<7x32x224xbf16, #tpu.memory_space<vmem>>, vector<1x32x224xbf16>
    %225 = vector.shape_cast %224 : vector<1x32x224xbf16> to vector<32x224xbf16>
    %226 = arith.extf %225 : vector<32x224xbf16> to vector<32x224xf32>
    %cst_134 = arith.constant dense<0.000000e+00> : vector<8x224xf32>
    %227 = tpu.matmul %157, %226, %cst_134 {dimension_numbers = #tpu.dot_dimension_numbers<[1], [0], [0], [1], [0, 0, 1, 1], [], []>} : vector<8x32xf32>, vector<32x224xf32>, vector<8x224xf32> -> vector<8x224xf32>
    %c6_135 = arith.constant 6 : index
    %c0_136 = arith.constant 0 : index
    %c0_137 = arith.constant 0 : index
    %228 = vector.load %arg14[%c6_135, %c0_136, %c0_137] : memref<7x1x224xf32, #tpu.memory_space<vmem>>, vector<1x1x224xf32>
    %229 = vector.shape_cast %228 : vector<1x1x224xf32> to vector<1x224xf32>
    %230 = vector.broadcast %229 : vector<1x224xf32> to vector<8x224xf32>
    %231 = arith.addf %227, %230 : vector<8x224xf32>
    %cst_138 = arith.constant 0.000000e+00 : f32
    %232 = vector.broadcast %cst_138 : f32 to vector<8x224xf32>
    %233 = arith.maximumf %231, %232 : vector<8x224xf32>
    %234 = vector.shape_cast %233 : vector<8x224xf32> to vector<1x8x224xf32>
    %235 = tpu.concatenate %168, %179, %190, %201, %212, %223, %234 in 0 : vector<1x8x224xf32>, vector<1x8x224xf32>, vector<1x8x224xf32>, vector<1x8x224xf32>, vector<1x8x224xf32>, vector<1x8x224xf32>, vector<1x8x224xf32> -> vector<7x8x224xf32>
    %236 = vector.shape_cast %235 : vector<7x8x224xf32> to vector<56x224xf32>
    %237 = vector.shape_cast %236 : vector<56x224xf32> to vector<7x8x224xf32>
    %cst_139 = arith.constant 0.000000e+00 : f32
    %238 = vector.broadcast %cst_139 : f32 to vector<1x8x224xf32>
    %239 = tpu.concatenate %238, %237, %238 in 0 : vector<1x8x224xf32>, vector<7x8x224xf32>, vector<1x8x224xf32> -> vector<9x8x224xf32>
    %240 = vector.extract_strided_slice %239 {offsets = [0, 0, 0], sizes = [7, 8, 224], strides = [1, 1, 1]} : vector<9x8x224xf32> to vector<7x8x224xf32>
    %241 = vector.shape_cast %240 : vector<7x8x224xf32> to vector<56x224xf32>
    %242 = vector.extract_strided_slice %239 {offsets = [1, 0, 0], sizes = [7, 8, 224], strides = [1, 1, 1]} : vector<9x8x224xf32> to vector<7x8x224xf32>
    %243 = vector.shape_cast %242 : vector<7x8x224xf32> to vector<56x224xf32>
    %244 = vector.extract_strided_slice %239 {offsets = [2, 0, 0], sizes = [7, 8, 224], strides = [1, 1, 1]} : vector<9x8x224xf32> to vector<7x8x224xf32>
    %245 = vector.shape_cast %244 : vector<7x8x224xf32> to vector<56x224xf32>
    %c0_140 = arith.constant 0 : index
    %c0_141 = arith.constant 0 : index
    %c0_142 = arith.constant 0 : index
    %246 = vector.load %arg15[%c0_140, %c0_141, %c0_142] : memref<4x224x224xbf16, #tpu.memory_space<vmem>>, vector<1x224x224xbf16>
    %247 = vector.shape_cast %246 : vector<1x224x224xbf16> to vector<224x224xbf16>
    %248 = arith.extf %247 : vector<224x224xbf16> to vector<224x224xf32>
    %cst_143 = arith.constant dense<0.000000e+00> : vector<56x224xf32>
    %249 = tpu.matmul %241, %248, %cst_143 {dimension_numbers = #tpu.dot_dimension_numbers<[1], [0], [0], [1], [0, 0, 1, 1], [], []>} : vector<56x224xf32>, vector<224x224xf32>, vector<56x224xf32> -> vector<56x224xf32>
    %c1_144 = arith.constant 1 : index
    %c0_145 = arith.constant 0 : index
    %c0_146 = arith.constant 0 : index
    %250 = vector.load %arg15[%c1_144, %c0_145, %c0_146] : memref<4x224x224xbf16, #tpu.memory_space<vmem>>, vector<1x224x224xbf16>
    %251 = vector.shape_cast %250 : vector<1x224x224xbf16> to vector<224x224xbf16>
    %252 = arith.extf %251 : vector<224x224xbf16> to vector<224x224xf32>
    %cst_147 = arith.constant dense<0.000000e+00> : vector<56x224xf32>
    %253 = tpu.matmul %243, %252, %cst_147 {dimension_numbers = #tpu.dot_dimension_numbers<[1], [0], [0], [1], [0, 0, 1, 1], [], []>} : vector<56x224xf32>, vector<224x224xf32>, vector<56x224xf32> -> vector<56x224xf32>
    %254 = arith.addf %249, %253 : vector<56x224xf32>
    %c2_148 = arith.constant 2 : index
    %c0_149 = arith.constant 0 : index
    %c0_150 = arith.constant 0 : index
    %255 = vector.load %arg15[%c2_148, %c0_149, %c0_150] : memref<4x224x224xbf16, #tpu.memory_space<vmem>>, vector<1x224x224xbf16>
    %256 = vector.shape_cast %255 : vector<1x224x224xbf16> to vector<224x224xbf16>
    %257 = arith.extf %256 : vector<224x224xbf16> to vector<224x224xf32>
    %cst_151 = arith.constant dense<0.000000e+00> : vector<56x224xf32>
    %258 = tpu.matmul %243, %257, %cst_151 {dimension_numbers = #tpu.dot_dimension_numbers<[1], [0], [0], [1], [0, 0, 1, 1], [], []>} : vector<56x224xf32>, vector<224x224xf32>, vector<56x224xf32> -> vector<56x224xf32>
    %c3_152 = arith.constant 3 : index
    %c0_153 = arith.constant 0 : index
    %c0_154 = arith.constant 0 : index
    %259 = vector.load %arg15[%c3_152, %c0_153, %c0_154] : memref<4x224x224xbf16, #tpu.memory_space<vmem>>, vector<1x224x224xbf16>
    %260 = vector.shape_cast %259 : vector<1x224x224xbf16> to vector<224x224xbf16>
    %261 = arith.extf %260 : vector<224x224xbf16> to vector<224x224xf32>
    %cst_155 = arith.constant dense<0.000000e+00> : vector<56x224xf32>
    %262 = tpu.matmul %245, %261, %cst_155 {dimension_numbers = #tpu.dot_dimension_numbers<[1], [0], [0], [1], [0, 0, 1, 1], [], []>} : vector<56x224xf32>, vector<224x224xf32>, vector<56x224xf32> -> vector<56x224xf32>
    %263 = arith.addf %258, %262 : vector<56x224xf32>
    %264 = vector.shape_cast %254 : vector<56x224xf32> to vector<7x1x8x224xf32>
    %265 = vector.shape_cast %263 : vector<56x224xf32> to vector<7x1x8x224xf32>
    %266 = tpu.concatenate %264, %265 in 1 : vector<7x1x8x224xf32>, vector<7x1x8x224xf32> -> vector<7x2x8x224xf32>
    %267 = vector.shape_cast %266 : vector<7x2x8x224xf32> to vector<112x224xf32>
    %cst_156 = arith.constant 0.000000e+00 : f32
    %268 = vector.broadcast %cst_156 : f32 to vector<112x224xf32>
    %269 = arith.maximumf %267, %268 : vector<112x224xf32>
    %270 = vector.shape_cast %269 : vector<112x224xf32> to vector<14x8x224xf32>
    %cst_157 = arith.constant 0.000000e+00 : f32
    %271 = vector.broadcast %cst_157 : f32 to vector<1x8x224xf32>
    %272 = tpu.concatenate %271, %270, %271 in 0 : vector<1x8x224xf32>, vector<14x8x224xf32>, vector<1x8x224xf32> -> vector<16x8x224xf32>
    %273 = vector.extract_strided_slice %272 {offsets = [0, 0, 0], sizes = [14, 8, 224], strides = [1, 1, 1]} : vector<16x8x224xf32> to vector<14x8x224xf32>
    %274 = vector.shape_cast %273 : vector<14x8x224xf32> to vector<112x224xf32>
    %275 = vector.extract_strided_slice %272 {offsets = [1, 0, 0], sizes = [14, 8, 224], strides = [1, 1, 1]} : vector<16x8x224xf32> to vector<14x8x224xf32>
    %276 = vector.shape_cast %275 : vector<14x8x224xf32> to vector<112x224xf32>
    %277 = vector.extract_strided_slice %272 {offsets = [2, 0, 0], sizes = [14, 8, 224], strides = [1, 1, 1]} : vector<16x8x224xf32> to vector<14x8x224xf32>
    %278 = vector.shape_cast %277 : vector<14x8x224xf32> to vector<112x224xf32>
    %c0_158 = arith.constant 0 : index
    %c0_159 = arith.constant 0 : index
    %c0_160 = arith.constant 0 : index
    %279 = vector.load %arg16[%c0_158, %c0_159, %c0_160] : memref<4x224x28xbf16, #tpu.memory_space<vmem>>, vector<1x224x28xbf16>
    %280 = vector.shape_cast %279 : vector<1x224x28xbf16> to vector<224x28xbf16>
    %281 = arith.extf %280 : vector<224x28xbf16> to vector<224x28xf32>
    %cst_161 = arith.constant dense<0.000000e+00> : vector<112x28xf32>
    %282 = tpu.matmul %274, %281, %cst_161 {dimension_numbers = #tpu.dot_dimension_numbers<[1], [0], [0], [1], [0, 0, 1, 1], [], []>} : vector<112x224xf32>, vector<224x28xf32>, vector<112x28xf32> -> vector<112x28xf32>
    %c1_162 = arith.constant 1 : index
    %c0_163 = arith.constant 0 : index
    %c0_164 = arith.constant 0 : index
    %283 = vector.load %arg16[%c1_162, %c0_163, %c0_164] : memref<4x224x28xbf16, #tpu.memory_space<vmem>>, vector<1x224x28xbf16>
    %284 = vector.shape_cast %283 : vector<1x224x28xbf16> to vector<224x28xbf16>
    %285 = arith.extf %284 : vector<224x28xbf16> to vector<224x28xf32>
    %cst_165 = arith.constant dense<0.000000e+00> : vector<112x28xf32>
    %286 = tpu.matmul %276, %285, %cst_165 {dimension_numbers = #tpu.dot_dimension_numbers<[1], [0], [0], [1], [0, 0, 1, 1], [], []>} : vector<112x224xf32>, vector<224x28xf32>, vector<112x28xf32> -> vector<112x28xf32>
    %287 = arith.addf %282, %286 : vector<112x28xf32>
    %c2_166 = arith.constant 2 : index
    %c0_167 = arith.constant 0 : index
    %c0_168 = arith.constant 0 : index
    %288 = vector.load %arg16[%c2_166, %c0_167, %c0_168] : memref<4x224x28xbf16, #tpu.memory_space<vmem>>, vector<1x224x28xbf16>
    %289 = vector.shape_cast %288 : vector<1x224x28xbf16> to vector<224x28xbf16>
    %290 = arith.extf %289 : vector<224x28xbf16> to vector<224x28xf32>
    %cst_169 = arith.constant dense<0.000000e+00> : vector<112x28xf32>
    %291 = tpu.matmul %276, %290, %cst_169 {dimension_numbers = #tpu.dot_dimension_numbers<[1], [0], [0], [1], [0, 0, 1, 1], [], []>} : vector<112x224xf32>, vector<224x28xf32>, vector<112x28xf32> -> vector<112x28xf32>
    %c3_170 = arith.constant 3 : index
    %c0_171 = arith.constant 0 : index
    %c0_172 = arith.constant 0 : index
    %292 = vector.load %arg16[%c3_170, %c0_171, %c0_172] : memref<4x224x28xbf16, #tpu.memory_space<vmem>>, vector<1x224x28xbf16>
    %293 = vector.shape_cast %292 : vector<1x224x28xbf16> to vector<224x28xbf16>
    %294 = arith.extf %293 : vector<224x28xbf16> to vector<224x28xf32>
    %cst_173 = arith.constant dense<0.000000e+00> : vector<112x28xf32>
    %295 = tpu.matmul %278, %294, %cst_173 {dimension_numbers = #tpu.dot_dimension_numbers<[1], [0], [0], [1], [0, 0, 1, 1], [], []>} : vector<112x224xf32>, vector<224x28xf32>, vector<112x28xf32> -> vector<112x28xf32>
    %296 = arith.addf %291, %295 : vector<112x28xf32>
    %297 = vector.shape_cast %287 : vector<112x28xf32> to vector<14x1x8x28xf32>
    %298 = vector.shape_cast %296 : vector<112x28xf32> to vector<14x1x8x28xf32>
    %299 = tpu.concatenate %297, %298 in 1 : vector<14x1x8x28xf32>, vector<14x1x8x28xf32> -> vector<14x2x8x28xf32>
    %300 = vector.shape_cast %299 : vector<14x2x8x28xf32> to vector<224x28xf32>
    %301 = vector.shape_cast %300 : vector<224x28xf32> to vector<28x8x28xf32>
    %c0_174 = arith.constant 0 : index
    %c0_175 = arith.constant 0 : index
    %c0_176 = arith.constant 0 : index
    %302 = vector.load %arg17[%c0_174, %c0_175, %c0_176] : memref<28x8x28xf32, #tpu.memory_space<vmem>>, vector<28x8x28xf32>
    tpu.vector_store %arg17[%c0_174, %c0_175, %c0_176], %301 {strides = array<i32>} : memref<28x8x28xf32, #tpu.memory_space<vmem>>, vector<28x8x28xf32>,
    %c0_177 = arith.constant 0 : index
    %c0_178 = arith.constant 0 : index
    %303 = vector.load %arg18[%c0_177, %c0_178] : memref<8x8xf32, #tpu.memory_space<vmem>>, vector<8x8xf32>
    tpu.vector_store %arg18[%c0_177, %c0_178], %139 {strides = array<i32>} : memref<8x8xf32, #tpu.memory_space<vmem>>, vector<8x8xf32>,
    %c0_179 = arith.constant 0 : index
    %c0_180 = arith.constant 0 : index
    %304 = vector.load %arg19[%c0_179, %c0_180] : memref<8x8xf32, #tpu.memory_space<vmem>>, vector<8x8xf32>
    tpu.vector_store %arg19[%c0_179, %c0_180], %145 {strides = array<i32>} : memref<8x8xf32, #tpu.memory_space<vmem>>, vector<8x8xf32>,
    return
  }
  func.func @transform_0(%arg0: i32) -> (i32, i32, i32) {
    %c0_i32 = arith.constant 0 : i32
    %c0_i32_0 = arith.constant 0 : i32
    %c0_i32_1 = arith.constant 0 : i32
    return %c0_i32, %arg0, %c0_i32_0 : i32, i32, i32
  }
  func.func @transform_1(%arg0: i32) -> (i32, i32) {
    %c0_i32 = arith.constant 0 : i32
    %c0_i32_0 = arith.constant 0 : i32
    return %arg0, %c0_i32 : i32, i32
  }
  func.func @transform_2(%arg0: i32) -> (i32, i32, i32) {
    %c0_i32 = arith.constant 0 : i32
    %c0_i32_0 = arith.constant 0 : i32
    %c0_i32_1 = arith.constant 0 : i32
    %c0_i32_2 = arith.constant 0 : i32
    return %c0_i32, %c0_i32_0, %c0_i32_1 : i32, i32, i32
  }
  func.func @transform_3(%arg0: i32) -> (i32, i32, i32) {
    %c0_i32 = arith.constant 0 : i32
    %c0_i32_0 = arith.constant 0 : i32
    %c0_i32_1 = arith.constant 0 : i32
    %c0_i32_2 = arith.constant 0 : i32
    return %c0_i32, %c0_i32_0, %c0_i32_1 : i32, i32, i32
  }
  func.func @transform_4(%arg0: i32) -> (i32, i32, i32) {
    %c0_i32 = arith.constant 0 : i32
    %c0_i32_0 = arith.constant 0 : i32
    %c0_i32_1 = arith.constant 0 : i32
    %c0_i32_2 = arith.constant 0 : i32
    return %c0_i32, %c0_i32_0, %c0_i32_1 : i32, i32, i32
  }
  func.func @transform_5(%arg0: i32) -> (i32, i32) {
    %c0_i32 = arith.constant 0 : i32
    %c0_i32_0 = arith.constant 0 : i32
    %c0_i32_1 = arith.constant 0 : i32
    return %c0_i32, %c0_i32_0 : i32, i32
  }
  func.func @transform_6(%arg0: i32) -> (i32, i32) {
    %c0_i32 = arith.constant 0 : i32
    %c0_i32_0 = arith.constant 0 : i32
    %c0_i32_1 = arith.constant 0 : i32
    return %c0_i32, %c0_i32_0 : i32, i32
  }
  func.func @transform_7(%arg0: i32) -> (i32, i32) {
    %c0_i32 = arith.constant 0 : i32
    %c0_i32_0 = arith.constant 0 : i32
    %c0_i32_1 = arith.constant 0 : i32
    return %c0_i32, %c0_i32_0 : i32, i32
  }
  func.func @transform_8(%arg0: i32) -> (i32, i32) {
    %c0_i32 = arith.constant 0 : i32
    %c0_i32_0 = arith.constant 0 : i32
    %c0_i32_1 = arith.constant 0 : i32
    return %c0_i32, %c0_i32_0 : i32, i32
  }
  func.func @transform_9(%arg0: i32) -> (i32, i32) {
    %c0_i32 = arith.constant 0 : i32
    %c0_i32_0 = arith.constant 0 : i32
    %c0_i32_1 = arith.constant 0 : i32
    return %c0_i32, %c0_i32_0 : i32, i32
  }
  func.func @transform_10(%arg0: i32) -> (i32, i32) {
    %c0_i32 = arith.constant 0 : i32
    %c0_i32_0 = arith.constant 0 : i32
    %c0_i32_1 = arith.constant 0 : i32
    return %c0_i32, %c0_i32_0 : i32, i32
  }
  func.func @transform_11(%arg0: i32) -> (i32, i32) {
    %c0_i32 = arith.constant 0 : i32
    %c0_i32_0 = arith.constant 0 : i32
    %c0_i32_1 = arith.constant 0 : i32
    return %c0_i32, %c0_i32_0 : i32, i32
  }
  func.func @transform_12(%arg0: i32) -> (i32, i32, i32) {
    %c0_i32 = arith.constant 0 : i32
    %c0_i32_0 = arith.constant 0 : i32
    %c0_i32_1 = arith.constant 0 : i32
    %c0_i32_2 = arith.constant 0 : i32
    return %c0_i32, %c0_i32_0, %c0_i32_1 : i32, i32, i32
  }
  func.func @transform_13(%arg0: i32) -> (i32, i32, i32) {
    %c0_i32 = arith.constant 0 : i32
    %c0_i32_0 = arith.constant 0 : i32
    %c0_i32_1 = arith.constant 0 : i32
    %c0_i32_2 = arith.constant 0 : i32
    return %c0_i32, %c0_i32_0, %c0_i32_1 : i32, i32, i32
  }
  func.func @transform_14(%arg0: i32) -> (i32, i32, i32) {
    %c0_i32 = arith.constant 0 : i32
    %c0_i32_0 = arith.constant 0 : i32
    %c0_i32_1 = arith.constant 0 : i32
    %c0_i32_2 = arith.constant 0 : i32
    return %c0_i32, %c0_i32_0, %c0_i32_1 : i32, i32, i32
  }
  func.func @transform_15(%arg0: i32) -> (i32, i32, i32) {
    %c0_i32 = arith.constant 0 : i32
    %c0_i32_0 = arith.constant 0 : i32
    %c0_i32_1 = arith.constant 0 : i32
    %c0_i32_2 = arith.constant 0 : i32
    return %c0_i32, %c0_i32_0, %c0_i32_1 : i32, i32, i32
  }
  func.func @transform_16(%arg0: i32) -> (i32, i32, i32) {
    %c0_i32 = arith.constant 0 : i32
    %c0_i32_0 = arith.constant 0 : i32
    %c0_i32_1 = arith.constant 0 : i32
    return %c0_i32, %arg0, %c0_i32_0 : i32, i32, i32
  }
  func.func @transform_17(%arg0: i32) -> (i32, i32) {
    %c0_i32 = arith.constant 0 : i32
    %c0_i32_0 = arith.constant 0 : i32
    return %arg0, %c0_i32 : i32, i32
  }
  func.func @transform_18(%arg0: i32) -> (i32, i32) {
    %c0_i32 = arith.constant 0 : i32
    %c0_i32_0 = arith.constant 0 : i32
    return %arg0, %c0_i32 : i32, i32
  }
}

</mosaic_0001>

<llo_original>
// kernel: vae_forward.1
$region0: #{vae_forward.1}
  #allocation0 [shape = 'u32[]', space=smem, size = 0x4, offset = 0x4, fixed_abs, tag = 'smem constant byte address 0x4 - core index']
  #allocation1 [shape = 'u32[144,128]{1,0:T(1,128)}', space=vmem, size = 0x12000, scoped, tag = 'internal scratch']
  %s0 = inlined_call_operand.vmem [shape: f32[28,8,28], index: 0, kind: input, shape index: {}]
  %s1 = inlined_call_operand.vmem [shape: f32[8,8], index: 1, kind: input, shape index: {}]
  %s2 = inlined_call_operand.vmem [shape: bf16[4,28,224], index: 2, kind: input, shape index: {}]
  %s3 = inlined_call_operand.vmem [shape: bf16[4,224,224], index: 3, kind: input, shape index: {}]
  %s4 = inlined_call_operand.vmem [shape: bf16[7,224,32], index: 4, kind: input, shape index: {}]
  %s5 = inlined_call_operand.vmem [shape: f32[1,32], index: 5, kind: input, shape index: {}]
  %s6 = inlined_call_operand.vmem [shape: bf16[32,8], index: 6, kind: input, shape index: {}]
  %s7 = inlined_call_operand.hbm [shape: f32[1,8], index: 7, kind: input, shape index: {}]
  %s8 = inlined_call_operand.vmem [shape: bf16[32,8], index: 8, kind: input, shape index: {}]
  %s9 = inlined_call_operand.hbm [shape: f32[1,8], index: 9, kind: input, shape index: {}]
  %s10 = inlined_call_operand.hbm [shape: bf16[8,32], index: 10, kind: input, shape index: {}]
  %s11 = inlined_call_operand.hbm [shape: f32[1,32], index: 11, kind: input, shape index: {}]
  %s12 = inlined_call_operand.vmem [shape: bf16[7,32,224], index: 12, kind: input, shape index: {}]
  %s13 = inlined_call_operand.hbm [shape: f32[7,1,224], index: 13, kind: input, shape index: {}]
  %s14 = inlined_call_operand.vmem [shape: bf16[4,224,224], index: 14, kind: input, shape index: {}]
  %s15 = inlined_call_operand.vmem [shape: bf16[4,224,28], index: 15, kind: input, shape index: {}]
  %s16 = inlined_call_operand.vmem [shape: f32[28,8,28], index: 16, kind: output, shape index: {0}]
  %s17 = inlined_call_operand.vmem [shape: f32[8,8], index: 17, kind: output, shape index: {1}]
  %s18 = inlined_call_operand.vmem [shape: f32[8,8], index: 18, kind: output, shape index: {2}]
  %19 = xla_tuple %s16, %s17, %s18
  %s20 = sld [smem:[#allocation0]]
  $region110: #{vae_forward.1} parent=0
    _
  %s22 = ssub.s32 1, %s20
  %s23 = scalar_select 0, %s22, %s20
  $region1: #{vae_forward.1} parent=0
    #allocation2 [shape = 'u8[512]{0}', space=vmem, size = 0x400, scoped, tag = 'input window, operand 7, single buffered']
    #allocation3 [shape = 's32[1]{0}', space=sflag, size = 0x4, scoped, tag = 'scoped memory for vae_forward.1']
    #allocation4 [shape = 'u8[512]{0}', space=vmem, size = 0x400, scoped, tag = 'input window, operand 9, single buffered']
    #allocation5 [shape = 's32[1]{0}', space=sflag, size = 0x4, scoped, tag = 'scoped memory for vae_forward.1']
    #allocation6 [shape = 'u8[2048]{0}', space=vmem, size = 0x800, scoped, tag = 'input window, operand 10, single buffered']
    #allocation7 [shape = 'u8[512]{0}', space=vmem, size = 0x400, scoped, tag = 'input window, operand 11, single buffered']
    #allocation8 [shape = 's32[1]{0}', space=sflag, size = 0x4, scoped, tag = 'scoped memory for vae_forward.1']
    #allocation9 [shape = 'u8[7168]{0}', space=vmem, size = 0x1c00, scoped, tag = 'input window, operand 13, single buffered']
    %24 = vsyncpa [#allocation3], 0
    %25 = vsyncpa [#allocation5], 0
    %26 = vsyncpa [#allocation8], 0
    // Predicated region
    $region2: #{vae_forward.1} parent=1 // pred_check
      _
    $region3: #{vae_forward.1} parent=1 // pred_check_branch
      %28 = sbr.rel (0) target = $region5
    $region4: #{vae_forward.1} parent=1 // pred_region
      _
    $region5: #{vae_forward.1} parent=1 // pred_fallthru
      _
    // Predicated region
    $region6: #{vae_forward.1} parent=1 // pred_check
      _
    $region7: #{vae_forward.1} parent=1 // pred_check_branch
      %30 = sbr.rel (0) target = $region9
    $region8: #{vae_forward.1} parent=1 // pred_region
      _
    $region9: #{vae_forward.1} parent=1 // pred_fallthru
      _
    // Predicated region
    $region10: #{vae_forward.1} parent=1 // pred_check
      _
    $region11: #{vae_forward.1} parent=1 // pred_check_branch
      %32 = sbr.rel (0) target = $region13
    $region12: #{vae_forward.1} parent=1 // pred_region
      _
    $region13: #{vae_forward.1} parent=1 // pred_fallthru
      _
    // Predicated region
    $region14: #{vae_forward.1} parent=1 // pred_check
      _
    $region15: #{vae_forward.1} parent=1 // pred_check_branch
      %34 = sbr.rel (0) target = $region17
    $region16: #{vae_forward.1} parent=1 // pred_region
      _
    $region17: #{vae_forward.1} parent=1 // pred_fallthru
      _
    // Predicated region
    $region18: #{vae_forward.1} parent=1 // pred_check
      _
    $region19: #{vae_forward.1} parent=1 // pred_check_branch
      %36 = sbr.rel (0) target = $region21
    $region20: #{vae_forward.1} parent=1 // pred_region
      _
    $region21: #{vae_forward.1} parent=1 // pred_fallthru
      _
    // Predicated region
    $region22: #{vae_forward.1} parent=1 // pred_check
      _
    $region23: #{vae_forward.1} parent=1 // pred_check_branch
      %38 = sbr.rel (0) target = $region25
    $region24: #{vae_forward.1} parent=1 // pred_region
      _
    $region25: #{vae_forward.1} parent=1 // pred_fallthru
      _
    // Predicated region
    $region26: #{vae_forward.1} parent=1 // pred_check
      _
    $region27: #{vae_forward.1} parent=1 // pred_check_branch
      %40 = sbr.rel (0) target = $region29
    $region28: #{vae_forward.1} parent=1 // pred_region
      _
    $region29: #{vae_forward.1} parent=1 // pred_fallthru
      _
    // Predicated region
    $region30: #{vae_forward.1} parent=1 // pred_check
      _
    $region31: #{vae_forward.1} parent=1 // pred_check_branch
      %42 = sbr.rel (0) target = $region33
    $region32: #{vae_forward.1} parent=1 // pred_region
      %s44 = ssub.s32 16, 16
      %45 = vsyncadd [#allocation3], %s44
      %s47 = sshll.u32 [#allocation2], 4
      %s48 = int_to_ptr.vmem [resolvable:$true] %s47
      %50 = dma.hbm_to_vmem [thread:$0]  %s7, 16, %s48, [#allocation3]
    $region33: #{vae_forward.1} parent=1 // pred_fallthru
      _
    // Predicated region
    $region34: #{vae_forward.1} parent=1 // pred_check
      _
    $region35: #{vae_forward.1} parent=1 // pred_check_branch
      %52 = sbr.rel (0) target = $region37
    $region36: #{vae_forward.1} parent=1 // pred_region
      _
    $region37: #{vae_forward.1} parent=1 // pred_fallthru
      _
    // Predicated region
    $region38: #{vae_forward.1} parent=1 // pred_check
      _
    $region39: #{vae_forward.1} parent=1 // pred_check_branch
      %54 = sbr.rel (0) target = $region41
    $region40: #{vae_forward.1} parent=1 // pred_region
      %s56 = ssub.s32 16, 16
      %57 = vsyncadd [#allocation5], %s56
      %s59 = sshll.u32 [#allocation4], 4
      %s60 = int_to_ptr.vmem [resolvable:$true] %s59
      %62 = dma.hbm_to_vmem [thread:$0]  %s9, 16, %s60, [#allocation5]
    $region41: #{vae_forward.1} parent=1 // pred_fallthru
      _
    // Predicated region
    $region42: #{vae_forward.1} parent=1 // pred_check
      _
    $region43: #{vae_forward.1} parent=1 // pred_check_branch
      %64 = sbr.rel (0) target = $region45
    $region44: #{vae_forward.1} parent=1 // pred_region
      %s66 = ssub.s32 64, 64
      %67 = vsyncadd [#allocation5], %s66
      %s69 = sshll.u32 [#allocation6], 4
      %s70 = int_to_ptr.vmem [resolvable:$true] %s69
      %72 = dma.hbm_to_vmem [thread:$0]  %s10, 64, %s70, [#allocation5]
    $region45: #{vae_forward.1} parent=1 // pred_fallthru
      _
    // Predicated region
    $region46: #{vae_forward.1} parent=1 // pred_check
      _
    $region47: #{vae_forward.1} parent=1 // pred_check_branch
      %74 = sbr.rel (0) target = $region49
    $region48: #{vae_forward.1} parent=1 // pred_region
      %s76 = ssub.s32 16, 16
      %77 = vsyncadd [#allocation8], %s76
      %s79 = sshll.u32 [#allocation7], 4
      %s80 = int_to_ptr.vmem [resolvable:$true] %s79
      %82 = dma.hbm_to_vmem [thread:$0]  %s11, 16, %s80, [#allocation8]
    $region49: #{vae_forward.1} parent=1 // pred_fallthru
      _
    // Predicated region
    $region50: #{vae_forward.1} parent=1 // pred_check
      _
    $region51: #{vae_forward.1} parent=1 // pred_check_branch
      %84 = sbr.rel (0) target = $region53
    $region52: #{vae_forward.1} parent=1 // pred_region
      _
    $region53: #{vae_forward.1} parent=1 // pred_fallthru
      _
    // Predicated region
    $region54: #{vae_forward.1} parent=1 // pred_check
      _
    $region55: #{vae_forward.1} parent=1 // pred_check_branch
      %86 = sbr.rel (0) target = $region57
    $region56: #{vae_forward.1} parent=1 // pred_region
      %s88 = ssub.s32 224, 224
      %89 = vsyncadd [#allocation8], %s88
      %s90 = sshll.u32 [#allocation9], 4
      %s91 = int_to_ptr.vmem [resolvable:$true] %s90
      %96 = dma.hbm_to_vmem [thread:$0]  %s13, 224, %s91, [#allocation8], 32, 32, 2
    $region57: #{vae_forward.1} parent=1 // pred_fallthru
      _
    // Predicated region
    $region58: #{vae_forward.1} parent=1 // pred_check
      _
    $region59: #{vae_forward.1} parent=1 // pred_check_branch
      %98 = sbr.rel (0) target = $region61
    $region60: #{vae_forward.1} parent=1 // pred_region
      _
    $region61: #{vae_forward.1} parent=1 // pred_fallthru
      _
    // Predicated region
    $region62: #{vae_forward.1} parent=1 // pred_check
      _
    $region63: #{vae_forward.1} parent=1 // pred_check_branch
      %100 = sbr.rel (0) target = $region65
    $region64: #{vae_forward.1} parent=1 // pred_region
      _
    $region65: #{vae_forward.1} parent=1 // pred_fallthru
      _
    // Predicated region
    $region66: #{vae_forward.1} parent=1 // pred_check
      _
    $region67: #{vae_forward.1} parent=1 // pred_check_branch
      %102 = sbr.rel (0) target = $region69
    $region68: #{vae_forward.1} parent=1 // pred_region
      %103 = dma.done [#allocation3], 16
    $region69: #{vae_forward.1} parent=1 // pred_fallthru
      _
    // Predicated region
    $region70: #{vae_forward.1} parent=1 // pred_check
      _
    $region71: #{vae_forward.1} parent=1 // pred_check_branch
      %105 = sbr.rel (0) target = $region73
    $region72: #{vae_forward.1} parent=1 // pred_region
      %106 = dma.done [#allocation5], 16
    $region73: #{vae_forward.1} parent=1 // pred_fallthru
      _
    // Predicated region
    $region74: #{vae_forward.1} parent=1 // pred_check
      _
    $region75: #{vae_forward.1} parent=1 // pred_check_branch
      %108 = sbr.rel (0) target = $region77
    $region76: #{vae_forward.1} parent=1 // pred_region
      %109 = dma.done [#allocation5], 64
    $region77: #{vae_forward.1} parent=1 // pred_fallthru
      _
    // Predicated region
    $region78: #{vae_forward.1} parent=1 // pred_check
      _
    $region79: #{vae_forward.1} parent=1 // pred_check_branch
      %111 = sbr.rel (0) target = $region81
    $region80: #{vae_forward.1} parent=1 // pred_region
      %112 = dma.done [#allocation8], 16
    $region81: #{vae_forward.1} parent=1 // pred_fallthru
      _
    // Predicated region
    $region82: #{vae_forward.1} parent=1 // pred_check
      _
    $region83: #{vae_forward.1} parent=1 // pred_check_branch
      %114 = sbr.rel (0) target = $region85
    $region84: #{vae_forward.1} parent=1 // pred_region
      %115 = dma.done [#allocation8], 224
    $region85: #{vae_forward.1} parent=1 // pred_fallthru
      _
    %v116 = vld [vmem:[%s0] sm:$0xff]
    %v117 = vld [vmem:[%s0 + $0x8] sm:$0xff]
    %v118 = vld [vmem:[%s0 + $0x10] sm:$0xff]
    %v119 = vld [vmem:[%s0 + $0x18] sm:$0xff]
    %v120 = vld [vmem:[%s0 + $0x20] sm:$0xff]
    %v121 = vld [vmem:[%s0 + $0x28] sm:$0xff]
    %v122 = vld [vmem:[%s0 + $0x30] sm:$0xff]
    %v123 = vld [vmem:[%s0 + $0x38] sm:$0xff]
    %v124 = vld [vmem:[%s0 + $0x40] sm:$0xff]
    %v125 = vld [vmem:[%s0 + $0x48] sm:$0xff]
    %v126 = vld [vmem:[%s0 + $0x50] sm:$0xff]
    %v127 = vld [vmem:[%s0 + $0x58] sm:$0xff]
    %v128 = vld [vmem:[%s0 + $0x60] sm:$0xff]
    %v129 = vld [vmem:[%s0 + $0x68] sm:$0xff]
    %v130 = vld [vmem:[%s0 + $0x70] sm:$0xff]
    %v131 = vld [vmem:[%s0 + $0x78] sm:$0xff]
    %v132 = vld [vmem:[%s0 + $0x80] sm:$0xff]
    %v133 = vld [vmem:[%s0 + $0x88] sm:$0xff]
    %v134 = vld [vmem:[%s0 + $0x90] sm:$0xff]
    %v135 = vld [vmem:[%s0 + $0x98] sm:$0xff]
    %v136 = vld [vmem:[%s0 + $0xa0] sm:$0xff]
    %v137 = vld [vmem:[%s0 + $0xa8] sm:$0xff]
    %v138 = vld [vmem:[%s0 + $0xb0] sm:$0xff]
    %v139 = vld [vmem:[%s0 + $0xb8] sm:$0xff]
    %v140 = vld [vmem:[%s0 + $0xc0] sm:$0xff]
    %v141 = vld [vmem:[%s0 + $0xc8] sm:$0xff]
    %v142 = vld [vmem:[%s0 + $0xd0] sm:$0xff]
    %v143 = vld [vmem:[%s0 + $0xd8] sm:$0xff]
    %v144 = vld [vmem:[%s2] sm:$0xff]
    %v145 = vld [vmem:[%s2 + $0x8] sm:$0xff]
    %v146 = vld [vmem:[%s2 + $0x10] sm:$0xff]
    %v147 = vld [vmem:[%s2 + $0x18] sm:$0x33]
    %v148 = vunpack.c.l.bf16 %v144
    %v149 = vunpack.c.h.bf16 %v144
    %v150 = vunpack.c.l.bf16 %v145
    %v151 = vunpack.c.h.bf16 %v145
    %v152 = vunpack.c.l.bf16 %v146
    %v153 = vunpack.c.h.bf16 %v146
    %v154 = vunpack.c.l.bf16 %v147
    %v155 = vunpack.c.h.bf16 %v147
    %s156 = scalar_lea.vmem %s2, 32
    %v157 = vld [vmem:[%s156] sm:$0xff]
    %v158 = vld [vmem:[%s156 + $0x8] sm:$0xff]
    %v159 = vld [vmem:[%s156 + $0x10] sm:$0xff]
    %v160 = vld [vmem:[%s156 + $0x18] sm:$0x33]
    %v161 = vunpack.c.l.bf16 %v157
    %v162 = vunpack.c.h.bf16 %v157
    %v163 = vunpack.c.l.bf16 %v158
    %v164 = vunpack.c.h.bf16 %v158
    %v165 = vunpack.c.l.bf16 %v159
    %v166 = vunpack.c.h.bf16 %v159
    %v167 = vunpack.c.l.bf16 %v160
    %v168 = vunpack.c.h.bf16 %v160
    %vm169 = vcmask 228352
    %v171 = vsel %vm169, %v116, 0
    %v174 = vsel %vm169, %v118, 0
    %v177 = vsel %vm169, %v120, 0
    %v180 = vsel %vm169, %v122, 0
    %v183 = vsel %vm169, %v124, 0
    %v186 = vsel %vm169, %v126, 0
    %v189 = vsel %vm169, %v128, 0
    %v192 = vsel %vm169, %v130, 0
    %v195 = vsel %vm169, %v132, 0
    %v198 = vsel %vm169, %v134, 0
    %v201 = vsel %vm169, %v136, 0
    %v204 = vsel %vm169, %v138, 0
    %v207 = vsel %vm169, %v140, 0
    %v210 = vsel %vm169, %v142, 0
    %vm212 = vcmask 1043456
    %v214 = vsel %vm212, %v167, 0
    %v217 = vsel %vm212, %v168, 0
    %219 = vmatprep.subr.mxu0 %v162
    %220 = vmatpush1.msra.mxu0 %v161
    %221 = vmatprep.subr.mxu0 %v164
    %222 = vmatpush1.msra.mxu0 %v163
    %223 = vmatprep.subr.mxu0 %v166
    %224 = vmatpush1.msra.mxu0 %v165
    %225 = vmatprep.subr.mxu0 %v217
    %226 = vmatpush1.msra.mxu0 %v214
    %227 = vmatprep.subr.mxu0 0.0
    %228 = vmatpush1.msra.mxu0 0.0
    %229 = vmatprep.subr.mxu0 0.0
    %230 = vmatpush1.msra.mxu0 0.0
    %231 = vmatprep.subr.mxu0 0.0
    %232 = vmatpush1.msra.mxu0 0.0
    %233 = vmatprep.subr.mxu0 0.0
    %234 = vmatpush1.msra.mxu0 0.0
    %235 = vmatprep.subr.mxu0 0.0
    %236 = vmatpush1.msra.mxu0 0.0
    %237 = vmatprep.subr.mxu0 0.0
    %238 = vmatpush1.msra.mxu0 0.0
    %239 = vmatprep.subr.mxu0 0.0
    %240 = vmatpush1.msra.mxu0 0.0
    %241 = vmatprep.subr.mxu0 0.0
    %242 = vmatpush1.msra.mxu0 0.0
    %243 = vmatprep.subr.mxu0 0.0
    %244 = vmatpush1.msra.mxu0 0.0
    %245 = vmatprep.subr.mxu0 0.0
    %246 = vmatpush1.msra.mxu0 0.0
    %247 = vmatprep.subr.mxu0 0.0
    %248 = vmatpush1.msra.mxu0 0.0
    %249 = vmatprep.subr.mxu0 0.0
    %250 = vmatpush1.msra.mxu0 0.0
    %251 = vmatprep.subr.mxu0 0.0
    %252 = vmatpush1.msra.mxu0 0.0
    %253 = vmatprep.subr.mxu0 0.0
    %254 = vmatpush1.msra.mxu0 0.0
    %255 = vmatprep.subr.mxu0 0.0
    %256 = vmatpush1.msra.mxu0 0.0
    %257 = vmatprep.subr.mxu0 0.0
    %258 = vmatpush1.msra.mxu0 0.0
    %259 = vmatprep.subr.mxu0 0.0
    %260 = vmatpush1.msra.mxu0 0.0
    %261 = vmatprep.subr.mxu0 0.0
    %262 = vmatpush1.msra.mxu0 0.0
    %263 = vmatprep.subr.mxu0 0.0
    %264 = vmatpush1.msra.mxu0 0.0
    %265 = vmatprep.subr.mxu0 0.0
    %266 = vmatpush1.msra.mxu0 0.0
    %267 = vmatprep.subr.mxu0 0.0
    %268 = vmatpush1.msra.mxu0 0.0
    %269 = vmatprep.subr.mxu0 0.0
    %270 = vmatpush1.msra.mxu0 0.0
    %271 = vmatprep.subr.mxu0 0.0
    %272 = vmatpush1.msra.mxu0 0.0
    %273 = vmatprep.subr.mxu0 0.0
    %274 = vmatpush1.msra.mxu0 0.0
    %275 = vmatprep.subr.mxu0 0.0
    %276 = vmatpush1.msra.mxu0 0.0
    %277 = vmatprep.subr.mxu0 0.0
    %278 = vmatpush1.msra.mxu0 0.0
    %279 = vmatprep.subr.mxu0 0.0
    %280 = vmatpush1.msra.mxu0 0.0
    %281 = vmatprep.subr.mxu0 0.0
    %282 = vmatpush1.msra.mxu0 0.0
    %283 = vmatprep.mubr.f32.mxu0 0.0
    %284 = vmatmul.mubr.f32.gmra.mrb[0].mxu0 %v171
    %v285 = vpop.f32.mrb[0].mxu0
    %v286 = vadd.f32 0.0, %v285
    %v287 = vpop.f32.mrb[0].mxu0
    %v288 = vadd.f32 0.0, %v287
    %289 = vmatprep.mubr.f32.mxu0 0.0
    %290 = vmatmul.mubr.f32.gmra.mrb[0].mxu0 %v174
    %v291 = vpop.f32.mrb[0].mxu0
    %v292 = vadd.f32 0.0, %v291
    %v293 = vpop.f32.mrb[0].mxu0
    %v294 = vadd.f32 0.0, %v293
    %295 = vmatprep.mubr.f32.mxu0 0.0
    %296 = vmatmul.mubr.f32.gmra.mrb[0].mxu0 %v177
    %v297 = vpop.f32.mrb[0].mxu0
    %v298 = vadd.f32 0.0, %v297
    %v299 = vpop.f32.mrb[0].mxu0
    %v300 = vadd.f32 0.0, %v299
    %301 = vmatprep.mubr.f32.mxu0 0.0
    %302 = vmatmul.mubr.f32.gmra.mrb[0].mxu0 %v180
    %v303 = vpop.f32.mrb[0].mxu0
    %v304 = vadd.f32 0.0, %v303
    %v305 = vpop.f32.mrb[0].mxu0
    %v306 = vadd.f32 0.0, %v305
    %307 = vmatprep.mubr.f32.mxu0 0.0
    %308 = vmatmul.mubr.f32.gmra.mrb[0].mxu0 %v183
    %v309 = vpop.f32.mrb[0].mxu0
    %v310 = vadd.f32 0.0, %v309
    %v311 = vpop.f32.mrb[0].mxu0
    %v312 = vadd.f32 0.0, %v311
    %313 = vmatprep.mubr.f32.mxu0 0.0
    %314 = vmatmul.mubr.f32.gmra.mrb[0].mxu0 %v186
    %v315 = vpop.f32.mrb[0].mxu0
    %v316 = vadd.f32 0.0, %v315
    %v317 = vpop.f32.mrb[0].mxu0
    %v318 = vadd.f32 0.0, %v317
    %319 = vmatprep.mubr.f32.mxu0 0.0
    %320 = vmatmul.mubr.f32.gmra.mrb[0].mxu0 %v189
    %v321 = vpop.f32.mrb[0].mxu0
    %v322 = vadd.f32 0.0, %v321
    %v323 = vpop.f32.mrb[0].mxu0
    %v324 = vadd.f32 0.0, %v323
    %325 = vmatprep.mubr.f32.mxu0 0.0
    %326 = vmatmul.mubr.f32.gmra.mrb[0].mxu0 %v192
    %v327 = vpop.f32.mrb[0].mxu0
    %v328 = vadd.f32 0.0, %v327
    %v329 = vpop.f32.mrb[0].mxu0
    %v330 = vadd.f32 0.0, %v329
    %331 = vmatprep.mubr.f32.mxu0 0.0
    %332 = vmatmul.mubr.f32.gmra.mrb[0].mxu0 %v195
    %v333 = vpop.f32.mrb[0].mxu0
    %v334 = vadd.f32 0.0, %v333
    %v335 = vpop.f32.mrb[0].mxu0
    %v336 = vadd.f32 0.0, %v335
    %337 = vmatprep.mubr.f32.mxu0 0.0
    %338 = vmatmul.mubr.f32.gmra.mrb[0].mxu0 %v198
    %v339 = vpop.f32.mrb[0].mxu0
    %v340 = vadd.f32 0.0, %v339
    %v341 = vpop.f32.mrb[0].mxu0
    %v342 = vadd.f32 0.0, %v341
    %343 = vmatprep.mubr.f32.mxu0 0.0
    %344 = vmatmul.mubr.f32.gmra.mrb[0].mxu0 %v201
    %v345 = vpop.f32.mrb[0].mxu0
    %v346 = vadd.f32 0.0, %v345
    %v347 = vpop.f32.mrb[0].mxu0
    %v348 = vadd.f32 0.0, %v347
    %349 = vmatprep.mubr.f32.mxu0 0.0
    %350 = vmatmul.mubr.f32.gmra.mrb[0].mxu0 %v204
    %v351 = vpop.f32.mrb[0].mxu0
    %v352 = vadd.f32 0.0, %v351
    %v353 = vpop.f32.mrb[0].mxu0
    %v354 = vadd.f32 0.0, %v353
    %355 = vmatprep.mubr.f32.mxu0 0.0
    %356 = vmatmul.mubr.f32.gmra.mrb[0].mxu0 %v207
    %v357 = vpop.f32.mrb[0].mxu0
    %v358 = vadd.f32 0.0, %v357
    %v359 = vpop.f32.mrb[0].mxu0
    %v360 = vadd.f32 0.0, %v359
    %361 = vmatprep.mubr.f32.mxu0 0.0
    %362 = vmatmul.mubr.f32.gmra.mrb[0].mxu0 %v210
    %v363 = vpop.f32.mrb[0].mxu0
    %v364 = vadd.f32 0.0, %v363
    %v365 = vpop.f32.mrb[0].mxu0
    %v366 = vadd.f32 0.0, %v365
    %367 = vdwg.mxu0
    %v369 = vsel %vm169, 0.0, 0
    %v372 = vsel %vm169, %v117, 0
    %v375 = vsel %vm169, %v119, 0
    %v378 = vsel %vm169, %v121, 0
    %v381 = vsel %vm169, %v123, 0
    %v384 = vsel %vm169, %v125, 0
    %v387 = vsel %vm169, %v127, 0
    %v390 = vsel %vm169, %v129, 0
    %v393 = vsel %vm169, %v131, 0
    %v396 = vsel %vm169, %v133, 0
    %v399 = vsel %vm169, %v135, 0
    %v402 = vsel %vm169, %v137, 0
    %v405 = vsel %vm169, %v139, 0
    %v408 = vsel %vm169, %v141, 0
    %v411 = vsel %vm212, %v154, 0
    %v414 = vsel %vm212, %v155, 0
    %416 = vmatprep.subr.mxu0 %v149
    %417 = vmatpush1.msra.mxu0 %v148
    %418 = vmatprep.subr.mxu0 %v151
    %419 = vmatpush1.msra.mxu0 %v150
    %420 = vmatprep.subr.mxu0 %v153
    %421 = vmatpush1.msra.mxu0 %v152
    %422 = vmatprep.subr.mxu0 %v414
    %423 = vmatpush1.msra.mxu0 %v411
    %424 = vmatprep.subr.mxu0 0.0
    %425 = vmatpush1.msra.mxu0 0.0
    %426 = vmatprep.subr.mxu0 0.0
    %427 = vmatpush1.msra.mxu0 0.0
    %428 = vmatprep.subr.mxu0 0.0
    %429 = vmatpush1.msra.mxu0 0.0
    %430 = vmatprep.subr.mxu0 0.0
    %431 = vmatpush1.msra.mxu0 0.0
    %432 = vmatprep.subr.mxu0 0.0
    %433 = vmatpush1.msra.mxu0 0.0
    %434 = vmatprep.subr.mxu0 0.0
    %435 = vmatpush1.msra.mxu0 0.0
    %436 = vmatprep.subr.mxu0 0.0
    %437 = vmatpush1.msra.mxu0 0.0
    %438 = vmatprep.subr.mxu0 0.0
    %439 = vmatpush1.msra.mxu0 0.0
    %440 = vmatprep.subr.mxu0 0.0
    %441 = vmatpush1.msra.mxu0 0.0
    %442 = vmatprep.subr.mxu0 0.0
    %443 = vmatpush1.msra.mxu0 0.0
    %444 = vmatprep.subr.mxu0 0.0
    %445 = vmatpush1.msra.mxu0 0.0
    %446 = vmatprep.subr.mxu0 0.0
    %447 = vmatpush1.msra.mxu0 0.0
    %448 = vmatprep.subr.mxu0 0.0
    %449 = vmatpush1.msra.mxu0 0.0
    %450 = vmatprep.subr.mxu0 0.0
    %451 = vmatpush1.msra.mxu0 0.0
    %452 = vmatprep.subr.mxu0 0.0
    %453 = vmatpush1.msra.mxu0 0.0
    %454 = vmatprep.subr.mxu0 0.0
    %455 = vmatpush1.msra.mxu0 0.0
    %456 = vmatprep.subr.mxu0 0.0
    %457 = vmatpush1.msra.mxu0 0.0
    %458 = vmatprep.subr.mxu0 0.0
    %459 = vmatpush1.msra.mxu0 0.0
    %460 = vmatprep.subr.mxu0 0.0
    %461 = vmatpush1.msra.mxu0 0.0
    %462 = vmatprep.subr.mxu0 0.0
    %463 = vmatpush1.msra.mxu0 0.0
    %464 = vmatprep.subr.mxu0 0.0
    %465 = vmatpush1.msra.mxu0 0.0
    %466 = vmatprep.subr.mxu0 0.0
    %467 = vmatpush1.msra.mxu0 0.0
    %468 = vmatprep.subr.mxu0 0.0
    %469 = vmatpush1.msra.mxu0 0.0
    %470 = vmatprep.subr.mxu0 0.0
    %471 = vmatpush1.msra.mxu0 0.0
    %472 = vmatprep.subr.mxu0 0.0
    %473 = vmatpush1.msra.mxu0 0.0
    %474 = vmatprep.subr.mxu0 0.0
    %475 = vmatpush1.msra.mxu0 0.0
    %476 = vmatprep.subr.mxu0 0.0
    %477 = vmatpush1.msra.mxu0 0.0
    %478 = vmatprep.subr.mxu0 0.0
    %479 = vmatpush1.msra.mxu0 0.0
    %480 = vmatprep.mubr.f32.mxu0 0.0
    %481 = vmatmul.mubr.f32.gmra.mrb[0].mxu0 %v369
    %v482 = vpop.f32.mrb[0].mxu0
    %v483 = vadd.f32 %v286, %v482
    %v484 = vpop.f32.mrb[0].mxu0
    %v485 = vadd.f32 %v288, %v484
    %486 = vmatprep.mubr.f32.mxu0 0.0
    %487 = vmatmul.mubr.f32.gmra.mrb[0].mxu0 %v372
    %v488 = vpop.f32.mrb[0].mxu0
    %v489 = vadd.f32 %v292, %v488
    %v490 = vpop.f32.mrb[0].mxu0
    %v491 = vadd.f32 %v294, %v490
    %492 = vmatprep.mubr.f32.mxu0 0.0
    %493 = vmatmul.mubr.f32.gmra.mrb[0].mxu0 %v375
    %v494 = vpop.f32.mrb[0].mxu0
    %v495 = vadd.f32 %v298, %v494
    %v496 = vpop.f32.mrb[0].mxu0
    %v497 = vadd.f32 %v300, %v496
    %498 = vmatprep.mubr.f32.mxu0 0.0
    %499 = vmatmul.mubr.f32.gmra.mrb[0].mxu0 %v378
    %v500 = vpop.f32.mrb[0].mxu0
    %v501 = vadd.f32 %v304, %v500
    %v502 = vpop.f32.mrb[0].mxu0
    %v503 = vadd.f32 %v306, %v502
    %504 = vmatprep.mubr.f32.mxu0 0.0
    %505 = vmatmul.mubr.f32.gmra.mrb[0].mxu0 %v381
    %v506 = vpop.f32.mrb[0].mxu0
    %v507 = vadd.f32 %v310, %v506
    %v508 = vpop.f32.mrb[0].mxu0
    %v509 = vadd.f32 %v312, %v508
    %510 = vmatprep.mubr.f32.mxu0 0.0
    %511 = vmatmul.mubr.f32.gmra.mrb[0].mxu0 %v384
    %v512 = vpop.f32.mrb[0].mxu0
    %v513 = vadd.f32 %v316, %v512
    %v514 = vpop.f32.mrb[0].mxu0
    %v515 = vadd.f32 %v318, %v514
    %516 = vmatprep.mubr.f32.mxu0 0.0
    %517 = vmatmul.mubr.f32.gmra.mrb[0].mxu0 %v387
    %v518 = vpop.f32.mrb[0].mxu0
    %v519 = vadd.f32 %v322, %v518
    %v520 = vpop.f32.mrb[0].mxu0
    %v521 = vadd.f32 %v324, %v520
    %522 = vmatprep.mubr.f32.mxu0 0.0
    %523 = vmatmul.mubr.f32.gmra.mrb[0].mxu0 %v390
    %v524 = vpop.f32.mrb[0].mxu0
    %v525 = vadd.f32 %v328, %v524
    %v526 = vpop.f32.mrb[0].mxu0
    %v527 = vadd.f32 %v330, %v526
    %528 = vmatprep.mubr.f32.mxu0 0.0
    %529 = vmatmul.mubr.f32.gmra.mrb[0].mxu0 %v393
    %v530 = vpop.f32.mrb[0].mxu0
    %v531 = vadd.f32 %v334, %v530
    %v532 = vpop.f32.mrb[0].mxu0
    %v533 = vadd.f32 %v336, %v532
    %534 = vmatprep.mubr.f32.mxu0 0.0
    %535 = vmatmul.mubr.f32.gmra.mrb[0].mxu0 %v396
    %v536 = vpop.f32.mrb[0].mxu0
    %v537 = vadd.f32 %v340, %v536
    %v538 = vpop.f32.mrb[0].mxu0
    %v539 = vadd.f32 %v342, %v538
    %540 = vmatprep.mubr.f32.mxu0 0.0
    %541 = vmatmul.mubr.f32.gmra.mrb[0].mxu0 %v399
    %v542 = vpop.f32.mrb[0].mxu0
    %v543 = vadd.f32 %v346, %v542
    %v544 = vpop.f32.mrb[0].mxu0
    %v545 = vadd.f32 %v348, %v544
    %546 = vmatprep.mubr.f32.mxu0 0.0
    %547 = vmatmul.mubr.f32.gmra.mrb[0].mxu0 %v402
    %v548 = vpop.f32.mrb[0].mxu0
    %v549 = vadd.f32 %v352, %v548
    %v550 = vpop.f32.mrb[0].mxu0
    %v551 = vadd.f32 %v354, %v550
    %552 = vmatprep.mubr.f32.mxu0 0.0
    %553 = vmatmul.mubr.f32.gmra.mrb[0].mxu0 %v405
    %v554 = vpop.f32.mrb[0].mxu0
    %v555 = vadd.f32 %v358, %v554
    %v556 = vpop.f32.mrb[0].mxu0
    %v557 = vadd.f32 %v360, %v556
    %558 = vmatprep.mubr.f32.mxu0 0.0
    %559 = vmatmul.mubr.f32.gmra.mrb[0].mxu0 %v408
    %v560 = vpop.f32.mrb[0].mxu0
    %v561 = vadd.f32 %v364, %v560
    %v562 = vpop.f32.mrb[0].mxu0
    %v563 = vadd.f32 %v366, %v562
    %564 = vdwg.mxu0
    %s565 = scalar_lea.vmem %s2, 64
    %v566 = vld [vmem:[%s565] sm:$0xff]
    %v567 = vld [vmem:[%s565 + $0x8] sm:$0xff]
    %v568 = vld [vmem:[%s565 + $0x10] sm:$0xff]
    %v569 = vld [vmem:[%s565 + $0x18] sm:$0x33]
    %v570 = vunpack.c.l.bf16 %v566
    %v571 = vunpack.c.h.bf16 %v566
    %v572 = vunpack.c.l.bf16 %v567
    %v573 = vunpack.c.h.bf16 %v567
    %v574 = vunpack.c.l.bf16 %v568
    %v575 = vunpack.c.h.bf16 %v568
    %v576 = vunpack.c.l.bf16 %v569
    %v577 = vunpack.c.h.bf16 %v569
    %v579 = vsel %vm169, %v143, 0
    %v582 = vsel %vm212, %v576, 0
    %v585 = vsel %vm212, %v577, 0
    %587 = vmatprep.subr.mxu0 %v571
    %588 = vmatpush1.msra.mxu0 %v570
    %589 = vmatprep.subr.mxu0 %v573
    %590 = vmatpush1.msra.mxu0 %v572
    %591 = vmatprep.subr.mxu0 %v575
    %592 = vmatpush1.msra.mxu0 %v574
    %593 = vmatprep.subr.mxu0 %v585
    %594 = vmatpush1.msra.mxu0 %v582
    %595 = vmatprep.subr.mxu0 0.0
    %596 = vmatpush1.msra.mxu0 0.0
    %597 = vmatprep.subr.mxu0 0.0
    %598 = vmatpush1.msra.mxu0 0.0
    %599 = vmatprep.subr.mxu0 0.0
    %600 = vmatpush1.msra.mxu0 0.0
    %601 = vmatprep.subr.mxu0 0.0
    %602 = vmatpush1.msra.mxu0 0.0
    %603 = vmatprep.subr.mxu0 0.0
    %604 = vmatpush1.msra.mxu0 0.0
    %605 = vmatprep.subr.mxu0 0.0
    %606 = vmatpush1.msra.mxu0 0.0
    %607 = vmatprep.subr.mxu0 0.0
    %608 = vmatpush1.msra.mxu0 0.0
    %609 = vmatprep.subr.mxu0 0.0
    %610 = vmatpush1.msra.mxu0 0.0
    %611 = vmatprep.subr.mxu0 0.0
    %612 = vmatpush1.msra.mxu0 0.0
    %613 = vmatprep.subr.mxu0 0.0
    %614 = vmatpush1.msra.mxu0 0.0
    %615 = vmatprep.subr.mxu0 0.0
    %616 = vmatpush1.msra.mxu0 0.0
    %617 = vmatprep.subr.mxu0 0.0
    %618 = vmatpush1.msra.mxu0 0.0
    %619 = vmatprep.subr.mxu0 0.0
    %620 = vmatpush1.msra.mxu0 0.0
    %621 = vmatprep.subr.mxu0 0.0
    %622 = vmatpush1.msra.mxu0 0.0
    %623 = vmatprep.subr.mxu0 0.0
    %624 = vmatpush1.msra.mxu0 0.0
    %625 = vmatprep.subr.mxu0 0.0
    %626 = vmatpush1.msra.mxu0 0.0
    %627 = vmatprep.subr.mxu0 0.0
    %628 = vmatpush1.msra.mxu0 0.0
    %629 = vmatprep.subr.mxu0 0.0
    %630 = vmatpush1.msra.mxu0 0.0
    %631 = vmatprep.subr.mxu0 0.0
    %632 = vmatpush1.msra.mxu0 0.0
    %633 = vmatprep.subr.mxu0 0.0
    %634 = vmatpush1.msra.mxu0 0.0
    %635 = vmatprep.subr.mxu0 0.0
    %636 = vmatpush1.msra.mxu0 0.0
    %637 = vmatprep.subr.mxu0 0.0
    %638 = vmatpush1.msra.mxu0 0.0
    %639 = vmatprep.subr.mxu0 0.0
    %640 = vmatpush1.msra.mxu0 0.0
    %641 = vmatprep.subr.mxu0 0.0
    %642 = vmatpush1.msra.mxu0 0.0
    %643 = vmatprep.subr.mxu0 0.0
    %644 = vmatpush1.msra.mxu0 0.0
    %645 = vmatprep.subr.mxu0 0.0
    %646 = vmatpush1.msra.mxu0 0.0
    %647 = vmatprep.subr.mxu0 0.0
    %648 = vmatpush1.msra.mxu0 0.0
    %649 = vmatprep.subr.mxu0 0.0
    %650 = vmatpush1.msra.mxu0 0.0
    %651 = vmatprep.mubr.f32.mxu0 0.0
    %652 = vmatmul.mubr.f32.gmra.mrb[0].mxu0 %v372
    %v653 = vpop.f32.mrb[0].mxu0
    %v654 = vadd.f32 0.0, %v653
    %v655 = vpop.f32.mrb[0].mxu0
    %v656 = vadd.f32 0.0, %v655
    %657 = vmatprep.mubr.f32.mxu0 0.0
    %658 = vmatmul.mubr.f32.gmra.mrb[0].mxu0 %v375
    %v659 = vpop.f32.mrb[0].mxu0
    %v660 = vadd.f32 0.0, %v659
    %v661 = vpop.f32.mrb[0].mxu0
    %v662 = vadd.f32 0.0, %v661
    %663 = vmatprep.mubr.f32.mxu0 0.0
    %664 = vmatmul.mubr.f32.gmra.mrb[0].mxu0 %v378
    %v665 = vpop.f32.mrb[0].mxu0
    %v666 = vadd.f32 0.0, %v665
    %v667 = vpop.f32.mrb[0].mxu0
    %v668 = vadd.f32 0.0, %v667
    %669 = vmatprep.mubr.f32.mxu0 0.0
    %670 = vmatmul.mubr.f32.gmra.mrb[0].mxu0 %v381
    %v671 = vpop.f32.mrb[0].mxu0
    %v672 = vadd.f32 0.0, %v671
    %v673 = vpop.f32.mrb[0].mxu0
    %v674 = vadd.f32 0.0, %v673
    %675 = vmatprep.mubr.f32.mxu0 0.0
    %676 = vmatmul.mubr.f32.gmra.mrb[0].mxu0 %v384
    %v677 = vpop.f32.mrb[0].mxu0
    %v678 = vadd.f32 0.0, %v677
    %v679 = vpop.f32.mrb[0].mxu0
    %v680 = vadd.f32 0.0, %v679
    %681 = vmatprep.mubr.f32.mxu0 0.0
    %682 = vmatmul.mubr.f32.gmra.mrb[0].mxu0 %v387
    %v683 = vpop.f32.mrb[0].mxu0
    %v684 = vadd.f32 0.0, %v683
    %v685 = vpop.f32.mrb[0].mxu0
    %v686 = vadd.f32 0.0, %v685
    %687 = vmatprep.mubr.f32.mxu0 0.0
    %688 = vmatmul.mubr.f32.gmra.mrb[0].mxu0 %v390
    %v689 = vpop.f32.mrb[0].mxu0
    %v690 = vadd.f32 0.0, %v689
    %v691 = vpop.f32.mrb[0].mxu0
    %v692 = vadd.f32 0.0, %v691
    %693 = vmatprep.mubr.f32.mxu0 0.0
    %694 = vmatmul.mubr.f32.gmra.mrb[0].mxu0 %v393
    %v695 = vpop.f32.mrb[0].mxu0
    %v696 = vadd.f32 0.0, %v695
    %v697 = vpop.f32.mrb[0].mxu0
    %v698 = vadd.f32 0.0, %v697
    %699 = vmatprep.mubr.f32.mxu0 0.0
    %700 = vmatmul.mubr.f32.gmra.mrb[0].mxu0 %v396
    %v701 = vpop.f32.mrb[0].mxu0
    %v702 = vadd.f32 0.0, %v701
    %v703 = vpop.f32.mrb[0].mxu0
    %v704 = vadd.f32 0.0, %v703
    %705 = vmatprep.mubr.f32.mxu0 0.0
    %706 = vmatmul.mubr.f32.gmra.mrb[0].mxu0 %v399
    %v707 = vpop.f32.mrb[0].mxu0
    %v708 = vadd.f32 0.0, %v707
    %v709 = vpop.f32.mrb[0].mxu0
    %v710 = vadd.f32 0.0, %v709
    %711 = vmatprep.mubr.f32.mxu0 0.0
    %712 = vmatmul.mubr.f32.gmra.mrb[0].mxu0 %v402
    %v713 = vpop.f32.mrb[0].mxu0
    %v714 = vadd.f32 0.0, %v713
    %v715 = vpop.f32.mrb[0].mxu0
    %v716 = vadd.f32 0.0, %v715
    %717 = vmatprep.mubr.f32.mxu0 0.0
    %718 = vmatmul.mubr.f32.gmra.mrb[0].mxu0 %v405
    %v719 = vpop.f32.mrb[0].mxu0
    %v720 = vadd.f32 0.0, %v719
    %v721 = vpop.f32.mrb[0].mxu0
    %v722 = vadd.f32 0.0, %v721
    %723 = vmatprep.mubr.f32.mxu0 0.0
    %724 = vmatmul.mubr.f32.gmra.mrb[0].mxu0 %v408
    %v725 = vpop.f32.mrb[0].mxu0
    %v726 = vadd.f32 0.0, %v725
    %v727 = vpop.f32.mrb[0].mxu0
    %v728 = vadd.f32 0.0, %v727
    %729 = vmatprep.mubr.f32.mxu0 0.0
    %730 = vmatmul.mubr.f32.gmra.mrb[0].mxu0 %v579
    %v731 = vpop.f32.mrb[0].mxu0
    %v732 = vadd.f32 0.0, %v731
    %v733 = vpop.f32.mrb[0].mxu0
    %v734 = vadd.f32 0.0, %v733
    %735 = vdwg.mxu0
    %v736 = vadd.f32 %v483, %v654
    %v737 = vadd.f32 %v485, %v656
    %v738 = vadd.f32 %v489, %v660
    %v739 = vadd.f32 %v491, %v662
    %v740 = vadd.f32 %v495, %v666
    %v741 = vadd.f32 %v497, %v668
    %v742 = vadd.f32 %v501, %v672
    %v743 = vadd.f32 %v503, %v674
    %v744 = vadd.f32 %v507, %v678
    %v745 = vadd.f32 %v509, %v680
    %v746 = vadd.f32 %v513, %v684
    %v747 = vadd.f32 %v515, %v686
    %v748 = vadd.f32 %v519, %v690
    %v749 = vadd.f32 %v521, %v692
    %v750 = vadd.f32 %v525, %v696
    %v751 = vadd.f32 %v527, %v698
    %v752 = vadd.f32 %v531, %v702
    %v753 = vadd.f32 %v533, %v704
    %v754 = vadd.f32 %v537, %v708
    %v755 = vadd.f32 %v539, %v710
    %v756 = vadd.f32 %v543, %v714
    %v757 = vadd.f32 %v545, %v716
    %v758 = vadd.f32 %v549, %v720
    %v759 = vadd.f32 %v551, %v722
    %v760 = vadd.f32 %v555, %v726
    %v761 = vadd.f32 %v557, %v728
    %v762 = vadd.f32 %v561, %v732
    %v763 = vadd.f32 %v563, %v734
    %s764 = scalar_lea.vmem %s2, 96
    %v765 = vld [vmem:[%s764] sm:$0xff]
    %v766 = vld [vmem:[%s764 + $0x8] sm:$0xff]
    %v767 = vld [vmem:[%s764 + $0x10] sm:$0xff]
    %v768 = vld [vmem:[%s764 + $0x18] sm:$0x33]
    %v769 = vunpack.c.l.bf16 %v765
    %v770 = vunpack.c.h.bf16 %v765
    %v771 = vunpack.c.l.bf16 %v766
    %v772 = vunpack.c.h.bf16 %v766
    %v773 = vunpack.c.l.bf16 %v767
    %v774 = vunpack.c.h.bf16 %v767
    %v775 = vunpack.c.l.bf16 %v768
    %v776 = vunpack.c.h.bf16 %v768
    %v778 = vsel %vm212, %v775, 0
    %v781 = vsel %vm212, %v776, 0
    %783 = vmatprep.subr.mxu0 %v770
    %784 = vmatpush1.msra.mxu0 %v769
    %785 = vmatprep.subr.mxu0 %v772
    %786 = vmatpush1.msra.mxu0 %v771
    %787 = vmatprep.subr.mxu0 %v774
    %788 = vmatpush1.msra.mxu0 %v773
    %789 = vmatprep.subr.mxu0 %v781
    %790 = vmatpush1.msra.mxu0 %v778
    %791 = vmatprep.subr.mxu0 0.0
    %792 = vmatpush1.msra.mxu0 0.0
    %793 = vmatprep.subr.mxu0 0.0
    %794 = vmatpush1.msra.mxu0 0.0
    %795 = vmatprep.subr.mxu0 0.0
    %796 = vmatpush1.msra.mxu0 0.0
    %797 = vmatprep.subr.mxu0 0.0
    %798 = vmatpush1.msra.mxu0 0.0
    %799 = vmatprep.subr.mxu0 0.0
    %800 = vmatpush1.msra.mxu0 0.0
    %801 = vmatprep.subr.mxu0 0.0
    %802 = vmatpush1.msra.mxu0 0.0
    %803 = vmatprep.subr.mxu0 0.0
    %804 = vmatpush1.msra.mxu0 0.0
    %805 = vmatprep.subr.mxu0 0.0
    %806 = vmatpush1.msra.mxu0 0.0
    %807 = vmatprep.subr.mxu0 0.0
    %808 = vmatpush1.msra.mxu0 0.0
    %809 = vmatprep.subr.mxu0 0.0
    %810 = vmatpush1.msra.mxu0 0.0
    %811 = vmatprep.subr.mxu0 0.0
    %812 = vmatpush1.msra.mxu0 0.0
    %813 = vmatprep.subr.mxu0 0.0
    %814 = vmatpush1.msra.mxu0 0.0
    %815 = vmatprep.subr.mxu0 0.0
    %816 = vmatpush1.msra.mxu0 0.0
    %817 = vmatprep.subr.mxu0 0.0
    %818 = vmatpush1.msra.mxu0 0.0
    %819 = vmatprep.subr.mxu0 0.0
    %820 = vmatpush1.msra.mxu0 0.0
    %821 = vmatprep.subr.mxu0 0.0
    %822 = vmatpush1.msra.mxu0 0.0
    %823 = vmatprep.subr.mxu0 0.0
    %824 = vmatpush1.msra.mxu0 0.0
    %825 = vmatprep.subr.mxu0 0.0
    %826 = vmatpush1.msra.mxu0 0.0
    %827 = vmatprep.subr.mxu0 0.0
    %828 = vmatpush1.msra.mxu0 0.0
    %829 = vmatprep.subr.mxu0 0.0
    %830 = vmatpush1.msra.mxu0 0.0
    %831 = vmatprep.subr.mxu0 0.0
    %832 = vmatpush1.msra.mxu0 0.0
    %833 = vmatprep.subr.mxu0 0.0
    %834 = vmatpush1.msra.mxu0 0.0
    %835 = vmatprep.subr.mxu0 0.0
    %836 = vmatpush1.msra.mxu0 0.0
    %837 = vmatprep.subr.mxu0 0.0
    %838 = vmatpush1.msra.mxu0 0.0
    %839 = vmatprep.subr.mxu0 0.0
    %840 = vmatpush1.msra.mxu0 0.0
    %841 = vmatprep.subr.mxu0 0.0
    %842 = vmatpush1.msra.mxu0 0.0
    %843 = vmatprep.subr.mxu0 0.0
    %844 = vmatpush1.msra.mxu0 0.0
    %845 = vmatprep.subr.mxu0 0.0
    %846 = vmatpush1.msra.mxu0 0.0
    %847 = vmatprep.mubr.f32.mxu0 0.0
    %848 = vmatmul.mubr.f32.gmra.mrb[0].mxu0 %v174
    %v849 = vpop.f32.mrb[0].mxu0
    %v850 = vadd.f32 0.0, %v849
    %v851 = vpop.f32.mrb[0].mxu0
    %v852 = vadd.f32 0.0, %v851
    %853 = vmatprep.mubr.f32.mxu0 0.0
    %854 = vmatmul.mubr.f32.gmra.mrb[0].mxu0 %v177
    %v855 = vpop.f32.mrb[0].mxu0
    %v856 = vadd.f32 0.0, %v855
    %v857 = vpop.f32.mrb[0].mxu0
    %v858 = vadd.f32 0.0, %v857
    %859 = vmatprep.mubr.f32.mxu0 0.0
    %860 = vmatmul.mubr.f32.gmra.mrb[0].mxu0 %v180
    %v861 = vpop.f32.mrb[0].mxu0
    %v862 = vadd.f32 0.0, %v861
    %v863 = vpop.f32.mrb[0].mxu0
    %v864 = vadd.f32 0.0, %v863
    %865 = vmatprep.mubr.f32.mxu0 0.0
    %866 = vmatmul.mubr.f32.gmra.mrb[0].mxu0 %v183
    %v867 = vpop.f32.mrb[0].mxu0
    %v868 = vadd.f32 0.0, %v867
    %v869 = vpop.f32.mrb[0].mxu0
    %v870 = vadd.f32 0.0, %v869
    %871 = vmatprep.mubr.f32.mxu0 0.0
    %872 = vmatmul.mubr.f32.gmra.mrb[0].mxu0 %v186
    %v873 = vpop.f32.mrb[0].mxu0
    %v874 = vadd.f32 0.0, %v873
    %v875 = vpop.f32.mrb[0].mxu0
    %v876 = vadd.f32 0.0, %v875
    %877 = vmatprep.mubr.f32.mxu0 0.0
    %878 = vmatmul.mubr.f32.gmra.mrb[0].mxu0 %v189
    %v879 = vpop.f32.mrb[0].mxu0
    %v880 = vadd.f32 0.0, %v879
    %v881 = vpop.f32.mrb[0].mxu0
    %v882 = vadd.f32 0.0, %v881
    %883 = vmatprep.mubr.f32.mxu0 0.0
    %884 = vmatmul.mubr.f32.gmra.mrb[0].mxu0 %v192
    %v885 = vpop.f32.mrb[0].mxu0
    %v886 = vadd.f32 0.0, %v885
    %v887 = vpop.f32.mrb[0].mxu0
    %v888 = vadd.f32 0.0, %v887
    %889 = vmatprep.mubr.f32.mxu0 0.0
    %890 = vmatmul.mubr.f32.gmra.mrb[0].mxu0 %v195
    %v891 = vpop.f32.mrb[0].mxu0
    %v892 = vadd.f32 0.0, %v891
    %v893 = vpop.f32.mrb[0].mxu0
    %v894 = vadd.f32 0.0, %v893
    %895 = vmatprep.mubr.f32.mxu0 0.0
    %896 = vmatmul.mubr.f32.gmra.mrb[0].mxu0 %v198
    %v897 = vpop.f32.mrb[0].mxu0
    %v898 = vadd.f32 0.0, %v897
    %v899 = vpop.f32.mrb[0].mxu0
    %v900 = vadd.f32 0.0, %v899
    %901 = vmatprep.mubr.f32.mxu0 0.0
    %902 = vmatmul.mubr.f32.gmra.mrb[0].mxu0 %v201
    %v903 = vpop.f32.mrb[0].mxu0
    %v904 = vadd.f32 0.0, %v903
    %v905 = vpop.f32.mrb[0].mxu0
    %v906 = vadd.f32 0.0, %v905
    %907 = vmatprep.mubr.f32.mxu0 0.0
    %908 = vmatmul.mubr.f32.gmra.mrb[0].mxu0 %v204
    %v909 = vpop.f32.mrb[0].mxu0
    %v910 = vadd.f32 0.0, %v909
    %v911 = vpop.f32.mrb[0].mxu0
    %v912 = vadd.f32 0.0, %v911
    %913 = vmatprep.mubr.f32.mxu0 0.0
    %914 = vmatmul.mubr.f32.gmra.mrb[0].mxu0 %v207
    %v915 = vpop.f32.mrb[0].mxu0
    %v916 = vadd.f32 0.0, %v915
    %v917 = vpop.f32.mrb[0].mxu0
    %v918 = vadd.f32 0.0, %v917
    %919 = vmatprep.mubr.f32.mxu0 0.0
    %920 = vmatmul.mubr.f32.gmra.mrb[0].mxu0 %v210
    %v921 = vpop.f32.mrb[0].mxu0
    %v922 = vadd.f32 0.0, %v921
    %v923 = vpop.f32.mrb[0].mxu0
    %v924 = vadd.f32 0.0, %v923
    %925 = vmatprep.mubr.f32.mxu0 0.0
    %926 = vmatmul.mubr.f32.gmra.mrb[0].mxu0 %v369
    %v927 = vpop.f32.mrb[0].mxu0
    %v928 = vadd.f32 0.0, %v927
    %v929 = vpop.f32.mrb[0].mxu0
    %v930 = vadd.f32 0.0, %v929
    %931 = vdwg.mxu0
    %v932 = vadd.f32 %v736, %v850
    %v933 = vadd.f32 %v737, %v852
    %v934 = vadd.f32 %v738, %v856
    %v935 = vadd.f32 %v739, %v858
    %v936 = vadd.f32 %v740, %v862
    %v937 = vadd.f32 %v741, %v864
    %v938 = vadd.f32 %v742, %v868
    %v939 = vadd.f32 %v743, %v870
    %v940 = vadd.f32 %v744, %v874
    %v941 = vadd.f32 %v745, %v876
    %v942 = vadd.f32 %v746, %v880
    %v943 = vadd.f32 %v747, %v882
    %v944 = vadd.f32 %v748, %v886
    %v945 = vadd.f32 %v749, %v888
    %v946 = vadd.f32 %v750, %v892
    %v947 = vadd.f32 %v751, %v894
    %v948 = vadd.f32 %v752, %v898
    %v949 = vadd.f32 %v753, %v900
    %v950 = vadd.f32 %v754, %v904
    %v951 = vadd.f32 %v755, %v906
    %v952 = vadd.f32 %v756, %v910
    %v953 = vadd.f32 %v757, %v912
    %v954 = vadd.f32 %v758, %v916
    %v955 = vadd.f32 %v759, %v918
    %v956 = vadd.f32 %v760, %v922
    %v957 = vadd.f32 %v761, %v924
    %v958 = vadd.f32 %v762, %v928
    %v959 = vadd.f32 %v763, %v930
    %v960 = vmax.f32 %v932, 0.0
    %v961 = vmax.f32 %v933, 0.0
    %v962 = vmax.f32 %v934, 0.0
    %v963 = vmax.f32 %v935, 0.0
    %v964 = vmax.f32 %v936, 0.0
    %v965 = vmax.f32 %v937, 0.0
    %v966 = vmax.f32 %v938, 0.0
    %v967 = vmax.f32 %v939, 0.0
    %v968 = vmax.f32 %v940, 0.0
    %v969 = vmax.f32 %v941, 0.0
    %v970 = vmax.f32 %v942, 0.0
    %v971 = vmax.f32 %v943, 0.0
    %v972 = vmax.f32 %v944, 0.0
    %v973 = vmax.f32 %v945, 0.0
    %v974 = vmax.f32 %v946, 0.0
    %v975 = vmax.f32 %v947, 0.0
    %v976 = vmax.f32 %v948, 0.0
    %v977 = vmax.f32 %v949, 0.0
    %v978 = vmax.f32 %v950, 0.0
    %v979 = vmax.f32 %v951, 0.0
    %v980 = vmax.f32 %v952, 0.0
    %v981 = vmax.f32 %v953, 0.0
    %v982 = vmax.f32 %v954, 0.0
    %v983 = vmax.f32 %v955, 0.0
    %v984 = vmax.f32 %v956, 0.0
    %v985 = vmax.f32 %v957, 0.0
    %v986 = vmax.f32 %v958, 0.0
    %v987 = vmax.f32 %v959, 0.0
    %v988 = vld [vmem:[%s3] sm:$0xff]
    %v989 = vld [vmem:[%s3 + $0x8] sm:$0xff]
    %v990 = vld [vmem:[%s3 + $0x10] sm:$0xff]
    %v991 = vld [vmem:[%s3 + $0x18] sm:$0xff]
    %v992 = vld [vmem:[%s3 + $0x20] sm:$0xff]
    %v993 = vld [vmem:[%s3 + $0x28] sm:$0xff]
    %v994 = vld [vmem:[%s3 + $0x30] sm:$0xff]
    %v995 = vld [vmem:[%s3 + $0x38] sm:$0xff]
    %v996 = vld [vmem:[%s3 + $0x40] sm:$0xff]
    %v997 = vld [vmem:[%s3 + $0x48] sm:$0xff]
    %v998 = vld [vmem:[%s3 + $0x50] sm:$0xff]
    %v999 = vld [vmem:[%s3 + $0x58] sm:$0xff]
    %v1000 = vld [vmem:[%s3 + $0x60] sm:$0xff]
    %v1001 = vld [vmem:[%s3 + $0x68] sm:$0xff]
    %v1002 = vld [vmem:[%s3 + $0x70] sm:$0xff]
    %v1003 = vld [vmem:[%s3 + $0x78] sm:$0xff]
    %v1004 = vld [vmem:[%s3 + $0x80] sm:$0xff]
    %v1005 = vld [vmem:[%s3 + $0x88] sm:$0xff]
    %v1006 = vld [vmem:[%s3 + $0x90] sm:$0xff]
    %v1007 = vld [vmem:[%s3 + $0x98] sm:$0xff]
    %v1008 = vld [vmem:[%s3 + $0xa0] sm:$0xff]
    %v1009 = vld [vmem:[%s3 + $0xa8] sm:$0xff]
    %v1010 = vld [vmem:[%s3 + $0xb0] sm:$0xff]
    %v1011 = vld [vmem:[%s3 + $0xb8] sm:$0xff]
    %v1012 = vld [vmem:[%s3 + $0xc0] sm:$0xff]
    %v1013 = vld [vmem:[%s3 + $0xc8] sm:$0xff]
    %v1014 = vld [vmem:[%s3 + $0xd0] sm:$0xff]
    %v1015 = vld [vmem:[%s3 + $0xd8] sm:$0xff]
    %v1016 = vunpack.c.l.bf16 %v988
    %v1017 = vunpack.c.h.bf16 %v988
    %v1018 = vunpack.c.l.bf16 %v989
    %v1019 = vunpack.c.h.bf16 %v989
    %v1020 = vunpack.c.l.bf16 %v990
    %v1021 = vunpack.c.h.bf16 %v990
    %v1022 = vunpack.c.l.bf16 %v991
    %v1023 = vunpack.c.h.bf16 %v991
    %v1024 = vunpack.c.l.bf16 %v992
    %v1025 = vunpack.c.h.bf16 %v992
    %v1026 = vunpack.c.l.bf16 %v993
    %v1027 = vunpack.c.h.bf16 %v993
    %v1028 = vunpack.c.l.bf16 %v994
    %v1029 = vunpack.c.h.bf16 %v994
    %v1030 = vunpack.c.l.bf16 %v995
    %v1031 = vunpack.c.h.bf16 %v995
    %v1032 = vunpack.c.l.bf16 %v996
    %v1033 = vunpack.c.h.bf16 %v996
    %v1034 = vunpack.c.l.bf16 %v997
    %v1035 = vunpack.c.h.bf16 %v997
    %v1036 = vunpack.c.l.bf16 %v998
    %v1037 = vunpack.c.h.bf16 %v998
    %v1038 = vunpack.c.l.bf16 %v999
    %v1039 = vunpack.c.h.bf16 %v999
    %v1040 = vunpack.c.l.bf16 %v1000
    %v1041 = vunpack.c.h.bf16 %v1000
    %v1042 = vunpack.c.l.bf16 %v1001
    %v1043 = vunpack.c.h.bf16 %v1001
    %v1044 = vunpack.c.l.bf16 %v1002
    %v1045 = vunpack.c.h.bf16 %v1002
    %v1046 = vunpack.c.l.bf16 %v1003
    %v1047 = vunpack.c.h.bf16 %v1003
    %v1048 = vunpack.c.l.bf16 %v1004
    %v1049 = vunpack.c.h.bf16 %v1004
    %v1050 = vunpack.c.l.bf16 %v1005
    %v1051 = vunpack.c.h.bf16 %v1005
    %v1052 = vunpack.c.l.bf16 %v1006
    %v1053 = vunpack.c.h.bf16 %v1006
    %v1054 = vunpack.c.l.bf16 %v1007
    %v1055 = vunpack.c.h.bf16 %v1007
    %v1056 = vunpack.c.l.bf16 %v1008
    %v1057 = vunpack.c.h.bf16 %v1008
    %v1058 = vunpack.c.l.bf16 %v1009
    %v1059 = vunpack.c.h.bf16 %v1009
    %v1060 = vunpack.c.l.bf16 %v1010
    %v1061 = vunpack.c.h.bf16 %v1010
    %v1062 = vunpack.c.l.bf16 %v1011
    %v1063 = vunpack.c.h.bf16 %v1011
    %v1064 = vunpack.c.l.bf16 %v1012
    %v1065 = vunpack.c.h.bf16 %v1012
    %v1066 = vunpack.c.l.bf16 %v1013
    %v1067 = vunpack.c.h.bf16 %v1013
    %v1068 = vunpack.c.l.bf16 %v1014
    %v1069 = vunpack.c.h.bf16 %v1014
    %v1070 = vunpack.c.l.bf16 %v1015
    %v1071 = vunpack.c.h.bf16 %v1015
    %s1072 = scalar_lea.vmem %s3, 224
    %v1073 = vld [vmem:[%s1072] sm:$0xff]
    %v1074 = vld [vmem:[%s1072 + $0x8] sm:$0xff]
    %v1075 = vld [vmem:[%s1072 + $0x10] sm:$0xff]
    %v1076 = vld [vmem:[%s1072 + $0x18] sm:$0xff]
    %v1077 = vld [vmem:[%s1072 + $0x20] sm:$0xff]
    %v1078 = vld [vmem:[%s1072 + $0x28] sm:$0xff]
    %v1079 = vld [vmem:[%s1072 + $0x30] sm:$0xff]
    %v1080 = vld [vmem:[%s1072 + $0x38] sm:$0xff]
    %v1081 = vld [vmem:[%s1072 + $0x40] sm:$0xff]
    %v1082 = vld [vmem:[%s1072 + $0x48] sm:$0xff]
    %v1083 = vld [vmem:[%s1072 + $0x50] sm:$0xff]
    %v1084 = vld [vmem:[%s1072 + $0x58] sm:$0xff]
    %v1085 = vld [vmem:[%s1072 + $0x60] sm:$0xff]
    %v1086 = vld [vmem:[%s1072 + $0x68] sm:$0xff]
    %v1087 = vld [vmem:[%s1072 + $0x70] sm:$0xff]
    %v1088 = vld [vmem:[%s1072 + $0x78] sm:$0xff]
    %v1089 = vld [vmem:[%s1072 + $0x80] sm:$0xff]
    %v1090 = vld [vmem:[%s1072 + $0x88] sm:$0xff]
    %v1091 = vld [vmem:[%s1072 + $0x90] sm:$0xff]
    %v1092 = vld [vmem:[%s1072 + $0x98] sm:$0xff]
    %v1093 = vld [vmem:[%s1072 + $0xa0] sm:$0xff]
    %v1094 = vld [vmem:[%s1072 + $0xa8] sm:$0xff]
    %v1095 = vld [vmem:[%s1072 + $0xb0] sm:$0xff]
    %v1096 = vld [vmem:[%s1072 + $0xb8] sm:$0xff]
    %v1097 = vld [vmem:[%s1072 + $0xc0] sm:$0xff]
    %v1098 = vld [vmem:[%s1072 + $0xc8] sm:$0xff]
    %v1099 = vld [vmem:[%s1072 + $0xd0] sm:$0xff]
    %v1100 = vld [vmem:[%s1072 + $0xd8] sm:$0xff]
    %v1101 = vunpack.c.l.bf16 %v1073
    %v1102 = vunpack.c.h.bf16 %v1073
    %v1103 = vunpack.c.l.bf16 %v1074
    %v1104 = vunpack.c.h.bf16 %v1074
    %v1105 = vunpack.c.l.bf16 %v1075
    %v1106 = vunpack.c.h.bf16 %v1075
    %v1107 = vunpack.c.l.bf16 %v1076
    %v1108 = vunpack.c.h.bf16 %v1076
    %v1109 = vunpack.c.l.bf16 %v1077
    %v1110 = vunpack.c.h.bf16 %v1077
    %v1111 = vunpack.c.l.bf16 %v1078
    %v1112 = vunpack.c.h.bf16 %v1078
    %v1113 = vunpack.c.l.bf16 %v1079
    %v1114 = vunpack.c.h.bf16 %v1079
    %v1115 = vunpack.c.l.bf16 %v1080
    %v1116 = vunpack.c.h.bf16 %v1080
    %v1117 = vunpack.c.l.bf16 %v1081
    %v1118 = vunpack.c.h.bf16 %v1081
    %v1119 = vunpack.c.l.bf16 %v1082
    %v1120 = vunpack.c.h.bf16 %v1082
    %v1121 = vunpack.c.l.bf16 %v1083
    %v1122 = vunpack.c.h.bf16 %v1083
    %v1123 = vunpack.c.l.bf16 %v1084
    %v1124 = vunpack.c.h.bf16 %v1084
    %v1125 = vunpack.c.l.bf16 %v1085
    %v1126 = vunpack.c.h.bf16 %v1085
    %v1127 = vunpack.c.l.bf16 %v1086
    %v1128 = vunpack.c.h.bf16 %v1086
    %v1129 = vunpack.c.l.bf16 %v1087
    %v1130 = vunpack.c.h.bf16 %v1087
    %v1131 = vunpack.c.l.bf16 %v1088
    %v1132 = vunpack.c.h.bf16 %v1088
    %v1133 = vunpack.c.l.bf16 %v1089
    %v1134 = vunpack.c.h.bf16 %v1089
    %v1135 = vunpack.c.l.bf16 %v1090
    %v1136 = vunpack.c.h.bf16 %v1090
    %v1137 = vunpack.c.l.bf16 %v1091
    %v1138 = vunpack.c.h.bf16 %v1091
    %v1139 = vunpack.c.l.bf16 %v1092
    %v1140 = vunpack.c.h.bf16 %v1092
    %v1141 = vunpack.c.l.bf16 %v1093
    %v1142 = vunpack.c.h.bf16 %v1093
    %v1143 = vunpack.c.l.bf16 %v1094
    %v1144 = vunpack.c.h.bf16 %v1094
    %v1145 = vunpack.c.l.bf16 %v1095
    %v1146 = vunpack.c.h.bf16 %v1095
    %v1147 = vunpack.c.l.bf16 %v1096
    %v1148 = vunpack.c.h.bf16 %v1096
    %v1149 = vunpack.c.l.bf16 %v1097
    %v1150 = vunpack.c.h.bf16 %v1097
    %v1151 = vunpack.c.l.bf16 %v1098
    %v1152 = vunpack.c.h.bf16 %v1098
    %v1153 = vunpack.c.l.bf16 %v1099
    %v1154 = vunpack.c.h.bf16 %v1099
    %v1155 = vunpack.c.l.bf16 %v1100
    %v1156 = vunpack.c.h.bf16 %v1100
    %vm1157 = vcmask 785408
    %v1159 = vsel %vm1157, %v961, 0
    %v1162 = vsel %vm1157, %v965, 0
    %v1165 = vsel %vm1157, %v969, 0
    %v1168 = vsel %vm1157, %v973, 0
    %v1171 = vsel %vm1157, %v977, 0
    %v1174 = vsel %vm1157, %v981, 0
    %v1177 = vsel %vm1157, %v985, 0
    %1179 = vmatprep.subr.mxu0 %v1102
    %1180 = vmatpush1.msra.mxu0 %v1101
    %1181 = vmatprep.subr.mxu0 %v1104
    %1182 = vmatpush1.msra.mxu0 %v1103
    %1183 = vmatprep.subr.mxu0 %v1106
    %1184 = vmatpush1.msra.mxu0 %v1105
    %1185 = vmatprep.subr.mxu0 %v1108
    %1186 = vmatpush1.msra.mxu0 %v1107
    %1187 = vmatprep.subr.mxu0 %v1110
    %1188 = vmatpush1.msra.mxu0 %v1109
    %1189 = vmatprep.subr.mxu0 %v1112
    %1190 = vmatpush1.msra.mxu0 %v1111
    %1191 = vmatprep.subr.mxu0 %v1114
    %1192 = vmatpush1.msra.mxu0 %v1113
    %1193 = vmatprep.subr.mxu0 %v1116
    %1194 = vmatpush1.msra.mxu0 %v1115
    %1195 = vmatprep.subr.mxu0 %v1118
    %1196 = vmatpush1.msra.mxu0 %v1117
    %1197 = vmatprep.subr.mxu0 %v1120
    %1198 = vmatpush1.msra.mxu0 %v1119
    %1199 = vmatprep.subr.mxu0 %v1122
    %1200 = vmatpush1.msra.mxu0 %v1121
    %1201 = vmatprep.subr.mxu0 %v1124
    %1202 = vmatpush1.msra.mxu0 %v1123
    %1203 = vmatprep.subr.mxu0 %v1126
    %1204 = vmatpush1.msra.mxu0 %v1125
    %1205 = vmatprep.subr.mxu0 %v1128
    %1206 = vmatpush1.msra.mxu0 %v1127
    %1207 = vmatprep.subr.mxu0 %v1130
    %1208 = vmatpush1.msra.mxu0 %v1129
    %1209 = vmatprep.subr.mxu0 %v1132
    %1210 = vmatpush1.msra.mxu0 %v1131
    %1211 = vmatprep.subr.mxu0 %v1134
    %1212 = vmatpush1.msra.mxu0 %v1133
    %1213 = vmatprep.subr.mxu0 %v1136
    %1214 = vmatpush1.msra.mxu0 %v1135
    %1215 = vmatprep.subr.mxu0 %v1138
    %1216 = vmatpush1.msra.mxu0 %v1137
    %1217 = vmatprep.subr.mxu0 %v1140
    %1218 = vmatpush1.msra.mxu0 %v1139
    %1219 = vmatprep.subr.mxu0 %v1142
    %1220 = vmatpush1.msra.mxu0 %v1141
    %1221 = vmatprep.subr.mxu0 %v1144
    %1222 = vmatpush1.msra.mxu0 %v1143
    %1223 = vmatprep.subr.mxu0 %v1146
    %1224 = vmatpush1.msra.mxu0 %v1145
    %1225 = vmatprep.subr.mxu0 %v1148
    %1226 = vmatpush1.msra.mxu0 %v1147
    %1227 = vmatprep.subr.mxu0 %v1150
    %1228 = vmatpush1.msra.mxu0 %v1149
    %1229 = vmatprep.subr.mxu0 %v1152
    %1230 = vmatpush1.msra.mxu0 %v1151
    %1231 = vmatprep.subr.mxu0 %v1154
    %1232 = vmatpush1.msra.mxu0 %v1153
    %1233 = vmatprep.subr.mxu0 %v1156
    %1234 = vmatpush1.msra.mxu0 %v1155
    %1235 = vmatprep.subr.mxu0 0.0
    %1236 = vmatpush1.msra.mxu0 0.0
    %1237 = vmatprep.subr.mxu0 0.0
    %1238 = vmatpush1.msra.mxu0 0.0
    %1239 = vmatprep.subr.mxu0 0.0
    %1240 = vmatpush1.msra.mxu0 0.0
    %1241 = vmatprep.subr.mxu0 0.0
    %1242 = vmatpush1.msra.mxu0 0.0
    %1243 = vmatprep.mubr.f32.mxu0 %v1159
    %1244 = vmatmul.mubr.f32.gmra.mrb[0].mxu0 %v960
    %v1245 = vpop.f32.mrb[0].mxu0
    %v1246 = vadd.f32 0.0, %v1245
    %v1247 = vpop.f32.mrb[0].mxu0
    %v1248 = vadd.f32 0.0, %v1247
    %1249 = vmatprep.mubr.f32.mxu0 %v1162
    %1250 = vmatmul.mubr.f32.gmra.mrb[0].mxu0 %v964
    %v1251 = vpop.f32.mrb[0].mxu0
    %v1252 = vadd.f32 0.0, %v1251
    %v1253 = vpop.f32.mrb[0].mxu0
    %v1254 = vadd.f32 0.0, %v1253
    %1255 = vmatprep.mubr.f32.mxu0 %v1165
    %1256 = vmatmul.mubr.f32.gmra.mrb[0].mxu0 %v968
    %v1257 = vpop.f32.mrb[0].mxu0
    %v1258 = vadd.f32 0.0, %v1257
    %v1259 = vpop.f32.mrb[0].mxu0
    %v1260 = vadd.f32 0.0, %v1259
    %1261 = vmatprep.mubr.f32.mxu0 %v1168
    %1262 = vmatmul.mubr.f32.gmra.mrb[0].mxu0 %v972
    %v1263 = vpop.f32.mrb[0].mxu0
    %v1264 = vadd.f32 0.0, %v1263
    %v1265 = vpop.f32.mrb[0].mxu0
    %v1266 = vadd.f32 0.0, %v1265
    %1267 = vmatprep.mubr.f32.mxu0 %v1171
    %1268 = vmatmul.mubr.f32.gmra.mrb[0].mxu0 %v976
    %v1269 = vpop.f32.mrb[0].mxu0
    %v1270 = vadd.f32 0.0, %v1269
    %v1271 = vpop.f32.mrb[0].mxu0
    %v1272 = vadd.f32 0.0, %v1271
    %1273 = vmatprep.mubr.f32.mxu0 %v1174
    %1274 = vmatmul.mubr.f32.gmra.mrb[0].mxu0 %v980
    %v1275 = vpop.f32.mrb[0].mxu0
    %v1276 = vadd.f32 0.0, %v1275
    %v1277 = vpop.f32.mrb[0].mxu0
    %v1278 = vadd.f32 0.0, %v1277
    %1279 = vmatprep.mubr.f32.mxu0 %v1177
    %1280 = vmatmul.mubr.f32.gmra.mrb[0].mxu0 %v984
    %v1281 = vpop.f32.mrb[0].mxu0
    %v1282 = vadd.f32 0.0, %v1281
    %v1283 = vpop.f32.mrb[0].mxu0
    %v1284 = vadd.f32 0.0, %v1283
    %1285 = vdwg.mxu0
    %v1286 = vsel %vm1157, 0.0, 0
    %v1289 = vsel %vm1157, %v963, 0
    %v1292 = vsel %vm1157, %v967, 0
    %v1295 = vsel %vm1157, %v971, 0
    %v1298 = vsel %vm1157, %v975, 0
    %v1301 = vsel %vm1157, %v979, 0
    %v1304 = vsel %vm1157, %v983, 0
    %1306 = vmatprep.subr.mxu0 %v1017
    %1307 = vmatpush1.msra.mxu0 %v1016
    %1308 = vmatprep.subr.mxu0 %v1019
    %1309 = vmatpush1.msra.mxu0 %v1018
    %1310 = vmatprep.subr.mxu0 %v1021
    %1311 = vmatpush1.msra.mxu0 %v1020
    %1312 = vmatprep.subr.mxu0 %v1023
    %1313 = vmatpush1.msra.mxu0 %v1022
    %1314 = vmatprep.subr.mxu0 %v1025
    %1315 = vmatpush1.msra.mxu0 %v1024
    %1316 = vmatprep.subr.mxu0 %v1027
    %1317 = vmatpush1.msra.mxu0 %v1026
    %1318 = vmatprep.subr.mxu0 %v1029
    %1319 = vmatpush1.msra.mxu0 %v1028
    %1320 = vmatprep.subr.mxu0 %v1031
    %1321 = vmatpush1.msra.mxu0 %v1030
    %1322 = vmatprep.subr.mxu0 %v1033
    %1323 = vmatpush1.msra.mxu0 %v1032
    %1324 = vmatprep.subr.mxu0 %v1035
    %1325 = vmatpush1.msra.mxu0 %v1034
    %1326 = vmatprep.subr.mxu0 %v1037
    %1327 = vmatpush1.msra.mxu0 %v1036
    %1328 = vmatprep.subr.mxu0 %v1039
    %1329 = vmatpush1.msra.mxu0 %v1038
    %1330 = vmatprep.subr.mxu0 %v1041
    %1331 = vmatpush1.msra.mxu0 %v1040
    %1332 = vmatprep.subr.mxu0 %v1043
    %1333 = vmatpush1.msra.mxu0 %v1042
    %1334 = vmatprep.subr.mxu0 %v1045
    %1335 = vmatpush1.msra.mxu0 %v1044
    %1336 = vmatprep.subr.mxu0 %v1047
    %1337 = vmatpush1.msra.mxu0 %v1046
    %1338 = vmatprep.subr.mxu0 %v1049
    %1339 = vmatpush1.msra.mxu0 %v1048
    %1340 = vmatprep.subr.mxu0 %v1051
    %1341 = vmatpush1.msra.mxu0 %v1050
    %1342 = vmatprep.subr.mxu0 %v1053
    %1343 = vmatpush1.msra.mxu0 %v1052
    %1344 = vmatprep.subr.mxu0 %v1055
    %1345 = vmatpush1.msra.mxu0 %v1054
    %1346 = vmatprep.subr.mxu0 %v1057
    %1347 = vmatpush1.msra.mxu0 %v1056
    %1348 = vmatprep.subr.mxu0 %v1059
    %1349 = vmatpush1.msra.mxu0 %v1058
    %1350 = vmatprep.subr.mxu0 %v1061
    %1351 = vmatpush1.msra.mxu0 %v1060
    %1352 = vmatprep.subr.mxu0 %v1063
    %1353 = vmatpush1.msra.mxu0 %v1062
    %1354 = vmatprep.subr.mxu0 %v1065
    %1355 = vmatpush1.msra.mxu0 %v1064
    %1356 = vmatprep.subr.mxu0 %v1067
    %1357 = vmatpush1.msra.mxu0 %v1066
    %1358 = vmatprep.subr.mxu0 %v1069
    %1359 = vmatpush1.msra.mxu0 %v1068
    %1360 = vmatprep.subr.mxu0 %v1071
    %1361 = vmatpush1.msra.mxu0 %v1070
    %1362 = vmatprep.subr.mxu0 0.0
    %1363 = vmatpush1.msra.mxu0 0.0
    %1364 = vmatprep.subr.mxu0 0.0
    %1365 = vmatpush1.msra.mxu0 0.0
    %1366 = vmatprep.subr.mxu0 0.0
    %1367 = vmatpush1.msra.mxu0 0.0
    %1368 = vmatprep.subr.mxu0 0.0
    %1369 = vmatpush1.msra.mxu0 0.0
    %1370 = vmatprep.mubr.f32.mxu0 %v1286
    %1371 = vmatmul.mubr.f32.gmra.mrb[0].mxu0 0.0
    %v1372 = vpop.f32.mrb[0].mxu0
    %v1373 = vadd.f32 %v1246, %v1372
    %v1374 = vpop.f32.mrb[0].mxu0
    %v1375 = vadd.f32 %v1248, %v1374
    %1376 = vmatprep.mubr.f32.mxu0 %v1289
    %1377 = vmatmul.mubr.f32.gmra.mrb[0].mxu0 %v962
    %v1378 = vpop.f32.mrb[0].mxu0
    %v1379 = vadd.f32 %v1252, %v1378
    %v1380 = vpop.f32.mrb[0].mxu0
    %v1381 = vadd.f32 %v1254, %v1380
    %1382 = vmatprep.mubr.f32.mxu0 %v1292
    %1383 = vmatmul.mubr.f32.gmra.mrb[0].mxu0 %v966
    %v1384 = vpop.f32.mrb[0].mxu0
    %v1385 = vadd.f32 %v1258, %v1384
    %v1386 = vpop.f32.mrb[0].mxu0
    %v1387 = vadd.f32 %v1260, %v1386
    %1388 = vmatprep.mubr.f32.mxu0 %v1295
    %1389 = vmatmul.mubr.f32.gmra.mrb[0].mxu0 %v970
    %v1390 = vpop.f32.mrb[0].mxu0
    %v1391 = vadd.f32 %v1264, %v1390
    %v1392 = vpop.f32.mrb[0].mxu0
    %v1393 = vadd.f32 %v1266, %v1392
    %1394 = vmatprep.mubr.f32.mxu0 %v1298
    %1395 = vmatmul.mubr.f32.gmra.mrb[0].mxu0 %v974
    %v1396 = vpop.f32.mrb[0].mxu0
    %v1397 = vadd.f32 %v1270, %v1396
    %v1398 = vpop.f32.mrb[0].mxu0
    %v1399 = vadd.f32 %v1272, %v1398
    %1400 = vmatprep.mubr.f32.mxu0 %v1301
    %1401 = vmatmul.mubr.f32.gmra.mrb[0].mxu0 %v978
    %v1402 = vpop.f32.mrb[0].mxu0
    %v1403 = vadd.f32 %v1276, %v1402
    %v1404 = vpop.f32.mrb[0].mxu0
    %v1405 = vadd.f32 %v1278, %v1404
    %1406 = vmatprep.mubr.f32.mxu0 %v1304
    %1407 = vmatmul.mubr.f32.gmra.mrb[0].mxu0 %v982
    %v1408 = vpop.f32.mrb[0].mxu0
    %v1409 = vadd.f32 %v1282, %v1408
    %v1410 = vpop.f32.mrb[0].mxu0
    %v1411 = vadd.f32 %v1284, %v1410
    %1412 = vdwg.mxu0
    %s1413 = scalar_lea.vmem %s3, 448
    %v1414 = vld [vmem:[%s1413] sm:$0xff]
    %v1415 = vld [vmem:[%s1413 + $0x8] sm:$0xff]
    %v1416 = vld [vmem:[%s1413 + $0x10] sm:$0xff]
    %v1417 = vld [vmem:[%s1413 + $0x18] sm:$0xff]
    %v1418 = vld [vmem:[%s1413 + $0x20] sm:$0xff]
    %v1419 = vld [vmem:[%s1413 + $0x28] sm:$0xff]
    %v1420 = vld [vmem:[%s1413 + $0x30] sm:$0xff]
    %v1421 = vld [vmem:[%s1413 + $0x38] sm:$0xff]
    %v1422 = vld [vmem:[%s1413 + $0x40] sm:$0xff]
    %v1423 = vld [vmem:[%s1413 + $0x48] sm:$0xff]
    %v1424 = vld [vmem:[%s1413 + $0x50] sm:$0xff]
    %v1425 = vld [vmem:[%s1413 + $0x58] sm:$0xff]
    %v1426 = vld [vmem:[%s1413 + $0x60] sm:$0xff]
    %v1427 = vld [vmem:[%s1413 + $0x68] sm:$0xff]
    %v1428 = vld [vmem:[%s1413 + $0x70] sm:$0xff]
    %v1429 = vld [vmem:[%s1413 + $0x78] sm:$0xff]
    %v1430 = vld [vmem:[%s1413 + $0x80] sm:$0xff]
    %v1431 = vld [vmem:[%s1413 + $0x88] sm:$0xff]
    %v1432 = vld [vmem:[%s1413 + $0x90] sm:$0xff]
    %v1433 = vld [vmem:[%s1413 + $0x98] sm:$0xff]
    %v1434 = vld [vmem:[%s1413 + $0xa0] sm:$0xff]
    %v1435 = vld [vmem:[%s1413 + $0xa8] sm:$0xff]
    %v1436 = vld [vmem:[%s1413 + $0xb0] sm:$0xff]
    %v1437 = vld [vmem:[%s1413 + $0xb8] sm:$0xff]
    %v1438 = vld [vmem:[%s1413 + $0xc0] sm:$0xff]
    %v1439 = vld [vmem:[%s1413 + $0xc8] sm:$0xff]
    %v1440 = vld [vmem:[%s1413 + $0xd0] sm:$0xff]
    %v1441 = vld [vmem:[%s1413 + $0xd8] sm:$0xff]
    %v1442 = vunpack.c.l.bf16 %v1414
    %v1443 = vunpack.c.h.bf16 %v1414
    %v1444 = vunpack.c.l.bf16 %v1415
    %v1445 = vunpack.c.h.bf16 %v1415
    %v1446 = vunpack.c.l.bf16 %v1416
    %v1447 = vunpack.c.h.bf16 %v1416
    %v1448 = vunpack.c.l.bf16 %v1417
    %v1449 = vunpack.c.h.bf16 %v1417
    %v1450 = vunpack.c.l.bf16 %v1418
    %v1451 = vunpack.c.h.bf16 %v1418
    %v1452 = vunpack.c.l.bf16 %v1419
    %v1453 = vunpack.c.h.bf16 %v1419
    %v1454 = vunpack.c.l.bf16 %v1420
    %v1455 = vunpack.c.h.bf16 %v1420
    %v1456 = vunpack.c.l.bf16 %v1421
    %v1457 = vunpack.c.h.bf16 %v1421
    %v1458 = vunpack.c.l.bf16 %v1422
    %v1459 = vunpack.c.h.bf16 %v1422
    %v1460 = vunpack.c.l.bf16 %v1423
    %v1461 = vunpack.c.h.bf16 %v1423
    %v1462 = vunpack.c.l.bf16 %v1424
    %v1463 = vunpack.c.h.bf16 %v1424
    %v1464 = vunpack.c.l.bf16 %v1425
    %v1465 = vunpack.c.h.bf16 %v1425
    %v1466 = vunpack.c.l.bf16 %v1426
    %v1467 = vunpack.c.h.bf16 %v1426
    %v1468 = vunpack.c.l.bf16 %v1427
    %v1469 = vunpack.c.h.bf16 %v1427
    %v1470 = vunpack.c.l.bf16 %v1428
    %v1471 = vunpack.c.h.bf16 %v1428
    %v1472 = vunpack.c.l.bf16 %v1429
    %v1473 = vunpack.c.h.bf16 %v1429
    %v1474 = vunpack.c.l.bf16 %v1430
    %v1475 = vunpack.c.h.bf16 %v1430
    %v1476 = vunpack.c.l.bf16 %v1431
    %v1477 = vunpack.c.h.bf16 %v1431
    %v1478 = vunpack.c.l.bf16 %v1432
    %v1479 = vunpack.c.h.bf16 %v1432
    %v1480 = vunpack.c.l.bf16 %v1433
    %v1481 = vunpack.c.h.bf16 %v1433
    %v1482 = vunpack.c.l.bf16 %v1434
    %v1483 = vunpack.c.h.bf16 %v1434
    %v1484 = vunpack.c.l.bf16 %v1435
    %v1485 = vunpack.c.h.bf16 %v1435
    %v1486 = vunpack.c.l.bf16 %v1436
    %v1487 = vunpack.c.h.bf16 %v1436
    %v1488 = vunpack.c.l.bf16 %v1437
    %v1489 = vunpack.c.h.bf16 %v1437
    %v1490 = vunpack.c.l.bf16 %v1438
    %v1491 = vunpack.c.h.bf16 %v1438
    %v1492 = vunpack.c.l.bf16 %v1439
    %v1493 = vunpack.c.h.bf16 %v1439
    %v1494 = vunpack.c.l.bf16 %v1440
    %v1495 = vunpack.c.h.bf16 %v1440
    %v1496 = vunpack.c.l.bf16 %v1441
    %v1497 = vunpack.c.h.bf16 %v1441
    %v1499 = vsel %vm1157, %v987, 0
    %1501 = vmatprep.subr.mxu0 %v1443
    %1502 = vmatpush1.msra.mxu0 %v1442
    %1503 = vmatprep.subr.mxu0 %v1445
    %1504 = vmatpush1.msra.mxu0 %v1444
    %1505 = vmatprep.subr.mxu0 %v1447
    %1506 = vmatpush1.msra.mxu0 %v1446
    %1507 = vmatprep.subr.mxu0 %v1449
    %1508 = vmatpush1.msra.mxu0 %v1448
    %1509 = vmatprep.subr.mxu0 %v1451
    %1510 = vmatpush1.msra.mxu0 %v1450
    %1511 = vmatprep.subr.mxu0 %v1453
    %1512 = vmatpush1.msra.mxu0 %v1452
    %1513 = vmatprep.subr.mxu0 %v1455
    %1514 = vmatpush1.msra.mxu0 %v1454
    %1515 = vmatprep.subr.mxu0 %v1457
    %1516 = vmatpush1.msra.mxu0 %v1456
    %1517 = vmatprep.subr.mxu0 %v1459
    %1518 = vmatpush1.msra.mxu0 %v1458
    %1519 = vmatprep.subr.mxu0 %v1461
    %1520 = vmatpush1.msra.mxu0 %v1460
    %1521 = vmatprep.subr.mxu0 %v1463
    %1522 = vmatpush1.msra.mxu0 %v1462
    %1523 = vmatprep.subr.mxu0 %v1465
    %1524 = vmatpush1.msra.mxu0 %v1464
    %1525 = vmatprep.subr.mxu0 %v1467
    %1526 = vmatpush1.msra.mxu0 %v1466
    %1527 = vmatprep.subr.mxu0 %v1469
    %1528 = vmatpush1.msra.mxu0 %v1468
    %1529 = vmatprep.subr.mxu0 %v1471
    %1530 = vmatpush1.msra.mxu0 %v1470
    %1531 = vmatprep.subr.mxu0 %v1473
    %1532 = vmatpush1.msra.mxu0 %v1472
    %1533 = vmatprep.subr.mxu0 %v1475
    %1534 = vmatpush1.msra.mxu0 %v1474
    %1535 = vmatprep.subr.mxu0 %v1477
    %1536 = vmatpush1.msra.mxu0 %v1476
    %1537 = vmatprep.subr.mxu0 %v1479
    %1538 = vmatpush1.msra.mxu0 %v1478
    %1539 = vmatprep.subr.mxu0 %v1481
    %1540 = vmatpush1.msra.mxu0 %v1480
    %1541 = vmatprep.subr.mxu0 %v1483
    %1542 = vmatpush1.msra.mxu0 %v1482
    %1543 = vmatprep.subr.mxu0 %v1485
    %1544 = vmatpush1.msra.mxu0 %v1484
    %1545 = vmatprep.subr.mxu0 %v1487
    %1546 = vmatpush1.msra.mxu0 %v1486
    %1547 = vmatprep.subr.mxu0 %v1489
    %1548 = vmatpush1.msra.mxu0 %v1488
    %1549 = vmatprep.subr.mxu0 %v1491
    %1550 = vmatpush1.msra.mxu0 %v1490
    %1551 = vmatprep.subr.mxu0 %v1493
    %1552 = vmatpush1.msra.mxu0 %v1492
    %1553 = vmatprep.subr.mxu0 %v1495
    %1554 = vmatpush1.msra.mxu0 %v1494
    %1555 = vmatprep.subr.mxu0 %v1497
    %1556 = vmatpush1.msra.mxu0 %v1496
    %1557 = vmatprep.subr.mxu0 0.0
    %1558 = vmatpush1.msra.mxu0 0.0
    %1559 = vmatprep.subr.mxu0 0.0
    %1560 = vmatpush1.msra.mxu0 0.0
    %1561 = vmatprep.subr.mxu0 0.0
    %1562 = vmatpush1.msra.mxu0 0.0
    %1563 = vmatprep.subr.mxu0 0.0
    %1564 = vmatpush1.msra.mxu0 0.0
    %1565 = vmatprep.mubr.f32.mxu0 %v1289
    %1566 = vmatmul.mubr.f32.gmra.mrb[0].mxu0 %v962
    %v1567 = vpop.f32.mrb[0].mxu0
    %v1568 = vadd.f32 0.0, %v1567
    %v1569 = vpop.f32.mrb[0].mxu0
    %v1570 = vadd.f32 0.0, %v1569
    %1571 = vmatprep.mubr.f32.mxu0 %v1292
    %1572 = vmatmul.mubr.f32.gmra.mrb[0].mxu0 %v966
    %v1573 = vpop.f32.mrb[0].mxu0
    %v1574 = vadd.f32 0.0, %v1573
    %v1575 = vpop.f32.mrb[0].mxu0
    %v1576 = vadd.f32 0.0, %v1575
    %1577 = vmatprep.mubr.f32.mxu0 %v1295
    %1578 = vmatmul.mubr.f32.gmra.mrb[0].mxu0 %v970
    %v1579 = vpop.f32.mrb[0].mxu0
    %v1580 = vadd.f32 0.0, %v1579
    %v1581 = vpop.f32.mrb[0].mxu0
    %v1582 = vadd.f32 0.0, %v1581
    %1583 = vmatprep.mubr.f32.mxu0 %v1298
    %1584 = vmatmul.mubr.f32.gmra.mrb[0].mxu0 %v974
    %v1585 = vpop.f32.mrb[0].mxu0
    %v1586 = vadd.f32 0.0, %v1585
    %v1587 = vpop.f32.mrb[0].mxu0
    %v1588 = vadd.f32 0.0, %v1587
    %1589 = vmatprep.mubr.f32.mxu0 %v1301
    %1590 = vmatmul.mubr.f32.gmra.mrb[0].mxu0 %v978
    %v1591 = vpop.f32.mrb[0].mxu0
    %v1592 = vadd.f32 0.0, %v1591
    %v1593 = vpop.f32.mrb[0].mxu0
    %v1594 = vadd.f32 0.0, %v1593
    %1595 = vmatprep.mubr.f32.mxu0 %v1304
    %1596 = vmatmul.mubr.f32.gmra.mrb[0].mxu0 %v982
    %v1597 = vpop.f32.mrb[0].mxu0
    %v1598 = vadd.f32 0.0, %v1597
    %v1599 = vpop.f32.mrb[0].mxu0
    %v1600 = vadd.f32 0.0, %v1599
    %1601 = vmatprep.mubr.f32.mxu0 %v1499
    %1602 = vmatmul.mubr.f32.gmra.mrb[0].mxu0 %v986
    %v1603 = vpop.f32.mrb[0].mxu0
    %v1604 = vadd.f32 0.0, %v1603
    %v1605 = vpop.f32.mrb[0].mxu0
    %v1606 = vadd.f32 0.0, %v1605
    %1607 = vdwg.mxu0
    %v1608 = vadd.f32 %v1373, %v1568
    %v1609 = vadd.f32 %v1375, %v1570
    %v1610 = vadd.f32 %v1379, %v1574
    %v1611 = vadd.f32 %v1381, %v1576
    %v1612 = vadd.f32 %v1385, %v1580
    %v1613 = vadd.f32 %v1387, %v1582
    %v1614 = vadd.f32 %v1391, %v1586
    %v1615 = vadd.f32 %v1393, %v1588
    %v1616 = vadd.f32 %v1397, %v1592
    %v1617 = vadd.f32 %v1399, %v1594
    %v1618 = vadd.f32 %v1403, %v1598
    %v1619 = vadd.f32 %v1405, %v1600
    %v1620 = vadd.f32 %v1409, %v1604
    %v1621 = vadd.f32 %v1411, %v1606
    %s1622 = scalar_lea.vmem %s3, 672
    %v1623 = vld [vmem:[%s1622] sm:$0xff]
    %v1624 = vld [vmem:[%s1622 + $0x8] sm:$0xff]
    %v1625 = vld [vmem:[%s1622 + $0x10] sm:$0xff]
    %v1626 = vld [vmem:[%s1622 + $0x18] sm:$0xff]
    %v1627 = vld [vmem:[%s1622 + $0x20] sm:$0xff]
    %v1628 = vld [vmem:[%s1622 + $0x28] sm:$0xff]
    %v1629 = vld [vmem:[%s1622 + $0x30] sm:$0xff]
    %v1630 = vld [vmem:[%s1622 + $0x38] sm:$0xff]
    %v1631 = vld [vmem:[%s1622 + $0x40] sm:$0xff]
    %v1632 = vld [vmem:[%s1622 + $0x48] sm:$0xff]
    %v1633 = vld [vmem:[%s1622 + $0x50] sm:$0xff]
    %v1634 = vld [vmem:[%s1622 + $0x58] sm:$0xff]
    %v1635 = vld [vmem:[%s1622 + $0x60] sm:$0xff]
    %v1636 = vld [vmem:[%s1622 + $0x68] sm:$0xff]
    %v1637 = vld [vmem:[%s1622 + $0x70] sm:$0xff]
    %v1638 = vld [vmem:[%s1622 + $0x78] sm:$0xff]
    %v1639 = vld [vmem:[%s1622 + $0x80] sm:$0xff]
    %v1640 = vld [vmem:[%s1622 + $0x88] sm:$0xff]
    %v1641 = vld [vmem:[%s1622 + $0x90] sm:$0xff]
    %v1642 = vld [vmem:[%s1622 + $0x98] sm:$0xff]
    %v1643 = vld [vmem:[%s1622 + $0xa0] sm:$0xff]
    %v1644 = vld [vmem:[%s1622 + $0xa8] sm:$0xff]
    %v1645 = vld [vmem:[%s1622 + $0xb0] sm:$0xff]
    %v1646 = vld [vmem:[%s1622 + $0xb8] sm:$0xff]
    %v1647 = vld [vmem:[%s1622 + $0xc0] sm:$0xff]
    %v1648 = vld [vmem:[%s1622 + $0xc8] sm:$0xff]
    %v1649 = vld [vmem:[%s1622 + $0xd0] sm:$0xff]
    %v1650 = vld [vmem:[%s1622 + $0xd8] sm:$0xff]
    %v1651 = vunpack.c.l.bf16 %v1623
    %v1652 = vunpack.c.h.bf16 %v1623
    %v1653 = vunpack.c.l.bf16 %v1624
    %v1654 = vunpack.c.h.bf16 %v1624
    %v1655 = vunpack.c.l.bf16 %v1625
    %v1656 = vunpack.c.h.bf16 %v1625
    %v1657 = vunpack.c.l.bf16 %v1626
    %v1658 = vunpack.c.h.bf16 %v1626
    %v1659 = vunpack.c.l.bf16 %v1627
    %v1660 = vunpack.c.h.bf16 %v1627
    %v1661 = vunpack.c.l.bf16 %v1628
    %v1662 = vunpack.c.h.bf16 %v1628
    %v1663 = vunpack.c.l.bf16 %v1629
    %v1664 = vunpack.c.h.bf16 %v1629
    %v1665 = vunpack.c.l.bf16 %v1630
    %v1666 = vunpack.c.h.bf16 %v1630
    %v1667 = vunpack.c.l.bf16 %v1631
    %v1668 = vunpack.c.h.bf16 %v1631
    %v1669 = vunpack.c.l.bf16 %v1632
    %v1670 = vunpack.c.h.bf16 %v1632
    %v1671 = vunpack.c.l.bf16 %v1633
    %v1672 = vunpack.c.h.bf16 %v1633
    %v1673 = vunpack.c.l.bf16 %v1634
    %v1674 = vunpack.c.h.bf16 %v1634
    %v1675 = vunpack.c.l.bf16 %v1635
    %v1676 = vunpack.c.h.bf16 %v1635
    %v1677 = vunpack.c.l.bf16 %v1636
    %v1678 = vunpack.c.h.bf16 %v1636
    %v1679 = vunpack.c.l.bf16 %v1637
    %v1680 = vunpack.c.h.bf16 %v1637
    %v1681 = vunpack.c.l.bf16 %v1638
    %v1682 = vunpack.c.h.bf16 %v1638
    %v1683 = vunpack.c.l.bf16 %v1639
    %v1684 = vunpack.c.h.bf16 %v1639
    %v1685 = vunpack.c.l.bf16 %v1640
    %v1686 = vunpack.c.h.bf16 %v1640
    %v1687 = vunpack.c.l.bf16 %v1641
    %v1688 = vunpack.c.h.bf16 %v1641
    %v1689 = vunpack.c.l.bf16 %v1642
    %v1690 = vunpack.c.h.bf16 %v1642
    %v1691 = vunpack.c.l.bf16 %v1643
    %v1692 = vunpack.c.h.bf16 %v1643
    %v1693 = vunpack.c.l.bf16 %v1644
    %v1694 = vunpack.c.h.bf16 %v1644
    %v1695 = vunpack.c.l.bf16 %v1645
    %v1696 = vunpack.c.h.bf16 %v1645
    %v1697 = vunpack.c.l.bf16 %v1646
    %v1698 = vunpack.c.h.bf16 %v1646
    %v1699 = vunpack.c.l.bf16 %v1647
    %v1700 = vunpack.c.h.bf16 %v1647
    %v1701 = vunpack.c.l.bf16 %v1648
    %v1702 = vunpack.c.h.bf16 %v1648
    %v1703 = vunpack.c.l.bf16 %v1649
    %v1704 = vunpack.c.h.bf16 %v1649
    %v1705 = vunpack.c.l.bf16 %v1650
    %v1706 = vunpack.c.h.bf16 %v1650
    %1707 = vmatprep.subr.mxu0 %v1652
    %1708 = vmatpush1.msra.mxu0 %v1651
    %1709 = vmatprep.subr.mxu0 %v1654
    %1710 = vmatpush1.msra.mxu0 %v1653
    %1711 = vmatprep.subr.mxu0 %v1656
    %1712 = vmatpush1.msra.mxu0 %v1655
    %1713 = vmatprep.subr.mxu0 %v1658
    %1714 = vmatpush1.msra.mxu0 %v1657
    %1715 = vmatprep.subr.mxu0 %v1660
    %1716 = vmatpush1.msra.mxu0 %v1659
    %1717 = vmatprep.subr.mxu0 %v1662
    %1718 = vmatpush1.msra.mxu0 %v1661
    %1719 = vmatprep.subr.mxu0 %v1664
    %1720 = vmatpush1.msra.mxu0 %v1663
    %1721 = vmatprep.subr.mxu0 %v1666
    %1722 = vmatpush1.msra.mxu0 %v1665
    %1723 = vmatprep.subr.mxu0 %v1668
    %1724 = vmatpush1.msra.mxu0 %v1667
    %1725 = vmatprep.subr.mxu0 %v1670
    %1726 = vmatpush1.msra.mxu0 %v1669
    %1727 = vmatprep.subr.mxu0 %v1672
    %1728 = vmatpush1.msra.mxu0 %v1671
    %1729 = vmatprep.subr.mxu0 %v1674
    %1730 = vmatpush1.msra.mxu0 %v1673
    %1731 = vmatprep.subr.mxu0 %v1676
    %1732 = vmatpush1.msra.mxu0 %v1675
    %1733 = vmatprep.subr.mxu0 %v1678
    %1734 = vmatpush1.msra.mxu0 %v1677
    %1735 = vmatprep.subr.mxu0 %v1680
    %1736 = vmatpush1.msra.mxu0 %v1679
    %1737 = vmatprep.subr.mxu0 %v1682
    %1738 = vmatpush1.msra.mxu0 %v1681
    %1739 = vmatprep.subr.mxu0 %v1684
    %1740 = vmatpush1.msra.mxu0 %v1683
    %1741 = vmatprep.subr.mxu0 %v1686
    %1742 = vmatpush1.msra.mxu0 %v1685
    %1743 = vmatprep.subr.mxu0 %v1688
    %1744 = vmatpush1.msra.mxu0 %v1687
    %1745 = vmatprep.subr.mxu0 %v1690
    %1746 = vmatpush1.msra.mxu0 %v1689
    %1747 = vmatprep.subr.mxu0 %v1692
    %1748 = vmatpush1.msra.mxu0 %v1691
    %1749 = vmatprep.subr.mxu0 %v1694
    %1750 = vmatpush1.msra.mxu0 %v1693
    %1751 = vmatprep.subr.mxu0 %v1696
    %1752 = vmatpush1.msra.mxu0 %v1695
    %1753 = vmatprep.subr.mxu0 %v1698
    %1754 = vmatpush1.msra.mxu0 %v1697
    %1755 = vmatprep.subr.mxu0 %v1700
    %1756 = vmatpush1.msra.mxu0 %v1699
    %1757 = vmatprep.subr.mxu0 %v1702
    %1758 = vmatpush1.msra.mxu0 %v1701
    %1759 = vmatprep.subr.mxu0 %v1704
    %1760 = vmatpush1.msra.mxu0 %v1703
    %1761 = vmatprep.subr.mxu0 %v1706
    %1762 = vmatpush1.msra.mxu0 %v1705
    %1763 = vmatprep.subr.mxu0 0.0
    %1764 = vmatpush1.msra.mxu0 0.0
    %1765 = vmatprep.subr.mxu0 0.0
    %1766 = vmatpush1.msra.mxu0 0.0
    %1767 = vmatprep.subr.mxu0 0.0
    %1768 = vmatpush1.msra.mxu0 0.0
    %1769 = vmatprep.subr.mxu0 0.0
    %1770 = vmatpush1.msra.mxu0 0.0
    %1771 = vmatprep.mubr.f32.mxu0 %v1162
    %1772 = vmatmul.mubr.f32.gmra.mrb[0].mxu0 %v964
    %v1773 = vpop.f32.mrb[0].mxu0
    %v1774 = vadd.f32 0.0, %v1773
    %v1775 = vpop.f32.mrb[0].mxu0
    %v1776 = vadd.f32 0.0, %v1775
    %1777 = vmatprep.mubr.f32.mxu0 %v1165
    %1778 = vmatmul.mubr.f32.gmra.mrb[0].mxu0 %v968
    %v1779 = vpop.f32.mrb[0].mxu0
    %v1780 = vadd.f32 0.0, %v1779
    %v1781 = vpop.f32.mrb[0].mxu0
    %v1782 = vadd.f32 0.0, %v1781
    %1783 = vmatprep.mubr.f32.mxu0 %v1168
    %1784 = vmatmul.mubr.f32.gmra.mrb[0].mxu0 %v972
    %v1785 = vpop.f32.mrb[0].mxu0
    %v1786 = vadd.f32 0.0, %v1785
    %v1787 = vpop.f32.mrb[0].mxu0
    %v1788 = vadd.f32 0.0, %v1787
    %1789 = vmatprep.mubr.f32.mxu0 %v1171
    %1790 = vmatmul.mubr.f32.gmra.mrb[0].mxu0 %v976
    %v1791 = vpop.f32.mrb[0].mxu0
    %v1792 = vadd.f32 0.0, %v1791
    %v1793 = vpop.f32.mrb[0].mxu0
    %v1794 = vadd.f32 0.0, %v1793
    %1795 = vmatprep.mubr.f32.mxu0 %v1174
    %1796 = vmatmul.mubr.f32.gmra.mrb[0].mxu0 %v980
    %v1797 = vpop.f32.mrb[0].mxu0
    %v1798 = vadd.f32 0.0, %v1797
    %v1799 = vpop.f32.mrb[0].mxu0
    %v1800 = vadd.f32 0.0, %v1799
    %1801 = vmatprep.mubr.f32.mxu0 %v1177
    %1802 = vmatmul.mubr.f32.gmra.mrb[0].mxu0 %v984
    %v1803 = vpop.f32.mrb[0].mxu0
    %v1804 = vadd.f32 0.0, %v1803
    %v1805 = vpop.f32.mrb[0].mxu0
    %v1806 = vadd.f32 0.0, %v1805
    %1807 = vmatprep.mubr.f32.mxu0 %v1286
    %1808 = vmatmul.mubr.f32.gmra.mrb[0].mxu0 0.0
    %v1809 = vpop.f32.mrb[0].mxu0
    %v1810 = vadd.f32 0.0, %v1809
    %v1811 = vpop.f32.mrb[0].mxu0
    %v1812 = vadd.f32 0.0, %v1811
    %1813 = vdwg.mxu0
    %v1814 = vadd.f32 %v1608, %v1774
    %v1815 = vadd.f32 %v1609, %v1776
    %v1816 = vadd.f32 %v1610, %v1780
    %v1817 = vadd.f32 %v1611, %v1782
    %v1818 = vadd.f32 %v1612, %v1786
    %v1819 = vadd.f32 %v1613, %v1788
    %v1820 = vadd.f32 %v1614, %v1792
    %v1821 = vadd.f32 %v1615, %v1794
    %v1822 = vadd.f32 %v1616, %v1798
    %v1823 = vadd.f32 %v1617, %v1800
    %v1824 = vadd.f32 %v1618, %v1804
    %v1825 = vadd.f32 %v1619, %v1806
    %v1826 = vadd.f32 %v1620, %v1810
    %v1827 = vadd.f32 %v1621, %v1812
    %v1828 = vmax.f32 %v1814, 0.0
    %v1829 = vmax.f32 %v1815, 0.0
    %v1830 = vmax.f32 %v1816, 0.0
    %v1831 = vmax.f32 %v1817, 0.0
    %v1832 = vmax.f32 %v1818, 0.0
    %v1833 = vmax.f32 %v1819, 0.0
    %v1834 = vmax.f32 %v1820, 0.0
    %v1835 = vmax.f32 %v1821, 0.0
    %v1836 = vmax.f32 %v1822, 0.0
    %v1837 = vmax.f32 %v1823, 0.0
    %v1838 = vmax.f32 %v1824, 0.0
    %v1839 = vmax.f32 %v1825, 0.0
    %v1840 = vmax.f32 %v1826, 0.0
    %v1841 = vmax.f32 %v1827, 0.0
    %v1842 = vld [vmem:[%s4] sm:$0xf]
    %v1843 = vld [vmem:[%s4 + $0x4] sm:$0xf]
    %v1844 = vld [vmem:[%s4 + $0x8] sm:$0xf]
    %v1845 = vld [vmem:[%s4 + $0xc] sm:$0xf]
    %v1846 = vld [vmem:[%s4 + $0x10] sm:$0xf]
    %v1847 = vld [vmem:[%s4 + $0x14] sm:$0xf]
    %v1848 = vld [vmem:[%s4 + $0x18] sm:$0xf]
    %v1849 = vld [vmem:[%s4 + $0x1c] sm:$0xf]
    %v1850 = vld [vmem:[%s4 + $0x20] sm:$0xf]
    %v1851 = vld [vmem:[%s4 + $0x24] sm:$0xf]
    %v1852 = vld [vmem:[%s4 + $0x28] sm:$0xf]
    %v1853 = vld [vmem:[%s4 + $0x2c] sm:$0xf]
    %v1854 = vld [vmem:[%s4 + $0x30] sm:$0xf]
    %v1855 = vld [vmem:[%s4 + $0x34] sm:$0xf]
    %v1856 = vld [vmem:[%s4 + $0x38] sm:$0xf]
    %v1857 = vld [vmem:[%s4 + $0x3c] sm:$0xf]
    %v1858 = vld [vmem:[%s4 + $0x40] sm:$0xf]
    %v1859 = vld [vmem:[%s4 + $0x44] sm:$0xf]
    %v1860 = vld [vmem:[%s4 + $0x48] sm:$0xf]
    %v1861 = vld [vmem:[%s4 + $0x4c] sm:$0xf]
    %v1862 = vld [vmem:[%s4 + $0x50] sm:$0xf]
    %v1863 = vld [vmem:[%s4 + $0x54] sm:$0xf]
    %v1864 = vld [vmem:[%s4 + $0x58] sm:$0xf]
    %v1865 = vld [vmem:[%s4 + $0x5c] sm:$0xf]
    %v1866 = vld [vmem:[%s4 + $0x60] sm:$0xf]
    %v1867 = vld [vmem:[%s4 + $0x64] sm:$0xf]
    %v1868 = vld [vmem:[%s4 + $0x68] sm:$0xf]
    %v1869 = vld [vmem:[%s4 + $0x6c] sm:$0xf]
    %v1870 = vunpack.c.l.bf16 %v1842
    %v1871 = vunpack.c.l.bf16 %v1843
    %v1872 = vunpack.c.l.bf16 %v1844
    %v1873 = vunpack.c.l.bf16 %v1845
    %v1874 = vunpack.c.l.bf16 %v1846
    %v1875 = vunpack.c.l.bf16 %v1847
    %v1876 = vunpack.c.l.bf16 %v1848
    %v1877 = vunpack.c.l.bf16 %v1849
    %v1878 = vunpack.c.l.bf16 %v1850
    %v1879 = vunpack.c.l.bf16 %v1851
    %v1880 = vunpack.c.l.bf16 %v1852
    %v1881 = vunpack.c.l.bf16 %v1853
    %v1882 = vunpack.c.l.bf16 %v1854
    %v1883 = vunpack.c.l.bf16 %v1855
    %v1884 = vunpack.c.l.bf16 %v1856
    %v1885 = vunpack.c.l.bf16 %v1857
    %v1886 = vunpack.c.l.bf16 %v1858
    %v1887 = vunpack.c.l.bf16 %v1859
    %v1888 = vunpack.c.l.bf16 %v1860
    %v1889 = vunpack.c.l.bf16 %v1861
    %v1890 = vunpack.c.l.bf16 %v1862
    %v1891 = vunpack.c.l.bf16 %v1863
    %v1892 = vunpack.c.l.bf16 %v1864
    %v1893 = vunpack.c.l.bf16 %v1865
    %v1894 = vunpack.c.l.bf16 %v1866
    %v1895 = vunpack.c.l.bf16 %v1867
    %v1896 = vunpack.c.l.bf16 %v1868
    %v1897 = vunpack.c.l.bf16 %v1869
    %s1898 = scalar_lea.vmem %s4, 112
    %v1899 = vld [vmem:[%s1898] sm:$0xf]
    %v1900 = vld [vmem:[%s1898 + $0x4] sm:$0xf]
    %v1901 = vld [vmem:[%s1898 + $0x8] sm:$0xf]
    %v1902 = vld [vmem:[%s1898 + $0xc] sm:$0xf]
    %v1903 = vld [vmem:[%s1898 + $0x10] sm:$0xf]
    %v1904 = vld [vmem:[%s1898 + $0x14] sm:$0xf]
    %v1905 = vld [vmem:[%s1898 + $0x18] sm:$0xf]
    %v1906 = vld [vmem:[%s1898 + $0x1c] sm:$0xf]
    %v1907 = vld [vmem:[%s1898 + $0x20] sm:$0xf]
    %v1908 = vld [vmem:[%s1898 + $0x24] sm:$0xf]
    %v1909 = vld [vmem:[%s1898 + $0x28] sm:$0xf]
    %v1910 = vld [vmem:[%s1898 + $0x2c] sm:$0xf]
    %v1911 = vld [vmem:[%s1898 + $0x30] sm:$0xf]
    %v1912 = vld [vmem:[%s1898 + $0x34] sm:$0xf]
    %v1913 = vld [vmem:[%s1898 + $0x38] sm:$0xf]
    %v1914 = vld [vmem:[%s1898 + $0x3c] sm:$0xf]
    %v1915 = vld [vmem:[%s1898 + $0x40] sm:$0xf]
    %v1916 = vld [vmem:[%s1898 + $0x44] sm:$0xf]
    %v1917 = vld [vmem:[%s1898 + $0x48] sm:$0xf]
    %v1918 = vld [vmem:[%s1898 + $0x4c] sm:$0xf]
    %v1919 = vld [vmem:[%s1898 + $0x50] sm:$0xf]
    %v1920 = vld [vmem:[%s1898 + $0x54] sm:$0xf]
    %v1921 = vld [vmem:[%s1898 + $0x58] sm:$0xf]
    %v1922 = vld [vmem:[%s1898 + $0x5c] sm:$0xf]
    %v1923 = vld [vmem:[%s1898 + $0x60] sm:$0xf]
    %v1924 = vld [vmem:[%s1898 + $0x64] sm:$0xf]
    %v1925 = vld [vmem:[%s1898 + $0x68] sm:$0xf]
    %v1926 = vld [vmem:[%s1898 + $0x6c] sm:$0xf]
    %v1927 = vunpack.c.l.bf16 %v1899
    %v1928 = vunpack.c.l.bf16 %v1900
    %v1929 = vunpack.c.l.bf16 %v1901
    %v1930 = vunpack.c.l.bf16 %v1902
    %v1931 = vunpack.c.l.bf16 %v1903
    %v1932 = vunpack.c.l.bf16 %v1904
    %v1933 = vunpack.c.l.bf16 %v1905
    %v1934 = vunpack.c.l.bf16 %v1906
    %v1935 = vunpack.c.l.bf16 %v1907
    %v1936 = vunpack.c.l.bf16 %v1908
    %v1937 = vunpack.c.l.bf16 %v1909
    %v1938 = vunpack.c.l.bf16 %v1910
    %v1939 = vunpack.c.l.bf16 %v1911
    %v1940 = vunpack.c.l.bf16 %v1912
    %v1941 = vunpack.c.l.bf16 %v1913
    %v1942 = vunpack.c.l.bf16 %v1914
    %v1943 = vunpack.c.l.bf16 %v1915
    %v1944 = vunpack.c.l.bf16 %v1916
    %v1945 = vunpack.c.l.bf16 %v1917
    %v1946 = vunpack.c.l.bf16 %v1918
    %v1947 = vunpack.c.l.bf16 %v1919
    %v1948 = vunpack.c.l.bf16 %v1920
    %v1949 = vunpack.c.l.bf16 %v1921
    %v1950 = vunpack.c.l.bf16 %v1922
    %v1951 = vunpack.c.l.bf16 %v1923
    %v1952 = vunpack.c.l.bf16 %v1924
    %v1953 = vunpack.c.l.bf16 %v1925
    %v1954 = vunpack.c.l.bf16 %v1926
    %v1956 = vsel %vm1157, %v1831, 0
    %1958 = vmatprep.subr.mxu0 0.0
    %1959 = vmatpush1.msra.mxu0 %v1927
    %1960 = vmatprep.subr.mxu0 0.0
    %1961 = vmatpush1.msra.mxu0 %v1928
    %1962 = vmatprep.subr.mxu0 0.0
    %1963 = vmatpush1.msra.mxu0 %v1929
    %1964 = vmatprep.subr.mxu0 0.0
    %1965 = vmatpush1.msra.mxu0 %v1930
    %1966 = vmatprep.subr.mxu0 0.0
    %1967 = vmatpush1.msra.mxu0 %v1931
    %1968 = vmatprep.subr.mxu0 0.0
    %1969 = vmatpush1.msra.mxu0 %v1932
    %1970 = vmatprep.subr.mxu0 0.0
    %1971 = vmatpush1.msra.mxu0 %v1933
    %1972 = vmatprep.subr.mxu0 0.0
    %1973 = vmatpush1.msra.mxu0 %v1934
    %1974 = vmatprep.subr.mxu0 0.0
    %1975 = vmatpush1.msra.mxu0 %v1935
    %1976 = vmatprep.subr.mxu0 0.0
    %1977 = vmatpush1.msra.mxu0 %v1936
    %1978 = vmatprep.subr.mxu0 0.0
    %1979 = vmatpush1.msra.mxu0 %v1937
    %1980 = vmatprep.subr.mxu0 0.0
    %1981 = vmatpush1.msra.mxu0 %v1938
    %1982 = vmatprep.subr.mxu0 0.0
    %1983 = vmatpush1.msra.mxu0 %v1939
    %1984 = vmatprep.subr.mxu0 0.0
    %1985 = vmatpush1.msra.mxu0 %v1940
    %1986 = vmatprep.subr.mxu0 0.0
    %1987 = vmatpush1.msra.mxu0 %v1941
    %1988 = vmatprep.subr.mxu0 0.0
    %1989 = vmatpush1.msra.mxu0 %v1942
    %1990 = vmatprep.subr.mxu0 0.0
    %1991 = vmatpush1.msra.mxu0 %v1943
    %1992 = vmatprep.subr.mxu0 0.0
    %1993 = vmatpush1.msra.mxu0 %v1944
    %1994 = vmatprep.subr.mxu0 0.0
    %1995 = vmatpush1.msra.mxu0 %v1945
    %1996 = vmatprep.subr.mxu0 0.0
    %1997 = vmatpush1.msra.mxu0 %v1946
    %1998 = vmatprep.subr.mxu0 0.0
    %1999 = vmatpush1.msra.mxu0 %v1947
    %2000 = vmatprep.subr.mxu0 0.0
    %2001 = vmatpush1.msra.mxu0 %v1948
    %2002 = vmatprep.subr.mxu0 0.0
    %2003 = vmatpush1.msra.mxu0 %v1949
    %2004 = vmatprep.subr.mxu0 0.0
    %2005 = vmatpush1.msra.mxu0 %v1950
    %2006 = vmatprep.subr.mxu0 0.0
    %2007 = vmatpush1.msra.mxu0 %v1951
    %2008 = vmatprep.subr.mxu0 0.0
    %2009 = vmatpush1.msra.mxu0 %v1952
    %2010 = vmatprep.subr.mxu0 0.0
    %2011 = vmatpush1.msra.mxu0 %v1953
    %2012 = vmatprep.subr.mxu0 0.0
    %2013 = vmatpush1.msra.mxu0 %v1954
    %2014 = vmatprep.subr.mxu0 0.0
    %2015 = vmatpush1.msra.mxu0 0.0
    %2016 = vmatprep.subr.mxu0 0.0
    %2017 = vmatpush1.msra.mxu0 0.0
    %2018 = vmatprep.subr.mxu0 0.0
    %2019 = vmatpush1.msra.mxu0 0.0
    %2020 = vmatprep.subr.mxu0 0.0
    %2021 = vmatpush1.msra.mxu0 0.0
    %2022 = vmatprep.mubr.f32.mxu0 %v1956
    %2023 = vmatmul.mubr.f32.gmra.mrb[0].mxu0 %v1830
    %v2024 = vpop.f32.mrb[0].mxu0
    %v2025 = vadd.f32 0.0, %v2024
    %v2026 = vpop.f32.mrb[0].mxu0
    %2027 = vdwg.mxu0
    %v2029 = vsel %vm1157, %v1829, 0
    %2031 = vmatprep.subr.mxu0 0.0
    %2032 = vmatpush1.msra.mxu0 %v1870
    %2033 = vmatprep.subr.mxu0 0.0
    %2034 = vmatpush1.msra.mxu0 %v1871
    %2035 = vmatprep.subr.mxu0 0.0
    %2036 = vmatpush1.msra.mxu0 %v1872
    %2037 = vmatprep.subr.mxu0 0.0
    %2038 = vmatpush1.msra.mxu0 %v1873
    %2039 = vmatprep.subr.mxu0 0.0
    %2040 = vmatpush1.msra.mxu0 %v1874
    %2041 = vmatprep.subr.mxu0 0.0
    %2042 = vmatpush1.msra.mxu0 %v1875
    %2043 = vmatprep.subr.mxu0 0.0
    %2044 = vmatpush1.msra.mxu0 %v1876
    %2045 = vmatprep.subr.mxu0 0.0
    %2046 = vmatpush1.msra.mxu0 %v1877
    %2047 = vmatprep.subr.mxu0 0.0
    %2048 = vmatpush1.msra.mxu0 %v1878
    %2049 = vmatprep.subr.mxu0 0.0
    %2050 = vmatpush1.msra.mxu0 %v1879
    %2051 = vmatprep.subr.mxu0 0.0
    %2052 = vmatpush1.msra.mxu0 %v1880
    %2053 = vmatprep.subr.mxu0 0.0
    %2054 = vmatpush1.msra.mxu0 %v1881
    %2055 = vmatprep.subr.mxu0 0.0
    %2056 = vmatpush1.msra.mxu0 %v1882
    %2057 = vmatprep.subr.mxu0 0.0
    %2058 = vmatpush1.msra.mxu0 %v1883
    %2059 = vmatprep.subr.mxu0 0.0
    %2060 = vmatpush1.msra.mxu0 %v1884
    %2061 = vmatprep.subr.mxu0 0.0
    %2062 = vmatpush1.msra.mxu0 %v1885
    %2063 = vmatprep.subr.mxu0 0.0
    %2064 = vmatpush1.msra.mxu0 %v1886
    %2065 = vmatprep.subr.mxu0 0.0
    %2066 = vmatpush1.msra.mxu0 %v1887
    %2067 = vmatprep.subr.mxu0 0.0
    %2068 = vmatpush1.msra.mxu0 %v1888
    %2069 = vmatprep.subr.mxu0 0.0
    %2070 = vmatpush1.msra.mxu0 %v1889
    %2071 = vmatprep.subr.mxu0 0.0
    %2072 = vmatpush1.msra.mxu0 %v1890
    %2073 = vmatprep.subr.mxu0 0.0
    %2074 = vmatpush1.msra.mxu0 %v1891
    %2075 = vmatprep.subr.mxu0 0.0
    %2076 = vmatpush1.msra.mxu0 %v1892
    %2077 = vmatprep.subr.mxu0 0.0
    %2078 = vmatpush1.msra.mxu0 %v1893
    %2079 = vmatprep.subr.mxu0 0.0
    %2080 = vmatpush1.msra.mxu0 %v1894
    %2081 = vmatprep.subr.mxu0 0.0
    %2082 = vmatpush1.msra.mxu0 %v1895
    %2083 = vmatprep.subr.mxu0 0.0
    %2084 = vmatpush1.msra.mxu0 %v1896
    %2085 = vmatprep.subr.mxu0 0.0
    %2086 = vmatpush1.msra.mxu0 %v1897
    %2087 = vmatprep.subr.mxu0 0.0
    %2088 = vmatpush1.msra.mxu0 0.0
    %2089 = vmatprep.subr.mxu0 0.0
    %2090 = vmatpush1.msra.mxu0 0.0
    %2091 = vmatprep.subr.mxu0 0.0
    %2092 = vmatpush1.msra.mxu0 0.0
    %2093 = vmatprep.subr.mxu0 0.0
    %2094 = vmatpush1.msra.mxu0 0.0
    %2095 = vmatprep.mubr.f32.mxu0 %v2029
    %2096 = vmatmul.mubr.f32.gmra.mrb[0].mxu0 %v1828
    %v2097 = vpop.f32.mrb[0].mxu0
    %v2098 = vadd.f32 %v2025, %v2097
    %v2099 = vpop.f32.mrb[0].mxu0
    %2100 = vdwg.mxu0
    %s2101 = scalar_lea.vmem %s4, 224
    %v2102 = vld [vmem:[%s2101] sm:$0xf]
    %v2103 = vld [vmem:[%s2101 + $0x4] sm:$0xf]
    %v2104 = vld [vmem:[%s2101 + $0x8] sm:$0xf]
    %v2105 = vld [vmem:[%s2101 + $0xc] sm:$0xf]
    %v2106 = vld [vmem:[%s2101 + $0x10] sm:$0xf]
    %v2107 = vld [vmem:[%s2101 + $0x14] sm:$0xf]
    %v2108 = vld [vmem:[%s2101 + $0x18] sm:$0xf]
    %v2109 = vld [vmem:[%s2101 + $0x1c] sm:$0xf]
    %v2110 = vld [vmem:[%s2101 + $0x20] sm:$0xf]
    %v2111 = vld [vmem:[%s2101 + $0x24] sm:$0xf]
    %v2112 = vld [vmem:[%s2101 + $0x28] sm:$0xf]
    %v2113 = vld [vmem:[%s2101 + $0x2c] sm:$0xf]
    %v2114 = vld [vmem:[%s2101 + $0x30] sm:$0xf]
    %v2115 = vld [vmem:[%s2101 + $0x34] sm:$0xf]
    %v2116 = vld [vmem:[%s2101 + $0x38] sm:$0xf]
    %v2117 = vld [vmem:[%s2101 + $0x3c] sm:$0xf]
    %v2118 = vld [vmem:[%s2101 + $0x40] sm:$0xf]
    %v2119 = vld [vmem:[%s2101 + $0x44] sm:$0xf]
    %v2120 = vld [vmem:[%s2101 + $0x48] sm:$0xf]
    %v2121 = vld [vmem:[%s2101 + $0x4c] sm:$0xf]
    %v2122 = vld [vmem:[%s2101 + $0x50] sm:$0xf]
    %v2123 = vld [vmem:[%s2101 + $0x54] sm:$0xf]
    %v2124 = vld [vmem:[%s2101 + $0x58] sm:$0xf]
    %v2125 = vld [vmem:[%s2101 + $0x5c] sm:$0xf]
    %v2126 = vld [vmem:[%s2101 + $0x60] sm:$0xf]
    %v2127 = vld [vmem:[%s2101 + $0x64] sm:$0xf]
    %v2128 = vld [vmem:[%s2101 + $0x68] sm:$0xf]
    %v2129 = vld [vmem:[%s2101 + $0x6c] sm:$0xf]
    %v2130 = vunpack.c.l.bf16 %v2102
    %v2131 = vunpack.c.l.bf16 %v2103
    %v2132 = vunpack.c.l.bf16 %v2104
    %v2133 = vunpack.c.l.bf16 %v2105
    %v2134 = vunpack.c.l.bf16 %v2106
    %v2135 = vunpack.c.l.bf16 %v2107
    %v2136 = vunpack.c.l.bf16 %v2108
    %v2137 = vunpack.c.l.bf16 %v2109
    %v2138 = vunpack.c.l.bf16 %v2110
    %v2139 = vunpack.c.l.bf16 %v2111
    %v2140 = vunpack.c.l.bf16 %v2112
    %v2141 = vunpack.c.l.bf16 %v2113
    %v2142 = vunpack.c.l.bf16 %v2114
    %v2143 = vunpack.c.l.bf16 %v2115
    %v2144 = vunpack.c.l.bf16 %v2116
    %v2145 = vunpack.c.l.bf16 %v2117
    %v2146 = vunpack.c.l.bf16 %v2118
    %v2147 = vunpack.c.l.bf16 %v2119
    %v2148 = vunpack.c.l.bf16 %v2120
    %v2149 = vunpack.c.l.bf16 %v2121
    %v2150 = vunpack.c.l.bf16 %v2122
    %v2151 = vunpack.c.l.bf16 %v2123
    %v2152 = vunpack.c.l.bf16 %v2124
    %v2153 = vunpack.c.l.bf16 %v2125
    %v2154 = vunpack.c.l.bf16 %v2126
    %v2155 = vunpack.c.l.bf16 %v2127
    %v2156 = vunpack.c.l.bf16 %v2128
    %v2157 = vunpack.c.l.bf16 %v2129
    %v2159 = vsel %vm1157, %v1833, 0
    %2161 = vmatprep.subr.mxu0 0.0
    %2162 = vmatpush1.msra.mxu0 %v2130
    %2163 = vmatprep.subr.mxu0 0.0
    %2164 = vmatpush1.msra.mxu0 %v2131
    %2165 = vmatprep.subr.mxu0 0.0
    %2166 = vmatpush1.msra.mxu0 %v2132
    %2167 = vmatprep.subr.mxu0 0.0
    %2168 = vmatpush1.msra.mxu0 %v2133
    %2169 = vmatprep.subr.mxu0 0.0
    %2170 = vmatpush1.msra.mxu0 %v2134
    %2171 = vmatprep.subr.mxu0 0.0
    %2172 = vmatpush1.msra.mxu0 %v2135
    %2173 = vmatprep.subr.mxu0 0.0
    %2174 = vmatpush1.msra.mxu0 %v2136
    %2175 = vmatprep.subr.mxu0 0.0
    %2176 = vmatpush1.msra.mxu0 %v2137
    %2177 = vmatprep.subr.mxu0 0.0
    %2178 = vmatpush1.msra.mxu0 %v2138
    %2179 = vmatprep.subr.mxu0 0.0
    %2180 = vmatpush1.msra.mxu0 %v2139
    %2181 = vmatprep.subr.mxu0 0.0
    %2182 = vmatpush1.msra.mxu0 %v2140
    %2183 = vmatprep.subr.mxu0 0.0
    %2184 = vmatpush1.msra.mxu0 %v2141
    %2185 = vmatprep.subr.mxu0 0.0
    %2186 = vmatpush1.msra.mxu0 %v2142
    %2187 = vmatprep.subr.mxu0 0.0
    %2188 = vmatpush1.msra.mxu0 %v2143
    %2189 = vmatprep.subr.mxu0 0.0
    %2190 = vmatpush1.msra.mxu0 %v2144
    %2191 = vmatprep.subr.mxu0 0.0
    %2192 = vmatpush1.msra.mxu0 %v2145
    %2193 = vmatprep.subr.mxu0 0.0
    %2194 = vmatpush1.msra.mxu0 %v2146
    %2195 = vmatprep.subr.mxu0 0.0
    %2196 = vmatpush1.msra.mxu0 %v2147
    %2197 = vmatprep.subr.mxu0 0.0
    %2198 = vmatpush1.msra.mxu0 %v2148
    %2199 = vmatprep.subr.mxu0 0.0
    %2200 = vmatpush1.msra.mxu0 %v2149
    %2201 = vmatprep.subr.mxu0 0.0
    %2202 = vmatpush1.msra.mxu0 %v2150
    %2203 = vmatprep.subr.mxu0 0.0
    %2204 = vmatpush1.msra.mxu0 %v2151
    %2205 = vmatprep.subr.mxu0 0.0
    %2206 = vmatpush1.msra.mxu0 %v2152
    %2207 = vmatprep.subr.mxu0 0.0
    %2208 = vmatpush1.msra.mxu0 %v2153
    %2209 = vmatprep.subr.mxu0 0.0
    %2210 = vmatpush1.msra.mxu0 %v2154
    %2211 = vmatprep.subr.mxu0 0.0
    %2212 = vmatpush1.msra.mxu0 %v2155
    %2213 = vmatprep.subr.mxu0 0.0
    %2214 = vmatpush1.msra.mxu0 %v2156
    %2215 = vmatprep.subr.mxu0 0.0
    %2216 = vmatpush1.msra.mxu0 %v2157
    %2217 = vmatprep.subr.mxu0 0.0
    %2218 = vmatpush1.msra.mxu0 0.0
    %2219 = vmatprep.subr.mxu0 0.0
    %2220 = vmatpush1.msra.mxu0 0.0
    %2221 = vmatprep.subr.mxu0 0.0
    %2222 = vmatpush1.msra.mxu0 0.0
    %2223 = vmatprep.subr.mxu0 0.0
    %2224 = vmatpush1.msra.mxu0 0.0
    %2225 = vmatprep.mubr.f32.mxu0 %v2159
    %2226 = vmatmul.mubr.f32.gmra.mrb[0].mxu0 %v1832
    %v2227 = vpop.f32.mrb[0].mxu0
    %v2228 = vadd.f32 0.0, %v2227
    %v2229 = vpop.f32.mrb[0].mxu0
    %2230 = vdwg.mxu0
    %v2231 = vadd.f32 %v2098, %v2228
    %s2232 = scalar_lea.vmem %s4, 336
    %v2233 = vld [vmem:[%s2232] sm:$0xf]
    %v2234 = vld [vmem:[%s2232 + $0x4] sm:$0xf]
    %v2235 = vld [vmem:[%s2232 + $0x8] sm:$0xf]
    %v2236 = vld [vmem:[%s2232 + $0xc] sm:$0xf]
    %v2237 = vld [vmem:[%s2232 + $0x10] sm:$0xf]
    %v2238 = vld [vmem:[%s2232 + $0x14] sm:$0xf]
    %v2239 = vld [vmem:[%s2232 + $0x18] sm:$0xf]
    %v2240 = vld [vmem:[%s2232 + $0x1c] sm:$0xf]
    %v2241 = vld [vmem:[%s2232 + $0x20] sm:$0xf]
    %v2242 = vld [vmem:[%s2232 + $0x24] sm:$0xf]
    %v2243 = vld [vmem:[%s2232 + $0x28] sm:$0xf]
    %v2244 = vld [vmem:[%s2232 + $0x2c] sm:$0xf]
    %v2245 = vld [vmem:[%s2232 + $0x30] sm:$0xf]
    %v2246 = vld [vmem:[%s2232 + $0x34] sm:$0xf]
    %v2247 = vld [vmem:[%s2232 + $0x38] sm:$0xf]
    %v2248 = vld [vmem:[%s2232 + $0x3c] sm:$0xf]
    %v2249 = vld [vmem:[%s2232 + $0x40] sm:$0xf]
    %v2250 = vld [vmem:[%s2232 + $0x44] sm:$0xf]
    %v2251 = vld [vmem:[%s2232 + $0x48] sm:$0xf]
    %v2252 = vld [vmem:[%s2232 + $0x4c] sm:$0xf]
    %v2253 = vld [vmem:[%s2232 + $0x50] sm:$0xf]
    %v2254 = vld [vmem:[%s2232 + $0x54] sm:$0xf]
    %v2255 = vld [vmem:[%s2232 + $0x58] sm:$0xf]
    %v2256 = vld [vmem:[%s2232 + $0x5c] sm:$0xf]
    %v2257 = vld [vmem:[%s2232 + $0x60] sm:$0xf]
    %v2258 = vld [vmem:[%s2232 + $0x64] sm:$0xf]
    %v2259 = vld [vmem:[%s2232 + $0x68] sm:$0xf]
    %v2260 = vld [vmem:[%s2232 + $0x6c] sm:$0xf]
    %v2261 = vunpack.c.l.bf16 %v2233
    %v2262 = vunpack.c.l.bf16 %v2234
    %v2263 = vunpack.c.l.bf16 %v2235
    %v2264 = vunpack.c.l.bf16 %v2236
    %v2265 = vunpack.c.l.bf16 %v2237
    %v2266 = vunpack.c.l.bf16 %v2238
    %v2267 = vunpack.c.l.bf16 %v2239
    %v2268 = vunpack.c.l.bf16 %v2240
    %v2269 = vunpack.c.l.bf16 %v2241
    %v2270 = vunpack.c.l.bf16 %v2242
    %v2271 = vunpack.c.l.bf16 %v2243
    %v2272 = vunpack.c.l.bf16 %v2244
    %v2273 = vunpack.c.l.bf16 %v2245
    %v2274 = vunpack.c.l.bf16 %v2246
    %v2275 = vunpack.c.l.bf16 %v2247
    %v2276 = vunpack.c.l.bf16 %v2248
    %v2277 = vunpack.c.l.bf16 %v2249
    %v2278 = vunpack.c.l.bf16 %v2250
    %v2279 = vunpack.c.l.bf16 %v2251
    %v2280 = vunpack.c.l.bf16 %v2252
    %v2281 = vunpack.c.l.bf16 %v2253
    %v2282 = vunpack.c.l.bf16 %v2254
    %v2283 = vunpack.c.l.bf16 %v2255
    %v2284 = vunpack.c.l.bf16 %v2256
    %v2285 = vunpack.c.l.bf16 %v2257
    %v2286 = vunpack.c.l.bf16 %v2258
    %v2287 = vunpack.c.l.bf16 %v2259
    %v2288 = vunpack.c.l.bf16 %v2260
    %v2290 = vsel %vm1157, %v1835, 0
    %2292 = vmatprep.subr.mxu0 0.0
    %2293 = vmatpush1.msra.mxu0 %v2261
    %2294 = vmatprep.subr.mxu0 0.0
    %2295 = vmatpush1.msra.mxu0 %v2262
    %2296 = vmatprep.subr.mxu0 0.0
    %2297 = vmatpush1.msra.mxu0 %v2263
    %2298 = vmatprep.subr.mxu0 0.0
    %2299 = vmatpush1.msra.mxu0 %v2264
    %2300 = vmatprep.subr.mxu0 0.0
    %2301 = vmatpush1.msra.mxu0 %v2265
    %2302 = vmatprep.subr.mxu0 0.0
    %2303 = vmatpush1.msra.mxu0 %v2266
    %2304 = vmatprep.subr.mxu0 0.0
    %2305 = vmatpush1.msra.mxu0 %v2267
    %2306 = vmatprep.subr.mxu0 0.0
    %2307 = vmatpush1.msra.mxu0 %v2268
    %2308 = vmatprep.subr.mxu0 0.0
    %2309 = vmatpush1.msra.mxu0 %v2269
    %2310 = vmatprep.subr.mxu0 0.0
    %2311 = vmatpush1.msra.mxu0 %v2270
    %2312 = vmatprep.subr.mxu0 0.0
    %2313 = vmatpush1.msra.mxu0 %v2271
    %2314 = vmatprep.subr.mxu0 0.0
    %2315 = vmatpush1.msra.mxu0 %v2272
    %2316 = vmatprep.subr.mxu0 0.0
    %2317 = vmatpush1.msra.mxu0 %v2273
    %2318 = vmatprep.subr.mxu0 0.0
    %2319 = vmatpush1.msra.mxu0 %v2274
    %2320 = vmatprep.subr.mxu0 0.0
    %2321 = vmatpush1.msra.mxu0 %v2275
    %2322 = vmatprep.subr.mxu0 0.0
    %2323 = vmatpush1.msra.mxu0 %v2276
    %2324 = vmatprep.subr.mxu0 0.0
    %2325 = vmatpush1.msra.mxu0 %v2277
    %2326 = vmatprep.subr.mxu0 0.0
    %2327 = vmatpush1.msra.mxu0 %v2278
    %2328 = vmatprep.subr.mxu0 0.0
    %2329 = vmatpush1.msra.mxu0 %v2279
    %2330 = vmatprep.subr.mxu0 0.0
    %2331 = vmatpush1.msra.mxu0 %v2280
    %2332 = vmatprep.subr.mxu0 0.0
    %2333 = vmatpush1.msra.mxu0 %v2281
    %2334 = vmatprep.subr.mxu0 0.0
    %2335 = vmatpush1.msra.mxu0 %v2282
    %2336 = vmatprep.subr.mxu0 0.0
    %2337 = vmatpush1.msra.mxu0 %v2283
    %2338 = vmatprep.subr.mxu0 0.0
    %2339 = vmatpush1.msra.mxu0 %v2284
    %2340 = vmatprep.subr.mxu0 0.0
    %2341 = vmatpush1.msra.mxu0 %v2285
    %2342 = vmatprep.subr.mxu0 0.0
    %2343 = vmatpush1.msra.mxu0 %v2286
    %2344 = vmatprep.subr.mxu0 0.0
    %2345 = vmatpush1.msra.mxu0 %v2287
    %2346 = vmatprep.subr.mxu0 0.0
    %2347 = vmatpush1.msra.mxu0 %v2288
    %2348 = vmatprep.subr.mxu0 0.0
    %2349 = vmatpush1.msra.mxu0 0.0
    %2350 = vmatprep.subr.mxu0 0.0
    %2351 = vmatpush1.msra.mxu0 0.0
    %2352 = vmatprep.subr.mxu0 0.0
    %2353 = vmatpush1.msra.mxu0 0.0
    %2354 = vmatprep.subr.mxu0 0.0
    %2355 = vmatpush1.msra.mxu0 0.0
    %2356 = vmatprep.mubr.f32.mxu0 %v2290
    %2357 = vmatmul.mubr.f32.gmra.mrb[0].mxu0 %v1834
    %v2358 = vpop.f32.mrb[0].mxu0
    %v2359 = vadd.f32 0.0, %v2358
    %v2360 = vpop.f32.mrb[0].mxu0
    %2361 = vdwg.mxu0
    %v2362 = vadd.f32 %v2231, %v2359
    %s2363 = scalar_lea.vmem %s4, 448
    %v2364 = vld [vmem:[%s2363] sm:$0xf]
    %v2365 = vld [vmem:[%s2363 + $0x4] sm:$0xf]
    %v2366 = vld [vmem:[%s2363 + $0x8] sm:$0xf]
    %v2367 = vld [vmem:[%s2363 + $0xc] sm:$0xf]
    %v2368 = vld [vmem:[%s2363 + $0x10] sm:$0xf]
    %v2369 = vld [vmem:[%s2363 + $0x14] sm:$0xf]
    %v2370 = vld [vmem:[%s2363 + $0x18] sm:$0xf]
    %v2371 = vld [vmem:[%s2363 + $0x1c] sm:$0xf]
    %v2372 = vld [vmem:[%s2363 + $0x20] sm:$0xf]
    %v2373 = vld [vmem:[%s2363 + $0x24] sm:$0xf]
    %v2374 = vld [vmem:[%s2363 + $0x28] sm:$0xf]
    %v2375 = vld [vmem:[%s2363 + $0x2c] sm:$0xf]
    %v2376 = vld [vmem:[%s2363 + $0x30] sm:$0xf]
    %v2377 = vld [vmem:[%s2363 + $0x34] sm:$0xf]
    %v2378 = vld [vmem:[%s2363 + $0x38] sm:$0xf]
    %v2379 = vld [vmem:[%s2363 + $0x3c] sm:$0xf]
    %v2380 = vld [vmem:[%s2363 + $0x40] sm:$0xf]
    %v2381 = vld [vmem:[%s2363 + $0x44] sm:$0xf]
    %v2382 = vld [vmem:[%s2363 + $0x48] sm:$0xf]
    %v2383 = vld [vmem:[%s2363 + $0x4c] sm:$0xf]
    %v2384 = vld [vmem:[%s2363 + $0x50] sm:$0xf]
    %v2385 = vld [vmem:[%s2363 + $0x54] sm:$0xf]
    %v2386 = vld [vmem:[%s2363 + $0x58] sm:$0xf]
    %v2387 = vld [vmem:[%s2363 + $0x5c] sm:$0xf]
    %v2388 = vld [vmem:[%s2363 + $0x60] sm:$0xf]
    %v2389 = vld [vmem:[%s2363 + $0x64] sm:$0xf]
    %v2390 = vld [vmem:[%s2363 + $0x68] sm:$0xf]
    %v2391 = vld [vmem:[%s2363 + $0x6c] sm:$0xf]
    %v2392 = vunpack.c.l.bf16 %v2364
    %v2393 = vunpack.c.l.bf16 %v2365
    %v2394 = vunpack.c.l.bf16 %v2366
    %v2395 = vunpack.c.l.bf16 %v2367
    %v2396 = vunpack.c.l.bf16 %v2368
    %v2397 = vunpack.c.l.bf16 %v2369
    %v2398 = vunpack.c.l.bf16 %v2370
    %v2399 = vunpack.c.l.bf16 %v2371
    %v2400 = vunpack.c.l.bf16 %v2372
    %v2401 = vunpack.c.l.bf16 %v2373
    %v2402 = vunpack.c.l.bf16 %v2374
    %v2403 = vunpack.c.l.bf16 %v2375
    %v2404 = vunpack.c.l.bf16 %v2376
    %v2405 = vunpack.c.l.bf16 %v2377
    %v2406 = vunpack.c.l.bf16 %v2378
    %v2407 = vunpack.c.l.bf16 %v2379
    %v2408 = vunpack.c.l.bf16 %v2380
    %v2409 = vunpack.c.l.bf16 %v2381
    %v2410 = vunpack.c.l.bf16 %v2382
    %v2411 = vunpack.c.l.bf16 %v2383
    %v2412 = vunpack.c.l.bf16 %v2384
    %v2413 = vunpack.c.l.bf16 %v2385
    %v2414 = vunpack.c.l.bf16 %v2386
    %v2415 = vunpack.c.l.bf16 %v2387
    %v2416 = vunpack.c.l.bf16 %v2388
    %v2417 = vunpack.c.l.bf16 %v2389
    %v2418 = vunpack.c.l.bf16 %v2390
    %v2419 = vunpack.c.l.bf16 %v2391
    %v2421 = vsel %vm1157, %v1837, 0
    %2423 = vmatprep.subr.mxu0 0.0
    %2424 = vmatpush1.msra.mxu0 %v2392
    %2425 = vmatprep.subr.mxu0 0.0
    %2426 = vmatpush1.msra.mxu0 %v2393
    %2427 = vmatprep.subr.mxu0 0.0
    %2428 = vmatpush1.msra.mxu0 %v2394
    %2429 = vmatprep.subr.mxu0 0.0
    %2430 = vmatpush1.msra.mxu0 %v2395
    %2431 = vmatprep.subr.mxu0 0.0
    %2432 = vmatpush1.msra.mxu0 %v2396
    %2433 = vmatprep.subr.mxu0 0.0
    %2434 = vmatpush1.msra.mxu0 %v2397
    %2435 = vmatprep.subr.mxu0 0.0
    %2436 = vmatpush1.msra.mxu0 %v2398
    %2437 = vmatprep.subr.mxu0 0.0
    %2438 = vmatpush1.msra.mxu0 %v2399
    %2439 = vmatprep.subr.mxu0 0.0
    %2440 = vmatpush1.msra.mxu0 %v2400
    %2441 = vmatprep.subr.mxu0 0.0
    %2442 = vmatpush1.msra.mxu0 %v2401
    %2443 = vmatprep.subr.mxu0 0.0
    %2444 = vmatpush1.msra.mxu0 %v2402
    %2445 = vmatprep.subr.mxu0 0.0
    %2446 = vmatpush1.msra.mxu0 %v2403
    %2447 = vmatprep.subr.mxu0 0.0
    %2448 = vmatpush1.msra.mxu0 %v2404
    %2449 = vmatprep.subr.mxu0 0.0
    %2450 = vmatpush1.msra.mxu0 %v2405
    %2451 = vmatprep.subr.mxu0 0.0
    %2452 = vmatpush1.msra.mxu0 %v2406
    %2453 = vmatprep.subr.mxu0 0.0
    %2454 = vmatpush1.msra.mxu0 %v2407
    %2455 = vmatprep.subr.mxu0 0.0
    %2456 = vmatpush1.msra.mxu0 %v2408
    %2457 = vmatprep.subr.mxu0 0.0
    %2458 = vmatpush1.msra.mxu0 %v2409
    %2459 = vmatprep.subr.mxu0 0.0
    %2460 = vmatpush1.msra.mxu0 %v2410
    %2461 = vmatprep.subr.mxu0 0.0
    %2462 = vmatpush1.msra.mxu0 %v2411
    %2463 = vmatprep.subr.mxu0 0.0
    %2464 = vmatpush1.msra.mxu0 %v2412
    %2465 = vmatprep.subr.mxu0 0.0
    %2466 = vmatpush1.msra.mxu0 %v2413
    %2467 = vmatprep.subr.mxu0 0.0
    %2468 = vmatpush1.msra.mxu0 %v2414
    %2469 = vmatprep.subr.mxu0 0.0
    %2470 = vmatpush1.msra.mxu0 %v2415
    %2471 = vmatprep.subr.mxu0 0.0
    %2472 = vmatpush1.msra.mxu0 %v2416
    %2473 = vmatprep.subr.mxu0 0.0
    %2474 = vmatpush1.msra.mxu0 %v2417
    %2475 = vmatprep.subr.mxu0 0.0
    %2476 = vmatpush1.msra.mxu0 %v2418
    %2477 = vmatprep.subr.mxu0 0.0
    %2478 = vmatpush1.msra.mxu0 %v2419
    %2479 = vmatprep.subr.mxu0 0.0
    %2480 = vmatpush1.msra.mxu0 0.0
    %2481 = vmatprep.subr.mxu0 0.0
    %2482 = vmatpush1.msra.mxu0 0.0
    %2483 = vmatprep.subr.mxu0 0.0
    %2484 = vmatpush1.msra.mxu0 0.0
    %2485 = vmatprep.subr.mxu0 0.0
    %2486 = vmatpush1.msra.mxu0 0.0
    %2487 = vmatprep.mubr.f32.mxu0 %v2421
    %2488 = vmatmul.mubr.f32.gmra.mrb[0].mxu0 %v1836
    %v2489 = vpop.f32.mrb[0].mxu0
    %v2490 = vadd.f32 0.0, %v2489
    %v2491 = vpop.f32.mrb[0].mxu0
    %2492 = vdwg.mxu0
    %v2493 = vadd.f32 %v2362, %v2490
    %s2494 = scalar_lea.vmem %s4, 560
    %v2495 = vld [vmem:[%s2494] sm:$0xf]
    %v2496 = vld [vmem:[%s2494 + $0x4] sm:$0xf]
    %v2497 = vld [vmem:[%s2494 + $0x8] sm:$0xf]
    %v2498 = vld [vmem:[%s2494 + $0xc] sm:$0xf]
    %v2499 = vld [vmem:[%s2494 + $0x10] sm:$0xf]
    %v2500 = vld [vmem:[%s2494 + $0x14] sm:$0xf]
    %v2501 = vld [vmem:[%s2494 + $0x18] sm:$0xf]
    %v2502 = vld [vmem:[%s2494 + $0x1c] sm:$0xf]
    %v2503 = vld [vmem:[%s2494 + $0x20] sm:$0xf]
    %v2504 = vld [vmem:[%s2494 + $0x24] sm:$0xf]
    %v2505 = vld [vmem:[%s2494 + $0x28] sm:$0xf]
    %v2506 = vld [vmem:[%s2494 + $0x2c] sm:$0xf]
    %v2507 = vld [vmem:[%s2494 + $0x30] sm:$0xf]
    %v2508 = vld [vmem:[%s2494 + $0x34] sm:$0xf]
    %v2509 = vld [vmem:[%s2494 + $0x38] sm:$0xf]
    %v2510 = vld [vmem:[%s2494 + $0x3c] sm:$0xf]
    %v2511 = vld [vmem:[%s2494 + $0x40] sm:$0xf]
    %v2512 = vld [vmem:[%s2494 + $0x44] sm:$0xf]
    %v2513 = vld [vmem:[%s2494 + $0x48] sm:$0xf]
    %v2514 = vld [vmem:[%s2494 + $0x4c] sm:$0xf]
    %v2515 = vld [vmem:[%s2494 + $0x50] sm:$0xf]
    %v2516 = vld [vmem:[%s2494 + $0x54] sm:$0xf]
    %v2517 = vld [vmem:[%s2494 + $0x58] sm:$0xf]
    %v2518 = vld [vmem:[%s2494 + $0x5c] sm:$0xf]
    %v2519 = vld [vmem:[%s2494 + $0x60] sm:$0xf]
    %v2520 = vld [vmem:[%s2494 + $0x64] sm:$0xf]
    %v2521 = vld [vmem:[%s2494 + $0x68] sm:$0xf]
    %v2522 = vld [vmem:[%s2494 + $0x6c] sm:$0xf]
    %v2523 = vunpack.c.l.bf16 %v2495
    %v2524 = vunpack.c.l.bf16 %v2496
    %v2525 = vunpack.c.l.bf16 %v2497
    %v2526 = vunpack.c.l.bf16 %v2498
    %v2527 = vunpack.c.l.bf16 %v2499
    %v2528 = vunpack.c.l.bf16 %v2500
    %v2529 = vunpack.c.l.bf16 %v2501
    %v2530 = vunpack.c.l.bf16 %v2502
    %v2531 = vunpack.c.l.bf16 %v2503
    %v2532 = vunpack.c.l.bf16 %v2504
    %v2533 = vunpack.c.l.bf16 %v2505
    %v2534 = vunpack.c.l.bf16 %v2506
    %v2535 = vunpack.c.l.bf16 %v2507
    %v2536 = vunpack.c.l.bf16 %v2508
    %v2537 = vunpack.c.l.bf16 %v2509
    %v2538 = vunpack.c.l.bf16 %v2510
    %v2539 = vunpack.c.l.bf16 %v2511
    %v2540 = vunpack.c.l.bf16 %v2512
    %v2541 = vunpack.c.l.bf16 %v2513
    %v2542 = vunpack.c.l.bf16 %v2514
    %v2543 = vunpack.c.l.bf16 %v2515
    %v2544 = vunpack.c.l.bf16 %v2516
    %v2545 = vunpack.c.l.bf16 %v2517
    %v2546 = vunpack.c.l.bf16 %v2518
    %v2547 = vunpack.c.l.bf16 %v2519
    %v2548 = vunpack.c.l.bf16 %v2520
    %v2549 = vunpack.c.l.bf16 %v2521
    %v2550 = vunpack.c.l.bf16 %v2522
    %v2552 = vsel %vm1157, %v1839, 0
    %2554 = vmatprep.subr.mxu0 0.0
    %2555 = vmatpush1.msra.mxu0 %v2523
    %2556 = vmatprep.subr.mxu0 0.0
    %2557 = vmatpush1.msra.mxu0 %v2524
    %2558 = vmatprep.subr.mxu0 0.0
    %2559 = vmatpush1.msra.mxu0 %v2525
    %2560 = vmatprep.subr.mxu0 0.0
    %2561 = vmatpush1.msra.mxu0 %v2526
    %2562 = vmatprep.subr.mxu0 0.0
    %2563 = vmatpush1.msra.mxu0 %v2527
    %2564 = vmatprep.subr.mxu0 0.0
    %2565 = vmatpush1.msra.mxu0 %v2528
    %2566 = vmatprep.subr.mxu0 0.0
    %2567 = vmatpush1.msra.mxu0 %v2529
    %2568 = vmatprep.subr.mxu0 0.0
    %2569 = vmatpush1.msra.mxu0 %v2530
    %2570 = vmatprep.subr.mxu0 0.0
    %2571 = vmatpush1.msra.mxu0 %v2531
    %2572 = vmatprep.subr.mxu0 0.0
    %2573 = vmatpush1.msra.mxu0 %v2532
    %2574 = vmatprep.subr.mxu0 0.0
    %2575 = vmatpush1.msra.mxu0 %v2533
    %2576 = vmatprep.subr.mxu0 0.0
    %2577 = vmatpush1.msra.mxu0 %v2534
    %2578 = vmatprep.subr.mxu0 0.0
    %2579 = vmatpush1.msra.mxu0 %v2535
    %2580 = vmatprep.subr.mxu0 0.0
    %2581 = vmatpush1.msra.mxu0 %v2536
    %2582 = vmatprep.subr.mxu0 0.0
    %2583 = vmatpush1.msra.mxu0 %v2537
    %2584 = vmatprep.subr.mxu0 0.0
    %2585 = vmatpush1.msra.mxu0 %v2538
    %2586 = vmatprep.subr.mxu0 0.0
    %2587 = vmatpush1.msra.mxu0 %v2539
    %2588 = vmatprep.subr.mxu0 0.0
    %2589 = vmatpush1.msra.mxu0 %v2540
    %2590 = vmatprep.subr.mxu0 0.0
    %2591 = vmatpush1.msra.mxu0 %v2541
    %2592 = vmatprep.subr.mxu0 0.0
    %2593 = vmatpush1.msra.mxu0 %v2542
    %2594 = vmatprep.subr.mxu0 0.0
    %2595 = vmatpush1.msra.mxu0 %v2543
    %2596 = vmatprep.subr.mxu0 0.0
    %2597 = vmatpush1.msra.mxu0 %v2544
    %2598 = vmatprep.subr.mxu0 0.0
    %2599 = vmatpush1.msra.mxu0 %v2545
    %2600 = vmatprep.subr.mxu0 0.0
    %2601 = vmatpush1.msra.mxu0 %v2546
    %2602 = vmatprep.subr.mxu0 0.0
    %2603 = vmatpush1.msra.mxu0 %v2547
    %2604 = vmatprep.subr.mxu0 0.0
    %2605 = vmatpush1.msra.mxu0 %v2548
    %2606 = vmatprep.subr.mxu0 0.0
    %2607 = vmatpush1.msra.mxu0 %v2549
    %2608 = vmatprep.subr.mxu0 0.0
    %2609 = vmatpush1.msra.mxu0 %v2550
    %2610 = vmatprep.subr.mxu0 0.0
    %2611 = vmatpush1.msra.mxu0 0.0
    %2612 = vmatprep.subr.mxu0 0.0
    %2613 = vmatpush1.msra.mxu0 0.0
    %2614 = vmatprep.subr.mxu0 0.0
    %2615 = vmatpush1.msra.mxu0 0.0
    %2616 = vmatprep.subr.mxu0 0.0
    %2617 = vmatpush1.msra.mxu0 0.0
    %2618 = vmatprep.mubr.f32.mxu0 %v2552
    %2619 = vmatmul.mubr.f32.gmra.mrb[0].mxu0 %v1838
    %v2620 = vpop.f32.mrb[0].mxu0
    %v2621 = vadd.f32 0.0, %v2620
    %v2622 = vpop.f32.mrb[0].mxu0
    %2623 = vdwg.mxu0
    %v2624 = vadd.f32 %v2493, %v2621
    %s2625 = scalar_lea.vmem %s4, 672
    %v2626 = vld [vmem:[%s2625] sm:$0xf]
    %v2627 = vld [vmem:[%s2625 + $0x4] sm:$0xf]
    %v2628 = vld [vmem:[%s2625 + $0x8] sm:$0xf]
    %v2629 = vld [vmem:[%s2625 + $0xc] sm:$0xf]
    %v2630 = vld [vmem:[%s2625 + $0x10] sm:$0xf]
    %v2631 = vld [vmem:[%s2625 + $0x14] sm:$0xf]
    %v2632 = vld [vmem:[%s2625 + $0x18] sm:$0xf]
    %v2633 = vld [vmem:[%s2625 + $0x1c] sm:$0xf]
    %v2634 = vld [vmem:[%s2625 + $0x20] sm:$0xf]
    %v2635 = vld [vmem:[%s2625 + $0x24] sm:$0xf]
    %v2636 = vld [vmem:[%s2625 + $0x28] sm:$0xf]
    %v2637 = vld [vmem:[%s2625 + $0x2c] sm:$0xf]
    %v2638 = vld [vmem:[%s2625 + $0x30] sm:$0xf]
    %v2639 = vld [vmem:[%s2625 + $0x34] sm:$0xf]
    %v2640 = vld [vmem:[%s2625 + $0x38] sm:$0xf]
    %v2641 = vld [vmem:[%s2625 + $0x3c] sm:$0xf]
    %v2642 = vld [vmem:[%s2625 + $0x40] sm:$0xf]
    %v2643 = vld [vmem:[%s2625 + $0x44] sm:$0xf]
    %v2644 = vld [vmem:[%s2625 + $0x48] sm:$0xf]
    %v2645 = vld [vmem:[%s2625 + $0x4c] sm:$0xf]
    %v2646 = vld [vmem:[%s2625 + $0x50] sm:$0xf]
    %v2647 = vld [vmem:[%s2625 + $0x54] sm:$0xf]
    %v2648 = vld [vmem:[%s2625 + $0x58] sm:$0xf]
    %v2649 = vld [vmem:[%s2625 + $0x5c] sm:$0xf]
    %v2650 = vld [vmem:[%s2625 + $0x60] sm:$0xf]
    %v2651 = vld [vmem:[%s2625 + $0x64] sm:$0xf]
    %v2652 = vld [vmem:[%s2625 + $0x68] sm:$0xf]
    %v2653 = vld [vmem:[%s2625 + $0x6c] sm:$0xf]
    %v2654 = vunpack.c.l.bf16 %v2626
    %v2655 = vunpack.c.l.bf16 %v2627
    %v2656 = vunpack.c.l.bf16 %v2628
    %v2657 = vunpack.c.l.bf16 %v2629
    %v2658 = vunpack.c.l.bf16 %v2630
    %v2659 = vunpack.c.l.bf16 %v2631
    %v2660 = vunpack.c.l.bf16 %v2632
    %v2661 = vunpack.c.l.bf16 %v2633
    %v2662 = vunpack.c.l.bf16 %v2634
    %v2663 = vunpack.c.l.bf16 %v2635
    %v2664 = vunpack.c.l.bf16 %v2636
    %v2665 = vunpack.c.l.bf16 %v2637
    %v2666 = vunpack.c.l.bf16 %v2638
    %v2667 = vunpack.c.l.bf16 %v2639
    %v2668 = vunpack.c.l.bf16 %v2640
    %v2669 = vunpack.c.l.bf16 %v2641
    %v2670 = vunpack.c.l.bf16 %v2642
    %v2671 = vunpack.c.l.bf16 %v2643
    %v2672 = vunpack.c.l.bf16 %v2644
    %v2673 = vunpack.c.l.bf16 %v2645
    %v2674 = vunpack.c.l.bf16 %v2646
    %v2675 = vunpack.c.l.bf16 %v2647
    %v2676 = vunpack.c.l.bf16 %v2648
    %v2677 = vunpack.c.l.bf16 %v2649
    %v2678 = vunpack.c.l.bf16 %v2650
    %v2679 = vunpack.c.l.bf16 %v2651
    %v2680 = vunpack.c.l.bf16 %v2652
    %v2681 = vunpack.c.l.bf16 %v2653
    %v2683 = vsel %vm1157, %v1841, 0
    %2685 = vmatprep.subr.mxu0 0.0
    %2686 = vmatpush1.msra.mxu0 %v2654
    %2687 = vmatprep.subr.mxu0 0.0
    %2688 = vmatpush1.msra.mxu0 %v2655
    %2689 = vmatprep.subr.mxu0 0.0
    %2690 = vmatpush1.msra.mxu0 %v2656
    %2691 = vmatprep.subr.mxu0 0.0
    %2692 = vmatpush1.msra.mxu0 %v2657
    %2693 = vmatprep.subr.mxu0 0.0
    %2694 = vmatpush1.msra.mxu0 %v2658
    %2695 = vmatprep.subr.mxu0 0.0
    %2696 = vmatpush1.msra.mxu0 %v2659
    %2697 = vmatprep.subr.mxu0 0.0
    %2698 = vmatpush1.msra.mxu0 %v2660
    %2699 = vmatprep.subr.mxu0 0.0
    %2700 = vmatpush1.msra.mxu0 %v2661
    %2701 = vmatprep.subr.mxu0 0.0
    %2702 = vmatpush1.msra.mxu0 %v2662
    %2703 = vmatprep.subr.mxu0 0.0
    %2704 = vmatpush1.msra.mxu0 %v2663
    %2705 = vmatprep.subr.mxu0 0.0
    %2706 = vmatpush1.msra.mxu0 %v2664
    %2707 = vmatprep.subr.mxu0 0.0
    %2708 = vmatpush1.msra.mxu0 %v2665
    %2709 = vmatprep.subr.mxu0 0.0
    %2710 = vmatpush1.msra.mxu0 %v2666
    %2711 = vmatprep.subr.mxu0 0.0
    %2712 = vmatpush1.msra.mxu0 %v2667
    %2713 = vmatprep.subr.mxu0 0.0
    %2714 = vmatpush1.msra.mxu0 %v2668
    %2715 = vmatprep.subr.mxu0 0.0
    %2716 = vmatpush1.msra.mxu0 %v2669
    %2717 = vmatprep.subr.mxu0 0.0
    %2718 = vmatpush1.msra.mxu0 %v2670
    %2719 = vmatprep.subr.mxu0 0.0
    %2720 = vmatpush1.msra.mxu0 %v2671
    %2721 = vmatprep.subr.mxu0 0.0
    %2722 = vmatpush1.msra.mxu0 %v2672
    %2723 = vmatprep.subr.mxu0 0.0
    %2724 = vmatpush1.msra.mxu0 %v2673
    %2725 = vmatprep.subr.mxu0 0.0
    %2726 = vmatpush1.msra.mxu0 %v2674
    %2727 = vmatprep.subr.mxu0 0.0
    %2728 = vmatpush1.msra.mxu0 %v2675
    %2729 = vmatprep.subr.mxu0 0.0
    %2730 = vmatpush1.msra.mxu0 %v2676
    %2731 = vmatprep.subr.mxu0 0.0
    %2732 = vmatpush1.msra.mxu0 %v2677
    %2733 = vmatprep.subr.mxu0 0.0
    %2734 = vmatpush1.msra.mxu0 %v2678
    %2735 = vmatprep.subr.mxu0 0.0
    %2736 = vmatpush1.msra.mxu0 %v2679
    %2737 = vmatprep.subr.mxu0 0.0
    %2738 = vmatpush1.msra.mxu0 %v2680
    %2739 = vmatprep.subr.mxu0 0.0
    %2740 = vmatpush1.msra.mxu0 %v2681
    %2741 = vmatprep.subr.mxu0 0.0
    %2742 = vmatpush1.msra.mxu0 0.0
    %2743 = vmatprep.subr.mxu0 0.0
    %2744 = vmatpush1.msra.mxu0 0.0
    %2745 = vmatprep.subr.mxu0 0.0
    %2746 = vmatpush1.msra.mxu0 0.0
    %2747 = vmatprep.subr.mxu0 0.0
    %2748 = vmatpush1.msra.mxu0 0.0
    %2749 = vmatprep.mubr.f32.mxu0 %v2683
    %2750 = vmatmul.mubr.f32.gmra.mrb[0].mxu0 %v1840
    %v2751 = vpop.f32.mrb[0].mxu0
    %v2752 = vadd.f32 0.0, %v2751
    %v2753 = vpop.f32.mrb[0].mxu0
    %2754 = vdwg.mxu0
    %v2755 = vadd.f32 %v2624, %v2752
    %v2756 = vld [vmem:[%s5] sm:$0x1]
    %v2758 = vlaneseq
    %v2759 = vshrl.u32 %v2758, 7
    %v2760 = vsub.s32 0, %v2759
    %v2761 = vrot.slane %v2756, %v2760
    %v2763 = vadd.f32 %v2755, %v2761
    %v2764 = vmax.f32 %v2763, 0.0
    %v2765 = vld [vmem:[%s6] sm:$0xf]
    %v2766 = vld [vmem:[%s6 + $0x4] sm:$0xf]
    %v2767 = vld [vmem:[%s6 + $0x8] sm:$0xf]
    %v2768 = vld [vmem:[%s6 + $0xc] sm:$0xf]
    %v2769 = vunpack.c.l.bf16 %v2765
    %v2770 = vunpack.c.l.bf16 %v2766
    %v2771 = vunpack.c.l.bf16 %v2767
    %v2772 = vunpack.c.l.bf16 %v2768
    %v2773 = vld [vmem:[#allocation2] sm:$0x1]
    %v2775 = vlaneseq
    %v2776 = vshrl.u32 %v2775, 7
    %v2777 = vsub.s32 0, %v2776
    %v2778 = vrot.slane %v2773, %v2777
    %vm2780 = vcmask 261120
    %v2782 = vsel %vm2780, %v2764, 0
    %2784 = vmatprep.subr.mxu0 0.0
    %2785 = vmatpush1.msra.mxu0 %v2769
    %2786 = vmatprep.subr.mxu0 0.0
    %2787 = vmatpush1.msra.mxu0 %v2770
    %2788 = vmatprep.subr.mxu0 0.0
    %2789 = vmatpush1.msra.mxu0 %v2771
    %2790 = vmatprep.subr.mxu0 0.0
    %2791 = vmatpush1.msra.mxu0 %v2772
    %2792 = vmatprep.subr.mxu0 0.0
    %2793 = vmatpush1.msra.mxu0 0.0
    %2794 = vmatprep.subr.mxu0 0.0
    %2795 = vmatpush1.msra.mxu0 0.0
    %2796 = vmatprep.subr.mxu0 0.0
    %2797 = vmatpush1.msra.mxu0 0.0
    %2798 = vmatprep.subr.mxu0 0.0
    %2799 = vmatpush1.msra.mxu0 0.0
    %2800 = vmatprep.subr.mxu0 0.0
    %2801 = vmatpush1.msra.mxu0 0.0
    %2802 = vmatprep.subr.mxu0 0.0
    %2803 = vmatpush1.msra.mxu0 0.0
    %2804 = vmatprep.subr.mxu0 0.0
    %2805 = vmatpush1.msra.mxu0 0.0
    %2806 = vmatprep.subr.mxu0 0.0
    %2807 = vmatpush1.msra.mxu0 0.0
    %2808 = vmatprep.subr.mxu0 0.0
    %2809 = vmatpush1.msra.mxu0 0.0
    %2810 = vmatprep.subr.mxu0 0.0
    %2811 = vmatpush1.msra.mxu0 0.0
    %2812 = vmatprep.subr.mxu0 0.0
    %2813 = vmatpush1.msra.mxu0 0.0
    %2814 = vmatprep.subr.mxu0 0.0
    %2815 = vmatpush1.msra.mxu0 0.0
    %2816 = vmatprep.subr.mxu0 0.0
    %2817 = vmatpush1.msra.mxu0 0.0
    %2818 = vmatprep.subr.mxu0 0.0
    %2819 = vmatpush1.msra.mxu0 0.0
    %2820 = vmatprep.subr.mxu0 0.0
    %2821 = vmatpush1.msra.mxu0 0.0
    %2822 = vmatprep.subr.mxu0 0.0
    %2823 = vmatpush1.msra.mxu0 0.0
    %2824 = vmatprep.subr.mxu0 0.0
    %2825 = vmatpush1.msra.mxu0 0.0
    %2826 = vmatprep.subr.mxu0 0.0
    %2827 = vmatpush1.msra.mxu0 0.0
    %2828 = vmatprep.subr.mxu0 0.0
    %2829 = vmatpush1.msra.mxu0 0.0
    %2830 = vmatprep.subr.mxu0 0.0
    %2831 = vmatpush1.msra.mxu0 0.0
    %2832 = vmatprep.subr.mxu0 0.0
    %2833 = vmatpush1.msra.mxu0 0.0
    %2834 = vmatprep.subr.mxu0 0.0
    %2835 = vmatpush1.msra.mxu0 0.0
    %2836 = vmatprep.subr.mxu0 0.0
    %2837 = vmatpush1.msra.mxu0 0.0
    %2838 = vmatprep.subr.mxu0 0.0
    %2839 = vmatpush1.msra.mxu0 0.0
    %2840 = vmatprep.subr.mxu0 0.0
    %2841 = vmatpush1.msra.mxu0 0.0
    %2842 = vmatprep.subr.mxu0 0.0
    %2843 = vmatpush1.msra.mxu0 0.0
    %2844 = vmatprep.subr.mxu0 0.0
    %2845 = vmatpush1.msra.mxu0 0.0
    %2846 = vmatprep.subr.mxu0 0.0
    %2847 = vmatpush1.msra.mxu0 0.0
    %2848 = vmatprep.mubr.f32.mxu0 0.0
    %2849 = vmatmul.mubr.f32.gmra.mrb[0].mxu0 %v2782
    %v2850 = vpop.f32.mrb[0].mxu0
    %v2851 = vadd.f32 %v2778, %v2850
    %v2852 = vpop.f32.mrb[0].mxu0
    %2853 = vdwg.mxu0
    %v2854 = vld [vmem:[%s8] sm:$0xf]
    %v2855 = vld [vmem:[%s8 + $0x4] sm:$0xf]
    %v2856 = vld [vmem:[%s8 + $0x8] sm:$0xf]
    %v2857 = vld [vmem:[%s8 + $0xc] sm:$0xf]
    %v2858 = vunpack.c.l.bf16 %v2854
    %v2859 = vunpack.c.l.bf16 %v2855
    %v2860 = vunpack.c.l.bf16 %v2856
    %v2861 = vunpack.c.l.bf16 %v2857
    %v2862 = vld [vmem:[#allocation4] sm:$0x1]
    %v2864 = vlaneseq
    %v2865 = vshrl.u32 %v2864, 7
    %v2866 = vsub.s32 0, %v2865
    %v2867 = vrot.slane %v2862, %v2866
    %2869 = vmatprep.subr.mxu0 0.0
    %2870 = vmatpush1.msra.mxu0 %v2858
    %2871 = vmatprep.subr.mxu0 0.0
    %2872 = vmatpush1.msra.mxu0 %v2859
    %2873 = vmatprep.subr.mxu0 0.0
    %2874 = vmatpush1.msra.mxu0 %v2860
    %2875 = vmatprep.subr.mxu0 0.0
    %2876 = vmatpush1.msra.mxu0 %v2861
    %2877 = vmatprep.subr.mxu0 0.0
    %2878 = vmatpush1.msra.mxu0 0.0
    %2879 = vmatprep.subr.mxu0 0.0
    %2880 = vmatpush1.msra.mxu0 0.0
    %2881 = vmatprep.subr.mxu0 0.0
    %2882 = vmatpush1.msra.mxu0 0.0
    %2883 = vmatprep.subr.mxu0 0.0
    %2884 = vmatpush1.msra.mxu0 0.0
    %2885 = vmatprep.subr.mxu0 0.0
    %2886 = vmatpush1.msra.mxu0 0.0
    %2887 = vmatprep.subr.mxu0 0.0
    %2888 = vmatpush1.msra.mxu0 0.0
    %2889 = vmatprep.subr.mxu0 0.0
    %2890 = vmatpush1.msra.mxu0 0.0
    %2891 = vmatprep.subr.mxu0 0.0
    %2892 = vmatpush1.msra.mxu0 0.0
    %2893 = vmatprep.subr.mxu0 0.0
    %2894 = vmatpush1.msra.mxu0 0.0
    %2895 = vmatprep.subr.mxu0 0.0
    %2896 = vmatpush1.msra.mxu0 0.0
    %2897 = vmatprep.subr.mxu0 0.0
    %2898 = vmatpush1.msra.mxu0 0.0
    %2899 = vmatprep.subr.mxu0 0.0
    %2900 = vmatpush1.msra.mxu0 0.0
    %2901 = vmatprep.subr.mxu0 0.0
    %2902 = vmatpush1.msra.mxu0 0.0
    %2903 = vmatprep.subr.mxu0 0.0
    %2904 = vmatpush1.msra.mxu0 0.0
    %2905 = vmatprep.subr.mxu0 0.0
    %2906 = vmatpush1.msra.mxu0 0.0
    %2907 = vmatprep.subr.mxu0 0.0
    %2908 = vmatpush1.msra.mxu0 0.0
    %2909 = vmatprep.subr.mxu0 0.0
    %2910 = vmatpush1.msra.mxu0 0.0
    %2911 = vmatprep.subr.mxu0 0.0
    %2912 = vmatpush1.msra.mxu0 0.0
    %2913 = vmatprep.subr.mxu0 0.0
    %2914 = vmatpush1.msra.mxu0 0.0
    %2915 = vmatprep.subr.mxu0 0.0
    %2916 = vmatpush1.msra.mxu0 0.0
    %2917 = vmatprep.subr.mxu0 0.0
    %2918 = vmatpush1.msra.mxu0 0.0
    %2919 = vmatprep.subr.mxu0 0.0
    %2920 = vmatpush1.msra.mxu0 0.0
    %2921 = vmatprep.subr.mxu0 0.0
    %2922 = vmatpush1.msra.mxu0 0.0
    %2923 = vmatprep.subr.mxu0 0.0
    %2924 = vmatpush1.msra.mxu0 0.0
    %2925 = vmatprep.subr.mxu0 0.0
    %2926 = vmatpush1.msra.mxu0 0.0
    %2927 = vmatprep.subr.mxu0 0.0
    %2928 = vmatpush1.msra.mxu0 0.0
    %2929 = vmatprep.subr.mxu0 0.0
    %2930 = vmatpush1.msra.mxu0 0.0
    %2931 = vmatprep.subr.mxu0 0.0
    %2932 = vmatpush1.msra.mxu0 0.0
    %2933 = vmatprep.mubr.f32.mxu0 0.0
    %2934 = vmatmul.mubr.f32.gmra.mrb[0].mxu0 %v2782
    %v2935 = vpop.f32.mrb[0].mxu0
    %v2936 = vadd.f32 %v2867, %v2935
    %v2937 = vpop.f32.mrb[0].mxu0
    %2938 = vdwg.mxu0
    %v2939 = vmul.f32 %v2936, 1.442695
    %v2940 = vpow.pop %v2939
    %v2941 = vld [vmem:[%s1] sm:$0xff]
    %v2942 = vmul.f32 %v2940, %v2941
    %v2943 = vadd.f32 %v2851, %v2942
    %v2944 = vld [vmem:[#allocation6] sm:$0xf]
    %v2945 = vunpack.c.l.bf16 %v2944
    %v2946 = vld [vmem:[#allocation7] sm:$0x1]
    %v2948 = vlaneseq
    %v2949 = vshrl.u32 %v2948, 7
    %v2950 = vsub.s32 0, %v2949
    %v2951 = vrot.slane %v2946, %v2950
    %vm2953 = vcmask 64512
    %v2955 = vsel %vm2953, %v2943, 0
    %2957 = vmatprep.subr.mxu0 0.0
    %2958 = vmatpush1.msra.mxu0 %v2945
    %2959 = vmatprep.subr.mxu0 0.0
    %2960 = vmatpush1.msra.mxu0 0.0
    %2961 = vmatprep.subr.mxu0 0.0
    %2962 = vmatpush1.msra.mxu0 0.0
    %2963 = vmatprep.subr.mxu0 0.0
    %2964 = vmatpush1.msra.mxu0 0.0
    %2965 = vmatprep.subr.mxu0 0.0
    %2966 = vmatpush1.msra.mxu0 0.0
    %2967 = vmatprep.subr.mxu0 0.0
    %2968 = vmatpush1.msra.mxu0 0.0
    %2969 = vmatprep.subr.mxu0 0.0
    %2970 = vmatpush1.msra.mxu0 0.0
    %2971 = vmatprep.subr.mxu0 0.0
    %2972 = vmatpush1.msra.mxu0 0.0
    %2973 = vmatprep.subr.mxu0 0.0
    %2974 = vmatpush1.msra.mxu0 0.0
    %2975 = vmatprep.subr.mxu0 0.0
    %2976 = vmatpush1.msra.mxu0 0.0
    %2977 = vmatprep.subr.mxu0 0.0
    %2978 = vmatpush1.msra.mxu0 0.0
    %2979 = vmatprep.subr.mxu0 0.0
    %2980 = vmatpush1.msra.mxu0 0.0
    %2981 = vmatprep.subr.mxu0 0.0
    %2982 = vmatpush1.msra.mxu0 0.0
    %2983 = vmatprep.subr.mxu0 0.0
    %2984 = vmatpush1.msra.mxu0 0.0
    %2985 = vmatprep.subr.mxu0 0.0
    %2986 = vmatpush1.msra.mxu0 0.0
    %2987 = vmatprep.subr.mxu0 0.0
    %2988 = vmatpush1.msra.mxu0 0.0
    %2989 = vmatprep.subr.mxu0 0.0
    %2990 = vmatpush1.msra.mxu0 0.0
    %2991 = vmatprep.subr.mxu0 0.0
    %2992 = vmatpush1.msra.mxu0 0.0
    %2993 = vmatprep.subr.mxu0 0.0
    %2994 = vmatpush1.msra.mxu0 0.0
    %2995 = vmatprep.subr.mxu0 0.0
    %2996 = vmatpush1.msra.mxu0 0.0
    %2997 = vmatprep.subr.mxu0 0.0
    %2998 = vmatpush1.msra.mxu0 0.0
    %2999 = vmatprep.subr.mxu0 0.0
    %3000 = vmatpush1.msra.mxu0 0.0
    %3001 = vmatprep.subr.mxu0 0.0
    %3002 = vmatpush1.msra.mxu0 0.0
    %3003 = vmatprep.subr.mxu0 0.0
    %3004 = vmatpush1.msra.mxu0 0.0
    %3005 = vmatprep.subr.mxu0 0.0
    %3006 = vmatpush1.msra.mxu0 0.0
    %3007 = vmatprep.subr.mxu0 0.0
    %3008 = vmatpush1.msra.mxu0 0.0
    %3009 = vmatprep.subr.mxu0 0.0
    %3010 = vmatpush1.msra.mxu0 0.0
    %3011 = vmatprep.subr.mxu0 0.0
    %3012 = vmatpush1.msra.mxu0 0.0
    %3013 = vmatprep.subr.mxu0 0.0
    %3014 = vmatpush1.msra.mxu0 0.0
    %3015 = vmatprep.subr.mxu0 0.0
    %3016 = vmatpush1.msra.mxu0 0.0
    %3017 = vmatprep.subr.mxu0 0.0
    %3018 = vmatpush1.msra.mxu0 0.0
    %3019 = vmatprep.subr.mxu0 0.0
    %3020 = vmatpush1.msra.mxu0 0.0
    %3021 = vmatprep.mubr.f32.mxu0 0.0
    %3022 = vmatmul.mubr.f32.gmra.mrb[0].mxu0 %v2955
    %v3023 = vpop.f32.mrb[0].mxu0
    %v3024 = vadd.f32 %v2951, %v3023
    %v3025 = vpop.f32.mrb[0].mxu0
    %3026 = vdwg.mxu0
    %v3027 = vmax.f32 %v3024, 0.0
    %v3028 = vld [vmem:[%s12] sm:$0xff]
    %v3029 = vld [vmem:[%s12 + $0x8] sm:$0xff]
    %v3030 = vld [vmem:[%s12 + $0x10] sm:$0xff]
    %v3031 = vld [vmem:[%s12 + $0x18] sm:$0xff]
    %v3032 = vunpack.c.l.bf16 %v3028
    %v3033 = vunpack.c.h.bf16 %v3028
    %v3034 = vunpack.c.l.bf16 %v3029
    %v3035 = vunpack.c.h.bf16 %v3029
    %v3036 = vunpack.c.l.bf16 %v3030
    %v3037 = vunpack.c.h.bf16 %v3030
    %v3038 = vunpack.c.l.bf16 %v3031
    %v3039 = vunpack.c.h.bf16 %v3031
    %v3040 = vld [vmem:[#allocation9] sm:$0x3]
    %v3042 = vlaneseq
    %v3043 = vshrl.u32 %v3042, 7
    %v3044 = vsub.s32 0, %v3043
    %v3045 = vrot.slane %v3040, %v3044
    %v3046 = vlaneseq
    %v3047 = vshrl.u32 %v3046, 7
    %v3048 = vsub.s32 1, %v3047
    %v3049 = vrot.slane %v3040, %v3048
    %v3053 = vsel %vm2780, %v3027, 0
    %3055 = vmatprep.subr.mxu0 %v3033
    %3056 = vmatpush1.msra.mxu0 %v3032
    %3057 = vmatprep.subr.mxu0 %v3035
    %3058 = vmatpush1.msra.mxu0 %v3034
    %3059 = vmatprep.subr.mxu0 %v3037
    %3060 = vmatpush1.msra.mxu0 %v3036
    %3061 = vmatprep.subr.mxu0 %v3039
    %3062 = vmatpush1.msra.mxu0 %v3038
    %3063 = vmatprep.subr.mxu0 0.0
    %3064 = vmatpush1.msra.mxu0 0.0
    %3065 = vmatprep.subr.mxu0 0.0
    %3066 = vmatpush1.msra.mxu0 0.0
    %3067 = vmatprep.subr.mxu0 0.0
    %3068 = vmatpush1.msra.mxu0 0.0
    %3069 = vmatprep.subr.mxu0 0.0
    %3070 = vmatpush1.msra.mxu0 0.0
    %3071 = vmatprep.subr.mxu0 0.0
    %3072 = vmatpush1.msra.mxu0 0.0
    %3073 = vmatprep.subr.mxu0 0.0
    %3074 = vmatpush1.msra.mxu0 0.0
    %3075 = vmatprep.subr.mxu0 0.0
    %3076 = vmatpush1.msra.mxu0 0.0
    %3077 = vmatprep.subr.mxu0 0.0
    %3078 = vmatpush1.msra.mxu0 0.0
    %3079 = vmatprep.subr.mxu0 0.0
    %3080 = vmatpush1.msra.mxu0 0.0
    %3081 = vmatprep.subr.mxu0 0.0
    %3082 = vmatpush1.msra.mxu0 0.0
    %3083 = vmatprep.subr.mxu0 0.0
    %3084 = vmatpush1.msra.mxu0 0.0
    %3085 = vmatprep.subr.mxu0 0.0
    %3086 = vmatpush1.msra.mxu0 0.0
    %3087 = vmatprep.subr.mxu0 0.0
    %3088 = vmatpush1.msra.mxu0 0.0
    %3089 = vmatprep.subr.mxu0 0.0
    %3090 = vmatpush1.msra.mxu0 0.0
    %3091 = vmatprep.subr.mxu0 0.0
    %3092 = vmatpush1.msra.mxu0 0.0
    %3093 = vmatprep.subr.mxu0 0.0
    %3094 = vmatpush1.msra.mxu0 0.0
    %3095 = vmatprep.subr.mxu0 0.0
    %3096 = vmatpush1.msra.mxu0 0.0
    %3097 = vmatprep.subr.mxu0 0.0
    %3098 = vmatpush1.msra.mxu0 0.0
    %3099 = vmatprep.subr.mxu0 0.0
    %3100 = vmatpush1.msra.mxu0 0.0
    %3101 = vmatprep.subr.mxu0 0.0
    %3102 = vmatpush1.msra.mxu0 0.0
    %3103 = vmatprep.subr.mxu0 0.0
    %3104 = vmatpush1.msra.mxu0 0.0
    %3105 = vmatprep.subr.mxu0 0.0
    %3106 = vmatpush1.msra.mxu0 0.0
    %3107 = vmatprep.subr.mxu0 0.0
    %3108 = vmatpush1.msra.mxu0 0.0
    %3109 = vmatprep.subr.mxu0 0.0
    %3110 = vmatpush1.msra.mxu0 0.0
    %3111 = vmatprep.subr.mxu0 0.0
    %3112 = vmatpush1.msra.mxu0 0.0
    %3113 = vmatprep.subr.mxu0 0.0
    %3114 = vmatpush1.msra.mxu0 0.0
    %3115 = vmatprep.subr.mxu0 0.0
    %3116 = vmatpush1.msra.mxu0 0.0
    %3117 = vmatprep.subr.mxu0 0.0
    %3118 = vmatpush1.msra.mxu0 0.0
    %3119 = vmatprep.mubr.f32.mxu0 0.0
    %3120 = vmatmul.mubr.f32.gmra.mrb[0].mxu0 %v3053
    %v3121 = vpop.f32.mrb[0].mxu0
    %v3122 = vadd.f32 %v3045, %v3121
    %v3123 = vpop.f32.mrb[0].mxu0
    %v3124 = vadd.f32 %v3049, %v3123
    %3125 = vdwg.mxu0
    %v3126 = vmax.f32 %v3122, 0.0
    %v3127 = vmax.f32 %v3124, 0.0
    %s3128 = scalar_lea.vmem %s12, 32
    %v3129 = vld [vmem:[%s3128] sm:$0xff]
    %v3130 = vld [vmem:[%s3128 + $0x8] sm:$0xff]
    %v3131 = vld [vmem:[%s3128 + $0x10] sm:$0xff]
    %v3132 = vld [vmem:[%s3128 + $0x18] sm:$0xff]
    %v3133 = vunpack.c.l.bf16 %v3129
    %v3134 = vunpack.c.h.bf16 %v3129
    %v3135 = vunpack.c.l.bf16 %v3130
    %v3136 = vunpack.c.h.bf16 %v3130
    %v3137 = vunpack.c.l.bf16 %v3131
    %v3138 = vunpack.c.h.bf16 %v3131
    %v3139 = vunpack.c.l.bf16 %v3132
    %v3140 = vunpack.c.h.bf16 %v3132
    %s3141 = scalar_lea.vmem [#allocation9], 2
    %v3142 = vld [vmem:[%s3141] sm:$0x3]
    %v3144 = vlaneseq
    %v3145 = vshrl.u32 %v3144, 7
    %v3146 = vsub.s32 0, %v3145
    %v3147 = vrot.slane %v3142, %v3146
    %v3148 = vlaneseq
    %v3149 = vshrl.u32 %v3148, 7
    %v3150 = vsub.s32 1, %v3149
    %v3151 = vrot.slane %v3142, %v3150
    %3154 = vmatprep.subr.mxu0 %v3134
    %3155 = vmatpush1.msra.mxu0 %v3133
    %3156 = vmatprep.subr.mxu0 %v3136
    %3157 = vmatpush1.msra.mxu0 %v3135
    %3158 = vmatprep.subr.mxu0 %v3138
    %3159 = vmatpush1.msra.mxu0 %v3137
    %3160 = vmatprep.subr.mxu0 %v3140
    %3161 = vmatpush1.msra.mxu0 %v3139
    %3162 = vmatprep.subr.mxu0 0.0
    %3163 = vmatpush1.msra.mxu0 0.0
    %3164 = vmatprep.subr.mxu0 0.0
    %3165 = vmatpush1.msra.mxu0 0.0
    %3166 = vmatprep.subr.mxu0 0.0
    %3167 = vmatpush1.msra.mxu0 0.0
    %3168 = vmatprep.subr.mxu0 0.0
    %3169 = vmatpush1.msra.mxu0 0.0
    %3170 = vmatprep.subr.mxu0 0.0
    %3171 = vmatpush1.msra.mxu0 0.0
    %3172 = vmatprep.subr.mxu0 0.0
    %3173 = vmatpush1.msra.mxu0 0.0
    %3174 = vmatprep.subr.mxu0 0.0
    %3175 = vmatpush1.msra.mxu0 0.0
    %3176 = vmatprep.subr.mxu0 0.0
    %3177 = vmatpush1.msra.mxu0 0.0
    %3178 = vmatprep.subr.mxu0 0.0
    %3179 = vmatpush1.msra.mxu0 0.0
    %3180 = vmatprep.subr.mxu0 0.0
    %3181 = vmatpush1.msra.mxu0 0.0
    %3182 = vmatprep.subr.mxu0 0.0
    %3183 = vmatpush1.msra.mxu0 0.0
    %3184 = vmatprep.subr.mxu0 0.0
    %3185 = vmatpush1.msra.mxu0 0.0
    %3186 = vmatprep.subr.mxu0 0.0
    %3187 = vmatpush1.msra.mxu0 0.0
    %3188 = vmatprep.subr.mxu0 0.0
    %3189 = vmatpush1.msra.mxu0 0.0
    %3190 = vmatprep.subr.mxu0 0.0
    %3191 = vmatpush1.msra.mxu0 0.0
    %3192 = vmatprep.subr.mxu0 0.0
    %3193 = vmatpush1.msra.mxu0 0.0
    %3194 = vmatprep.subr.mxu0 0.0
    %3195 = vmatpush1.msra.mxu0 0.0
    %3196 = vmatprep.subr.mxu0 0.0
    %3197 = vmatpush1.msra.mxu0 0.0
    %3198 = vmatprep.subr.mxu0 0.0
    %3199 = vmatpush1.msra.mxu0 0.0
    %3200 = vmatprep.subr.mxu0 0.0
    %3201 = vmatpush1.msra.mxu0 0.0
    %3202 = vmatprep.subr.mxu0 0.0
    %3203 = vmatpush1.msra.mxu0 0.0
    %3204 = vmatprep.subr.mxu0 0.0
    %3205 = vmatpush1.msra.mxu0 0.0
    %3206 = vmatprep.subr.mxu0 0.0
    %3207 = vmatpush1.msra.mxu0 0.0
    %3208 = vmatprep.subr.mxu0 0.0
    %3209 = vmatpush1.msra.mxu0 0.0
    %3210 = vmatprep.subr.mxu0 0.0
    %3211 = vmatpush1.msra.mxu0 0.0
    %3212 = vmatprep.subr.mxu0 0.0
    %3213 = vmatpush1.msra.mxu0 0.0
    %3214 = vmatprep.subr.mxu0 0.0
    %3215 = vmatpush1.msra.mxu0 0.0
    %3216 = vmatprep.subr.mxu0 0.0
    %3217 = vmatpush1.msra.mxu0 0.0
    %3218 = vmatprep.mubr.f32.mxu0 0.0
    %3219 = vmatmul.mubr.f32.gmra.mrb[0].mxu0 %v3053
    %v3220 = vpop.f32.mrb[0].mxu0
    %v3221 = vadd.f32 %v3147, %v3220
    %v3222 = vpop.f32.mrb[0].mxu0
    %v3223 = vadd.f32 %v3151, %v3222
    %3224 = vdwg.mxu0
    %v3225 = vmax.f32 %v3221, 0.0
    %v3226 = vmax.f32 %v3223, 0.0
    %s3227 = scalar_lea.vmem %s12, 64
    %v3228 = vld [vmem:[%s3227] sm:$0xff]
    %v3229 = vld [vmem:[%s3227 + $0x8] sm:$0xff]
    %v3230 = vld [vmem:[%s3227 + $0x10] sm:$0xff]
    %v3231 = vld [vmem:[%s3227 + $0x18] sm:$0xff]
    %v3232 = vunpack.c.l.bf16 %v3228
    %v3233 = vunpack.c.h.bf16 %v3228
    %v3234 = vunpack.c.l.bf16 %v3229
    %v3235 = vunpack.c.h.bf16 %v3229
    %v3236 = vunpack.c.l.bf16 %v3230
    %v3237 = vunpack.c.h.bf16 %v3230
    %v3238 = vunpack.c.l.bf16 %v3231
    %v3239 = vunpack.c.h.bf16 %v3231
    %s3240 = scalar_lea.vmem [#allocation9], 4
    %v3241 = vld [vmem:[%s3240] sm:$0x3]
    %v3243 = vlaneseq
    %v3244 = vshrl.u32 %v3243, 7
    %v3245 = vsub.s32 0, %v3244
    %v3246 = vrot.slane %v3241, %v3245
    %v3247 = vlaneseq
    %v3248 = vshrl.u32 %v3247, 7
    %v3249 = vsub.s32 1, %v3248
    %v3250 = vrot.slane %v3241, %v3249
    %3253 = vmatprep.subr.mxu0 %v3233
    %3254 = vmatpush1.msra.mxu0 %v3232
    %3255 = vmatprep.subr.mxu0 %v3235
    %3256 = vmatpush1.msra.mxu0 %v3234
    %3257 = vmatprep.subr.mxu0 %v3237
    %3258 = vmatpush1.msra.mxu0 %v3236
    %3259 = vmatprep.subr.mxu0 %v3239
    %3260 = vmatpush1.msra.mxu0 %v3238
    %3261 = vmatprep.subr.mxu0 0.0
    %3262 = vmatpush1.msra.mxu0 0.0
    %3263 = vmatprep.subr.mxu0 0.0
    %3264 = vmatpush1.msra.mxu0 0.0
    %3265 = vmatprep.subr.mxu0 0.0
    %3266 = vmatpush1.msra.mxu0 0.0
    %3267 = vmatprep.subr.mxu0 0.0
    %3268 = vmatpush1.msra.mxu0 0.0
    %3269 = vmatprep.subr.mxu0 0.0
    %3270 = vmatpush1.msra.mxu0 0.0
    %3271 = vmatprep.subr.mxu0 0.0
    %3272 = vmatpush1.msra.mxu0 0.0
    %3273 = vmatprep.subr.mxu0 0.0
    %3274 = vmatpush1.msra.mxu0 0.0
    %3275 = vmatprep.subr.mxu0 0.0
    %3276 = vmatpush1.msra.mxu0 0.0
    %3277 = vmatprep.subr.mxu0 0.0
    %3278 = vmatpush1.msra.mxu0 0.0
    %3279 = vmatprep.subr.mxu0 0.0
    %3280 = vmatpush1.msra.mxu0 0.0
    %3281 = vmatprep.subr.mxu0 0.0
    %3282 = vmatpush1.msra.mxu0 0.0
    %3283 = vmatprep.subr.mxu0 0.0
    %3284 = vmatpush1.msra.mxu0 0.0
    %3285 = vmatprep.subr.mxu0 0.0
    %3286 = vmatpush1.msra.mxu0 0.0
    %3287 = vmatprep.subr.mxu0 0.0
    %3288 = vmatpush1.msra.mxu0 0.0
    %3289 = vmatprep.subr.mxu0 0.0
    %3290 = vmatpush1.msra.mxu0 0.0
    %3291 = vmatprep.subr.mxu0 0.0
    %3292 = vmatpush1.msra.mxu0 0.0
    %3293 = vmatprep.subr.mxu0 0.0
    %3294 = vmatpush1.msra.mxu0 0.0
    %3295 = vmatprep.subr.mxu0 0.0
    %3296 = vmatpush1.msra.mxu0 0.0
    %3297 = vmatprep.subr.mxu0 0.0
    %3298 = vmatpush1.msra.mxu0 0.0
    %3299 = vmatprep.subr.mxu0 0.0
    %3300 = vmatpush1.msra.mxu0 0.0
    %3301 = vmatprep.subr.mxu0 0.0
    %3302 = vmatpush1.msra.mxu0 0.0
    %3303 = vmatprep.subr.mxu0 0.0
    %3304 = vmatpush1.msra.mxu0 0.0
    %3305 = vmatprep.subr.mxu0 0.0
    %3306 = vmatpush1.msra.mxu0 0.0
    %3307 = vmatprep.subr.mxu0 0.0
    %3308 = vmatpush1.msra.mxu0 0.0
    %3309 = vmatprep.subr.mxu0 0.0
    %3310 = vmatpush1.msra.mxu0 0.0
    %3311 = vmatprep.subr.mxu0 0.0
    %3312 = vmatpush1.msra.mxu0 0.0
    %3313 = vmatprep.subr.mxu0 0.0
    %3314 = vmatpush1.msra.mxu0 0.0
    %3315 = vmatprep.subr.mxu0 0.0
    %3316 = vmatpush1.msra.mxu0 0.0
    %3317 = vmatprep.mubr.f32.mxu0 0.0
    %3318 = vmatmul.mubr.f32.gmra.mrb[0].mxu0 %v3053
    %v3319 = vpop.f32.mrb[0].mxu0
    %v3320 = vadd.f32 %v3246, %v3319
    %v3321 = vpop.f32.mrb[0].mxu0
    %v3322 = vadd.f32 %v3250, %v3321
    %3323 = vdwg.mxu0
    %v3324 = vmax.f32 %v3320, 0.0
    %v3325 = vmax.f32 %v3322, 0.0
    %s3326 = scalar_lea.vmem %s12, 96
    %v3327 = vld [vmem:[%s3326] sm:$0xff]
    %v3328 = vld [vmem:[%s3326 + $0x8] sm:$0xff]
    %v3329 = vld [vmem:[%s3326 + $0x10] sm:$0xff]
    %v3330 = vld [vmem:[%s3326 + $0x18] sm:$0xff]
    %v3331 = vunpack.c.l.bf16 %v3327
    %v3332 = vunpack.c.h.bf16 %v3327
    %v3333 = vunpack.c.l.bf16 %v3328
    %v3334 = vunpack.c.h.bf16 %v3328
    %v3335 = vunpack.c.l.bf16 %v3329
    %v3336 = vunpack.c.h.bf16 %v3329
    %v3337 = vunpack.c.l.bf16 %v3330
    %v3338 = vunpack.c.h.bf16 %v3330
    %s3339 = scalar_lea.vmem [#allocation9], 6
    %v3340 = vld [vmem:[%s3339] sm:$0x3]
    %v3342 = vlaneseq
    %v3343 = vshrl.u32 %v3342, 7
    %v3344 = vsub.s32 0, %v3343
    %v3345 = vrot.slane %v3340, %v3344
    %v3346 = vlaneseq
    %v3347 = vshrl.u32 %v3346, 7
    %v3348 = vsub.s32 1, %v3347
    %v3349 = vrot.slane %v3340, %v3348
    %3352 = vmatprep.subr.mxu0 %v3332
    %3353 = vmatpush1.msra.mxu0 %v3331
    %3354 = vmatprep.subr.mxu0 %v3334
    %3355 = vmatpush1.msra.mxu0 %v3333
    %3356 = vmatprep.subr.mxu0 %v3336
    %3357 = vmatpush1.msra.mxu0 %v3335
    %3358 = vmatprep.subr.mxu0 %v3338
    %3359 = vmatpush1.msra.mxu0 %v3337
    %3360 = vmatprep.subr.mxu0 0.0
    %3361 = vmatpush1.msra.mxu0 0.0
    %3362 = vmatprep.subr.mxu0 0.0
    %3363 = vmatpush1.msra.mxu0 0.0
    %3364 = vmatprep.subr.mxu0 0.0
    %3365 = vmatpush1.msra.mxu0 0.0
    %3366 = vmatprep.subr.mxu0 0.0
    %3367 = vmatpush1.msra.mxu0 0.0
    %3368 = vmatprep.subr.mxu0 0.0
    %3369 = vmatpush1.msra.mxu0 0.0
    %3370 = vmatprep.subr.mxu0 0.0
    %3371 = vmatpush1.msra.mxu0 0.0
    %3372 = vmatprep.subr.mxu0 0.0
    %3373 = vmatpush1.msra.mxu0 0.0
    %3374 = vmatprep.subr.mxu0 0.0
    %3375 = vmatpush1.msra.mxu0 0.0
    %3376 = vmatprep.subr.mxu0 0.0
    %3377 = vmatpush1.msra.mxu0 0.0
    %3378 = vmatprep.subr.mxu0 0.0
    %3379 = vmatpush1.msra.mxu0 0.0
    %3380 = vmatprep.subr.mxu0 0.0
    %3381 = vmatpush1.msra.mxu0 0.0
    %3382 = vmatprep.subr.mxu0 0.0
    %3383 = vmatpush1.msra.mxu0 0.0
    %3384 = vmatprep.subr.mxu0 0.0
    %3385 = vmatpush1.msra.mxu0 0.0
    %3386 = vmatprep.subr.mxu0 0.0
    %3387 = vmatpush1.msra.mxu0 0.0
    %3388 = vmatprep.subr.mxu0 0.0
    %3389 = vmatpush1.msra.mxu0 0.0
    %3390 = vmatprep.subr.mxu0 0.0
    %3391 = vmatpush1.msra.mxu0 0.0
    %3392 = vmatprep.subr.mxu0 0.0
    %3393 = vmatpush1.msra.mxu0 0.0
    %3394 = vmatprep.subr.mxu0 0.0
    %3395 = vmatpush1.msra.mxu0 0.0
    %3396 = vmatprep.subr.mxu0 0.0
    %3397 = vmatpush1.msra.mxu0 0.0
    %3398 = vmatprep.subr.mxu0 0.0
    %3399 = vmatpush1.msra.mxu0 0.0
    %3400 = vmatprep.subr.mxu0 0.0
    %3401 = vmatpush1.msra.mxu0 0.0
    %3402 = vmatprep.subr.mxu0 0.0
    %3403 = vmatpush1.msra.mxu0 0.0
    %3404 = vmatprep.subr.mxu0 0.0
    %3405 = vmatpush1.msra.mxu0 0.0
    %3406 = vmatprep.subr.mxu0 0.0
    %3407 = vmatpush1.msra.mxu0 0.0
    %3408 = vmatprep.subr.mxu0 0.0
    %3409 = vmatpush1.msra.mxu0 0.0
    %3410 = vmatprep.subr.mxu0 0.0
    %3411 = vmatpush1.msra.mxu0 0.0
    %3412 = vmatprep.subr.mxu0 0.0
    %3413 = vmatpush1.msra.mxu0 0.0
    %3414 = vmatprep.subr.mxu0 0.0
    %3415 = vmatpush1.msra.mxu0 0.0
    %3416 = vmatprep.mubr.f32.mxu0 0.0
    %3417 = vmatmul.mubr.f32.gmra.mrb[0].mxu0 %v3053
    %v3418 = vpop.f32.mrb[0].mxu0
    %v3419 = vadd.f32 %v3345, %v3418
    %v3420 = vpop.f32.mrb[0].mxu0
    %v3421 = vadd.f32 %v3349, %v3420
    %3422 = vdwg.mxu0
    %v3423 = vmax.f32 %v3419, 0.0
    %v3424 = vmax.f32 %v3421, 0.0
    %s3425 = scalar_lea.vmem %s12, 128
    %v3426 = vld [vmem:[%s3425] sm:$0xff]
    %v3427 = vld [vmem:[%s3425 + $0x8] sm:$0xff]
    %v3428 = vld [vmem:[%s3425 + $0x10] sm:$0xff]
    %v3429 = vld [vmem:[%s3425 + $0x18] sm:$0xff]
    %v3430 = vunpack.c.l.bf16 %v3426
    %v3431 = vunpack.c.h.bf16 %v3426
    %v3432 = vunpack.c.l.bf16 %v3427
    %v3433 = vunpack.c.h.bf16 %v3427
    %v3434 = vunpack.c.l.bf16 %v3428
    %v3435 = vunpack.c.h.bf16 %v3428
    %v3436 = vunpack.c.l.bf16 %v3429
    %v3437 = vunpack.c.h.bf16 %v3429
    %s3438 = scalar_lea.vmem [#allocation9], 8
    %v3439 = vld [vmem:[%s3438] sm:$0x3]
    %v3441 = vlaneseq
    %v3442 = vshrl.u32 %v3441, 7
    %v3443 = vsub.s32 0, %v3442
    %v3444 = vrot.slane %v3439, %v3443
    %v3445 = vlaneseq
    %v3446 = vshrl.u32 %v3445, 7
    %v3447 = vsub.s32 1, %v3446
    %v3448 = vrot.slane %v3439, %v3447
    %3451 = vmatprep.subr.mxu0 %v3431
    %3452 = vmatpush1.msra.mxu0 %v3430
    %3453 = vmatprep.subr.mxu0 %v3433
    %3454 = vmatpush1.msra.mxu0 %v3432
    %3455 = vmatprep.subr.mxu0 %v3435
    %3456 = vmatpush1.msra.mxu0 %v3434
    %3457 = vmatprep.subr.mxu0 %v3437
    %3458 = vmatpush1.msra.mxu0 %v3436
    %3459 = vmatprep.subr.mxu0 0.0
    %3460 = vmatpush1.msra.mxu0 0.0
    %3461 = vmatprep.subr.mxu0 0.0
    %3462 = vmatpush1.msra.mxu0 0.0
    %3463 = vmatprep.subr.mxu0 0.0
    %3464 = vmatpush1.msra.mxu0 0.0
    %3465 = vmatprep.subr.mxu0 0.0
    %3466 = vmatpush1.msra.mxu0 0.0
    %3467 = vmatprep.subr.mxu0 0.0
    %3468 = vmatpush1.msra.mxu0 0.0
    %3469 = vmatprep.subr.mxu0 0.0
    %3470 = vmatpush1.msra.mxu0 0.0
    %3471 = vmatprep.subr.mxu0 0.0
    %3472 = vmatpush1.msra.mxu0 0.0
    %3473 = vmatprep.subr.mxu0 0.0
    %3474 = vmatpush1.msra.mxu0 0.0
    %3475 = vmatprep.subr.mxu0 0.0
    %3476 = vmatpush1.msra.mxu0 0.0
    %3477 = vmatprep.subr.mxu0 0.0
    %3478 = vmatpush1.msra.mxu0 0.0
    %3479 = vmatprep.subr.mxu0 0.0
    %3480 = vmatpush1.msra.mxu0 0.0
    %3481 = vmatprep.subr.mxu0 0.0
    %3482 = vmatpush1.msra.mxu0 0.0
    %3483 = vmatprep.subr.mxu0 0.0
    %3484 = vmatpush1.msra.mxu0 0.0
    %3485 = vmatprep.subr.mxu0 0.0
    %3486 = vmatpush1.msra.mxu0 0.0
    %3487 = vmatprep.subr.mxu0 0.0
    %3488 = vmatpush1.msra.mxu0 0.0
    %3489 = vmatprep.subr.mxu0 0.0
    %3490 = vmatpush1.msra.mxu0 0.0
    %3491 = vmatprep.subr.mxu0 0.0
    %3492 = vmatpush1.msra.mxu0 0.0
    %3493 = vmatprep.subr.mxu0 0.0
    %3494 = vmatpush1.msra.mxu0 0.0
    %3495 = vmatprep.subr.mxu0 0.0
    %3496 = vmatpush1.msra.mxu0 0.0
    %3497 = vmatprep.subr.mxu0 0.0
    %3498 = vmatpush1.msra.mxu0 0.0
    %3499 = vmatprep.subr.mxu0 0.0
    %3500 = vmatpush1.msra.mxu0 0.0
    %3501 = vmatprep.subr.mxu0 0.0
    %3502 = vmatpush1.msra.mxu0 0.0
    %3503 = vmatprep.subr.mxu0 0.0
    %3504 = vmatpush1.msra.mxu0 0.0
    %3505 = vmatprep.subr.mxu0 0.0
    %3506 = vmatpush1.msra.mxu0 0.0
    %3507 = vmatprep.subr.mxu0 0.0
    %3508 = vmatpush1.msra.mxu0 0.0
    %3509 = vmatprep.subr.mxu0 0.0
    %3510 = vmatpush1.msra.mxu0 0.0
    %3511 = vmatprep.subr.mxu0 0.0
    %3512 = vmatpush1.msra.mxu0 0.0
    %3513 = vmatprep.subr.mxu0 0.0
    %3514 = vmatpush1.msra.mxu0 0.0
    %3515 = vmatprep.mubr.f32.mxu0 0.0
    %3516 = vmatmul.mubr.f32.gmra.mrb[0].mxu0 %v3053
    %v3517 = vpop.f32.mrb[0].mxu0
    %v3518 = vadd.f32 %v3444, %v3517
    %v3519 = vpop.f32.mrb[0].mxu0
    %v3520 = vadd.f32 %v3448, %v3519
    %3521 = vdwg.mxu0
    %v3522 = vmax.f32 %v3518, 0.0
    %v3523 = vmax.f32 %v3520, 0.0
    %s3524 = scalar_lea.vmem %s12, 160
    %v3525 = vld [vmem:[%s3524] sm:$0xff]
    %v3526 = vld [vmem:[%s3524 + $0x8] sm:$0xff]
    %v3527 = vld [vmem:[%s3524 + $0x10] sm:$0xff]
    %v3528 = vld [vmem:[%s3524 + $0x18] sm:$0xff]
    %v3529 = vunpack.c.l.bf16 %v3525
    %v3530 = vunpack.c.h.bf16 %v3525
    %v3531 = vunpack.c.l.bf16 %v3526
    %v3532 = vunpack.c.h.bf16 %v3526
    %v3533 = vunpack.c.l.bf16 %v3527
    %v3534 = vunpack.c.h.bf16 %v3527
    %v3535 = vunpack.c.l.bf16 %v3528
    %v3536 = vunpack.c.h.bf16 %v3528
    %s3537 = scalar_lea.vmem [#allocation9], 10
    %v3538 = vld [vmem:[%s3537] sm:$0x3]
    %v3540 = vlaneseq
    %v3541 = vshrl.u32 %v3540, 7
    %v3542 = vsub.s32 0, %v3541
    %v3543 = vrot.slane %v3538, %v3542
    %v3544 = vlaneseq
    %v3545 = vshrl.u32 %v3544, 7
    %v3546 = vsub.s32 1, %v3545
    %v3547 = vrot.slane %v3538, %v3546
    %3550 = vmatprep.subr.mxu0 %v3530
    %3551 = vmatpush1.msra.mxu0 %v3529
    %3552 = vmatprep.subr.mxu0 %v3532
    %3553 = vmatpush1.msra.mxu0 %v3531
    %3554 = vmatprep.subr.mxu0 %v3534
    %3555 = vmatpush1.msra.mxu0 %v3533
    %3556 = vmatprep.subr.mxu0 %v3536
    %3557 = vmatpush1.msra.mxu0 %v3535
    %3558 = vmatprep.subr.mxu0 0.0
    %3559 = vmatpush1.msra.mxu0 0.0
    %3560 = vmatprep.subr.mxu0 0.0
    %3561 = vmatpush1.msra.mxu0 0.0
    %3562 = vmatprep.subr.mxu0 0.0
    %3563 = vmatpush1.msra.mxu0 0.0
    %3564 = vmatprep.subr.mxu0 0.0
    %3565 = vmatpush1.msra.mxu0 0.0
    %3566 = vmatprep.subr.mxu0 0.0
    %3567 = vmatpush1.msra.mxu0 0.0
    %3568 = vmatprep.subr.mxu0 0.0
    %3569 = vmatpush1.msra.mxu0 0.0
    %3570 = vmatprep.subr.mxu0 0.0
    %3571 = vmatpush1.msra.mxu0 0.0
    %3572 = vmatprep.subr.mxu0 0.0
    %3573 = vmatpush1.msra.mxu0 0.0
    %3574 = vmatprep.subr.mxu0 0.0
    %3575 = vmatpush1.msra.mxu0 0.0
    %3576 = vmatprep.subr.mxu0 0.0
    %3577 = vmatpush1.msra.mxu0 0.0
    %3578 = vmatprep.subr.mxu0 0.0
    %3579 = vmatpush1.msra.mxu0 0.0
    %3580 = vmatprep.subr.mxu0 0.0
    %3581 = vmatpush1.msra.mxu0 0.0
    %3582 = vmatprep.subr.mxu0 0.0
    %3583 = vmatpush1.msra.mxu0 0.0
    %3584 = vmatprep.subr.mxu0 0.0
    %3585 = vmatpush1.msra.mxu0 0.0
    %3586 = vmatprep.subr.mxu0 0.0
    %3587 = vmatpush1.msra.mxu0 0.0
    %3588 = vmatprep.subr.mxu0 0.0
    %3589 = vmatpush1.msra.mxu0 0.0
    %3590 = vmatprep.subr.mxu0 0.0
    %3591 = vmatpush1.msra.mxu0 0.0
    %3592 = vmatprep.subr.mxu0 0.0
    %3593 = vmatpush1.msra.mxu0 0.0
    %3594 = vmatprep.subr.mxu0 0.0
    %3595 = vmatpush1.msra.mxu0 0.0
    %3596 = vmatprep.subr.mxu0 0.0
    %3597 = vmatpush1.msra.mxu0 0.0
    %3598 = vmatprep.subr.mxu0 0.0
    %3599 = vmatpush1.msra.mxu0 0.0
    %3600 = vmatprep.subr.mxu0 0.0
    %3601 = vmatpush1.msra.mxu0 0.0
    %3602 = vmatprep.subr.mxu0 0.0
    %3603 = vmatpush1.msra.mxu0 0.0
    %3604 = vmatprep.subr.mxu0 0.0
    %3605 = vmatpush1.msra.mxu0 0.0
    %3606 = vmatprep.subr.mxu0 0.0
    %3607 = vmatpush1.msra.mxu0 0.0
    %3608 = vmatprep.subr.mxu0 0.0
    %3609 = vmatpush1.msra.mxu0 0.0
    %3610 = vmatprep.subr.mxu0 0.0
    %3611 = vmatpush1.msra.mxu0 0.0
    %3612 = vmatprep.subr.mxu0 0.0
    %3613 = vmatpush1.msra.mxu0 0.0
    %3614 = vmatprep.mubr.f32.mxu0 0.0
    %3615 = vmatmul.mubr.f32.gmra.mrb[0].mxu0 %v3053
    %v3616 = vpop.f32.mrb[0].mxu0
    %v3617 = vadd.f32 %v3543, %v3616
    %v3618 = vpop.f32.mrb[0].mxu0
    %v3619 = vadd.f32 %v3547, %v3618
    %3620 = vdwg.mxu0
    %v3621 = vmax.f32 %v3617, 0.0
    %v3622 = vmax.f32 %v3619, 0.0
    %s3623 = scalar_lea.vmem %s12, 192
    %v3624 = vld [vmem:[%s3623] sm:$0xff]
    %v3625 = vld [vmem:[%s3623 + $0x8] sm:$0xff]
    %v3626 = vld [vmem:[%s3623 + $0x10] sm:$0xff]
    %v3627 = vld [vmem:[%s3623 + $0x18] sm:$0xff]
    %v3628 = vunpack.c.l.bf16 %v3624
    %v3629 = vunpack.c.h.bf16 %v3624
    %v3630 = vunpack.c.l.bf16 %v3625
    %v3631 = vunpack.c.h.bf16 %v3625
    %v3632 = vunpack.c.l.bf16 %v3626
    %v3633 = vunpack.c.h.bf16 %v3626
    %v3634 = vunpack.c.l.bf16 %v3627
    %v3635 = vunpack.c.h.bf16 %v3627
    %s3636 = scalar_lea.vmem [#allocation9], 12
    %v3637 = vld [vmem:[%s3636] sm:$0x3]
    %v3639 = vlaneseq
    %v3640 = vshrl.u32 %v3639, 7
    %v3641 = vsub.s32 0, %v3640
    %v3642 = vrot.slane %v3637, %v3641
    %v3643 = vlaneseq
    %v3644 = vshrl.u32 %v3643, 7
    %v3645 = vsub.s32 1, %v3644
    %v3646 = vrot.slane %v3637, %v3645
    %3649 = vmatprep.subr.mxu0 %v3629
    %3650 = vmatpush1.msra.mxu0 %v3628
    %3651 = vmatprep.subr.mxu0 %v3631
    %3652 = vmatpush1.msra.mxu0 %v3630
    %3653 = vmatprep.subr.mxu0 %v3633
    %3654 = vmatpush1.msra.mxu0 %v3632
    %3655 = vmatprep.subr.mxu0 %v3635
    %3656 = vmatpush1.msra.mxu0 %v3634
    %3657 = vmatprep.subr.mxu0 0.0
    %3658 = vmatpush1.msra.mxu0 0.0
    %3659 = vmatprep.subr.mxu0 0.0
    %3660 = vmatpush1.msra.mxu0 0.0
    %3661 = vmatprep.subr.mxu0 0.0
    %3662 = vmatpush1.msra.mxu0 0.0
    %3663 = vmatprep.subr.mxu0 0.0
    %3664 = vmatpush1.msra.mxu0 0.0
    %3665 = vmatprep.subr.mxu0 0.0
    %3666 = vmatpush1.msra.mxu0 0.0
    %3667 = vmatprep.subr.mxu0 0.0
    %3668 = vmatpush1.msra.mxu0 0.0
    %3669 = vmatprep.subr.mxu0 0.0
    %3670 = vmatpush1.msra.mxu0 0.0
    %3671 = vmatprep.subr.mxu0 0.0
    %3672 = vmatpush1.msra.mxu0 0.0
    %3673 = vmatprep.subr.mxu0 0.0
    %3674 = vmatpush1.msra.mxu0 0.0
    %3675 = vmatprep.subr.mxu0 0.0
    %3676 = vmatpush1.msra.mxu0 0.0
    %3677 = vmatprep.subr.mxu0 0.0
    %3678 = vmatpush1.msra.mxu0 0.0
    %3679 = vmatprep.subr.mxu0 0.0
    %3680 = vmatpush1.msra.mxu0 0.0
    %3681 = vmatprep.subr.mxu0 0.0
    %3682 = vmatpush1.msra.mxu0 0.0
    %3683 = vmatprep.subr.mxu0 0.0
    %3684 = vmatpush1.msra.mxu0 0.0
    %3685 = vmatprep.subr.mxu0 0.0
    %3686 = vmatpush1.msra.mxu0 0.0
    %3687 = vmatprep.subr.mxu0 0.0
    %3688 = vmatpush1.msra.mxu0 0.0
    %3689 = vmatprep.subr.mxu0 0.0
    %3690 = vmatpush1.msra.mxu0 0.0
    %3691 = vmatprep.subr.mxu0 0.0
    %3692 = vmatpush1.msra.mxu0 0.0
    %3693 = vmatprep.subr.mxu0 0.0
    %3694 = vmatpush1.msra.mxu0 0.0
    %3695 = vmatprep.subr.mxu0 0.0
    %3696 = vmatpush1.msra.mxu0 0.0
    %3697 = vmatprep.subr.mxu0 0.0
    %3698 = vmatpush1.msra.mxu0 0.0
    %3699 = vmatprep.subr.mxu0 0.0
    %3700 = vmatpush1.msra.mxu0 0.0
    %3701 = vmatprep.subr.mxu0 0.0
    %3702 = vmatpush1.msra.mxu0 0.0
    %3703 = vmatprep.subr.mxu0 0.0
    %3704 = vmatpush1.msra.mxu0 0.0
    %3705 = vmatprep.subr.mxu0 0.0
    %3706 = vmatpush1.msra.mxu0 0.0
    %3707 = vmatprep.subr.mxu0 0.0
    %3708 = vmatpush1.msra.mxu0 0.0
    %3709 = vmatprep.subr.mxu0 0.0
    %3710 = vmatpush1.msra.mxu0 0.0
    %3711 = vmatprep.subr.mxu0 0.0
    %3712 = vmatpush1.msra.mxu0 0.0
    %3713 = vmatprep.mubr.f32.mxu0 0.0
    %3714 = vmatmul.mubr.f32.gmra.mrb[0].mxu0 %v3053
    %v3715 = vpop.f32.mrb[0].mxu0
    %v3716 = vadd.f32 %v3642, %v3715
    %v3717 = vpop.f32.mrb[0].mxu0
    %v3718 = vadd.f32 %v3646, %v3717
    %3719 = vdwg.mxu0
    %v3720 = vmax.f32 %v3716, 0.0
    %v3721 = vmax.f32 %v3718, 0.0
    %v3722 = vld [vmem:[%s14] sm:$0xff]
    %v3723 = vld [vmem:[%s14 + $0x8] sm:$0xff]
    %v3724 = vld [vmem:[%s14 + $0x10] sm:$0xff]
    %v3725 = vld [vmem:[%s14 + $0x18] sm:$0xff]
    %v3726 = vld [vmem:[%s14 + $0x20] sm:$0xff]
    %v3727 = vld [vmem:[%s14 + $0x28] sm:$0xff]
    %v3728 = vld [vmem:[%s14 + $0x30] sm:$0xff]
    %v3729 = vld [vmem:[%s14 + $0x38] sm:$0xff]
    %v3730 = vld [vmem:[%s14 + $0x40] sm:$0xff]
    %v3731 = vld [vmem:[%s14 + $0x48] sm:$0xff]
    %v3732 = vld [vmem:[%s14 + $0x50] sm:$0xff]
    %v3733 = vld [vmem:[%s14 + $0x58] sm:$0xff]
    %v3734 = vld [vmem:[%s14 + $0x60] sm:$0xff]
    %v3735 = vld [vmem:[%s14 + $0x68] sm:$0xff]
    %v3736 = vld [vmem:[%s14 + $0x70] sm:$0xff]
    %v3737 = vld [vmem:[%s14 + $0x78] sm:$0xff]
    %v3738 = vld [vmem:[%s14 + $0x80] sm:$0xff]
    %v3739 = vld [vmem:[%s14 + $0x88] sm:$0xff]
    %v3740 = vld [vmem:[%s14 + $0x90] sm:$0xff]
    %v3741 = vld [vmem:[%s14 + $0x98] sm:$0xff]
    %v3742 = vld [vmem:[%s14 + $0xa0] sm:$0xff]
    %v3743 = vld [vmem:[%s14 + $0xa8] sm:$0xff]
    %v3744 = vld [vmem:[%s14 + $0xb0] sm:$0xff]
    %v3745 = vld [vmem:[%s14 + $0xb8] sm:$0xff]
    %v3746 = vld [vmem:[%s14 + $0xc0] sm:$0xff]
    %v3747 = vld [vmem:[%s14 + $0xc8] sm:$0xff]
    %v3748 = vld [vmem:[%s14 + $0xd0] sm:$0xff]
    %v3749 = vld [vmem:[%s14 + $0xd8] sm:$0xff]
    %v3750 = vunpack.c.l.bf16 %v3722
    %v3751 = vunpack.c.h.bf16 %v3722
    %v3752 = vunpack.c.l.bf16 %v3723
    %v3753 = vunpack.c.h.bf16 %v3723
    %v3754 = vunpack.c.l.bf16 %v3724
    %v3755 = vunpack.c.h.bf16 %v3724
    %v3756 = vunpack.c.l.bf16 %v3725
    %v3757 = vunpack.c.h.bf16 %v3725
    %v3758 = vunpack.c.l.bf16 %v3726
    %v3759 = vunpack.c.h.bf16 %v3726
    %v3760 = vunpack.c.l.bf16 %v3727
    %v3761 = vunpack.c.h.bf16 %v3727
    %v3762 = vunpack.c.l.bf16 %v3728
    %v3763 = vunpack.c.h.bf16 %v3728
    %v3764 = vunpack.c.l.bf16 %v3729
    %v3765 = vunpack.c.h.bf16 %v3729
    %v3766 = vunpack.c.l.bf16 %v3730
    %v3767 = vunpack.c.h.bf16 %v3730
    %v3768 = vunpack.c.l.bf16 %v3731
    %v3769 = vunpack.c.h.bf16 %v3731
    %v3770 = vunpack.c.l.bf16 %v3732
    %v3771 = vunpack.c.h.bf16 %v3732
    %v3772 = vunpack.c.l.bf16 %v3733
    %v3773 = vunpack.c.h.bf16 %v3733
    %v3774 = vunpack.c.l.bf16 %v3734
    %v3775 = vunpack.c.h.bf16 %v3734
    %v3776 = vunpack.c.l.bf16 %v3735
    %v3777 = vunpack.c.h.bf16 %v3735
    %v3778 = vunpack.c.l.bf16 %v3736
    %v3779 = vunpack.c.h.bf16 %v3736
    %v3780 = vunpack.c.l.bf16 %v3737
    %v3781 = vunpack.c.h.bf16 %v3737
    %v3782 = vunpack.c.l.bf16 %v3738
    %v3783 = vunpack.c.h.bf16 %v3738
    %v3784 = vunpack.c.l.bf16 %v3739
    %v3785 = vunpack.c.h.bf16 %v3739
    %v3786 = vunpack.c.l.bf16 %v3740
    %v3787 = vunpack.c.h.bf16 %v3740
    %v3788 = vunpack.c.l.bf16 %v3741
    %v3789 = vunpack.c.h.bf16 %v3741
    %v3790 = vunpack.c.l.bf16 %v3742
    %v3791 = vunpack.c.h.bf16 %v3742
    %v3792 = vunpack.c.l.bf16 %v3743
    %v3793 = vunpack.c.h.bf16 %v3743
    %v3794 = vunpack.c.l.bf16 %v3744
    %v3795 = vunpack.c.h.bf16 %v3744
    %v3796 = vunpack.c.l.bf16 %v3745
    %v3797 = vunpack.c.h.bf16 %v3745
    %v3798 = vunpack.c.l.bf16 %v3746
    %v3799 = vunpack.c.h.bf16 %v3746
    %v3800 = vunpack.c.l.bf16 %v3747
    %v3801 = vunpack.c.h.bf16 %v3747
    %v3802 = vunpack.c.l.bf16 %v3748
    %v3803 = vunpack.c.h.bf16 %v3748
    %v3804 = vunpack.c.l.bf16 %v3749
    %v3805 = vunpack.c.h.bf16 %v3749
    %s3806 = scalar_lea.vmem %s14, 224
    %v3807 = vld [vmem:[%s3806] sm:$0xff]
    %v3808 = vld [vmem:[%s3806 + $0x8] sm:$0xff]
    %v3809 = vld [vmem:[%s3806 + $0x10] sm:$0xff]
    %v3810 = vld [vmem:[%s3806 + $0x18] sm:$0xff]
    %v3811 = vld [vmem:[%s3806 + $0x20] sm:$0xff]
    %v3812 = vld [vmem:[%s3806 + $0x28] sm:$0xff]
    %v3813 = vld [vmem:[%s3806 + $0x30] sm:$0xff]
    %v3814 = vld [vmem:[%s3806 + $0x38] sm:$0xff]
    %v3815 = vld [vmem:[%s3806 + $0x40] sm:$0xff]
    %v3816 = vld [vmem:[%s3806 + $0x48] sm:$0xff]
    %v3817 = vld [vmem:[%s3806 + $0x50] sm:$0xff]
    %v3818 = vld [vmem:[%s3806 + $0x58] sm:$0xff]
    %v3819 = vld [vmem:[%s3806 + $0x60] sm:$0xff]
    %v3820 = vld [vmem:[%s3806 + $0x68] sm:$0xff]
    %v3821 = vld [vmem:[%s3806 + $0x70] sm:$0xff]
    %v3822 = vld [vmem:[%s3806 + $0x78] sm:$0xff]
    %v3823 = vld [vmem:[%s3806 + $0x80] sm:$0xff]
    %v3824 = vld [vmem:[%s3806 + $0x88] sm:$0xff]
    %v3825 = vld [vmem:[%s3806 + $0x90] sm:$0xff]
    %v3826 = vld [vmem:[%s3806 + $0x98] sm:$0xff]
    %v3827 = vld [vmem:[%s3806 + $0xa0] sm:$0xff]
    %v3828 = vld [vmem:[%s3806 + $0xa8] sm:$0xff]
    %v3829 = vld [vmem:[%s3806 + $0xb0] sm:$0xff]
    %v3830 = vld [vmem:[%s3806 + $0xb8] sm:$0xff]
    %v3831 = vld [vmem:[%s3806 + $0xc0] sm:$0xff]
    %v3832 = vld [vmem:[%s3806 + $0xc8] sm:$0xff]
    %v3833 = vld [vmem:[%s3806 + $0xd0] sm:$0xff]
    %v3834 = vld [vmem:[%s3806 + $0xd8] sm:$0xff]
    %v3835 = vunpack.c.l.bf16 %v3807
    %v3836 = vunpack.c.h.bf16 %v3807
    %v3837 = vunpack.c.l.bf16 %v3808
    %v3838 = vunpack.c.h.bf16 %v3808
    %v3839 = vunpack.c.l.bf16 %v3809
    %v3840 = vunpack.c.h.bf16 %v3809
    %v3841 = vunpack.c.l.bf16 %v3810
    %v3842 = vunpack.c.h.bf16 %v3810
    %v3843 = vunpack.c.l.bf16 %v3811
    %v3844 = vunpack.c.h.bf16 %v3811
    %v3845 = vunpack.c.l.bf16 %v3812
    %v3846 = vunpack.c.h.bf16 %v3812
    %v3847 = vunpack.c.l.bf16 %v3813
    %v3848 = vunpack.c.h.bf16 %v3813
    %v3849 = vunpack.c.l.bf16 %v3814
    %v3850 = vunpack.c.h.bf16 %v3814
    %v3851 = vunpack.c.l.bf16 %v3815
    %v3852 = vunpack.c.h.bf16 %v3815
    %v3853 = vunpack.c.l.bf16 %v3816
    %v3854 = vunpack.c.h.bf16 %v3816
    %v3855 = vunpack.c.l.bf16 %v3817
    %v3856 = vunpack.c.h.bf16 %v3817
    %v3857 = vunpack.c.l.bf16 %v3818
    %v3858 = vunpack.c.h.bf16 %v3818
    %v3859 = vunpack.c.l.bf16 %v3819
    %v3860 = vunpack.c.h.bf16 %v3819
    %v3861 = vunpack.c.l.bf16 %v3820
    %v3862 = vunpack.c.h.bf16 %v3820
    %v3863 = vunpack.c.l.bf16 %v3821
    %v3864 = vunpack.c.h.bf16 %v3821
    %v3865 = vunpack.c.l.bf16 %v3822
    %v3866 = vunpack.c.h.bf16 %v3822
    %v3867 = vunpack.c.l.bf16 %v3823
    %v3868 = vunpack.c.h.bf16 %v3823
    %v3869 = vunpack.c.l.bf16 %v3824
    %v3870 = vunpack.c.h.bf16 %v3824
    %v3871 = vunpack.c.l.bf16 %v3825
    %v3872 = vunpack.c.h.bf16 %v3825
    %v3873 = vunpack.c.l.bf16 %v3826
    %v3874 = vunpack.c.h.bf16 %v3826
    %v3875 = vunpack.c.l.bf16 %v3827
    %v3876 = vunpack.c.h.bf16 %v3827
    %v3877 = vunpack.c.l.bf16 %v3828
    %v3878 = vunpack.c.h.bf16 %v3828
    %v3879 = vunpack.c.l.bf16 %v3829
    %v3880 = vunpack.c.h.bf16 %v3829
    %v3881 = vunpack.c.l.bf16 %v3830
    %v3882 = vunpack.c.h.bf16 %v3830
    %v3883 = vunpack.c.l.bf16 %v3831
    %v3884 = vunpack.c.h.bf16 %v3831
    %v3885 = vunpack.c.l.bf16 %v3832
    %v3886 = vunpack.c.h.bf16 %v3832
    %v3887 = vunpack.c.l.bf16 %v3833
    %v3888 = vunpack.c.h.bf16 %v3833
    %v3889 = vunpack.c.l.bf16 %v3834
    %v3890 = vunpack.c.h.bf16 %v3834
    %v3892 = vsel %vm1157, %v3127, 0
    %v3895 = vsel %vm1157, %v3226, 0
    %v3898 = vsel %vm1157, %v3325, 0
    %v3901 = vsel %vm1157, %v3424, 0
    %v3904 = vsel %vm1157, %v3523, 0
    %v3907 = vsel %vm1157, %v3622, 0
    %v3910 = vsel %vm1157, %v3721, 0
    %3912 = vmatprep.subr.mxu0 %v3836
    %3913 = vmatpush1.msra.mxu0 %v3835
    %3914 = vmatprep.subr.mxu0 %v3838
    %3915 = vmatpush1.msra.mxu0 %v3837
    %3916 = vmatprep.subr.mxu0 %v3840
    %3917 = vmatpush1.msra.mxu0 %v3839
    %3918 = vmatprep.subr.mxu0 %v3842
    %3919 = vmatpush1.msra.mxu0 %v3841
    %3920 = vmatprep.subr.mxu0 %v3844
    %3921 = vmatpush1.msra.mxu0 %v3843
    %3922 = vmatprep.subr.mxu0 %v3846
    %3923 = vmatpush1.msra.mxu0 %v3845
    %3924 = vmatprep.subr.mxu0 %v3848
    %3925 = vmatpush1.msra.mxu0 %v3847
    %3926 = vmatprep.subr.mxu0 %v3850
    %3927 = vmatpush1.msra.mxu0 %v3849
    %3928 = vmatprep.subr.mxu0 %v3852
    %3929 = vmatpush1.msra.mxu0 %v3851
    %3930 = vmatprep.subr.mxu0 %v3854
    %3931 = vmatpush1.msra.mxu0 %v3853
    %3932 = vmatprep.subr.mxu0 %v3856
    %3933 = vmatpush1.msra.mxu0 %v3855
    %3934 = vmatprep.subr.mxu0 %v3858
    %3935 = vmatpush1.msra.mxu0 %v3857
    %3936 = vmatprep.subr.mxu0 %v3860
    %3937 = vmatpush1.msra.mxu0 %v3859
    %3938 = vmatprep.subr.mxu0 %v3862
    %3939 = vmatpush1.msra.mxu0 %v3861
    %3940 = vmatprep.subr.mxu0 %v3864
    %3941 = vmatpush1.msra.mxu0 %v3863
    %3942 = vmatprep.subr.mxu0 %v3866
    %3943 = vmatpush1.msra.mxu0 %v3865
    %3944 = vmatprep.subr.mxu0 %v3868
    %3945 = vmatpush1.msra.mxu0 %v3867
    %3946 = vmatprep.subr.mxu0 %v3870
    %3947 = vmatpush1.msra.mxu0 %v3869
    %3948 = vmatprep.subr.mxu0 %v3872
    %3949 = vmatpush1.msra.mxu0 %v3871
    %3950 = vmatprep.subr.mxu0 %v3874
    %3951 = vmatpush1.msra.mxu0 %v3873
    %3952 = vmatprep.subr.mxu0 %v3876
    %3953 = vmatpush1.msra.mxu0 %v3875
    %3954 = vmatprep.subr.mxu0 %v3878
    %3955 = vmatpush1.msra.mxu0 %v3877
    %3956 = vmatprep.subr.mxu0 %v3880
    %3957 = vmatpush1.msra.mxu0 %v3879
    %3958 = vmatprep.subr.mxu0 %v3882
    %3959 = vmatpush1.msra.mxu0 %v3881
    %3960 = vmatprep.subr.mxu0 %v3884
    %3961 = vmatpush1.msra.mxu0 %v3883
    %3962 = vmatprep.subr.mxu0 %v3886
    %3963 = vmatpush1.msra.mxu0 %v3885
    %3964 = vmatprep.subr.mxu0 %v3888
    %3965 = vmatpush1.msra.mxu0 %v3887
    %3966 = vmatprep.subr.mxu0 %v3890
    %3967 = vmatpush1.msra.mxu0 %v3889
    %3968 = vmatprep.subr.mxu0 0.0
    %3969 = vmatpush1.msra.mxu0 0.0
    %3970 = vmatprep.subr.mxu0 0.0
    %3971 = vmatpush1.msra.mxu0 0.0
    %3972 = vmatprep.subr.mxu0 0.0
    %3973 = vmatpush1.msra.mxu0 0.0
    %3974 = vmatprep.subr.mxu0 0.0
    %3975 = vmatpush1.msra.mxu0 0.0
    %3976 = vmatprep.mubr.f32.mxu0 %v3892
    %3977 = vmatmul.mubr.f32.gmra.mrb[0].mxu0 %v3126
    %v3978 = vpop.f32.mrb[0].mxu0
    %v3979 = vadd.f32 0.0, %v3978
    %v3980 = vpop.f32.mrb[0].mxu0
    %v3981 = vadd.f32 0.0, %v3980
    %3982 = vmatprep.mubr.f32.mxu0 %v3895
    %3983 = vmatmul.mubr.f32.gmra.mrb[0].mxu0 %v3225
    %v3984 = vpop.f32.mrb[0].mxu0
    %v3985 = vadd.f32 0.0, %v3984
    %v3986 = vpop.f32.mrb[0].mxu0
    %v3987 = vadd.f32 0.0, %v3986
    %3988 = vmatprep.mubr.f32.mxu0 %v3898
    %3989 = vmatmul.mubr.f32.gmra.mrb[0].mxu0 %v3324
    %v3990 = vpop.f32.mrb[0].mxu0
    %v3991 = vadd.f32 0.0, %v3990
    %v3992 = vpop.f32.mrb[0].mxu0
    %v3993 = vadd.f32 0.0, %v3992
    %3994 = vmatprep.mubr.f32.mxu0 %v3901
    %3995 = vmatmul.mubr.f32.gmra.mrb[0].mxu0 %v3423
    %v3996 = vpop.f32.mrb[0].mxu0
    %v3997 = vadd.f32 0.0, %v3996
    %v3998 = vpop.f32.mrb[0].mxu0
    %v3999 = vadd.f32 0.0, %v3998
    %4000 = vmatprep.mubr.f32.mxu0 %v3904
    %4001 = vmatmul.mubr.f32.gmra.mrb[0].mxu0 %v3522
    %v4002 = vpop.f32.mrb[0].mxu0
    %v4003 = vadd.f32 0.0, %v4002
    %v4004 = vpop.f32.mrb[0].mxu0
    %v4005 = vadd.f32 0.0, %v4004
    %4006 = vmatprep.mubr.f32.mxu0 %v3907
    %4007 = vmatmul.mubr.f32.gmra.mrb[0].mxu0 %v3621
    %v4008 = vpop.f32.mrb[0].mxu0
    %v4009 = vadd.f32 0.0, %v4008
    %v4010 = vpop.f32.mrb[0].mxu0
    %v4011 = vadd.f32 0.0, %v4010
    %4012 = vmatprep.mubr.f32.mxu0 %v3910
    %4013 = vmatmul.mubr.f32.gmra.mrb[0].mxu0 %v3720
    %v4014 = vpop.f32.mrb[0].mxu0
    %v4015 = vadd.f32 0.0, %v4014
    %v4016 = vpop.f32.mrb[0].mxu0
    %v4017 = vadd.f32 0.0, %v4016
    %4018 = vdwg.mxu0
    %4019 = vmatprep.subr.mxu0 %v3751
    %4020 = vmatpush1.msra.mxu0 %v3750
    %4021 = vmatprep.subr.mxu0 %v3753
    %4022 = vmatpush1.msra.mxu0 %v3752
    %4023 = vmatprep.subr.mxu0 %v3755
    %4024 = vmatpush1.msra.mxu0 %v3754
    %4025 = vmatprep.subr.mxu0 %v3757
    %4026 = vmatpush1.msra.mxu0 %v3756
    %4027 = vmatprep.subr.mxu0 %v3759
    %4028 = vmatpush1.msra.mxu0 %v3758
    %4029 = vmatprep.subr.mxu0 %v3761
    %4030 = vmatpush1.msra.mxu0 %v3760
    %4031 = vmatprep.subr.mxu0 %v3763
    %4032 = vmatpush1.msra.mxu0 %v3762
    %4033 = vmatprep.subr.mxu0 %v3765
    %4034 = vmatpush1.msra.mxu0 %v3764
    %4035 = vmatprep.subr.mxu0 %v3767
    %4036 = vmatpush1.msra.mxu0 %v3766
    %4037 = vmatprep.subr.mxu0 %v3769
    %4038 = vmatpush1.msra.mxu0 %v3768
    %4039 = vmatprep.subr.mxu0 %v3771
    %4040 = vmatpush1.msra.mxu0 %v3770
    %4041 = vmatprep.subr.mxu0 %v3773
    %4042 = vmatpush1.msra.mxu0 %v3772
    %4043 = vmatprep.subr.mxu0 %v3775
    %4044 = vmatpush1.msra.mxu0 %v3774
    %4045 = vmatprep.subr.mxu0 %v3777
    %4046 = vmatpush1.msra.mxu0 %v3776
    %4047 = vmatprep.subr.mxu0 %v3779
    %4048 = vmatpush1.msra.mxu0 %v3778
    %4049 = vmatprep.subr.mxu0 %v3781
    %4050 = vmatpush1.msra.mxu0 %v3780
    %4051 = vmatprep.subr.mxu0 %v3783
    %4052 = vmatpush1.msra.mxu0 %v3782
    %4053 = vmatprep.subr.mxu0 %v3785
    %4054 = vmatpush1.msra.mxu0 %v3784
    %4055 = vmatprep.subr.mxu0 %v3787
    %4056 = vmatpush1.msra.mxu0 %v3786
    %4057 = vmatprep.subr.mxu0 %v3789
    %4058 = vmatpush1.msra.mxu0 %v3788
    %4059 = vmatprep.subr.mxu0 %v3791
    %4060 = vmatpush1.msra.mxu0 %v3790
    %4061 = vmatprep.subr.mxu0 %v3793
    %4062 = vmatpush1.msra.mxu0 %v3792
    %4063 = vmatprep.subr.mxu0 %v3795
    %4064 = vmatpush1.msra.mxu0 %v3794
    %4065 = vmatprep.subr.mxu0 %v3797
    %4066 = vmatpush1.msra.mxu0 %v3796
    %4067 = vmatprep.subr.mxu0 %v3799
    %4068 = vmatpush1.msra.mxu0 %v3798
    %4069 = vmatprep.subr.mxu0 %v3801
    %4070 = vmatpush1.msra.mxu0 %v3800
    %4071 = vmatprep.subr.mxu0 %v3803
    %4072 = vmatpush1.msra.mxu0 %v3802
    %4073 = vmatprep.subr.mxu0 %v3805
    %4074 = vmatpush1.msra.mxu0 %v3804
    %4075 = vmatprep.subr.mxu0 0.0
    %4076 = vmatpush1.msra.mxu0 0.0
    %4077 = vmatprep.subr.mxu0 0.0
    %4078 = vmatpush1.msra.mxu0 0.0
    %4079 = vmatprep.subr.mxu0 0.0
    %4080 = vmatpush1.msra.mxu0 0.0
    %4081 = vmatprep.subr.mxu0 0.0
    %4082 = vmatpush1.msra.mxu0 0.0
    %4083 = vmatprep.mubr.f32.mxu0 %v1286
    %4084 = vmatmul.mubr.f32.gmra.mrb[0].mxu0 0.0
    %v4085 = vpop.f32.mrb[0].mxu0
    %v4086 = vadd.f32 %v3979, %v4085
    %v4087 = vpop.f32.mrb[0].mxu0
    %v4088 = vadd.f32 %v3981, %v4087
    %4089 = vmatprep.mubr.f32.mxu0 %v3892
    %4090 = vmatmul.mubr.f32.gmra.mrb[0].mxu0 %v3126
    %v4091 = vpop.f32.mrb[0].mxu0
    %v4092 = vadd.f32 %v3985, %v4091
    %v4093 = vpop.f32.mrb[0].mxu0
    %v4094 = vadd.f32 %v3987, %v4093
    %4095 = vmatprep.mubr.f32.mxu0 %v3895
    %4096 = vmatmul.mubr.f32.gmra.mrb[0].mxu0 %v3225
    %v4097 = vpop.f32.mrb[0].mxu0
    %v4098 = vadd.f32 %v3991, %v4097
    %v4099 = vpop.f32.mrb[0].mxu0
    %v4100 = vadd.f32 %v3993, %v4099
    %4101 = vmatprep.mubr.f32.mxu0 %v3898
    %4102 = vmatmul.mubr.f32.gmra.mrb[0].mxu0 %v3324
    %v4103 = vpop.f32.mrb[0].mxu0
    %v4104 = vadd.f32 %v3997, %v4103
    %v4105 = vpop.f32.mrb[0].mxu0
    %v4106 = vadd.f32 %v3999, %v4105
    %4107 = vmatprep.mubr.f32.mxu0 %v3901
    %4108 = vmatmul.mubr.f32.gmra.mrb[0].mxu0 %v3423
    %v4109 = vpop.f32.mrb[0].mxu0
    %v4110 = vadd.f32 %v4003, %v4109
    %v4111 = vpop.f32.mrb[0].mxu0
    %v4112 = vadd.f32 %v4005, %v4111
    %4113 = vmatprep.mubr.f32.mxu0 %v3904
    %4114 = vmatmul.mubr.f32.gmra.mrb[0].mxu0 %v3522
    %v4115 = vpop.f32.mrb[0].mxu0
    %v4116 = vadd.f32 %v4009, %v4115
    %v4117 = vpop.f32.mrb[0].mxu0
    %v4118 = vadd.f32 %v4011, %v4117
    %4119 = vmatprep.mubr.f32.mxu0 %v3907
    %4120 = vmatmul.mubr.f32.gmra.mrb[0].mxu0 %v3621
    %v4121 = vpop.f32.mrb[0].mxu0
    %v4122 = vadd.f32 %v4015, %v4121
    %v4123 = vpop.f32.mrb[0].mxu0
    %v4124 = vadd.f32 %v4017, %v4123
    %4125 = vdwg.mxu0
    %s4126 = scalar_lea.vmem %s14, 448
    %v4127 = vld [vmem:[%s4126] sm:$0xff]
    %v4128 = vld [vmem:[%s4126 + $0x8] sm:$0xff]
    %v4129 = vld [vmem:[%s4126 + $0x10] sm:$0xff]
    %v4130 = vld [vmem:[%s4126 + $0x18] sm:$0xff]
    %v4131 = vld [vmem:[%s4126 + $0x20] sm:$0xff]
    %v4132 = vld [vmem:[%s4126 + $0x28] sm:$0xff]
    %v4133 = vld [vmem:[%s4126 + $0x30] sm:$0xff]
    %v4134 = vld [vmem:[%s4126 + $0x38] sm:$0xff]
    %v4135 = vld [vmem:[%s4126 + $0x40] sm:$0xff]
    %v4136 = vld [vmem:[%s4126 + $0x48] sm:$0xff]
    %v4137 = vld [vmem:[%s4126 + $0x50] sm:$0xff]
    %v4138 = vld [vmem:[%s4126 + $0x58] sm:$0xff]
    %v4139 = vld [vmem:[%s4126 + $0x60] sm:$0xff]
    %v4140 = vld [vmem:[%s4126 + $0x68] sm:$0xff]
    %v4141 = vld [vmem:[%s4126 + $0x70] sm:$0xff]
    %v4142 = vld [vmem:[%s4126 + $0x78] sm:$0xff]
    %v4143 = vld [vmem:[%s4126 + $0x80] sm:$0xff]
    %v4144 = vld [vmem:[%s4126 + $0x88] sm:$0xff]
    %v4145 = vld [vmem:[%s4126 + $0x90] sm:$0xff]
    %v4146 = vld [vmem:[%s4126 + $0x98] sm:$0xff]
    %v4147 = vld [vmem:[%s4126 + $0xa0] sm:$0xff]
    %v4148 = vld [vmem:[%s4126 + $0xa8] sm:$0xff]
    %v4149 = vld [vmem:[%s4126 + $0xb0] sm:$0xff]
    %v4150 = vld [vmem:[%s4126 + $0xb8] sm:$0xff]
    %v4151 = vld [vmem:[%s4126 + $0xc0] sm:$0xff]
    %v4152 = vld [vmem:[%s4126 + $0xc8] sm:$0xff]
    %v4153 = vld [vmem:[%s4126 + $0xd0] sm:$0xff]
    %v4154 = vld [vmem:[%s4126 + $0xd8] sm:$0xff]
    %v4155 = vunpack.c.l.bf16 %v4127
    %v4156 = vunpack.c.h.bf16 %v4127
    %v4157 = vunpack.c.l.bf16 %v4128
    %v4158 = vunpack.c.h.bf16 %v4128
    %v4159 = vunpack.c.l.bf16 %v4129
    %v4160 = vunpack.c.h.bf16 %v4129
    %v4161 = vunpack.c.l.bf16 %v4130
    %v4162 = vunpack.c.h.bf16 %v4130
    %v4163 = vunpack.c.l.bf16 %v4131
    %v4164 = vunpack.c.h.bf16 %v4131
    %v4165 = vunpack.c.l.bf16 %v4132
    %v4166 = vunpack.c.h.bf16 %v4132
    %v4167 = vunpack.c.l.bf16 %v4133
    %v4168 = vunpack.c.h.bf16 %v4133
    %v4169 = vunpack.c.l.bf16 %v4134
    %v4170 = vunpack.c.h.bf16 %v4134
    %v4171 = vunpack.c.l.bf16 %v4135
    %v4172 = vunpack.c.h.bf16 %v4135
    %v4173 = vunpack.c.l.bf16 %v4136
    %v4174 = vunpack.c.h.bf16 %v4136
    %v4175 = vunpack.c.l.bf16 %v4137
    %v4176 = vunpack.c.h.bf16 %v4137
    %v4177 = vunpack.c.l.bf16 %v4138
    %v4178 = vunpack.c.h.bf16 %v4138
    %v4179 = vunpack.c.l.bf16 %v4139
    %v4180 = vunpack.c.h.bf16 %v4139
    %v4181 = vunpack.c.l.bf16 %v4140
    %v4182 = vunpack.c.h.bf16 %v4140
    %v4183 = vunpack.c.l.bf16 %v4141
    %v4184 = vunpack.c.h.bf16 %v4141
    %v4185 = vunpack.c.l.bf16 %v4142
    %v4186 = vunpack.c.h.bf16 %v4142
    %v4187 = vunpack.c.l.bf16 %v4143
    %v4188 = vunpack.c.h.bf16 %v4143
    %v4189 = vunpack.c.l.bf16 %v4144
    %v4190 = vunpack.c.h.bf16 %v4144
    %v4191 = vunpack.c.l.bf16 %v4145
    %v4192 = vunpack.c.h.bf16 %v4145
    %v4193 = vunpack.c.l.bf16 %v4146
    %v4194 = vunpack.c.h.bf16 %v4146
    %v4195 = vunpack.c.l.bf16 %v4147
    %v4196 = vunpack.c.h.bf16 %v4147
    %v4197 = vunpack.c.l.bf16 %v4148
    %v4198 = vunpack.c.h.bf16 %v4148
    %v4199 = vunpack.c.l.bf16 %v4149
    %v4200 = vunpack.c.h.bf16 %v4149
    %v4201 = vunpack.c.l.bf16 %v4150
    %v4202 = vunpack.c.h.bf16 %v4150
    %v4203 = vunpack.c.l.bf16 %v4151
    %v4204 = vunpack.c.h.bf16 %v4151
    %v4205 = vunpack.c.l.bf16 %v4152
    %v4206 = vunpack.c.h.bf16 %v4152
    %v4207 = vunpack.c.l.bf16 %v4153
    %v4208 = vunpack.c.h.bf16 %v4153
    %v4209 = vunpack.c.l.bf16 %v4154
    %v4210 = vunpack.c.h.bf16 %v4154
    %s4211 = scalar_lea.vmem %s14, 672
    %v4212 = vld [vmem:[%s4211] sm:$0xff]
    %v4213 = vld [vmem:[%s4211 + $0x8] sm:$0xff]
    %v4214 = vld [vmem:[%s4211 + $0x10] sm:$0xff]
    %v4215 = vld [vmem:[%s4211 + $0x18] sm:$0xff]
    %v4216 = vld [vmem:[%s4211 + $0x20] sm:$0xff]
    %v4217 = vld [vmem:[%s4211 + $0x28] sm:$0xff]
    %v4218 = vld [vmem:[%s4211 + $0x30] sm:$0xff]
    %v4219 = vld [vmem:[%s4211 + $0x38] sm:$0xff]
    %v4220 = vld [vmem:[%s4211 + $0x40] sm:$0xff]
    %v4221 = vld [vmem:[%s4211 + $0x48] sm:$0xff]
    %v4222 = vld [vmem:[%s4211 + $0x50] sm:$0xff]
    %v4223 = vld [vmem:[%s4211 + $0x58] sm:$0xff]
    %v4224 = vld [vmem:[%s4211 + $0x60] sm:$0xff]
    %v4225 = vld [vmem:[%s4211 + $0x68] sm:$0xff]
    %v4226 = vld [vmem:[%s4211 + $0x70] sm:$0xff]
    %v4227 = vld [vmem:[%s4211 + $0x78] sm:$0xff]
    %v4228 = vld [vmem:[%s4211 + $0x80] sm:$0xff]
    %v4229 = vld [vmem:[%s4211 + $0x88] sm:$0xff]
    %v4230 = vld [vmem:[%s4211 + $0x90] sm:$0xff]
    %v4231 = vld [vmem:[%s4211 + $0x98] sm:$0xff]
    %v4232 = vld [vmem:[%s4211 + $0xa0] sm:$0xff]
    %v4233 = vld [vmem:[%s4211 + $0xa8] sm:$0xff]
    %v4234 = vld [vmem:[%s4211 + $0xb0] sm:$0xff]
    %v4235 = vld [vmem:[%s4211 + $0xb8] sm:$0xff]
    %v4236 = vld [vmem:[%s4211 + $0xc0] sm:$0xff]
    %v4237 = vld [vmem:[%s4211 + $0xc8] sm:$0xff]
    %v4238 = vld [vmem:[%s4211 + $0xd0] sm:$0xff]
    %v4239 = vld [vmem:[%s4211 + $0xd8] sm:$0xff]
    %v4240 = vunpack.c.l.bf16 %v4212
    %v4241 = vunpack.c.h.bf16 %v4212
    %v4242 = vunpack.c.l.bf16 %v4213
    %v4243 = vunpack.c.h.bf16 %v4213
    %v4244 = vunpack.c.l.bf16 %v4214
    %v4245 = vunpack.c.h.bf16 %v4214
    %v4246 = vunpack.c.l.bf16 %v4215
    %v4247 = vunpack.c.h.bf16 %v4215
    %v4248 = vunpack.c.l.bf16 %v4216
    %v4249 = vunpack.c.h.bf16 %v4216
    %v4250 = vunpack.c.l.bf16 %v4217
    %v4251 = vunpack.c.h.bf16 %v4217
    %v4252 = vunpack.c.l.bf16 %v4218
    %v4253 = vunpack.c.h.bf16 %v4218
    %v4254 = vunpack.c.l.bf16 %v4219
    %v4255 = vunpack.c.h.bf16 %v4219
    %v4256 = vunpack.c.l.bf16 %v4220
    %v4257 = vunpack.c.h.bf16 %v4220
    %v4258 = vunpack.c.l.bf16 %v4221
    %v4259 = vunpack.c.h.bf16 %v4221
    %v4260 = vunpack.c.l.bf16 %v4222
    %v4261 = vunpack.c.h.bf16 %v4222
    %v4262 = vunpack.c.l.bf16 %v4223
    %v4263 = vunpack.c.h.bf16 %v4223
    %v4264 = vunpack.c.l.bf16 %v4224
    %v4265 = vunpack.c.h.bf16 %v4224
    %v4266 = vunpack.c.l.bf16 %v4225
    %v4267 = vunpack.c.h.bf16 %v4225
    %v4268 = vunpack.c.l.bf16 %v4226
    %v4269 = vunpack.c.h.bf16 %v4226
    %v4270 = vunpack.c.l.bf16 %v4227
    %v4271 = vunpack.c.h.bf16 %v4227
    %v4272 = vunpack.c.l.bf16 %v4228
    %v4273 = vunpack.c.h.bf16 %v4228
    %v4274 = vunpack.c.l.bf16 %v4229
    %v4275 = vunpack.c.h.bf16 %v4229
    %v4276 = vunpack.c.l.bf16 %v4230
    %v4277 = vunpack.c.h.bf16 %v4230
    %v4278 = vunpack.c.l.bf16 %v4231
    %v4279 = vunpack.c.h.bf16 %v4231
    %v4280 = vunpack.c.l.bf16 %v4232
    %v4281 = vunpack.c.h.bf16 %v4232
    %v4282 = vunpack.c.l.bf16 %v4233
    %v4283 = vunpack.c.h.bf16 %v4233
    %v4284 = vunpack.c.l.bf16 %v4234
    %v4285 = vunpack.c.h.bf16 %v4234
    %v4286 = vunpack.c.l.bf16 %v4235
    %v4287 = vunpack.c.h.bf16 %v4235
    %v4288 = vunpack.c.l.bf16 %v4236
    %v4289 = vunpack.c.h.bf16 %v4236
    %v4290 = vunpack.c.l.bf16 %v4237
    %v4291 = vunpack.c.h.bf16 %v4237
    %v4292 = vunpack.c.l.bf16 %v4238
    %v4293 = vunpack.c.h.bf16 %v4238
    %v4294 = vunpack.c.l.bf16 %v4239
    %v4295 = vunpack.c.h.bf16 %v4239
    %4296 = vmatprep.subr.mxu0 %v4241
    %4297 = vmatpush1.msra.mxu0 %v4240
    %4298 = vmatprep.subr.mxu0 %v4243
    %4299 = vmatpush1.msra.mxu0 %v4242
    %4300 = vmatprep.subr.mxu0 %v4245
    %4301 = vmatpush1.msra.mxu0 %v4244
    %4302 = vmatprep.subr.mxu0 %v4247
    %4303 = vmatpush1.msra.mxu0 %v4246
    %4304 = vmatprep.subr.mxu0 %v4249
    %4305 = vmatpush1.msra.mxu0 %v4248
    %4306 = vmatprep.subr.mxu0 %v4251
    %4307 = vmatpush1.msra.mxu0 %v4250
    %4308 = vmatprep.subr.mxu0 %v4253
    %4309 = vmatpush1.msra.mxu0 %v4252
    %4310 = vmatprep.subr.mxu0 %v4255
    %4311 = vmatpush1.msra.mxu0 %v4254
    %4312 = vmatprep.subr.mxu0 %v4257
    %4313 = vmatpush1.msra.mxu0 %v4256
    %4314 = vmatprep.subr.mxu0 %v4259
    %4315 = vmatpush1.msra.mxu0 %v4258
    %4316 = vmatprep.subr.mxu0 %v4261
    %4317 = vmatpush1.msra.mxu0 %v4260
    %4318 = vmatprep.subr.mxu0 %v4263
    %4319 = vmatpush1.msra.mxu0 %v4262
    %4320 = vmatprep.subr.mxu0 %v4265
    %4321 = vmatpush1.msra.mxu0 %v4264
    %4322 = vmatprep.subr.mxu0 %v4267
    %4323 = vmatpush1.msra.mxu0 %v4266
    %4324 = vmatprep.subr.mxu0 %v4269
    %4325 = vmatpush1.msra.mxu0 %v4268
    %4326 = vmatprep.subr.mxu0 %v4271
    %4327 = vmatpush1.msra.mxu0 %v4270
    %4328 = vmatprep.subr.mxu0 %v4273
    %4329 = vmatpush1.msra.mxu0 %v4272
    %4330 = vmatprep.subr.mxu0 %v4275
    %4331 = vmatpush1.msra.mxu0 %v4274
    %4332 = vmatprep.subr.mxu0 %v4277
    %4333 = vmatpush1.msra.mxu0 %v4276
    %4334 = vmatprep.subr.mxu0 %v4279
    %4335 = vmatpush1.msra.mxu0 %v4278
    %4336 = vmatprep.subr.mxu0 %v4281
    %4337 = vmatpush1.msra.mxu0 %v4280
    %4338 = vmatprep.subr.mxu0 %v4283
    %4339 = vmatpush1.msra.mxu0 %v4282
    %4340 = vmatprep.subr.mxu0 %v4285
    %4341 = vmatpush1.msra.mxu0 %v4284
    %4342 = vmatprep.subr.mxu0 %v4287
    %4343 = vmatpush1.msra.mxu0 %v4286
    %4344 = vmatprep.subr.mxu0 %v4289
    %4345 = vmatpush1.msra.mxu0 %v4288
    %4346 = vmatprep.subr.mxu0 %v4291
    %4347 = vmatpush1.msra.mxu0 %v4290
    %4348 = vmatprep.subr.mxu0 %v4293
    %4349 = vmatpush1.msra.mxu0 %v4292
    %4350 = vmatprep.subr.mxu0 %v4295
    %4351 = vmatpush1.msra.mxu0 %v4294
    %4352 = vmatprep.subr.mxu0 0.0
    %4353 = vmatpush1.msra.mxu0 0.0
    %4354 = vmatprep.subr.mxu0 0.0
    %4355 = vmatpush1.msra.mxu0 0.0
    %4356 = vmatprep.subr.mxu0 0.0
    %4357 = vmatpush1.msra.mxu0 0.0
    %4358 = vmatprep.subr.mxu0 0.0
    %4359 = vmatpush1.msra.mxu0 0.0
    %4360 = vmatprep.mubr.f32.mxu0 %v3895
    %4361 = vmatmul.mubr.f32.gmra.mrb[0].mxu0 %v3225
    %v4362 = vpop.f32.mrb[0].mxu0
    %v4363 = vadd.f32 0.0, %v4362
    %v4364 = vpop.f32.mrb[0].mxu0
    %v4365 = vadd.f32 0.0, %v4364
    %4366 = vmatprep.mubr.f32.mxu0 %v3898
    %4367 = vmatmul.mubr.f32.gmra.mrb[0].mxu0 %v3324
    %v4368 = vpop.f32.mrb[0].mxu0
    %v4369 = vadd.f32 0.0, %v4368
    %v4370 = vpop.f32.mrb[0].mxu0
    %v4371 = vadd.f32 0.0, %v4370
    %4372 = vmatprep.mubr.f32.mxu0 %v3901
    %4373 = vmatmul.mubr.f32.gmra.mrb[0].mxu0 %v3423
    %v4374 = vpop.f32.mrb[0].mxu0
    %v4375 = vadd.f32 0.0, %v4374
    %v4376 = vpop.f32.mrb[0].mxu0
    %v4377 = vadd.f32 0.0, %v4376
    %4378 = vmatprep.mubr.f32.mxu0 %v3904
    %4379 = vmatmul.mubr.f32.gmra.mrb[0].mxu0 %v3522
    %v4380 = vpop.f32.mrb[0].mxu0
    %v4381 = vadd.f32 0.0, %v4380
    %v4382 = vpop.f32.mrb[0].mxu0
    %v4383 = vadd.f32 0.0, %v4382
    %4384 = vmatprep.mubr.f32.mxu0 %v3907
    %4385 = vmatmul.mubr.f32.gmra.mrb[0].mxu0 %v3621
    %v4386 = vpop.f32.mrb[0].mxu0
    %v4387 = vadd.f32 0.0, %v4386
    %v4388 = vpop.f32.mrb[0].mxu0
    %v4389 = vadd.f32 0.0, %v4388
    %4390 = vmatprep.mubr.f32.mxu0 %v3910
    %4391 = vmatmul.mubr.f32.gmra.mrb[0].mxu0 %v3720
    %v4392 = vpop.f32.mrb[0].mxu0
    %v4393 = vadd.f32 0.0, %v4392
    %v4394 = vpop.f32.mrb[0].mxu0
    %v4395 = vadd.f32 0.0, %v4394
    %4396 = vmatprep.mubr.f32.mxu0 %v1286
    %4397 = vmatmul.mubr.f32.gmra.mrb[0].mxu0 0.0
    %v4398 = vpop.f32.mrb[0].mxu0
    %v4399 = vadd.f32 0.0, %v4398
    %v4400 = vpop.f32.mrb[0].mxu0
    %v4401 = vadd.f32 0.0, %v4400
    %4402 = vdwg.mxu0
    %4403 = vmatprep.subr.mxu0 %v4156
    %4404 = vmatpush1.msra.mxu0 %v4155
    %4405 = vmatprep.subr.mxu0 %v4158
    %4406 = vmatpush1.msra.mxu0 %v4157
    %4407 = vmatprep.subr.mxu0 %v4160
    %4408 = vmatpush1.msra.mxu0 %v4159
    %4409 = vmatprep.subr.mxu0 %v4162
    %4410 = vmatpush1.msra.mxu0 %v4161
    %4411 = vmatprep.subr.mxu0 %v4164
    %4412 = vmatpush1.msra.mxu0 %v4163
    %4413 = vmatprep.subr.mxu0 %v4166
    %4414 = vmatpush1.msra.mxu0 %v4165
    %4415 = vmatprep.subr.mxu0 %v4168
    %4416 = vmatpush1.msra.mxu0 %v4167
    %4417 = vmatprep.subr.mxu0 %v4170
    %4418 = vmatpush1.msra.mxu0 %v4169
    %4419 = vmatprep.subr.mxu0 %v4172
    %4420 = vmatpush1.msra.mxu0 %v4171
    %4421 = vmatprep.subr.mxu0 %v4174
    %4422 = vmatpush1.msra.mxu0 %v4173
    %4423 = vmatprep.subr.mxu0 %v4176
    %4424 = vmatpush1.msra.mxu0 %v4175
    %4425 = vmatprep.subr.mxu0 %v4178
    %4426 = vmatpush1.msra.mxu0 %v4177
    %4427 = vmatprep.subr.mxu0 %v4180
    %4428 = vmatpush1.msra.mxu0 %v4179
    %4429 = vmatprep.subr.mxu0 %v4182
    %4430 = vmatpush1.msra.mxu0 %v4181
    %4431 = vmatprep.subr.mxu0 %v4184
    %4432 = vmatpush1.msra.mxu0 %v4183
    %4433 = vmatprep.subr.mxu0 %v4186
    %4434 = vmatpush1.msra.mxu0 %v4185
    %4435 = vmatprep.subr.mxu0 %v4188
    %4436 = vmatpush1.msra.mxu0 %v4187
    %4437 = vmatprep.subr.mxu0 %v4190
    %4438 = vmatpush1.msra.mxu0 %v4189
    %4439 = vmatprep.subr.mxu0 %v4192
    %4440 = vmatpush1.msra.mxu0 %v4191
    %4441 = vmatprep.subr.mxu0 %v4194
    %4442 = vmatpush1.msra.mxu0 %v4193
    %4443 = vmatprep.subr.mxu0 %v4196
    %4444 = vmatpush1.msra.mxu0 %v4195
    %4445 = vmatprep.subr.mxu0 %v4198
    %4446 = vmatpush1.msra.mxu0 %v4197
    %4447 = vmatprep.subr.mxu0 %v4200
    %4448 = vmatpush1.msra.mxu0 %v4199
    %4449 = vmatprep.subr.mxu0 %v4202
    %4450 = vmatpush1.msra.mxu0 %v4201
    %4451 = vmatprep.subr.mxu0 %v4204
    %4452 = vmatpush1.msra.mxu0 %v4203
    %4453 = vmatprep.subr.mxu0 %v4206
    %4454 = vmatpush1.msra.mxu0 %v4205
    %4455 = vmatprep.subr.mxu0 %v4208
    %4456 = vmatpush1.msra.mxu0 %v4207
    %4457 = vmatprep.subr.mxu0 %v4210
    %4458 = vmatpush1.msra.mxu0 %v4209
    %4459 = vmatprep.subr.mxu0 0.0
    %4460 = vmatpush1.msra.mxu0 0.0
    %4461 = vmatprep.subr.mxu0 0.0
    %4462 = vmatpush1.msra.mxu0 0.0
    %4463 = vmatprep.subr.mxu0 0.0
    %4464 = vmatpush1.msra.mxu0 0.0
    %4465 = vmatprep.subr.mxu0 0.0
    %4466 = vmatpush1.msra.mxu0 0.0
    %4467 = vmatprep.mubr.f32.mxu0 %v3892
    %4468 = vmatmul.mubr.f32.gmra.mrb[0].mxu0 %v3126
    %v4469 = vpop.f32.mrb[0].mxu0
    %v4470 = vadd.f32 %v4363, %v4469
    %v4471 = vpop.f32.mrb[0].mxu0
    %v4472 = vadd.f32 %v4365, %v4471
    %4473 = vmatprep.mubr.f32.mxu0 %v3895
    %4474 = vmatmul.mubr.f32.gmra.mrb[0].mxu0 %v3225
    %v4475 = vpop.f32.mrb[0].mxu0
    %v4476 = vadd.f32 %v4369, %v4475
    %v4477 = vpop.f32.mrb[0].mxu0
    %v4478 = vadd.f32 %v4371, %v4477
    %4479 = vmatprep.mubr.f32.mxu0 %v3898
    %4480 = vmatmul.mubr.f32.gmra.mrb[0].mxu0 %v3324
    %v4481 = vpop.f32.mrb[0].mxu0
    %v4482 = vadd.f32 %v4375, %v4481
    %v4483 = vpop.f32.mrb[0].mxu0
    %v4484 = vadd.f32 %v4377, %v4483
    %4485 = vmatprep.mubr.f32.mxu0 %v3901
    %4486 = vmatmul.mubr.f32.gmra.mrb[0].mxu0 %v3423
    %v4487 = vpop.f32.mrb[0].mxu0
    %v4488 = vadd.f32 %v4381, %v4487
    %v4489 = vpop.f32.mrb[0].mxu0
    %v4490 = vadd.f32 %v4383, %v4489
    %4491 = vmatprep.mubr.f32.mxu0 %v3904
    %4492 = vmatmul.mubr.f32.gmra.mrb[0].mxu0 %v3522
    %v4493 = vpop.f32.mrb[0].mxu0
    %v4494 = vadd.f32 %v4387, %v4493
    %v4495 = vpop.f32.mrb[0].mxu0
    %v4496 = vadd.f32 %v4389, %v4495
    %4497 = vmatprep.mubr.f32.mxu0 %v3907
    %4498 = vmatmul.mubr.f32.gmra.mrb[0].mxu0 %v3621
    %v4499 = vpop.f32.mrb[0].mxu0
    %v4500 = vadd.f32 %v4393, %v4499
    %v4501 = vpop.f32.mrb[0].mxu0
    %v4502 = vadd.f32 %v4395, %v4501
    %4503 = vmatprep.mubr.f32.mxu0 %v3910
    %4504 = vmatmul.mubr.f32.gmra.mrb[0].mxu0 %v3720
    %v4505 = vpop.f32.mrb[0].mxu0
    %v4506 = vadd.f32 %v4399, %v4505
    %v4507 = vpop.f32.mrb[0].mxu0
    %v4508 = vadd.f32 %v4401, %v4507
    %4509 = vdwg.mxu0
    %v4510 = vmax.f32 %v4086, 0.0
    %v4511 = vmax.f32 %v4088, 0.0
    %v4512 = vmax.f32 %v4470, 0.0
    %v4513 = vmax.f32 %v4472, 0.0
    %v4514 = vmax.f32 %v4092, 0.0
    %v4515 = vmax.f32 %v4094, 0.0
    %v4516 = vmax.f32 %v4476, 0.0
    %v4517 = vmax.f32 %v4478, 0.0
    %v4518 = vmax.f32 %v4098, 0.0
    %v4519 = vmax.f32 %v4100, 0.0
    %v4520 = vmax.f32 %v4482, 0.0
    %v4521 = vmax.f32 %v4484, 0.0
    %v4522 = vmax.f32 %v4104, 0.0
    %v4523 = vmax.f32 %v4106, 0.0
    %v4524 = vmax.f32 %v4488, 0.0
    %v4525 = vmax.f32 %v4490, 0.0
    %v4526 = vmax.f32 %v4110, 0.0
    %v4527 = vmax.f32 %v4112, 0.0
    %v4528 = vmax.f32 %v4494, 0.0
    %v4529 = vmax.f32 %v4496, 0.0
    %v4530 = vmax.f32 %v4116, 0.0
    %v4531 = vmax.f32 %v4118, 0.0
    %v4532 = vmax.f32 %v4500, 0.0
    %v4533 = vmax.f32 %v4502, 0.0
    %v4534 = vmax.f32 %v4122, 0.0
    %v4535 = vmax.f32 %v4124, 0.0
    %v4536 = vmax.f32 %v4506, 0.0
    %v4537 = vmax.f32 %v4508, 0.0
    %v4538 = vld [vmem:[%s15] sm:$0xf]
    %v4539 = vld [vmem:[%s15 + $0x4] sm:$0xf]
    %v4540 = vld [vmem:[%s15 + $0x8] sm:$0xf]
    %v4541 = vld [vmem:[%s15 + $0xc] sm:$0xf]
    %v4542 = vld [vmem:[%s15 + $0x10] sm:$0xf]
    %v4543 = vld [vmem:[%s15 + $0x14] sm:$0xf]
    %v4544 = vld [vmem:[%s15 + $0x18] sm:$0xf]
    %v4545 = vld [vmem:[%s15 + $0x1c] sm:$0xf]
    %v4546 = vld [vmem:[%s15 + $0x20] sm:$0xf]
    %v4547 = vld [vmem:[%s15 + $0x24] sm:$0xf]
    %v4548 = vld [vmem:[%s15 + $0x28] sm:$0xf]
    %v4549 = vld [vmem:[%s15 + $0x2c] sm:$0xf]
    %v4550 = vld [vmem:[%s15 + $0x30] sm:$0xf]
    %v4551 = vld [vmem:[%s15 + $0x34] sm:$0xf]
    %v4552 = vld [vmem:[%s15 + $0x38] sm:$0xf]
    %v4553 = vld [vmem:[%s15 + $0x3c] sm:$0xf]
    %v4554 = vld [vmem:[%s15 + $0x40] sm:$0xf]
    %v4555 = vld [vmem:[%s15 + $0x44] sm:$0xf]
    %v4556 = vld [vmem:[%s15 + $0x48] sm:$0xf]
    %v4557 = vld [vmem:[%s15 + $0x4c] sm:$0xf]
    %v4558 = vld [vmem:[%s15 + $0x50] sm:$0xf]
    %v4559 = vld [vmem:[%s15 + $0x54] sm:$0xf]
    %v4560 = vld [vmem:[%s15 + $0x58] sm:$0xf]
    %v4561 = vld [vmem:[%s15 + $0x5c] sm:$0xf]
    %v4562 = vld [vmem:[%s15 + $0x60] sm:$0xf]
    %v4563 = vld [vmem:[%s15 + $0x64] sm:$0xf]
    %v4564 = vld [vmem:[%s15 + $0x68] sm:$0xf]
    %v4565 = vld [vmem:[%s15 + $0x6c] sm:$0xf]
    %v4566 = vunpack.c.l.bf16 %v4538
    %v4567 = vunpack.c.l.bf16 %v4539
    %v4568 = vunpack.c.l.bf16 %v4540
    %v4569 = vunpack.c.l.bf16 %v4541
    %v4570 = vunpack.c.l.bf16 %v4542
    %v4571 = vunpack.c.l.bf16 %v4543
    %v4572 = vunpack.c.l.bf16 %v4544
    %v4573 = vunpack.c.l.bf16 %v4545
    %v4574 = vunpack.c.l.bf16 %v4546
    %v4575 = vunpack.c.l.bf16 %v4547
    %v4576 = vunpack.c.l.bf16 %v4548
    %v4577 = vunpack.c.l.bf16 %v4549
    %v4578 = vunpack.c.l.bf16 %v4550
    %v4579 = vunpack.c.l.bf16 %v4551
    %v4580 = vunpack.c.l.bf16 %v4552
    %v4581 = vunpack.c.l.bf16 %v4553
    %v4582 = vunpack.c.l.bf16 %v4554
    %v4583 = vunpack.c.l.bf16 %v4555
    %v4584 = vunpack.c.l.bf16 %v4556
    %v4585 = vunpack.c.l.bf16 %v4557
    %v4586 = vunpack.c.l.bf16 %v4558
    %v4587 = vunpack.c.l.bf16 %v4559
    %v4588 = vunpack.c.l.bf16 %v4560
    %v4589 = vunpack.c.l.bf16 %v4561
    %v4590 = vunpack.c.l.bf16 %v4562
    %v4591 = vunpack.c.l.bf16 %v4563
    %v4592 = vunpack.c.l.bf16 %v4564
    %v4593 = vunpack.c.l.bf16 %v4565
    %s4594 = scalar_lea.vmem %s15, 112
    %v4595 = vld [vmem:[%s4594] sm:$0xf]
    %v4596 = vld [vmem:[%s4594 + $0x4] sm:$0xf]
    %v4597 = vld [vmem:[%s4594 + $0x8] sm:$0xf]
    %v4598 = vld [vmem:[%s4594 + $0xc] sm:$0xf]
    %v4599 = vld [vmem:[%s4594 + $0x10] sm:$0xf]
    %v4600 = vld [vmem:[%s4594 + $0x14] sm:$0xf]
    %v4601 = vld [vmem:[%s4594 + $0x18] sm:$0xf]
    %v4602 = vld [vmem:[%s4594 + $0x1c] sm:$0xf]
    %v4603 = vld [vmem:[%s4594 + $0x20] sm:$0xf]
    %v4604 = vld [vmem:[%s4594 + $0x24] sm:$0xf]
    %v4605 = vld [vmem:[%s4594 + $0x28] sm:$0xf]
    %v4606 = vld [vmem:[%s4594 + $0x2c] sm:$0xf]
    %v4607 = vld [vmem:[%s4594 + $0x30] sm:$0xf]
    %v4608 = vld [vmem:[%s4594 + $0x34] sm:$0xf]
    %v4609 = vld [vmem:[%s4594 + $0x38] sm:$0xf]
    %v4610 = vld [vmem:[%s4594 + $0x3c] sm:$0xf]
    %v4611 = vld [vmem:[%s4594 + $0x40] sm:$0xf]
    %v4612 = vld [vmem:[%s4594 + $0x44] sm:$0xf]
    %v4613 = vld [vmem:[%s4594 + $0x48] sm:$0xf]
    %v4614 = vld [vmem:[%s4594 + $0x4c] sm:$0xf]
    %v4615 = vld [vmem:[%s4594 + $0x50] sm:$0xf]
    %v4616 = vld [vmem:[%s4594 + $0x54] sm:$0xf]
    %v4617 = vld [vmem:[%s4594 + $0x58] sm:$0xf]
    %v4618 = vld [vmem:[%s4594 + $0x5c] sm:$0xf]
    %v4619 = vld [vmem:[%s4594 + $0x60] sm:$0xf]
    %v4620 = vld [vmem:[%s4594 + $0x64] sm:$0xf]
    %v4621 = vld [vmem:[%s4594 + $0x68] sm:$0xf]
    %v4622 = vld [vmem:[%s4594 + $0x6c] sm:$0xf]
    %v4623 = vunpack.c.l.bf16 %v4595
    %v4624 = vunpack.c.l.bf16 %v4596
    %v4625 = vunpack.c.l.bf16 %v4597
    %v4626 = vunpack.c.l.bf16 %v4598
    %v4627 = vunpack.c.l.bf16 %v4599
    %v4628 = vunpack.c.l.bf16 %v4600
    %v4629 = vunpack.c.l.bf16 %v4601
    %v4630 = vunpack.c.l.bf16 %v4602
    %v4631 = vunpack.c.l.bf16 %v4603
    %v4632 = vunpack.c.l.bf16 %v4604
    %v4633 = vunpack.c.l.bf16 %v4605
    %v4634 = vunpack.c.l.bf16 %v4606
    %v4635 = vunpack.c.l.bf16 %v4607
    %v4636 = vunpack.c.l.bf16 %v4608
    %v4637 = vunpack.c.l.bf16 %v4609
    %v4638 = vunpack.c.l.bf16 %v4610
    %v4639 = vunpack.c.l.bf16 %v4611
    %v4640 = vunpack.c.l.bf16 %v4612
    %v4641 = vunpack.c.l.bf16 %v4613
    %v4642 = vunpack.c.l.bf16 %v4614
    %v4643 = vunpack.c.l.bf16 %v4615
    %v4644 = vunpack.c.l.bf16 %v4616
    %v4645 = vunpack.c.l.bf16 %v4617
    %v4646 = vunpack.c.l.bf16 %v4618
    %v4647 = vunpack.c.l.bf16 %v4619
    %v4648 = vunpack.c.l.bf16 %v4620
    %v4649 = vunpack.c.l.bf16 %v4621
    %v4650 = vunpack.c.l.bf16 %v4622
    %v4652 = vsel %vm1157, %v4511, 0
    %v4655 = vsel %vm1157, %v4513, 0
    %v4658 = vsel %vm1157, %v4515, 0
    %v4661 = vsel %vm1157, %v4517, 0
    %v4664 = vsel %vm1157, %v4519, 0
    %v4667 = vsel %vm1157, %v4521, 0
    %v4670 = vsel %vm1157, %v4523, 0
    %v4673 = vsel %vm1157, %v4525, 0
    %v4676 = vsel %vm1157, %v4527, 0
    %v4679 = vsel %vm1157, %v4529, 0
    %v4682 = vsel %vm1157, %v4531, 0
    %v4685 = vsel %vm1157, %v4533, 0
    %v4688 = vsel %vm1157, %v4535, 0
    %v4691 = vsel %vm1157, %v4537, 0
    %4693 = vmatprep.subr.mxu0 0.0
    %4694 = vmatpush1.msra.mxu0 %v4623
    %4695 = vmatprep.subr.mxu0 0.0
    %4696 = vmatpush1.msra.mxu0 %v4624
    %4697 = vmatprep.subr.mxu0 0.0
    %4698 = vmatpush1.msra.mxu0 %v4625
    %4699 = vmatprep.subr.mxu0 0.0
    %4700 = vmatpush1.msra.mxu0 %v4626
    %4701 = vmatprep.subr.mxu0 0.0
    %4702 = vmatpush1.msra.mxu0 %v4627
    %4703 = vmatprep.subr.mxu0 0.0
    %4704 = vmatpush1.msra.mxu0 %v4628
    %4705 = vmatprep.subr.mxu0 0.0
    %4706 = vmatpush1.msra.mxu0 %v4629
    %4707 = vmatprep.subr.mxu0 0.0
    %4708 = vmatpush1.msra.mxu0 %v4630
    %4709 = vmatprep.subr.mxu0 0.0
    %4710 = vmatpush1.msra.mxu0 %v4631
    %4711 = vmatprep.subr.mxu0 0.0
    %4712 = vmatpush1.msra.mxu0 %v4632
    %4713 = vmatprep.subr.mxu0 0.0
    %4714 = vmatpush1.msra.mxu0 %v4633
    %4715 = vmatprep.subr.mxu0 0.0
    %4716 = vmatpush1.msra.mxu0 %v4634
    %4717 = vmatprep.subr.mxu0 0.0
    %4718 = vmatpush1.msra.mxu0 %v4635
    %4719 = vmatprep.subr.mxu0 0.0
    %4720 = vmatpush1.msra.mxu0 %v4636
    %4721 = vmatprep.subr.mxu0 0.0
    %4722 = vmatpush1.msra.mxu0 %v4637
    %4723 = vmatprep.subr.mxu0 0.0
    %4724 = vmatpush1.msra.mxu0 %v4638
    %4725 = vmatprep.subr.mxu0 0.0
    %4726 = vmatpush1.msra.mxu0 %v4639
    %4727 = vmatprep.subr.mxu0 0.0
    %4728 = vmatpush1.msra.mxu0 %v4640
    %4729 = vmatprep.subr.mxu0 0.0
    %4730 = vmatpush1.msra.mxu0 %v4641
    %4731 = vmatprep.subr.mxu0 0.0
    %4732 = vmatpush1.msra.mxu0 %v4642
    %4733 = vmatprep.subr.mxu0 0.0
    %4734 = vmatpush1.msra.mxu0 %v4643
    %4735 = vmatprep.subr.mxu0 0.0
    %4736 = vmatpush1.msra.mxu0 %v4644
    %4737 = vmatprep.subr.mxu0 0.0
    %4738 = vmatpush1.msra.mxu0 %v4645
    %4739 = vmatprep.subr.mxu0 0.0
    %4740 = vmatpush1.msra.mxu0 %v4646
    %4741 = vmatprep.subr.mxu0 0.0
    %4742 = vmatpush1.msra.mxu0 %v4647
    %4743 = vmatprep.subr.mxu0 0.0
    %4744 = vmatpush1.msra.mxu0 %v4648
    %4745 = vmatprep.subr.mxu0 0.0
    %4746 = vmatpush1.msra.mxu0 %v4649
    %4747 = vmatprep.subr.mxu0 0.0
    %4748 = vmatpush1.msra.mxu0 %v4650
    %4749 = vmatprep.subr.mxu0 0.0
    %4750 = vmatpush1.msra.mxu0 0.0
    %4751 = vmatprep.subr.mxu0 0.0
    %4752 = vmatpush1.msra.mxu0 0.0
    %4753 = vmatprep.subr.mxu0 0.0
    %4754 = vmatpush1.msra.mxu0 0.0
    %4755 = vmatprep.subr.mxu0 0.0
    %4756 = vmatpush1.msra.mxu0 0.0
    %4757 = vmatprep.mubr.f32.mxu0 %v4652
    %4758 = vmatmul.mubr.f32.gmra.mrb[0].mxu0 %v4510
    %v4759 = vpop.f32.mrb[0].mxu0
    %v4760 = vadd.f32 0.0, %v4759
    %v4761 = vpop.f32.mrb[0].mxu0
    %4762 = vmatprep.mubr.f32.mxu0 %v4655
    %4763 = vmatmul.mubr.f32.gmra.mrb[0].mxu0 %v4512
    %v4764 = vpop.f32.mrb[0].mxu0
    %v4765 = vadd.f32 0.0, %v4764
    %v4766 = vpop.f32.mrb[0].mxu0
    %4767 = vmatprep.mubr.f32.mxu0 %v4658
    %4768 = vmatmul.mubr.f32.gmra.mrb[0].mxu0 %v4514
    %v4769 = vpop.f32.mrb[0].mxu0
    %v4770 = vadd.f32 0.0, %v4769
    %v4771 = vpop.f32.mrb[0].mxu0
    %4772 = vmatprep.mubr.f32.mxu0 %v4661
    %4773 = vmatmul.mubr.f32.gmra.mrb[0].mxu0 %v4516
    %v4774 = vpop.f32.mrb[0].mxu0
    %v4775 = vadd.f32 0.0, %v4774
    %v4776 = vpop.f32.mrb[0].mxu0
    %4777 = vmatprep.mubr.f32.mxu0 %v4664
    %4778 = vmatmul.mubr.f32.gmra.mrb[0].mxu0 %v4518
    %v4779 = vpop.f32.mrb[0].mxu0
    %v4780 = vadd.f32 0.0, %v4779
    %v4781 = vpop.f32.mrb[0].mxu0
    %4782 = vmatprep.mubr.f32.mxu0 %v4667
    %4783 = vmatmul.mubr.f32.gmra.mrb[0].mxu0 %v4520
    %v4784 = vpop.f32.mrb[0].mxu0
    %v4785 = vadd.f32 0.0, %v4784
    %v4786 = vpop.f32.mrb[0].mxu0
    %4787 = vmatprep.mubr.f32.mxu0 %v4670
    %4788 = vmatmul.mubr.f32.gmra.mrb[0].mxu0 %v4522
    %v4789 = vpop.f32.mrb[0].mxu0
    %v4790 = vadd.f32 0.0, %v4789
    %v4791 = vpop.f32.mrb[0].mxu0
    %4792 = vmatprep.mubr.f32.mxu0 %v4673
    %4793 = vmatmul.mubr.f32.gmra.mrb[0].mxu0 %v4524
    %v4794 = vpop.f32.mrb[0].mxu0
    %v4795 = vadd.f32 0.0, %v4794
    %v4796 = vpop.f32.mrb[0].mxu0
    %4797 = vmatprep.mubr.f32.mxu0 %v4676
    %4798 = vmatmul.mubr.f32.gmra.mrb[0].mxu0 %v4526
    %v4799 = vpop.f32.mrb[0].mxu0
    %v4800 = vadd.f32 0.0, %v4799
    %v4801 = vpop.f32.mrb[0].mxu0
    %4802 = vmatprep.mubr.f32.mxu0 %v4679
    %4803 = vmatmul.mubr.f32.gmra.mrb[0].mxu0 %v4528
    %v4804 = vpop.f32.mrb[0].mxu0
    %v4805 = vadd.f32 0.0, %v4804
    %v4806 = vpop.f32.mrb[0].mxu0
    %4807 = vmatprep.mubr.f32.mxu0 %v4682
    %4808 = vmatmul.mubr.f32.gmra.mrb[0].mxu0 %v4530
    %v4809 = vpop.f32.mrb[0].mxu0
    %v4810 = vadd.f32 0.0, %v4809
    %v4811 = vpop.f32.mrb[0].mxu0
    %4812 = vmatprep.mubr.f32.mxu0 %v4685
    %4813 = vmatmul.mubr.f32.gmra.mrb[0].mxu0 %v4532
    %v4814 = vpop.f32.mrb[0].mxu0
    %v4815 = vadd.f32 0.0, %v4814
    %v4816 = vpop.f32.mrb[0].mxu0
    %4817 = vmatprep.mubr.f32.mxu0 %v4688
    %4818 = vmatmul.mubr.f32.gmra.mrb[0].mxu0 %v4534
    %v4819 = vpop.f32.mrb[0].mxu0
    %v4820 = vadd.f32 0.0, %v4819
    %v4821 = vpop.f32.mrb[0].mxu0
    %4822 = vmatprep.mubr.f32.mxu0 %v4691
    %4823 = vmatmul.mubr.f32.gmra.mrb[0].mxu0 %v4536
    %v4824 = vpop.f32.mrb[0].mxu0
    %v4825 = vadd.f32 0.0, %v4824
    %v4826 = vpop.f32.mrb[0].mxu0
    %4827 = vdwg.mxu0
    %4828 = vmatprep.subr.mxu0 0.0
    %4829 = vmatpush1.msra.mxu0 %v4566
    %4830 = vmatprep.subr.mxu0 0.0
    %4831 = vmatpush1.msra.mxu0 %v4567
    %4832 = vmatprep.subr.mxu0 0.0
    %4833 = vmatpush1.msra.mxu0 %v4568
    %4834 = vmatprep.subr.mxu0 0.0
    %4835 = vmatpush1.msra.mxu0 %v4569
    %4836 = vmatprep.subr.mxu0 0.0
    %4837 = vmatpush1.msra.mxu0 %v4570
    %4838 = vmatprep.subr.mxu0 0.0
    %4839 = vmatpush1.msra.mxu0 %v4571
    %4840 = vmatprep.subr.mxu0 0.0
    %4841 = vmatpush1.msra.mxu0 %v4572
    %4842 = vmatprep.subr.mxu0 0.0
    %4843 = vmatpush1.msra.mxu0 %v4573
    %4844 = vmatprep.subr.mxu0 0.0
    %4845 = vmatpush1.msra.mxu0 %v4574
    %4846 = vmatprep.subr.mxu0 0.0
    %4847 = vmatpush1.msra.mxu0 %v4575
    %4848 = vmatprep.subr.mxu0 0.0
    %4849 = vmatpush1.msra.mxu0 %v4576
    %4850 = vmatprep.subr.mxu0 0.0
    %4851 = vmatpush1.msra.mxu0 %v4577
    %4852 = vmatprep.subr.mxu0 0.0
    %4853 = vmatpush1.msra.mxu0 %v4578
    %4854 = vmatprep.subr.mxu0 0.0
    %4855 = vmatpush1.msra.mxu0 %v4579
    %4856 = vmatprep.subr.mxu0 0.0
    %4857 = vmatpush1.msra.mxu0 %v4580
    %4858 = vmatprep.subr.mxu0 0.0
    %4859 = vmatpush1.msra.mxu0 %v4581
    %4860 = vmatprep.subr.mxu0 0.0
    %4861 = vmatpush1.msra.mxu0 %v4582
    %4862 = vmatprep.subr.mxu0 0.0
    %4863 = vmatpush1.msra.mxu0 %v4583
    %4864 = vmatprep.subr.mxu0 0.0
    %4865 = vmatpush1.msra.mxu0 %v4584
    %4866 = vmatprep.subr.mxu0 0.0
    %4867 = vmatpush1.msra.mxu0 %v4585
    %4868 = vmatprep.subr.mxu0 0.0
    %4869 = vmatpush1.msra.mxu0 %v4586
    %4870 = vmatprep.subr.mxu0 0.0
    %4871 = vmatpush1.msra.mxu0 %v4587
    %4872 = vmatprep.subr.mxu0 0.0
    %4873 = vmatpush1.msra.mxu0 %v4588
    %4874 = vmatprep.subr.mxu0 0.0
    %4875 = vmatpush1.msra.mxu0 %v4589
    %4876 = vmatprep.subr.mxu0 0.0
    %4877 = vmatpush1.msra.mxu0 %v4590
    %4878 = vmatprep.subr.mxu0 0.0
    %4879 = vmatpush1.msra.mxu0 %v4591
    %4880 = vmatprep.subr.mxu0 0.0
    %4881 = vmatpush1.msra.mxu0 %v4592
    %4882 = vmatprep.subr.mxu0 0.0
    %4883 = vmatpush1.msra.mxu0 %v4593
    %4884 = vmatprep.subr.mxu0 0.0
    %4885 = vmatpush1.msra.mxu0 0.0
    %4886 = vmatprep.subr.mxu0 0.0
    %4887 = vmatpush1.msra.mxu0 0.0
    %4888 = vmatprep.subr.mxu0 0.0
    %4889 = vmatpush1.msra.mxu0 0.0
    %4890 = vmatprep.subr.mxu0 0.0
    %4891 = vmatpush1.msra.mxu0 0.0
    %4892 = vmatprep.mubr.f32.mxu0 %v1286
    %4893 = vmatmul.mubr.f32.gmra.mrb[0].mxu0 0.0
    %v4894 = vpop.f32.mrb[0].mxu0
    %v4895 = vadd.f32 %v4760, %v4894
    %v4896 = vpop.f32.mrb[0].mxu0
    %4897 = vmatprep.mubr.f32.mxu0 %v4652
    %4898 = vmatmul.mubr.f32.gmra.mrb[0].mxu0 %v4510
    %v4899 = vpop.f32.mrb[0].mxu0
    %v4900 = vadd.f32 %v4765, %v4899
    %v4901 = vpop.f32.mrb[0].mxu0
    %4902 = vmatprep.mubr.f32.mxu0 %v4655
    %4903 = vmatmul.mubr.f32.gmra.mrb[0].mxu0 %v4512
    %v4904 = vpop.f32.mrb[0].mxu0
    %v4905 = vadd.f32 %v4770, %v4904
    %v4906 = vpop.f32.mrb[0].mxu0
    %4907 = vmatprep.mubr.f32.mxu0 %v4658
    %4908 = vmatmul.mubr.f32.gmra.mrb[0].mxu0 %v4514
    %v4909 = vpop.f32.mrb[0].mxu0
    %v4910 = vadd.f32 %v4775, %v4909
    %v4911 = vpop.f32.mrb[0].mxu0
    %4912 = vmatprep.mubr.f32.mxu0 %v4661
    %4913 = vmatmul.mubr.f32.gmra.mrb[0].mxu0 %v4516
    %v4914 = vpop.f32.mrb[0].mxu0
    %v4915 = vadd.f32 %v4780, %v4914
    %v4916 = vpop.f32.mrb[0].mxu0
    %4917 = vmatprep.mubr.f32.mxu0 %v4664
    %4918 = vmatmul.mubr.f32.gmra.mrb[0].mxu0 %v4518
    %v4919 = vpop.f32.mrb[0].mxu0
    %v4920 = vadd.f32 %v4785, %v4919
    %v4921 = vpop.f32.mrb[0].mxu0
    %4922 = vmatprep.mubr.f32.mxu0 %v4667
    %4923 = vmatmul.mubr.f32.gmra.mrb[0].mxu0 %v4520
    %v4924 = vpop.f32.mrb[0].mxu0
    %v4925 = vadd.f32 %v4790, %v4924
    %v4926 = vpop.f32.mrb[0].mxu0
    %4927 = vmatprep.mubr.f32.mxu0 %v4670
    %4928 = vmatmul.mubr.f32.gmra.mrb[0].mxu0 %v4522
    %v4929 = vpop.f32.mrb[0].mxu0
    %v4930 = vadd.f32 %v4795, %v4929
    %v4931 = vpop.f32.mrb[0].mxu0
    %4932 = vmatprep.mubr.f32.mxu0 %v4673
    %4933 = vmatmul.mubr.f32.gmra.mrb[0].mxu0 %v4524
    %v4934 = vpop.f32.mrb[0].mxu0
    %v4935 = vadd.f32 %v4800, %v4934
    %v4936 = vpop.f32.mrb[0].mxu0
    %4937 = vmatprep.mubr.f32.mxu0 %v4676
    %4938 = vmatmul.mubr.f32.gmra.mrb[0].mxu0 %v4526
    %v4939 = vpop.f32.mrb[0].mxu0
    %v4940 = vadd.f32 %v4805, %v4939
    %v4941 = vpop.f32.mrb[0].mxu0
    %4942 = vmatprep.mubr.f32.mxu0 %v4679
    %4943 = vmatmul.mubr.f32.gmra.mrb[0].mxu0 %v4528
    %v4944 = vpop.f32.mrb[0].mxu0
    %v4945 = vadd.f32 %v4810, %v4944
    %v4946 = vpop.f32.mrb[0].mxu0
    %4947 = vmatprep.mubr.f32.mxu0 %v4682
    %4948 = vmatmul.mubr.f32.gmra.mrb[0].mxu0 %v4530
    %v4949 = vpop.f32.mrb[0].mxu0
    %v4950 = vadd.f32 %v4815, %v4949
    %v4951 = vpop.f32.mrb[0].mxu0
    %4952 = vmatprep.mubr.f32.mxu0 %v4685
    %4953 = vmatmul.mubr.f32.gmra.mrb[0].mxu0 %v4532
    %v4954 = vpop.f32.mrb[0].mxu0
    %v4955 = vadd.f32 %v4820, %v4954
    %v4956 = vpop.f32.mrb[0].mxu0
    %4957 = vmatprep.mubr.f32.mxu0 %v4688
    %4958 = vmatmul.mubr.f32.gmra.mrb[0].mxu0 %v4534
    %v4959 = vpop.f32.mrb[0].mxu0
    %v4960 = vadd.f32 %v4825, %v4959
    %v4961 = vpop.f32.mrb[0].mxu0
    %4962 = vdwg.mxu0
    %s4963 = scalar_lea.vmem %s15, 224
    %v4964 = vld [vmem:[%s4963] sm:$0xf]
    %v4965 = vld [vmem:[%s4963 + $0x4] sm:$0xf]
    %v4966 = vld [vmem:[%s4963 + $0x8] sm:$0xf]
    %v4967 = vld [vmem:[%s4963 + $0xc] sm:$0xf]
    %v4968 = vld [vmem:[%s4963 + $0x10] sm:$0xf]
    %v4969 = vld [vmem:[%s4963 + $0x14] sm:$0xf]
    %v4970 = vld [vmem:[%s4963 + $0x18] sm:$0xf]
    %v4971 = vld [vmem:[%s4963 + $0x1c] sm:$0xf]
    %v4972 = vld [vmem:[%s4963 + $0x20] sm:$0xf]
    %v4973 = vld [vmem:[%s4963 + $0x24] sm:$0xf]
    %v4974 = vld [vmem:[%s4963 + $0x28] sm:$0xf]
    %v4975 = vld [vmem:[%s4963 + $0x2c] sm:$0xf]
    %v4976 = vld [vmem:[%s4963 + $0x30] sm:$0xf]
    %v4977 = vld [vmem:[%s4963 + $0x34] sm:$0xf]
    %v4978 = vld [vmem:[%s4963 + $0x38] sm:$0xf]
    %v4979 = vld [vmem:[%s4963 + $0x3c] sm:$0xf]
    %v4980 = vld [vmem:[%s4963 + $0x40] sm:$0xf]
    %v4981 = vld [vmem:[%s4963 + $0x44] sm:$0xf]
    %v4982 = vld [vmem:[%s4963 + $0x48] sm:$0xf]
    %v4983 = vld [vmem:[%s4963 + $0x4c] sm:$0xf]
    %v4984 = vld [vmem:[%s4963 + $0x50] sm:$0xf]
    %v4985 = vld [vmem:[%s4963 + $0x54] sm:$0xf]
    %v4986 = vld [vmem:[%s4963 + $0x58] sm:$0xf]
    %v4987 = vld [vmem:[%s4963 + $0x5c] sm:$0xf]
    %v4988 = vld [vmem:[%s4963 + $0x60] sm:$0xf]
    %v4989 = vld [vmem:[%s4963 + $0x64] sm:$0xf]
    %v4990 = vld [vmem:[%s4963 + $0x68] sm:$0xf]
    %v4991 = vld [vmem:[%s4963 + $0x6c] sm:$0xf]
    %v4992 = vunpack.c.l.bf16 %v4964
    %v4993 = vunpack.c.l.bf16 %v4965
    %v4994 = vunpack.c.l.bf16 %v4966
    %v4995 = vunpack.c.l.bf16 %v4967
    %v4996 = vunpack.c.l.bf16 %v4968
    %v4997 = vunpack.c.l.bf16 %v4969
    %v4998 = vunpack.c.l.bf16 %v4970
    %v4999 = vunpack.c.l.bf16 %v4971
    %v5000 = vunpack.c.l.bf16 %v4972
    %v5001 = vunpack.c.l.bf16 %v4973
    %v5002 = vunpack.c.l.bf16 %v4974
    %v5003 = vunpack.c.l.bf16 %v4975
    %v5004 = vunpack.c.l.bf16 %v4976
    %v5005 = vunpack.c.l.bf16 %v4977
    %v5006 = vunpack.c.l.bf16 %v4978
    %v5007 = vunpack.c.l.bf16 %v4979
    %v5008 = vunpack.c.l.bf16 %v4980
    %v5009 = vunpack.c.l.bf16 %v4981
    %v5010 = vunpack.c.l.bf16 %v4982
    %v5011 = vunpack.c.l.bf16 %v4983
    %v5012 = vunpack.c.l.bf16 %v4984
    %v5013 = vunpack.c.l.bf16 %v4985
    %v5014 = vunpack.c.l.bf16 %v4986
    %v5015 = vunpack.c.l.bf16 %v4987
    %v5016 = vunpack.c.l.bf16 %v4988
    %v5017 = vunpack.c.l.bf16 %v4989
    %v5018 = vunpack.c.l.bf16 %v4990
    %v5019 = vunpack.c.l.bf16 %v4991
    %s5020 = scalar_lea.vmem %s15, 336
    %v5021 = vld [vmem:[%s5020] sm:$0xf]
    %v5022 = vld [vmem:[%s5020 + $0x4] sm:$0xf]
    %v5023 = vld [vmem:[%s5020 + $0x8] sm:$0xf]
    %v5024 = vld [vmem:[%s5020 + $0xc] sm:$0xf]
    %v5025 = vld [vmem:[%s5020 + $0x10] sm:$0xf]
    %v5026 = vld [vmem:[%s5020 + $0x14] sm:$0xf]
    %v5027 = vld [vmem:[%s5020 + $0x18] sm:$0xf]
    %v5028 = vld [vmem:[%s5020 + $0x1c] sm:$0xf]
    %v5029 = vld [vmem:[%s5020 + $0x20] sm:$0xf]
    %v5030 = vld [vmem:[%s5020 + $0x24] sm:$0xf]
    %v5031 = vld [vmem:[%s5020 + $0x28] sm:$0xf]
    %v5032 = vld [vmem:[%s5020 + $0x2c] sm:$0xf]
    %v5033 = vld [vmem:[%s5020 + $0x30] sm:$0xf]
    %v5034 = vld [vmem:[%s5020 + $0x34] sm:$0xf]
    %v5035 = vld [vmem:[%s5020 + $0x38] sm:$0xf]
    %v5036 = vld [vmem:[%s5020 + $0x3c] sm:$0xf]
    %v5037 = vld [vmem:[%s5020 + $0x40] sm:$0xf]
    %v5038 = vld [vmem:[%s5020 + $0x44] sm:$0xf]
    %v5039 = vld [vmem:[%s5020 + $0x48] sm:$0xf]
    %v5040 = vld [vmem:[%s5020 + $0x4c] sm:$0xf]
    %v5041 = vld [vmem:[%s5020 + $0x50] sm:$0xf]
    %v5042 = vld [vmem:[%s5020 + $0x54] sm:$0xf]
    %v5043 = vld [vmem:[%s5020 + $0x58] sm:$0xf]
    %v5044 = vld [vmem:[%s5020 + $0x5c] sm:$0xf]
    %v5045 = vld [vmem:[%s5020 + $0x60] sm:$0xf]
    %v5046 = vld [vmem:[%s5020 + $0x64] sm:$0xf]
    %v5047 = vld [vmem:[%s5020 + $0x68] sm:$0xf]
    %v5048 = vld [vmem:[%s5020 + $0x6c] sm:$0xf]
    %v5049 = vunpack.c.l.bf16 %v5021
    %v5050 = vunpack.c.l.bf16 %v5022
    %v5051 = vunpack.c.l.bf16 %v5023
    %v5052 = vunpack.c.l.bf16 %v5024
    %v5053 = vunpack.c.l.bf16 %v5025
    %v5054 = vunpack.c.l.bf16 %v5026
    %v5055 = vunpack.c.l.bf16 %v5027
    %v5056 = vunpack.c.l.bf16 %v5028
    %v5057 = vunpack.c.l.bf16 %v5029
    %v5058 = vunpack.c.l.bf16 %v5030
    %v5059 = vunpack.c.l.bf16 %v5031
    %v5060 = vunpack.c.l.bf16 %v5032
    %v5061 = vunpack.c.l.bf16 %v5033
    %v5062 = vunpack.c.l.bf16 %v5034
    %v5063 = vunpack.c.l.bf16 %v5035
    %v5064 = vunpack.c.l.bf16 %v5036
    %v5065 = vunpack.c.l.bf16 %v5037
    %v5066 = vunpack.c.l.bf16 %v5038
    %v5067 = vunpack.c.l.bf16 %v5039
    %v5068 = vunpack.c.l.bf16 %v5040
    %v5069 = vunpack.c.l.bf16 %v5041
    %v5070 = vunpack.c.l.bf16 %v5042
    %v5071 = vunpack.c.l.bf16 %v5043
    %v5072 = vunpack.c.l.bf16 %v5044
    %v5073 = vunpack.c.l.bf16 %v5045
    %v5074 = vunpack.c.l.bf16 %v5046
    %v5075 = vunpack.c.l.bf16 %v5047
    %v5076 = vunpack.c.l.bf16 %v5048
    %5077 = vmatprep.subr.mxu0 0.0
    %5078 = vmatpush1.msra.mxu0 %v5049
    %5079 = vmatprep.subr.mxu0 0.0
    %5080 = vmatpush1.msra.mxu0 %v5050
    %5081 = vmatprep.subr.mxu0 0.0
    %5082 = vmatpush1.msra.mxu0 %v5051
    %5083 = vmatprep.subr.mxu0 0.0
    %5084 = vmatpush1.msra.mxu0 %v5052
    %5085 = vmatprep.subr.mxu0 0.0
    %5086 = vmatpush1.msra.mxu0 %v5053
    %5087 = vmatprep.subr.mxu0 0.0
    %5088 = vmatpush1.msra.mxu0 %v5054
    %5089 = vmatprep.subr.mxu0 0.0
    %5090 = vmatpush1.msra.mxu0 %v5055
    %5091 = vmatprep.subr.mxu0 0.0
    %5092 = vmatpush1.msra.mxu0 %v5056
    %5093 = vmatprep.subr.mxu0 0.0
    %5094 = vmatpush1.msra.mxu0 %v5057
    %5095 = vmatprep.subr.mxu0 0.0
    %5096 = vmatpush1.msra.mxu0 %v5058
    %5097 = vmatprep.subr.mxu0 0.0
    %5098 = vmatpush1.msra.mxu0 %v5059
    %5099 = vmatprep.subr.mxu0 0.0
    %5100 = vmatpush1.msra.mxu0 %v5060
    %5101 = vmatprep.subr.mxu0 0.0
    %5102 = vmatpush1.msra.mxu0 %v5061
    %5103 = vmatprep.subr.mxu0 0.0
    %5104 = vmatpush1.msra.mxu0 %v5062
    %5105 = vmatprep.subr.mxu0 0.0
    %5106 = vmatpush1.msra.mxu0 %v5063
    %5107 = vmatprep.subr.mxu0 0.0
    %5108 = vmatpush1.msra.mxu0 %v5064
    %5109 = vmatprep.subr.mxu0 0.0
    %5110 = vmatpush1.msra.mxu0 %v5065
    %5111 = vmatprep.subr.mxu0 0.0
    %5112 = vmatpush1.msra.mxu0 %v5066
    %5113 = vmatprep.subr.mxu0 0.0
    %5114 = vmatpush1.msra.mxu0 %v5067
    %5115 = vmatprep.subr.mxu0 0.0
    %5116 = vmatpush1.msra.mxu0 %v5068
    %5117 = vmatprep.subr.mxu0 0.0
    %5118 = vmatpush1.msra.mxu0 %v5069
    %5119 = vmatprep.subr.mxu0 0.0
    %5120 = vmatpush1.msra.mxu0 %v5070
    %5121 = vmatprep.subr.mxu0 0.0
    %5122 = vmatpush1.msra.mxu0 %v5071
    %5123 = vmatprep.subr.mxu0 0.0
    %5124 = vmatpush1.msra.mxu0 %v5072
    %5125 = vmatprep.subr.mxu0 0.0
    %5126 = vmatpush1.msra.mxu0 %v5073
    %5127 = vmatprep.subr.mxu0 0.0
    %5128 = vmatpush1.msra.mxu0 %v5074
    %5129 = vmatprep.subr.mxu0 0.0
    %5130 = vmatpush1.msra.mxu0 %v5075
    %5131 = vmatprep.subr.mxu0 0.0
    %5132 = vmatpush1.msra.mxu0 %v5076
    %5133 = vmatprep.subr.mxu0 0.0
    %5134 = vmatpush1.msra.mxu0 0.0
    %5135 = vmatprep.subr.mxu0 0.0
    %5136 = vmatpush1.msra.mxu0 0.0
    %5137 = vmatprep.subr.mxu0 0.0
    %5138 = vmatpush1.msra.mxu0 0.0
    %5139 = vmatprep.subr.mxu0 0.0
    %5140 = vmatpush1.msra.mxu0 0.0
    %5141 = vmatprep.mubr.f32.mxu0 %v4655
    %5142 = vmatmul.mubr.f32.gmra.mrb[0].mxu0 %v4512
    %v5143 = vpop.f32.mrb[0].mxu0
    %v5144 = vadd.f32 0.0, %v5143
    %v5145 = vpop.f32.mrb[0].mxu0
    %5146 = vmatprep.mubr.f32.mxu0 %v4658
    %5147 = vmatmul.mubr.f32.gmra.mrb[0].mxu0 %v4514
    %v5148 = vpop.f32.mrb[0].mxu0
    %v5149 = vadd.f32 0.0, %v5148
    %v5150 = vpop.f32.mrb[0].mxu0
    %5151 = vmatprep.mubr.f32.mxu0 %v4661
    %5152 = vmatmul.mubr.f32.gmra.mrb[0].mxu0 %v4516
    %v5153 = vpop.f32.mrb[0].mxu0
    %v5154 = vadd.f32 0.0, %v5153
    %v5155 = vpop.f32.mrb[0].mxu0
    %5156 = vmatprep.mubr.f32.mxu0 %v4664
    %5157 = vmatmul.mubr.f32.gmra.mrb[0].mxu0 %v4518
    %v5158 = vpop.f32.mrb[0].mxu0
    %v5159 = vadd.f32 0.0, %v5158
    %v5160 = vpop.f32.mrb[0].mxu0
    %5161 = vmatprep.mubr.f32.mxu0 %v4667
    %5162 = vmatmul.mubr.f32.gmra.mrb[0].mxu0 %v4520
    %v5163 = vpop.f32.mrb[0].mxu0
    %v5164 = vadd.f32 0.0, %v5163
    %v5165 = vpop.f32.mrb[0].mxu0
    %5166 = vmatprep.mubr.f32.mxu0 %v4670
    %5167 = vmatmul.mubr.f32.gmra.mrb[0].mxu0 %v4522
    %v5168 = vpop.f32.mrb[0].mxu0
    %v5169 = vadd.f32 0.0, %v5168
    %v5170 = vpop.f32.mrb[0].mxu0
    %5171 = vmatprep.mubr.f32.mxu0 %v4673
    %5172 = vmatmul.mubr.f32.gmra.mrb[0].mxu0 %v4524
    %v5173 = vpop.f32.mrb[0].mxu0
    %v5174 = vadd.f32 0.0, %v5173
    %v5175 = vpop.f32.mrb[0].mxu0
    %5176 = vmatprep.mubr.f32.mxu0 %v4676
    %5177 = vmatmul.mubr.f32.gmra.mrb[0].mxu0 %v4526
    %v5178 = vpop.f32.mrb[0].mxu0
    %v5179 = vadd.f32 0.0, %v5178
    %v5180 = vpop.f32.mrb[0].mxu0
    %5181 = vmatprep.mubr.f32.mxu0 %v4679
    %5182 = vmatmul.mubr.f32.gmra.mrb[0].mxu0 %v4528
    %v5183 = vpop.f32.mrb[0].mxu0
    %v5184 = vadd.f32 0.0, %v5183
    %v5185 = vpop.f32.mrb[0].mxu0
    %5186 = vmatprep.mubr.f32.mxu0 %v4682
    %5187 = vmatmul.mubr.f32.gmra.mrb[0].mxu0 %v4530
    %v5188 = vpop.f32.mrb[0].mxu0
    %v5189 = vadd.f32 0.0, %v5188
    %v5190 = vpop.f32.mrb[0].mxu0
    %5191 = vmatprep.mubr.f32.mxu0 %v4685
    %5192 = vmatmul.mubr.f32.gmra.mrb[0].mxu0 %v4532
    %v5193 = vpop.f32.mrb[0].mxu0
    %v5194 = vadd.f32 0.0, %v5193
    %v5195 = vpop.f32.mrb[0].mxu0
    %5196 = vmatprep.mubr.f32.mxu0 %v4688
    %5197 = vmatmul.mubr.f32.gmra.mrb[0].mxu0 %v4534
    %v5198 = vpop.f32.mrb[0].mxu0
    %v5199 = vadd.f32 0.0, %v5198
    %v5200 = vpop.f32.mrb[0].mxu0
    %5201 = vmatprep.mubr.f32.mxu0 %v4691
    %5202 = vmatmul.mubr.f32.gmra.mrb[0].mxu0 %v4536
    %v5203 = vpop.f32.mrb[0].mxu0
    %v5204 = vadd.f32 0.0, %v5203
    %v5205 = vpop.f32.mrb[0].mxu0
    %5206 = vmatprep.mubr.f32.mxu0 %v1286
    %5207 = vmatmul.mubr.f32.gmra.mrb[0].mxu0 0.0
    %v5208 = vpop.f32.mrb[0].mxu0
    %v5209 = vadd.f32 0.0, %v5208
    %v5210 = vpop.f32.mrb[0].mxu0
    %5211 = vdwg.mxu0
    %5212 = vmatprep.subr.mxu0 0.0
    %5213 = vmatpush1.msra.mxu0 %v4992
    %5214 = vmatprep.subr.mxu0 0.0
    %5215 = vmatpush1.msra.mxu0 %v4993
    %5216 = vmatprep.subr.mxu0 0.0
    %5217 = vmatpush1.msra.mxu0 %v4994
    %5218 = vmatprep.subr.mxu0 0.0
    %5219 = vmatpush1.msra.mxu0 %v4995
    %5220 = vmatprep.subr.mxu0 0.0
    %5221 = vmatpush1.msra.mxu0 %v4996
    %5222 = vmatprep.subr.mxu0 0.0
    %5223 = vmatpush1.msra.mxu0 %v4997
    %5224 = vmatprep.subr.mxu0 0.0
    %5225 = vmatpush1.msra.mxu0 %v4998
    %5226 = vmatprep.subr.mxu0 0.0
    %5227 = vmatpush1.msra.mxu0 %v4999
    %5228 = vmatprep.subr.mxu0 0.0
    %5229 = vmatpush1.msra.mxu0 %v5000
    %5230 = vmatprep.subr.mxu0 0.0
    %5231 = vmatpush1.msra.mxu0 %v5001
    %5232 = vmatprep.subr.mxu0 0.0
    %5233 = vmatpush1.msra.mxu0 %v5002
    %5234 = vmatprep.subr.mxu0 0.0
    %5235 = vmatpush1.msra.mxu0 %v5003
    %5236 = vmatprep.subr.mxu0 0.0
    %5237 = vmatpush1.msra.mxu0 %v5004
    %5238 = vmatprep.subr.mxu0 0.0
    %5239 = vmatpush1.msra.mxu0 %v5005
    %5240 = vmatprep.subr.mxu0 0.0
    %5241 = vmatpush1.msra.mxu0 %v5006
    %5242 = vmatprep.subr.mxu0 0.0
    %5243 = vmatpush1.msra.mxu0 %v5007
    %5244 = vmatprep.subr.mxu0 0.0
    %5245 = vmatpush1.msra.mxu0 %v5008
    %5246 = vmatprep.subr.mxu0 0.0
    %5247 = vmatpush1.msra.mxu0 %v5009
    %5248 = vmatprep.subr.mxu0 0.0
    %5249 = vmatpush1.msra.mxu0 %v5010
    %5250 = vmatprep.subr.mxu0 0.0
    %5251 = vmatpush1.msra.mxu0 %v5011
    %5252 = vmatprep.subr.mxu0 0.0
    %5253 = vmatpush1.msra.mxu0 %v5012
    %5254 = vmatprep.subr.mxu0 0.0
    %5255 = vmatpush1.msra.mxu0 %v5013
    %5256 = vmatprep.subr.mxu0 0.0
    %5257 = vmatpush1.msra.mxu0 %v5014
    %5258 = vmatprep.subr.mxu0 0.0
    %5259 = vmatpush1.msra.mxu0 %v5015
    %5260 = vmatprep.subr.mxu0 0.0
    %5261 = vmatpush1.msra.mxu0 %v5016
    %5262 = vmatprep.subr.mxu0 0.0
    %5263 = vmatpush1.msra.mxu0 %v5017
    %5264 = vmatprep.subr.mxu0 0.0
    %5265 = vmatpush1.msra.mxu0 %v5018
    %5266 = vmatprep.subr.mxu0 0.0
    %5267 = vmatpush1.msra.mxu0 %v5019
    %5268 = vmatprep.subr.mxu0 0.0
    %5269 = vmatpush1.msra.mxu0 0.0
    %5270 = vmatprep.subr.mxu0 0.0
    %5271 = vmatpush1.msra.mxu0 0.0
    %5272 = vmatprep.subr.mxu0 0.0
    %5273 = vmatpush1.msra.mxu0 0.0
    %5274 = vmatprep.subr.mxu0 0.0
    %5275 = vmatpush1.msra.mxu0 0.0
    %5276 = vmatprep.mubr.f32.mxu0 %v4652
    %5277 = vmatmul.mubr.f32.gmra.mrb[0].mxu0 %v4510
    %v5278 = vpop.f32.mrb[0].mxu0
    %v5279 = vadd.f32 %v5144, %v5278
    %v5280 = vpop.f32.mrb[0].mxu0
    %5281 = vmatprep.mubr.f32.mxu0 %v4655
    %5282 = vmatmul.mubr.f32.gmra.mrb[0].mxu0 %v4512
    %v5283 = vpop.f32.mrb[0].mxu0
    %v5284 = vadd.f32 %v5149, %v5283
    %v5285 = vpop.f32.mrb[0].mxu0
    %5286 = vmatprep.mubr.f32.mxu0 %v4658
    %5287 = vmatmul.mubr.f32.gmra.mrb[0].mxu0 %v4514
    %v5288 = vpop.f32.mrb[0].mxu0
    %v5289 = vadd.f32 %v5154, %v5288
    %v5290 = vpop.f32.mrb[0].mxu0
    %5291 = vmatprep.mubr.f32.mxu0 %v4661
    %5292 = vmatmul.mubr.f32.gmra.mrb[0].mxu0 %v4516
    %v5293 = vpop.f32.mrb[0].mxu0
    %v5294 = vadd.f32 %v5159, %v5293
    %v5295 = vpop.f32.mrb[0].mxu0
    %5296 = vmatprep.mubr.f32.mxu0 %v4664
    %5297 = vmatmul.mubr.f32.gmra.mrb[0].mxu0 %v4518
    %v5298 = vpop.f32.mrb[0].mxu0
    %v5299 = vadd.f32 %v5164, %v5298
    %v5300 = vpop.f32.mrb[0].mxu0
    %5301 = vmatprep.mubr.f32.mxu0 %v4667
    %5302 = vmatmul.mubr.f32.gmra.mrb[0].mxu0 %v4520
    %v5303 = vpop.f32.mrb[0].mxu0
    %v5304 = vadd.f32 %v5169, %v5303
    %v5305 = vpop.f32.mrb[0].mxu0
    %5306 = vmatprep.mubr.f32.mxu0 %v4670
    %5307 = vmatmul.mubr.f32.gmra.mrb[0].mxu0 %v4522
    %v5308 = vpop.f32.mrb[0].mxu0
    %v5309 = vadd.f32 %v5174, %v5308
    %v5310 = vpop.f32.mrb[0].mxu0
    %5311 = vmatprep.mubr.f32.mxu0 %v4673
    %5312 = vmatmul.mubr.f32.gmra.mrb[0].mxu0 %v4524
    %v5313 = vpop.f32.mrb[0].mxu0
    %v5314 = vadd.f32 %v5179, %v5313
    %v5315 = vpop.f32.mrb[0].mxu0
    %5316 = vmatprep.mubr.f32.mxu0 %v4676
    %5317 = vmatmul.mubr.f32.gmra.mrb[0].mxu0 %v4526
    %v5318 = vpop.f32.mrb[0].mxu0
    %v5319 = vadd.f32 %v5184, %v5318
    %v5320 = vpop.f32.mrb[0].mxu0
    %5321 = vmatprep.mubr.f32.mxu0 %v4679
    %5322 = vmatmul.mubr.f32.gmra.mrb[0].mxu0 %v4528
    %v5323 = vpop.f32.mrb[0].mxu0
    %v5324 = vadd.f32 %v5189, %v5323
    %v5325 = vpop.f32.mrb[0].mxu0
    %5326 = vmatprep.mubr.f32.mxu0 %v4682
    %5327 = vmatmul.mubr.f32.gmra.mrb[0].mxu0 %v4530
    %v5328 = vpop.f32.mrb[0].mxu0
    %v5329 = vadd.f32 %v5194, %v5328
    %v5330 = vpop.f32.mrb[0].mxu0
    %5331 = vmatprep.mubr.f32.mxu0 %v4685
    %5332 = vmatmul.mubr.f32.gmra.mrb[0].mxu0 %v4532
    %v5333 = vpop.f32.mrb[0].mxu0
    %v5334 = vadd.f32 %v5199, %v5333
    %v5335 = vpop.f32.mrb[0].mxu0
    %5336 = vmatprep.mubr.f32.mxu0 %v4688
    %5337 = vmatmul.mubr.f32.gmra.mrb[0].mxu0 %v4534
    %v5338 = vpop.f32.mrb[0].mxu0
    %v5339 = vadd.f32 %v5204, %v5338
    %v5340 = vpop.f32.mrb[0].mxu0
    %5341 = vmatprep.mubr.f32.mxu0 %v4691
    %5342 = vmatmul.mubr.f32.gmra.mrb[0].mxu0 %v4536
    %v5343 = vpop.f32.mrb[0].mxu0
    %v5344 = vadd.f32 %v5209, %v5343
    %v5345 = vpop.f32.mrb[0].mxu0
    %5346 = vdwg.mxu0
    %5347 = vst.msk [vmem:[%s16] sm:$0xff] %vm169, %v4895
    %5348 = vst.msk [vmem:[%s16 + $0x8] sm:$0xff] %vm169, %v5279
    %5349 = vst.msk [vmem:[%s16 + $0x10] sm:$0xff] %vm169, %v4900
    %5350 = vst.msk [vmem:[%s16 + $0x18] sm:$0xff] %vm169, %v5284
    %5351 = vst.msk [vmem:[%s16 + $0x20] sm:$0xff] %vm169, %v4905
    %5352 = vst.msk [vmem:[%s16 + $0x28] sm:$0xff] %vm169, %v5289
    %5353 = vst.msk [vmem:[%s16 + $0x30] sm:$0xff] %vm169, %v4910
    %5354 = vst.msk [vmem:[%s16 + $0x38] sm:$0xff] %vm169, %v5294
    %5355 = vst.msk [vmem:[%s16 + $0x40] sm:$0xff] %vm169, %v4915
    %5356 = vst.msk [vmem:[%s16 + $0x48] sm:$0xff] %vm169, %v5299
    %5357 = vst.msk [vmem:[%s16 + $0x50] sm:$0xff] %vm169, %v4920
    %5358 = vst.msk [vmem:[%s16 + $0x58] sm:$0xff] %vm169, %v5304
    %5359 = vst.msk [vmem:[%s16 + $0x60] sm:$0xff] %vm169, %v4925
    %5360 = vst.msk [vmem:[%s16 + $0x68] sm:$0xff] %vm169, %v5309
    %5361 = vst.msk [vmem:[%s16 + $0x70] sm:$0xff] %vm169, %v4930
    %5362 = vst.msk [vmem:[%s16 + $0x78] sm:$0xff] %vm169, %v5314
    %5363 = vst.msk [vmem:[%s16 + $0x80] sm:$0xff] %vm169, %v4935
    %5364 = vst.msk [vmem:[%s16 + $0x88] sm:$0xff] %vm169, %v5319
    %5365 = vst.msk [vmem:[%s16 + $0x90] sm:$0xff] %vm169, %v4940
    %5366 = vst.msk [vmem:[%s16 + $0x98] sm:$0xff] %vm169, %v5324
    %5367 = vst.msk [vmem:[%s16 + $0xa0] sm:$0xff] %vm169, %v4945
    %5368 = vst.msk [vmem:[%s16 + $0xa8] sm:$0xff] %vm169, %v5329
    %5369 = vst.msk [vmem:[%s16 + $0xb0] sm:$0xff] %vm169, %v4950
    %5370 = vst.msk [vmem:[%s16 + $0xb8] sm:$0xff] %vm169, %v5334
    %5371 = vst.msk [vmem:[%s16 + $0xc0] sm:$0xff] %vm169, %v4955
    %5372 = vst.msk [vmem:[%s16 + $0xc8] sm:$0xff] %vm169, %v5339
    %5373 = vst.msk [vmem:[%s16 + $0xd0] sm:$0xff] %vm169, %v4960
    %5374 = vst.msk [vmem:[%s16 + $0xd8] sm:$0xff] %vm169, %v5344
    %5375 = vst.msk [vmem:[%s17] sm:$0xff] %vm2953, %v2851
    %5376 = vst.msk [vmem:[%s18] sm:$0xff] %vm2953, %v2936
    // Predicated region
    $region86: #{vae_forward.1} parent=1 // pred_check
      _
    $region87: #{vae_forward.1} parent=1 // pred_check_branch
      %5378 = sbr.rel (0) target = $region89
    $region88: #{vae_forward.1} parent=1 // pred_region
      _
    $region89: #{vae_forward.1} parent=1 // pred_fallthru
      _
    // Predicated region
    $region90: #{vae_forward.1} parent=1 // pred_check
      _
    $region91: #{vae_forward.1} parent=1 // pred_check_branch
      %5380 = sbr.rel (0) target = $region93
    $region92: #{vae_forward.1} parent=1 // pred_region
      _
    $region93: #{vae_forward.1} parent=1 // pred_fallthru
      _
    // Predicated region
    $region94: #{vae_forward.1} parent=1 // pred_check
      _
    $region95: #{vae_forward.1} parent=1 // pred_check_branch
      %5382 = sbr.rel (0) target = $region97
    $region96: #{vae_forward.1} parent=1 // pred_region
      _
    $region97: #{vae_forward.1} parent=1 // pred_fallthru
      _
    // Predicated region
    $region98: #{vae_forward.1} parent=1 // pred_check
      _
    $region99: #{vae_forward.1} parent=1 // pred_check_branch
      %5384 = sbr.rel (0) target = $region101
    $region100: #{vae_forward.1} parent=1 // pred_region
      _
    $region101: #{vae_forward.1} parent=1 // pred_fallthru
      _
    // Predicated region
    $region102: #{vae_forward.1} parent=1 // pred_check
      _
    $region103: #{vae_forward.1} parent=1 // pred_check_branch
      %5386 = sbr.rel (0) target = $region105
    $region104: #{vae_forward.1} parent=1 // pred_region
      _
    $region105: #{vae_forward.1} parent=1 // pred_fallthru
      _
    // Predicated region
    $region106: #{vae_forward.1} parent=1 // pred_check
      _
    $region107: #{vae_forward.1} parent=1 // pred_check_branch
      %5388 = sbr.rel (0) target = $region109
    $region108: #{vae_forward.1} parent=1 // pred_region
      _
    $region109: #{vae_forward.1} parent=1 // pred_fallthru
      _
    %5389 = vsyncpa [#allocation3], 1
    %5390 = vsyncpa [#allocation5], 1
    %5391 = vsyncpa [#allocation8], 1

</llo_original>
